<compile_context>
chip_gen: v7x
topology: tpu7x:2x2x1
jax: 0.10.0
libtpu: 0.0.40
codegen_flags: <defaults>
</compile_context>

<pallas_src>
import functools

import jax
import jax.numpy as jnp
from jax import lax
from jax.experimental import pallas as pl
from jax.experimental.pallas import tpu as pltpu


def _ode_decoder_kernel(times_ref,                        # SMEM (T,) f32
                        z_ref,                            # VMEM (B, Z)
                        w1v_ref, w1t_ref, b1_ref,         # (Z,H), (1,H), (1,H)
                        w2_ref, b2_ref,                   # (H,H), (1,H)
                        w3p_ref, b3p_ref,                 # (H,Z), (1,Z)  zero-padded
                        out_ref,                          # VMEM (T, B, Z), resident
                        *, num_sub, num_steps):
    # Hoist all weights/biases into vregs once (~14 vregs total); every
    # unrolled RK4 stage reuses them instead of re-loading from VMEM.
    w1v = w1v_ref[...]
    w1t = w1t_ref[...]
    b1 = b1_ref[...]
    w2 = w2_ref[...]
    b2 = b2_ref[...]
    w3p = w3p_ref[...]
    b3p = b3p_ref[...]

    def odefunc(tb, v):
        # latent_odefunc(cat([v, t])) with the time column of W1 split out and
        # the (t * w1t + b1) term precomputed by the caller.
        # TODO(synk): at K=12/H=32 a VPU broadcast-MAC chain may beat the MXU
        #             round-trip latency (and bf16 operands would halve MXU
        #             passes) — keep f32 MXU dots until measured/validated.
        h = jnp.tanh(jnp.dot(v, w1v, preferred_element_type=jnp.float32) + tb)
        h = jnp.tanh(jnp.dot(h, w2, preferred_element_type=jnp.float32) + b2)
        # W3 padded with zero columns for [L_dim:], so the dz_ part is exactly 0.
        return jnp.dot(h, w3p, preferred_element_type=jnp.float32) + b3p

    v0 = z_ref[...]
    out_ref[0] = v0          # odeint returns the initial state at times[0]

    def time_step(i, v):
        t0 = times_ref[i - 1]
        t1 = times_ref[i]
        dt = (t1 - t0) / num_sub

        def rk4_step(s, vv):
            t = t0 + s.astype(jnp.float32) * dt
            tb_a = t * w1t + b1                 # stage k1
            tb_m = (t + 0.5 * dt) * w1t + b1    # shared by k2 and k3
            tb_b = (t + dt) * w1t + b1          # stage k4
            k1 = odefunc(tb_a, vv)
            k2 = odefunc(tb_m, vv + 0.5 * dt * k1)
            k3 = odefunc(tb_m, vv + 0.5 * dt * k2)
            k4 = odefunc(tb_b, vv + dt * k3)
            return vv + (dt / 6.0) * (k1 + 2.0 * k2 + 2.0 * k3 + k4)

        # Substeps fully unrolled for LLO scheduling visibility on the chain.
        v1 = lax.fori_loop(0, num_sub, rk4_step, v, unroll=True)
        out_ref[i] = v1
        return v1

    # Outer loop over time steps stays rolled (strictly sequential chain).
    lax.fori_loop(1, num_steps, time_step, v0)


def abstract_ode_decoder_forward(x, z, params, *, L_dim, num_sub=8):
    """x: (B, P, 1) f32, z: (B, Z) f32 -> latent (B, P, L_dim) f32."""
    B, P, _ = x.shape
    Z = z.shape[1]
    w1v, w1t, b1, w2, b2, w3p, b3p = params

    x_sort = x[:, :, -1]
    # torch.unique(x_sort, sorted=True); test inputs have exactly P unique times.
    # TODO(synk): the dynamic unique-count of torch.unique needs a static size here.
    times = jnp.unique(x_sort, size=P).astype(jnp.float32)
    T = P

    kernel = functools.partial(_ode_decoder_kernel, num_sub=num_sub, num_steps=T)
    v_all = pl.pallas_call(
        kernel,
        out_shape=jax.ShapeDtypeStruct((T, B, Z), jnp.float32),
        in_specs=[pl.BlockSpec(memory_space=pltpu.MemorySpace.SMEM)]
                 + [pl.BlockSpec(memory_space=pltpu.MemorySpace.VMEM)] * 8,
        out_specs=pl.BlockSpec(memory_space=pltpu.MemorySpace.VMEM),
    )(times, z, w1v, w1t, b1, w2, b2, w3p, b3p)

    # <1 KB at these shapes: the permute/slice outside the kernel is negligible.
    permuted_v = jnp.transpose(v_all, (1, 0, 2))      # v.permute(1, 0, 2)
    latent = permuted_v[:, :, :L_dim]
    return latent


def init_params(key, z_dim, h_dim, L_dim):
    """Deterministic nn.Linear-style init for latent_odefunc; returns kernel params."""
    inp_dim = z_dim + 1  # x_dim == 1, exclude_time == False
    ks = jax.random.split(key, 6)

    def linear(kw, kb, fan_in, fan_out):
        bound = 1.0 / jnp.sqrt(jnp.float32(fan_in))
        W = jax.random.uniform(kw, (fan_in, fan_out), jnp.float32, -bound, bound)
        b = jax.random.uniform(kb, (1, fan_out), jnp.float32, -bound, bound)
        return W, b

    W1, b1 = linear(ks[0], ks[1], inp_dim, h_dim)
    W2, b2 = linear(ks[2], ks[3], h_dim, h_dim)
    W3, b3 = linear(ks[4], ks[5], h_dim, L_dim)   # L_out_dim == L_dim

    w1v = W1[:z_dim, :]            # (Z, H)
    w1t = W1[z_dim:z_dim + 1, :]   # (1, H)  -- time column
    # Zero-pad output projection from L_dim to z_dim (dz_ = 0).
    w3p = jnp.concatenate([W3, jnp.zeros((h_dim, z_dim - L_dim), jnp.float32)], axis=1)
    b3p = jnp.concatenate([b3, jnp.zeros((1, z_dim - L_dim), jnp.float32)], axis=1)
    return (w1v, w1t, b1, W2, b2, w3p, b3p)


def reference_forward(x, z, params, *, L_dim, num_sub=8):
    """Pure-JAX reference of the same fixed-step RK4 integration."""
    w1v, w1t, b1, w2, b2, w3p, b3p = params

    def odefunc(t, v):
        h = jnp.tanh(v @ w1v + t * w1t + b1)
        h = jnp.tanh(h @ w2 + b2)
        return h @ w3p + b3p

    times = jnp.unique(x[:, :, -1], size=x.shape[1]).astype(jnp.float32)
    vs = [z]
    v = z
    for i in range(1, times.shape[0]):
        t0, t1 = times[i - 1], times[i]
        dt = (t1 - t0) / num_sub
        for s in range(num_sub):
            t = t0 + s * dt
            k1 = odefunc(t, v)
            k2 = odefunc(t + 0.5 * dt, v + 0.5 * dt * k1)
            k3 = odefunc(t + 0.5 * dt, v + 0.5 * dt * k2)
            k4 = odefunc(t + dt, v + dt * k3)
            v = v + (dt / 6.0) * (k1 + 2.0 * k2 + 2.0 * k3 + k4)
        vs.append(v)
    v_all = jnp.stack(vs, axis=0)
    return jnp.transpose(v_all, (1, 0, 2))[:, :, :L_dim]


if __name__ == "__main__":
    # Small shapes consistent with the module: x_dim=1, z_dim=12, h_dim=32, L_dim=8
    batch, num_points = 2, 8
    x_dim, z_dim, h_dim, L_dim = 1, 12, 32, 8

    key = jax.random.PRNGKey(0)
    kp, kz = jax.random.split(key)
    params = init_params(kp, z_dim, h_dim, L_dim)

    # x times: shared strictly-increasing grid across the batch (P unique values).
    t_grid = jnp.linspace(0.1, 1.0, num_points, dtype=jnp.float32)
    x = jnp.broadcast_to(t_grid[None, :, None], (batch, num_points, x_dim))
    z = jax.random.normal(kz, (batch, z_dim), dtype=jnp.float32)

    latent = abstract_ode_decoder_forward(x, z, params, L_dim=L_dim, num_sub=8)
    latent = jax.block_until_ready(latent)

    ref = reference_forward(x, z, params, L_dim=L_dim, num_sub=8)
    assert latent.shape == (batch, num_points, L_dim)
    assert jnp.allclose(latent, ref, rtol=1e-3, atol=1e-3), "mismatch vs JAX reference"

    print("KERNEL_OK")
</pallas_src>

<mosaic_0001>
module attributes {stable_mosaic.version = 11 : i64} {
  func.func @_ode_decoder_kernel(%arg0: memref<8xf32, #tpu.memory_space<smem>>, %arg1: memref<2x12xf32, #tpu.memory_space<vmem>>, %arg2: memref<12x32xf32, #tpu.memory_space<vmem>>, %arg3: memref<1x32xf32, #tpu.memory_space<vmem>>, %arg4: memref<1x32xf32, #tpu.memory_space<vmem>>, %arg5: memref<32x32xf32, #tpu.memory_space<vmem>>, %arg6: memref<1x32xf32, #tpu.memory_space<vmem>>, %arg7: memref<32x12xf32, #tpu.memory_space<vmem>>, %arg8: memref<1x12xf32, #tpu.memory_space<vmem>>, %arg9: memref<8x2x12xf32, #tpu.memory_space<vmem>>) attributes {dimension_semantics = [], scalar_prefetch = 0 : i64, scratch_operands = 0 : i64, tpu.core_type = #tpu.core_type<tc>} {
    %c0 = arith.constant 0 : index
    %c0_0 = arith.constant 0 : index
    %0 = vector.load %arg2[%c0, %c0_0] : memref<12x32xf32, #tpu.memory_space<vmem>>, vector<12x32xf32>
    %c0_1 = arith.constant 0 : index
    %c0_2 = arith.constant 0 : index
    %1 = vector.load %arg3[%c0_1, %c0_2] : memref<1x32xf32, #tpu.memory_space<vmem>>, vector<1x32xf32>
    %c0_3 = arith.constant 0 : index
    %c0_4 = arith.constant 0 : index
    %2 = vector.load %arg4[%c0_3, %c0_4] : memref<1x32xf32, #tpu.memory_space<vmem>>, vector<1x32xf32>
    %c0_5 = arith.constant 0 : index
    %c0_6 = arith.constant 0 : index
    %3 = vector.load %arg5[%c0_5, %c0_6] : memref<32x32xf32, #tpu.memory_space<vmem>>, vector<32x32xf32>
    %c0_7 = arith.constant 0 : index
    %c0_8 = arith.constant 0 : index
    %4 = vector.load %arg6[%c0_7, %c0_8] : memref<1x32xf32, #tpu.memory_space<vmem>>, vector<1x32xf32>
    %c0_9 = arith.constant 0 : index
    %c0_10 = arith.constant 0 : index
    %5 = vector.load %arg7[%c0_9, %c0_10] : memref<32x12xf32, #tpu.memory_space<vmem>>, vector<32x12xf32>
    %c0_11 = arith.constant 0 : index
    %c0_12 = arith.constant 0 : index
    %6 = vector.load %arg8[%c0_11, %c0_12] : memref<1x12xf32, #tpu.memory_space<vmem>>, vector<1x12xf32>
    %c0_13 = arith.constant 0 : index
    %c0_14 = arith.constant 0 : index
    %7 = vector.load %arg1[%c0_13, %c0_14] : memref<2x12xf32, #tpu.memory_space<vmem>>, vector<2x12xf32>
    %c0_15 = arith.constant 0 : index
    %c0_16 = arith.constant 0 : index
    %c0_17 = arith.constant 0 : index
    %8 = vector.load %arg9[%c0_15, %c0_16, %c0_17] : memref<8x2x12xf32, #tpu.memory_space<vmem>>, vector<1x2x12xf32>
    %9 = vector.shape_cast %8 : vector<1x2x12xf32> to vector<2x12xf32>
    %10 = vector.shape_cast %7 : vector<2x12xf32> to vector<1x2x12xf32>
    tpu.vector_store %arg9[%c0_15, %c0_16, %c0_17], %10 {strides = array<i32>} : memref<8x2x12xf32, #tpu.memory_space<vmem>>, vector<1x2x12xf32>,
    %c1_i32 = arith.constant 1 : i32
    %c7_i32 = arith.constant 7 : i32
    %11 = arith.addi %c1_i32, %c7_i32 : i32
    %c1_i32_18 = arith.constant 1 : i32
    %12 = scf.for %arg10 = %c1_i32 to %11 step %c1_i32_18 iter_args(%arg11 = %7) -> (vector<2x12xf32>)  : i32 {
      %c1_i32_20 = arith.constant 1 : i32
      %13 = arith.subi %arg10, %c1_i32_20 : i32
      %14 = arith.index_cast %13 : i32 to index
      %15 = memref.load %arg0[%14] : memref<8xf32, #tpu.memory_space<smem>>
      %16 = arith.index_cast %arg10 : i32 to index
      %17 = memref.load %arg0[%16] : memref<8xf32, #tpu.memory_space<smem>>
      %18 = arith.subf %17, %15 : f32
      %cst = arith.constant 8.000000e+00 : f32
      %19 = arith.divf %18, %cst : f32
      %c0_i32 = arith.constant 0 : i32
      %20 = arith.sitofp %c0_i32 : i32 to f32
      %21 = arith.mulf %20, %19 : f32
      %22 = arith.addf %15, %21 : f32
      %23 = vector.broadcast %22 : f32 to vector<1x32xf32>
      %24 = arith.mulf %23, %1 : vector<1x32xf32>
      %25 = arith.addf %24, %2 : vector<1x32xf32>
      %cst_21 = arith.constant 5.000000e-01 : f32
      %26 = arith.mulf %cst_21, %19 : f32
      %27 = arith.addf %22, %26 : f32
      %28 = vector.broadcast %27 : f32 to vector<1x32xf32>
      %29 = arith.mulf %28, %1 : vector<1x32xf32>
      %30 = arith.addf %29, %2 : vector<1x32xf32>
      %31 = arith.addf %22, %19 : f32
      %32 = vector.broadcast %31 : f32 to vector<1x32xf32>
      %33 = arith.mulf %32, %1 : vector<1x32xf32>
      %34 = arith.addf %33, %2 : vector<1x32xf32>
      %cst_22 = arith.constant dense<0.000000e+00> : vector<2x32xf32>
      %35 = tpu.matmul %arg11, %0, %cst_22 {dimension_numbers = #tpu.dot_dimension_numbers<[1], [0], [0], [1], [0, 0, 1, 1], [], []>} : vector<2x12xf32>, vector<12x32xf32>, vector<2x32xf32> -> vector<2x32xf32>
      %36 = vector.broadcast %25 : vector<1x32xf32> to vector<2x32xf32>
      %37 = arith.addf %35, %36 : vector<2x32xf32>
      %38 = math.tanh %37 : vector<2x32xf32>
      %cst_23 = arith.constant dense<0.000000e+00> : vector<2x32xf32>
      %39 = tpu.matmul %38, %3, %cst_23 {dimension_numbers = #tpu.dot_dimension_numbers<[1], [0], [0], [1], [0, 0, 1, 1], [], []>} : vector<2x32xf32>, vector<32x32xf32>, vector<2x32xf32> -> vector<2x32xf32>
      %40 = vector.broadcast %4 : vector<1x32xf32> to vector<2x32xf32>
      %41 = arith.addf %39, %40 : vector<2x32xf32>
      %42 = math.tanh %41 : vector<2x32xf32>
      %cst_24 = arith.constant dense<0.000000e+00> : vector<2x12xf32>
      %43 = tpu.matmul %42, %5, %cst_24 {dimension_numbers = #tpu.dot_dimension_numbers<[1], [0], [0], [1], [0, 0, 1, 1], [], []>} : vector<2x32xf32>, vector<32x12xf32>, vector<2x12xf32> -> vector<2x12xf32>
      %44 = vector.broadcast %6 : vector<1x12xf32> to vector<2x12xf32>
      %45 = arith.addf %43, %44 : vector<2x12xf32>
      %cst_25 = arith.constant 5.000000e-01 : f32
      %46 = arith.mulf %cst_25, %19 : f32
      %47 = vector.broadcast %46 : f32 to vector<2x12xf32>
      %48 = arith.mulf %47, %45 : vector<2x12xf32>
      %49 = arith.addf %arg11, %48 : vector<2x12xf32>
      %cst_26 = arith.constant dense<0.000000e+00> : vector<2x32xf32>
      %50 = tpu.matmul %49, %0, %cst_26 {dimension_numbers = #tpu.dot_dimension_numbers<[1], [0], [0], [1], [0, 0, 1, 1], [], []>} : vector<2x12xf32>, vector<12x32xf32>, vector<2x32xf32> -> vector<2x32xf32>
      %51 = vector.broadcast %30 : vector<1x32xf32> to vector<2x32xf32>
      %52 = arith.addf %50, %51 : vector<2x32xf32>
      %53 = math.tanh %52 : vector<2x32xf32>
      %cst_27 = arith.constant dense<0.000000e+00> : vector<2x32xf32>
      %54 = tpu.matmul %53, %3, %cst_27 {dimension_numbers = #tpu.dot_dimension_numbers<[1], [0], [0], [1], [0, 0, 1, 1], [], []>} : vector<2x32xf32>, vector<32x32xf32>, vector<2x32xf32> -> vector<2x32xf32>
      %55 = vector.broadcast %4 : vector<1x32xf32> to vector<2x32xf32>
      %56 = arith.addf %54, %55 : vector<2x32xf32>
      %57 = math.tanh %56 : vector<2x32xf32>
      %cst_28 = arith.constant dense<0.000000e+00> : vector<2x12xf32>
      %58 = tpu.matmul %57, %5, %cst_28 {dimension_numbers = #tpu.dot_dimension_numbers<[1], [0], [0], [1], [0, 0, 1, 1], [], []>} : vector<2x32xf32>, vector<32x12xf32>, vector<2x12xf32> -> vector<2x12xf32>
      %59 = vector.broadcast %6 : vector<1x12xf32> to vector<2x12xf32>
      %60 = arith.addf %58, %59 : vector<2x12xf32>
      %cst_29 = arith.constant 5.000000e-01 : f32
      %61 = arith.mulf %cst_29, %19 : f32
      %62 = vector.broadcast %61 : f32 to vector<2x12xf32>
      %63 = arith.mulf %62, %60 : vector<2x12xf32>
      %64 = arith.addf %arg11, %63 : vector<2x12xf32>
      %cst_30 = arith.constant dense<0.000000e+00> : vector<2x32xf32>
      %65 = tpu.matmul %64, %0, %cst_30 {dimension_numbers = #tpu.dot_dimension_numbers<[1], [0], [0], [1], [0, 0, 1, 1], [], []>} : vector<2x12xf32>, vector<12x32xf32>, vector<2x32xf32> -> vector<2x32xf32>
      %66 = vector.broadcast %30 : vector<1x32xf32> to vector<2x32xf32>
      %67 = arith.addf %65, %66 : vector<2x32xf32>
      %68 = math.tanh %67 : vector<2x32xf32>
      %cst_31 = arith.constant dense<0.000000e+00> : vector<2x32xf32>
      %69 = tpu.matmul %68, %3, %cst_31 {dimension_numbers = #tpu.dot_dimension_numbers<[1], [0], [0], [1], [0, 0, 1, 1], [], []>} : vector<2x32xf32>, vector<32x32xf32>, vector<2x32xf32> -> vector<2x32xf32>
      %70 = vector.broadcast %4 : vector<1x32xf32> to vector<2x32xf32>
      %71 = arith.addf %69, %70 : vector<2x32xf32>
      %72 = math.tanh %71 : vector<2x32xf32>
      %cst_32 = arith.constant dense<0.000000e+00> : vector<2x12xf32>
      %73 = tpu.matmul %72, %5, %cst_32 {dimension_numbers = #tpu.dot_dimension_numbers<[1], [0], [0], [1], [0, 0, 1, 1], [], []>} : vector<2x32xf32>, vector<32x12xf32>, vector<2x12xf32> -> vector<2x12xf32>
      %74 = vector.broadcast %6 : vector<1x12xf32> to vector<2x12xf32>
      %75 = arith.addf %73, %74 : vector<2x12xf32>
      %76 = vector.broadcast %19 : f32 to vector<2x12xf32>
      %77 = arith.mulf %76, %75 : vector<2x12xf32>
      %78 = arith.addf %arg11, %77 : vector<2x12xf32>
      %cst_33 = arith.constant dense<0.000000e+00> : vector<2x32xf32>
      %79 = tpu.matmul %78, %0, %cst_33 {dimension_numbers = #tpu.dot_dimension_numbers<[1], [0], [0], [1], [0, 0, 1, 1], [], []>} : vector<2x12xf32>, vector<12x32xf32>, vector<2x32xf32> -> vector<2x32xf32>
      %80 = vector.broadcast %34 : vector<1x32xf32> to vector<2x32xf32>
      %81 = arith.addf %79, %80 : vector<2x32xf32>
      %82 = math.tanh %81 : vector<2x32xf32>
      %cst_34 = arith.constant dense<0.000000e+00> : vector<2x32xf32>
      %83 = tpu.matmul %82, %3, %cst_34 {dimension_numbers = #tpu.dot_dimension_numbers<[1], [0], [0], [1], [0, 0, 1, 1], [], []>} : vector<2x32xf32>, vector<32x32xf32>, vector<2x32xf32> -> vector<2x32xf32>
      %84 = vector.broadcast %4 : vector<1x32xf32> to vector<2x32xf32>
      %85 = arith.addf %83, %84 : vector<2x32xf32>
      %86 = math.tanh %85 : vector<2x32xf32>
      %cst_35 = arith.constant dense<0.000000e+00> : vector<2x12xf32>
      %87 = tpu.matmul %86, %5, %cst_35 {dimension_numbers = #tpu.dot_dimension_numbers<[1], [0], [0], [1], [0, 0, 1, 1], [], []>} : vector<2x32xf32>, vector<32x12xf32>, vector<2x12xf32> -> vector<2x12xf32>
      %88 = vector.broadcast %6 : vector<1x12xf32> to vector<2x12xf32>
      %89 = arith.addf %87, %88 : vector<2x12xf32>
      %cst_36 = arith.constant 6.000000e+00 : f32
      %90 = arith.divf %19, %cst_36 : f32
      %cst_37 = arith.constant 2.000000e+00 : f32
      %91 = vector.broadcast %cst_37 : f32 to vector<2x12xf32>
      %92 = arith.mulf %91, %60 : vector<2x12xf32>
      %93 = arith.addf %45, %92 : vector<2x12xf32>
      %cst_38 = arith.constant 2.000000e+00 : f32
      %94 = vector.broadcast %cst_38 : f32 to vector<2x12xf32>
      %95 = arith.mulf %94, %75 : vector<2x12xf32>
      %96 = arith.addf %93, %95 : vector<2x12xf32>
      %97 = arith.addf %96, %89 : vector<2x12xf32>
      %98 = vector.broadcast %90 : f32 to vector<2x12xf32>
      %99 = arith.mulf %98, %97 : vector<2x12xf32>
      %100 = arith.addf %arg11, %99 : vector<2x12xf32>
      %c1_i32_39 = arith.constant 1 : i32
      %101 = arith.sitofp %c1_i32_39 : i32 to f32
      %102 = arith.mulf %101, %19 : f32
      %103 = arith.addf %15, %102 : f32
      %104 = vector.broadcast %103 : f32 to vector<1x32xf32>
      %105 = arith.mulf %104, %1 : vector<1x32xf32>
      %106 = arith.addf %105, %2 : vector<1x32xf32>
      %cst_40 = arith.constant 5.000000e-01 : f32
      %107 = arith.mulf %cst_40, %19 : f32
      %108 = arith.addf %103, %107 : f32
      %109 = vector.broadcast %108 : f32 to vector<1x32xf32>
      %110 = arith.mulf %109, %1 : vector<1x32xf32>
      %111 = arith.addf %110, %2 : vector<1x32xf32>
      %112 = arith.addf %103, %19 : f32
      %113 = vector.broadcast %112 : f32 to vector<1x32xf32>
      %114 = arith.mulf %113, %1 : vector<1x32xf32>
      %115 = arith.addf %114, %2 : vector<1x32xf32>
      %cst_41 = arith.constant dense<0.000000e+00> : vector<2x32xf32>
      %116 = tpu.matmul %100, %0, %cst_41 {dimension_numbers = #tpu.dot_dimension_numbers<[1], [0], [0], [1], [0, 0, 1, 1], [], []>} : vector<2x12xf32>, vector<12x32xf32>, vector<2x32xf32> -> vector<2x32xf32>
      %117 = vector.broadcast %106 : vector<1x32xf32> to vector<2x32xf32>
      %118 = arith.addf %116, %117 : vector<2x32xf32>
      %119 = math.tanh %118 : vector<2x32xf32>
      %cst_42 = arith.constant dense<0.000000e+00> : vector<2x32xf32>
      %120 = tpu.matmul %119, %3, %cst_42 {dimension_numbers = #tpu.dot_dimension_numbers<[1], [0], [0], [1], [0, 0, 1, 1], [], []>} : vector<2x32xf32>, vector<32x32xf32>, vector<2x32xf32> -> vector<2x32xf32>
      %121 = vector.broadcast %4 : vector<1x32xf32> to vector<2x32xf32>
      %122 = arith.addf %120, %121 : vector<2x32xf32>
      %123 = math.tanh %122 : vector<2x32xf32>
      %cst_43 = arith.constant dense<0.000000e+00> : vector<2x12xf32>
      %124 = tpu.matmul %123, %5, %cst_43 {dimension_numbers = #tpu.dot_dimension_numbers<[1], [0], [0], [1], [0, 0, 1, 1], [], []>} : vector<2x32xf32>, vector<32x12xf32>, vector<2x12xf32> -> vector<2x12xf32>
      %125 = vector.broadcast %6 : vector<1x12xf32> to vector<2x12xf32>
      %126 = arith.addf %124, %125 : vector<2x12xf32>
      %cst_44 = arith.constant 5.000000e-01 : f32
      %127 = arith.mulf %cst_44, %19 : f32
      %128 = vector.broadcast %127 : f32 to vector<2x12xf32>
      %129 = arith.mulf %128, %126 : vector<2x12xf32>
      %130 = arith.addf %100, %129 : vector<2x12xf32>
      %cst_45 = arith.constant dense<0.000000e+00> : vector<2x32xf32>
      %131 = tpu.matmul %130, %0, %cst_45 {dimension_numbers = #tpu.dot_dimension_numbers<[1], [0], [0], [1], [0, 0, 1, 1], [], []>} : vector<2x12xf32>, vector<12x32xf32>, vector<2x32xf32> -> vector<2x32xf32>
      %132 = vector.broadcast %111 : vector<1x32xf32> to vector<2x32xf32>
      %133 = arith.addf %131, %132 : vector<2x32xf32>
      %134 = math.tanh %133 : vector<2x32xf32>
      %cst_46 = arith.constant dense<0.000000e+00> : vector<2x32xf32>
      %135 = tpu.matmul %134, %3, %cst_46 {dimension_numbers = #tpu.dot_dimension_numbers<[1], [0], [0], [1], [0, 0, 1, 1], [], []>} : vector<2x32xf32>, vector<32x32xf32>, vector<2x32xf32> -> vector<2x32xf32>
      %136 = vector.broadcast %4 : vector<1x32xf32> to vector<2x32xf32>
      %137 = arith.addf %135, %136 : vector<2x32xf32>
      %138 = math.tanh %137 : vector<2x32xf32>
      %cst_47 = arith.constant dense<0.000000e+00> : vector<2x12xf32>
      %139 = tpu.matmul %138, %5, %cst_47 {dimension_numbers = #tpu.dot_dimension_numbers<[1], [0], [0], [1], [0, 0, 1, 1], [], []>} : vector<2x32xf32>, vector<32x12xf32>, vector<2x12xf32> -> vector<2x12xf32>
      %140 = vector.broadcast %6 : vector<1x12xf32> to vector<2x12xf32>
      %141 = arith.addf %139, %140 : vector<2x12xf32>
      %cst_48 = arith.constant 5.000000e-01 : f32
      %142 = arith.mulf %cst_48, %19 : f32
      %143 = vector.broadcast %142 : f32 to vector<2x12xf32>
      %144 = arith.mulf %143, %141 : vector<2x12xf32>
      %145 = arith.addf %100, %144 : vector<2x12xf32>
      %cst_49 = arith.constant dense<0.000000e+00> : vector<2x32xf32>
      %146 = tpu.matmul %145, %0, %cst_49 {dimension_numbers = #tpu.dot_dimension_numbers<[1], [0], [0], [1], [0, 0, 1, 1], [], []>} : vector<2x12xf32>, vector<12x32xf32>, vector<2x32xf32> -> vector<2x32xf32>
      %147 = vector.broadcast %111 : vector<1x32xf32> to vector<2x32xf32>
      %148 = arith.addf %146, %147 : vector<2x32xf32>
      %149 = math.tanh %148 : vector<2x32xf32>
      %cst_50 = arith.constant dense<0.000000e+00> : vector<2x32xf32>
      %150 = tpu.matmul %149, %3, %cst_50 {dimension_numbers = #tpu.dot_dimension_numbers<[1], [0], [0], [1], [0, 0, 1, 1], [], []>} : vector<2x32xf32>, vector<32x32xf32>, vector<2x32xf32> -> vector<2x32xf32>
      %151 = vector.broadcast %4 : vector<1x32xf32> to vector<2x32xf32>
      %152 = arith.addf %150, %151 : vector<2x32xf32>
      %153 = math.tanh %152 : vector<2x32xf32>
      %cst_51 = arith.constant dense<0.000000e+00> : vector<2x12xf32>
      %154 = tpu.matmul %153, %5, %cst_51 {dimension_numbers = #tpu.dot_dimension_numbers<[1], [0], [0], [1], [0, 0, 1, 1], [], []>} : vector<2x32xf32>, vector<32x12xf32>, vector<2x12xf32> -> vector<2x12xf32>
      %155 = vector.broadcast %6 : vector<1x12xf32> to vector<2x12xf32>
      %156 = arith.addf %154, %155 : vector<2x12xf32>
      %157 = vector.broadcast %19 : f32 to vector<2x12xf32>
      %158 = arith.mulf %157, %156 : vector<2x12xf32>
      %159 = arith.addf %100, %158 : vector<2x12xf32>
      %cst_52 = arith.constant dense<0.000000e+00> : vector<2x32xf32>
      %160 = tpu.matmul %159, %0, %cst_52 {dimension_numbers = #tpu.dot_dimension_numbers<[1], [0], [0], [1], [0, 0, 1, 1], [], []>} : vector<2x12xf32>, vector<12x32xf32>, vector<2x32xf32> -> vector<2x32xf32>
      %161 = vector.broadcast %115 : vector<1x32xf32> to vector<2x32xf32>
      %162 = arith.addf %160, %161 : vector<2x32xf32>
      %163 = math.tanh %162 : vector<2x32xf32>
      %cst_53 = arith.constant dense<0.000000e+00> : vector<2x32xf32>
      %164 = tpu.matmul %163, %3, %cst_53 {dimension_numbers = #tpu.dot_dimension_numbers<[1], [0], [0], [1], [0, 0, 1, 1], [], []>} : vector<2x32xf32>, vector<32x32xf32>, vector<2x32xf32> -> vector<2x32xf32>
      %165 = vector.broadcast %4 : vector<1x32xf32> to vector<2x32xf32>
      %166 = arith.addf %164, %165 : vector<2x32xf32>
      %167 = math.tanh %166 : vector<2x32xf32>
      %cst_54 = arith.constant dense<0.000000e+00> : vector<2x12xf32>
      %168 = tpu.matmul %167, %5, %cst_54 {dimension_numbers = #tpu.dot_dimension_numbers<[1], [0], [0], [1], [0, 0, 1, 1], [], []>} : vector<2x32xf32>, vector<32x12xf32>, vector<2x12xf32> -> vector<2x12xf32>
      %169 = vector.broadcast %6 : vector<1x12xf32> to vector<2x12xf32>
      %170 = arith.addf %168, %169 : vector<2x12xf32>
      %cst_55 = arith.constant 6.000000e+00 : f32
      %171 = arith.divf %19, %cst_55 : f32
      %cst_56 = arith.constant 2.000000e+00 : f32
      %172 = vector.broadcast %cst_56 : f32 to vector<2x12xf32>
      %173 = arith.mulf %172, %141 : vector<2x12xf32>
      %174 = arith.addf %126, %173 : vector<2x12xf32>
      %cst_57 = arith.constant 2.000000e+00 : f32
      %175 = vector.broadcast %cst_57 : f32 to vector<2x12xf32>
      %176 = arith.mulf %175, %156 : vector<2x12xf32>
      %177 = arith.addf %174, %176 : vector<2x12xf32>
      %178 = arith.addf %177, %170 : vector<2x12xf32>
      %179 = vector.broadcast %171 : f32 to vector<2x12xf32>
      %180 = arith.mulf %179, %178 : vector<2x12xf32>
      %181 = arith.addf %100, %180 : vector<2x12xf32>
      %c2_i32 = arith.constant 2 : i32
      %182 = arith.sitofp %c2_i32 : i32 to f32
      %183 = arith.mulf %182, %19 : f32
      %184 = arith.addf %15, %183 : f32
      %185 = vector.broadcast %184 : f32 to vector<1x32xf32>
      %186 = arith.mulf %185, %1 : vector<1x32xf32>
      %187 = arith.addf %186, %2 : vector<1x32xf32>
      %cst_58 = arith.constant 5.000000e-01 : f32
      %188 = arith.mulf %cst_58, %19 : f32
      %189 = arith.addf %184, %188 : f32
      %190 = vector.broadcast %189 : f32 to vector<1x32xf32>
      %191 = arith.mulf %190, %1 : vector<1x32xf32>
      %192 = arith.addf %191, %2 : vector<1x32xf32>
      %193 = arith.addf %184, %19 : f32
      %194 = vector.broadcast %193 : f32 to vector<1x32xf32>
      %195 = arith.mulf %194, %1 : vector<1x32xf32>
      %196 = arith.addf %195, %2 : vector<1x32xf32>
      %cst_59 = arith.constant dense<0.000000e+00> : vector<2x32xf32>
      %197 = tpu.matmul %181, %0, %cst_59 {dimension_numbers = #tpu.dot_dimension_numbers<[1], [0], [0], [1], [0, 0, 1, 1], [], []>} : vector<2x12xf32>, vector<12x32xf32>, vector<2x32xf32> -> vector<2x32xf32>
      %198 = vector.broadcast %187 : vector<1x32xf32> to vector<2x32xf32>
      %199 = arith.addf %197, %198 : vector<2x32xf32>
      %200 = math.tanh %199 : vector<2x32xf32>
      %cst_60 = arith.constant dense<0.000000e+00> : vector<2x32xf32>
      %201 = tpu.matmul %200, %3, %cst_60 {dimension_numbers = #tpu.dot_dimension_numbers<[1], [0], [0], [1], [0, 0, 1, 1], [], []>} : vector<2x32xf32>, vector<32x32xf32>, vector<2x32xf32> -> vector<2x32xf32>
      %202 = vector.broadcast %4 : vector<1x32xf32> to vector<2x32xf32>
      %203 = arith.addf %201, %202 : vector<2x32xf32>
      %204 = math.tanh %203 : vector<2x32xf32>
      %cst_61 = arith.constant dense<0.000000e+00> : vector<2x12xf32>
      %205 = tpu.matmul %204, %5, %cst_61 {dimension_numbers = #tpu.dot_dimension_numbers<[1], [0], [0], [1], [0, 0, 1, 1], [], []>} : vector<2x32xf32>, vector<32x12xf32>, vector<2x12xf32> -> vector<2x12xf32>
      %206 = vector.broadcast %6 : vector<1x12xf32> to vector<2x12xf32>
      %207 = arith.addf %205, %206 : vector<2x12xf32>
      %cst_62 = arith.constant 5.000000e-01 : f32
      %208 = arith.mulf %cst_62, %19 : f32
      %209 = vector.broadcast %208 : f32 to vector<2x12xf32>
      %210 = arith.mulf %209, %207 : vector<2x12xf32>
      %211 = arith.addf %181, %210 : vector<2x12xf32>
      %cst_63 = arith.constant dense<0.000000e+00> : vector<2x32xf32>
      %212 = tpu.matmul %211, %0, %cst_63 {dimension_numbers = #tpu.dot_dimension_numbers<[1], [0], [0], [1], [0, 0, 1, 1], [], []>} : vector<2x12xf32>, vector<12x32xf32>, vector<2x32xf32> -> vector<2x32xf32>
      %213 = vector.broadcast %192 : vector<1x32xf32> to vector<2x32xf32>
      %214 = arith.addf %212, %213 : vector<2x32xf32>
      %215 = math.tanh %214 : vector<2x32xf32>
      %cst_64 = arith.constant dense<0.000000e+00> : vector<2x32xf32>
      %216 = tpu.matmul %215, %3, %cst_64 {dimension_numbers = #tpu.dot_dimension_numbers<[1], [0], [0], [1], [0, 0, 1, 1], [], []>} : vector<2x32xf32>, vector<32x32xf32>, vector<2x32xf32> -> vector<2x32xf32>
      %217 = vector.broadcast %4 : vector<1x32xf32> to vector<2x32xf32>
      %218 = arith.addf %216, %217 : vector<2x32xf32>
      %219 = math.tanh %218 : vector<2x32xf32>
      %cst_65 = arith.constant dense<0.000000e+00> : vector<2x12xf32>
      %220 = tpu.matmul %219, %5, %cst_65 {dimension_numbers = #tpu.dot_dimension_numbers<[1], [0], [0], [1], [0, 0, 1, 1], [], []>} : vector<2x32xf32>, vector<32x12xf32>, vector<2x12xf32> -> vector<2x12xf32>
      %221 = vector.broadcast %6 : vector<1x12xf32> to vector<2x12xf32>
      %222 = arith.addf %220, %221 : vector<2x12xf32>
      %cst_66 = arith.constant 5.000000e-01 : f32
      %223 = arith.mulf %cst_66, %19 : f32
      %224 = vector.broadcast %223 : f32 to vector<2x12xf32>
      %225 = arith.mulf %224, %222 : vector<2x12xf32>
      %226 = arith.addf %181, %225 : vector<2x12xf32>
      %cst_67 = arith.constant dense<0.000000e+00> : vector<2x32xf32>
      %227 = tpu.matmul %226, %0, %cst_67 {dimension_numbers = #tpu.dot_dimension_numbers<[1], [0], [0], [1], [0, 0, 1, 1], [], []>} : vector<2x12xf32>, vector<12x32xf32>, vector<2x32xf32> -> vector<2x32xf32>
      %228 = vector.broadcast %192 : vector<1x32xf32> to vector<2x32xf32>
      %229 = arith.addf %227, %228 : vector<2x32xf32>
      %230 = math.tanh %229 : vector<2x32xf32>
      %cst_68 = arith.constant dense<0.000000e+00> : vector<2x32xf32>
      %231 = tpu.matmul %230, %3, %cst_68 {dimension_numbers = #tpu.dot_dimension_numbers<[1], [0], [0], [1], [0, 0, 1, 1], [], []>} : vector<2x32xf32>, vector<32x32xf32>, vector<2x32xf32> -> vector<2x32xf32>
      %232 = vector.broadcast %4 : vector<1x32xf32> to vector<2x32xf32>
      %233 = arith.addf %231, %232 : vector<2x32xf32>
      %234 = math.tanh %233 : vector<2x32xf32>
      %cst_69 = arith.constant dense<0.000000e+00> : vector<2x12xf32>
      %235 = tpu.matmul %234, %5, %cst_69 {dimension_numbers = #tpu.dot_dimension_numbers<[1], [0], [0], [1], [0, 0, 1, 1], [], []>} : vector<2x32xf32>, vector<32x12xf32>, vector<2x12xf32> -> vector<2x12xf32>
      %236 = vector.broadcast %6 : vector<1x12xf32> to vector<2x12xf32>
      %237 = arith.addf %235, %236 : vector<2x12xf32>
      %238 = vector.broadcast %19 : f32 to vector<2x12xf32>
      %239 = arith.mulf %238, %237 : vector<2x12xf32>
      %240 = arith.addf %181, %239 : vector<2x12xf32>
      %cst_70 = arith.constant dense<0.000000e+00> : vector<2x32xf32>
      %241 = tpu.matmul %240, %0, %cst_70 {dimension_numbers = #tpu.dot_dimension_numbers<[1], [0], [0], [1], [0, 0, 1, 1], [], []>} : vector<2x12xf32>, vector<12x32xf32>, vector<2x32xf32> -> vector<2x32xf32>
      %242 = vector.broadcast %196 : vector<1x32xf32> to vector<2x32xf32>
      %243 = arith.addf %241, %242 : vector<2x32xf32>
      %244 = math.tanh %243 : vector<2x32xf32>
      %cst_71 = arith.constant dense<0.000000e+00> : vector<2x32xf32>
      %245 = tpu.matmul %244, %3, %cst_71 {dimension_numbers = #tpu.dot_dimension_numbers<[1], [0], [0], [1], [0, 0, 1, 1], [], []>} : vector<2x32xf32>, vector<32x32xf32>, vector<2x32xf32> -> vector<2x32xf32>
      %246 = vector.broadcast %4 : vector<1x32xf32> to vector<2x32xf32>
      %247 = arith.addf %245, %246 : vector<2x32xf32>
      %248 = math.tanh %247 : vector<2x32xf32>
      %cst_72 = arith.constant dense<0.000000e+00> : vector<2x12xf32>
      %249 = tpu.matmul %248, %5, %cst_72 {dimension_numbers = #tpu.dot_dimension_numbers<[1], [0], [0], [1], [0, 0, 1, 1], [], []>} : vector<2x32xf32>, vector<32x12xf32>, vector<2x12xf32> -> vector<2x12xf32>
      %250 = vector.broadcast %6 : vector<1x12xf32> to vector<2x12xf32>
      %251 = arith.addf %249, %250 : vector<2x12xf32>
      %cst_73 = arith.constant 6.000000e+00 : f32
      %252 = arith.divf %19, %cst_73 : f32
      %cst_74 = arith.constant 2.000000e+00 : f32
      %253 = vector.broadcast %cst_74 : f32 to vector<2x12xf32>
      %254 = arith.mulf %253, %222 : vector<2x12xf32>
      %255 = arith.addf %207, %254 : vector<2x12xf32>
      %cst_75 = arith.constant 2.000000e+00 : f32
      %256 = vector.broadcast %cst_75 : f32 to vector<2x12xf32>
      %257 = arith.mulf %256, %237 : vector<2x12xf32>
      %258 = arith.addf %255, %257 : vector<2x12xf32>
      %259 = arith.addf %258, %251 : vector<2x12xf32>
      %260 = vector.broadcast %252 : f32 to vector<2x12xf32>
      %261 = arith.mulf %260, %259 : vector<2x12xf32>
      %262 = arith.addf %181, %261 : vector<2x12xf32>
      %c3_i32 = arith.constant 3 : i32
      %263 = arith.sitofp %c3_i32 : i32 to f32
      %264 = arith.mulf %263, %19 : f32
      %265 = arith.addf %15, %264 : f32
      %266 = vector.broadcast %265 : f32 to vector<1x32xf32>
      %267 = arith.mulf %266, %1 : vector<1x32xf32>
      %268 = arith.addf %267, %2 : vector<1x32xf32>
      %cst_76 = arith.constant 5.000000e-01 : f32
      %269 = arith.mulf %cst_76, %19 : f32
      %270 = arith.addf %265, %269 : f32
      %271 = vector.broadcast %270 : f32 to vector<1x32xf32>
      %272 = arith.mulf %271, %1 : vector<1x32xf32>
      %273 = arith.addf %272, %2 : vector<1x32xf32>
      %274 = arith.addf %265, %19 : f32
      %275 = vector.broadcast %274 : f32 to vector<1x32xf32>
      %276 = arith.mulf %275, %1 : vector<1x32xf32>
      %277 = arith.addf %276, %2 : vector<1x32xf32>
      %cst_77 = arith.constant dense<0.000000e+00> : vector<2x32xf32>
      %278 = tpu.matmul %262, %0, %cst_77 {dimension_numbers = #tpu.dot_dimension_numbers<[1], [0], [0], [1], [0, 0, 1, 1], [], []>} : vector<2x12xf32>, vector<12x32xf32>, vector<2x32xf32> -> vector<2x32xf32>
      %279 = vector.broadcast %268 : vector<1x32xf32> to vector<2x32xf32>
      %280 = arith.addf %278, %279 : vector<2x32xf32>
      %281 = math.tanh %280 : vector<2x32xf32>
      %cst_78 = arith.constant dense<0.000000e+00> : vector<2x32xf32>
      %282 = tpu.matmul %281, %3, %cst_78 {dimension_numbers = #tpu.dot_dimension_numbers<[1], [0], [0], [1], [0, 0, 1, 1], [], []>} : vector<2x32xf32>, vector<32x32xf32>, vector<2x32xf32> -> vector<2x32xf32>
      %283 = vector.broadcast %4 : vector<1x32xf32> to vector<2x32xf32>
      %284 = arith.addf %282, %283 : vector<2x32xf32>
      %285 = math.tanh %284 : vector<2x32xf32>
      %cst_79 = arith.constant dense<0.000000e+00> : vector<2x12xf32>
      %286 = tpu.matmul %285, %5, %cst_79 {dimension_numbers = #tpu.dot_dimension_numbers<[1], [0], [0], [1], [0, 0, 1, 1], [], []>} : vector<2x32xf32>, vector<32x12xf32>, vector<2x12xf32> -> vector<2x12xf32>
      %287 = vector.broadcast %6 : vector<1x12xf32> to vector<2x12xf32>
      %288 = arith.addf %286, %287 : vector<2x12xf32>
      %cst_80 = arith.constant 5.000000e-01 : f32
      %289 = arith.mulf %cst_80, %19 : f32
      %290 = vector.broadcast %289 : f32 to vector<2x12xf32>
      %291 = arith.mulf %290, %288 : vector<2x12xf32>
      %292 = arith.addf %262, %291 : vector<2x12xf32>
      %cst_81 = arith.constant dense<0.000000e+00> : vector<2x32xf32>
      %293 = tpu.matmul %292, %0, %cst_81 {dimension_numbers = #tpu.dot_dimension_numbers<[1], [0], [0], [1], [0, 0, 1, 1], [], []>} : vector<2x12xf32>, vector<12x32xf32>, vector<2x32xf32> -> vector<2x32xf32>
      %294 = vector.broadcast %273 : vector<1x32xf32> to vector<2x32xf32>
      %295 = arith.addf %293, %294 : vector<2x32xf32>
      %296 = math.tanh %295 : vector<2x32xf32>
      %cst_82 = arith.constant dense<0.000000e+00> : vector<2x32xf32>
      %297 = tpu.matmul %296, %3, %cst_82 {dimension_numbers = #tpu.dot_dimension_numbers<[1], [0], [0], [1], [0, 0, 1, 1], [], []>} : vector<2x32xf32>, vector<32x32xf32>, vector<2x32xf32> -> vector<2x32xf32>
      %298 = vector.broadcast %4 : vector<1x32xf32> to vector<2x32xf32>
      %299 = arith.addf %297, %298 : vector<2x32xf32>
      %300 = math.tanh %299 : vector<2x32xf32>
      %cst_83 = arith.constant dense<0.000000e+00> : vector<2x12xf32>
      %301 = tpu.matmul %300, %5, %cst_83 {dimension_numbers = #tpu.dot_dimension_numbers<[1], [0], [0], [1], [0, 0, 1, 1], [], []>} : vector<2x32xf32>, vector<32x12xf32>, vector<2x12xf32> -> vector<2x12xf32>
      %302 = vector.broadcast %6 : vector<1x12xf32> to vector<2x12xf32>
      %303 = arith.addf %301, %302 : vector<2x12xf32>
      %cst_84 = arith.constant 5.000000e-01 : f32
      %304 = arith.mulf %cst_84, %19 : f32
      %305 = vector.broadcast %304 : f32 to vector<2x12xf32>
      %306 = arith.mulf %305, %303 : vector<2x12xf32>
      %307 = arith.addf %262, %306 : vector<2x12xf32>
      %cst_85 = arith.constant dense<0.000000e+00> : vector<2x32xf32>
      %308 = tpu.matmul %307, %0, %cst_85 {dimension_numbers = #tpu.dot_dimension_numbers<[1], [0], [0], [1], [0, 0, 1, 1], [], []>} : vector<2x12xf32>, vector<12x32xf32>, vector<2x32xf32> -> vector<2x32xf32>
      %309 = vector.broadcast %273 : vector<1x32xf32> to vector<2x32xf32>
      %310 = arith.addf %308, %309 : vector<2x32xf32>
      %311 = math.tanh %310 : vector<2x32xf32>
      %cst_86 = arith.constant dense<0.000000e+00> : vector<2x32xf32>
      %312 = tpu.matmul %311, %3, %cst_86 {dimension_numbers = #tpu.dot_dimension_numbers<[1], [0], [0], [1], [0, 0, 1, 1], [], []>} : vector<2x32xf32>, vector<32x32xf32>, vector<2x32xf32> -> vector<2x32xf32>
      %313 = vector.broadcast %4 : vector<1x32xf32> to vector<2x32xf32>
      %314 = arith.addf %312, %313 : vector<2x32xf32>
      %315 = math.tanh %314 : vector<2x32xf32>
      %cst_87 = arith.constant dense<0.000000e+00> : vector<2x12xf32>
      %316 = tpu.matmul %315, %5, %cst_87 {dimension_numbers = #tpu.dot_dimension_numbers<[1], [0], [0], [1], [0, 0, 1, 1], [], []>} : vector<2x32xf32>, vector<32x12xf32>, vector<2x12xf32> -> vector<2x12xf32>
      %317 = vector.broadcast %6 : vector<1x12xf32> to vector<2x12xf32>
      %318 = arith.addf %316, %317 : vector<2x12xf32>
      %319 = vector.broadcast %19 : f32 to vector<2x12xf32>
      %320 = arith.mulf %319, %318 : vector<2x12xf32>
      %321 = arith.addf %262, %320 : vector<2x12xf32>
      %cst_88 = arith.constant dense<0.000000e+00> : vector<2x32xf32>
      %322 = tpu.matmul %321, %0, %cst_88 {dimension_numbers = #tpu.dot_dimension_numbers<[1], [0], [0], [1], [0, 0, 1, 1], [], []>} : vector<2x12xf32>, vector<12x32xf32>, vector<2x32xf32> -> vector<2x32xf32>
      %323 = vector.broadcast %277 : vector<1x32xf32> to vector<2x32xf32>
      %324 = arith.addf %322, %323 : vector<2x32xf32>
      %325 = math.tanh %324 : vector<2x32xf32>
      %cst_89 = arith.constant dense<0.000000e+00> : vector<2x32xf32>
      %326 = tpu.matmul %325, %3, %cst_89 {dimension_numbers = #tpu.dot_dimension_numbers<[1], [0], [0], [1], [0, 0, 1, 1], [], []>} : vector<2x32xf32>, vector<32x32xf32>, vector<2x32xf32> -> vector<2x32xf32>
      %327 = vector.broadcast %4 : vector<1x32xf32> to vector<2x32xf32>
      %328 = arith.addf %326, %327 : vector<2x32xf32>
      %329 = math.tanh %328 : vector<2x32xf32>
      %cst_90 = arith.constant dense<0.000000e+00> : vector<2x12xf32>
      %330 = tpu.matmul %329, %5, %cst_90 {dimension_numbers = #tpu.dot_dimension_numbers<[1], [0], [0], [1], [0, 0, 1, 1], [], []>} : vector<2x32xf32>, vector<32x12xf32>, vector<2x12xf32> -> vector<2x12xf32>
      %331 = vector.broadcast %6 : vector<1x12xf32> to vector<2x12xf32>
      %332 = arith.addf %330, %331 : vector<2x12xf32>
      %cst_91 = arith.constant 6.000000e+00 : f32
      %333 = arith.divf %19, %cst_91 : f32
      %cst_92 = arith.constant 2.000000e+00 : f32
      %334 = vector.broadcast %cst_92 : f32 to vector<2x12xf32>
      %335 = arith.mulf %334, %303 : vector<2x12xf32>
      %336 = arith.addf %288, %335 : vector<2x12xf32>
      %cst_93 = arith.constant 2.000000e+00 : f32
      %337 = vector.broadcast %cst_93 : f32 to vector<2x12xf32>
      %338 = arith.mulf %337, %318 : vector<2x12xf32>
      %339 = arith.addf %336, %338 : vector<2x12xf32>
      %340 = arith.addf %339, %332 : vector<2x12xf32>
      %341 = vector.broadcast %333 : f32 to vector<2x12xf32>
      %342 = arith.mulf %341, %340 : vector<2x12xf32>
      %343 = arith.addf %262, %342 : vector<2x12xf32>
      %c4_i32 = arith.constant 4 : i32
      %344 = arith.sitofp %c4_i32 : i32 to f32
      %345 = arith.mulf %344, %19 : f32
      %346 = arith.addf %15, %345 : f32
      %347 = vector.broadcast %346 : f32 to vector<1x32xf32>
      %348 = arith.mulf %347, %1 : vector<1x32xf32>
      %349 = arith.addf %348, %2 : vector<1x32xf32>
      %cst_94 = arith.constant 5.000000e-01 : f32
      %350 = arith.mulf %cst_94, %19 : f32
      %351 = arith.addf %346, %350 : f32
      %352 = vector.broadcast %351 : f32 to vector<1x32xf32>
      %353 = arith.mulf %352, %1 : vector<1x32xf32>
      %354 = arith.addf %353, %2 : vector<1x32xf32>
      %355 = arith.addf %346, %19 : f32
      %356 = vector.broadcast %355 : f32 to vector<1x32xf32>
      %357 = arith.mulf %356, %1 : vector<1x32xf32>
      %358 = arith.addf %357, %2 : vector<1x32xf32>
      %cst_95 = arith.constant dense<0.000000e+00> : vector<2x32xf32>
      %359 = tpu.matmul %343, %0, %cst_95 {dimension_numbers = #tpu.dot_dimension_numbers<[1], [0], [0], [1], [0, 0, 1, 1], [], []>} : vector<2x12xf32>, vector<12x32xf32>, vector<2x32xf32> -> vector<2x32xf32>
      %360 = vector.broadcast %349 : vector<1x32xf32> to vector<2x32xf32>
      %361 = arith.addf %359, %360 : vector<2x32xf32>
      %362 = math.tanh %361 : vector<2x32xf32>
      %cst_96 = arith.constant dense<0.000000e+00> : vector<2x32xf32>
      %363 = tpu.matmul %362, %3, %cst_96 {dimension_numbers = #tpu.dot_dimension_numbers<[1], [0], [0], [1], [0, 0, 1, 1], [], []>} : vector<2x32xf32>, vector<32x32xf32>, vector<2x32xf32> -> vector<2x32xf32>
      %364 = vector.broadcast %4 : vector<1x32xf32> to vector<2x32xf32>
      %365 = arith.addf %363, %364 : vector<2x32xf32>
      %366 = math.tanh %365 : vector<2x32xf32>
      %cst_97 = arith.constant dense<0.000000e+00> : vector<2x12xf32>
      %367 = tpu.matmul %366, %5, %cst_97 {dimension_numbers = #tpu.dot_dimension_numbers<[1], [0], [0], [1], [0, 0, 1, 1], [], []>} : vector<2x32xf32>, vector<32x12xf32>, vector<2x12xf32> -> vector<2x12xf32>
      %368 = vector.broadcast %6 : vector<1x12xf32> to vector<2x12xf32>
      %369 = arith.addf %367, %368 : vector<2x12xf32>
      %cst_98 = arith.constant 5.000000e-01 : f32
      %370 = arith.mulf %cst_98, %19 : f32
      %371 = vector.broadcast %370 : f32 to vector<2x12xf32>
      %372 = arith.mulf %371, %369 : vector<2x12xf32>
      %373 = arith.addf %343, %372 : vector<2x12xf32>
      %cst_99 = arith.constant dense<0.000000e+00> : vector<2x32xf32>
      %374 = tpu.matmul %373, %0, %cst_99 {dimension_numbers = #tpu.dot_dimension_numbers<[1], [0], [0], [1], [0, 0, 1, 1], [], []>} : vector<2x12xf32>, vector<12x32xf32>, vector<2x32xf32> -> vector<2x32xf32>
      %375 = vector.broadcast %354 : vector<1x32xf32> to vector<2x32xf32>
      %376 = arith.addf %374, %375 : vector<2x32xf32>
      %377 = math.tanh %376 : vector<2x32xf32>
      %cst_100 = arith.constant dense<0.000000e+00> : vector<2x32xf32>
      %378 = tpu.matmul %377, %3, %cst_100 {dimension_numbers = #tpu.dot_dimension_numbers<[1], [0], [0], [1], [0, 0, 1, 1], [], []>} : vector<2x32xf32>, vector<32x32xf32>, vector<2x32xf32> -> vector<2x32xf32>
      %379 = vector.broadcast %4 : vector<1x32xf32> to vector<2x32xf32>
      %380 = arith.addf %378, %379 : vector<2x32xf32>
      %381 = math.tanh %380 : vector<2x32xf32>
      %cst_101 = arith.constant dense<0.000000e+00> : vector<2x12xf32>
      %382 = tpu.matmul %381, %5, %cst_101 {dimension_numbers = #tpu.dot_dimension_numbers<[1], [0], [0], [1], [0, 0, 1, 1], [], []>} : vector<2x32xf32>, vector<32x12xf32>, vector<2x12xf32> -> vector<2x12xf32>
      %383 = vector.broadcast %6 : vector<1x12xf32> to vector<2x12xf32>
      %384 = arith.addf %382, %383 : vector<2x12xf32>
      %cst_102 = arith.constant 5.000000e-01 : f32
      %385 = arith.mulf %cst_102, %19 : f32
      %386 = vector.broadcast %385 : f32 to vector<2x12xf32>
      %387 = arith.mulf %386, %384 : vector<2x12xf32>
      %388 = arith.addf %343, %387 : vector<2x12xf32>
      %cst_103 = arith.constant dense<0.000000e+00> : vector<2x32xf32>
      %389 = tpu.matmul %388, %0, %cst_103 {dimension_numbers = #tpu.dot_dimension_numbers<[1], [0], [0], [1], [0, 0, 1, 1], [], []>} : vector<2x12xf32>, vector<12x32xf32>, vector<2x32xf32> -> vector<2x32xf32>
      %390 = vector.broadcast %354 : vector<1x32xf32> to vector<2x32xf32>
      %391 = arith.addf %389, %390 : vector<2x32xf32>
      %392 = math.tanh %391 : vector<2x32xf32>
      %cst_104 = arith.constant dense<0.000000e+00> : vector<2x32xf32>
      %393 = tpu.matmul %392, %3, %cst_104 {dimension_numbers = #tpu.dot_dimension_numbers<[1], [0], [0], [1], [0, 0, 1, 1], [], []>} : vector<2x32xf32>, vector<32x32xf32>, vector<2x32xf32> -> vector<2x32xf32>
      %394 = vector.broadcast %4 : vector<1x32xf32> to vector<2x32xf32>
      %395 = arith.addf %393, %394 : vector<2x32xf32>
      %396 = math.tanh %395 : vector<2x32xf32>
      %cst_105 = arith.constant dense<0.000000e+00> : vector<2x12xf32>
      %397 = tpu.matmul %396, %5, %cst_105 {dimension_numbers = #tpu.dot_dimension_numbers<[1], [0], [0], [1], [0, 0, 1, 1], [], []>} : vector<2x32xf32>, vector<32x12xf32>, vector<2x12xf32> -> vector<2x12xf32>
      %398 = vector.broadcast %6 : vector<1x12xf32> to vector<2x12xf32>
      %399 = arith.addf %397, %398 : vector<2x12xf32>
      %400 = vector.broadcast %19 : f32 to vector<2x12xf32>
      %401 = arith.mulf %400, %399 : vector<2x12xf32>
      %402 = arith.addf %343, %401 : vector<2x12xf32>
      %cst_106 = arith.constant dense<0.000000e+00> : vector<2x32xf32>
      %403 = tpu.matmul %402, %0, %cst_106 {dimension_numbers = #tpu.dot_dimension_numbers<[1], [0], [0], [1], [0, 0, 1, 1], [], []>} : vector<2x12xf32>, vector<12x32xf32>, vector<2x32xf32> -> vector<2x32xf32>
      %404 = vector.broadcast %358 : vector<1x32xf32> to vector<2x32xf32>
      %405 = arith.addf %403, %404 : vector<2x32xf32>
      %406 = math.tanh %405 : vector<2x32xf32>
      %cst_107 = arith.constant dense<0.000000e+00> : vector<2x32xf32>
      %407 = tpu.matmul %406, %3, %cst_107 {dimension_numbers = #tpu.dot_dimension_numbers<[1], [0], [0], [1], [0, 0, 1, 1], [], []>} : vector<2x32xf32>, vector<32x32xf32>, vector<2x32xf32> -> vector<2x32xf32>
      %408 = vector.broadcast %4 : vector<1x32xf32> to vector<2x32xf32>
      %409 = arith.addf %407, %408 : vector<2x32xf32>
      %410 = math.tanh %409 : vector<2x32xf32>
      %cst_108 = arith.constant dense<0.000000e+00> : vector<2x12xf32>
      %411 = tpu.matmul %410, %5, %cst_108 {dimension_numbers = #tpu.dot_dimension_numbers<[1], [0], [0], [1], [0, 0, 1, 1], [], []>} : vector<2x32xf32>, vector<32x12xf32>, vector<2x12xf32> -> vector<2x12xf32>
      %412 = vector.broadcast %6 : vector<1x12xf32> to vector<2x12xf32>
      %413 = arith.addf %411, %412 : vector<2x12xf32>
      %cst_109 = arith.constant 6.000000e+00 : f32
      %414 = arith.divf %19, %cst_109 : f32
      %cst_110 = arith.constant 2.000000e+00 : f32
      %415 = vector.broadcast %cst_110 : f32 to vector<2x12xf32>
      %416 = arith.mulf %415, %384 : vector<2x12xf32>
      %417 = arith.addf %369, %416 : vector<2x12xf32>
      %cst_111 = arith.constant 2.000000e+00 : f32
      %418 = vector.broadcast %cst_111 : f32 to vector<2x12xf32>
      %419 = arith.mulf %418, %399 : vector<2x12xf32>
      %420 = arith.addf %417, %419 : vector<2x12xf32>
      %421 = arith.addf %420, %413 : vector<2x12xf32>
      %422 = vector.broadcast %414 : f32 to vector<2x12xf32>
      %423 = arith.mulf %422, %421 : vector<2x12xf32>
      %424 = arith.addf %343, %423 : vector<2x12xf32>
      %c5_i32 = arith.constant 5 : i32
      %425 = arith.sitofp %c5_i32 : i32 to f32
      %426 = arith.mulf %425, %19 : f32
      %427 = arith.addf %15, %426 : f32
      %428 = vector.broadcast %427 : f32 to vector<1x32xf32>
      %429 = arith.mulf %428, %1 : vector<1x32xf32>
      %430 = arith.addf %429, %2 : vector<1x32xf32>
      %cst_112 = arith.constant 5.000000e-01 : f32
      %431 = arith.mulf %cst_112, %19 : f32
      %432 = arith.addf %427, %431 : f32
      %433 = vector.broadcast %432 : f32 to vector<1x32xf32>
      %434 = arith.mulf %433, %1 : vector<1x32xf32>
      %435 = arith.addf %434, %2 : vector<1x32xf32>
      %436 = arith.addf %427, %19 : f32
      %437 = vector.broadcast %436 : f32 to vector<1x32xf32>
      %438 = arith.mulf %437, %1 : vector<1x32xf32>
      %439 = arith.addf %438, %2 : vector<1x32xf32>
      %cst_113 = arith.constant dense<0.000000e+00> : vector<2x32xf32>
      %440 = tpu.matmul %424, %0, %cst_113 {dimension_numbers = #tpu.dot_dimension_numbers<[1], [0], [0], [1], [0, 0, 1, 1], [], []>} : vector<2x12xf32>, vector<12x32xf32>, vector<2x32xf32> -> vector<2x32xf32>
      %441 = vector.broadcast %430 : vector<1x32xf32> to vector<2x32xf32>
      %442 = arith.addf %440, %441 : vector<2x32xf32>
      %443 = math.tanh %442 : vector<2x32xf32>
      %cst_114 = arith.constant dense<0.000000e+00> : vector<2x32xf32>
      %444 = tpu.matmul %443, %3, %cst_114 {dimension_numbers = #tpu.dot_dimension_numbers<[1], [0], [0], [1], [0, 0, 1, 1], [], []>} : vector<2x32xf32>, vector<32x32xf32>, vector<2x32xf32> -> vector<2x32xf32>
      %445 = vector.broadcast %4 : vector<1x32xf32> to vector<2x32xf32>
      %446 = arith.addf %444, %445 : vector<2x32xf32>
      %447 = math.tanh %446 : vector<2x32xf32>
      %cst_115 = arith.constant dense<0.000000e+00> : vector<2x12xf32>
      %448 = tpu.matmul %447, %5, %cst_115 {dimension_numbers = #tpu.dot_dimension_numbers<[1], [0], [0], [1], [0, 0, 1, 1], [], []>} : vector<2x32xf32>, vector<32x12xf32>, vector<2x12xf32> -> vector<2x12xf32>
      %449 = vector.broadcast %6 : vector<1x12xf32> to vector<2x12xf32>
      %450 = arith.addf %448, %449 : vector<2x12xf32>
      %cst_116 = arith.constant 5.000000e-01 : f32
      %451 = arith.mulf %cst_116, %19 : f32
      %452 = vector.broadcast %451 : f32 to vector<2x12xf32>
      %453 = arith.mulf %452, %450 : vector<2x12xf32>
      %454 = arith.addf %424, %453 : vector<2x12xf32>
      %cst_117 = arith.constant dense<0.000000e+00> : vector<2x32xf32>
      %455 = tpu.matmul %454, %0, %cst_117 {dimension_numbers = #tpu.dot_dimension_numbers<[1], [0], [0], [1], [0, 0, 1, 1], [], []>} : vector<2x12xf32>, vector<12x32xf32>, vector<2x32xf32> -> vector<2x32xf32>
      %456 = vector.broadcast %435 : vector<1x32xf32> to vector<2x32xf32>
      %457 = arith.addf %455, %456 : vector<2x32xf32>
      %458 = math.tanh %457 : vector<2x32xf32>
      %cst_118 = arith.constant dense<0.000000e+00> : vector<2x32xf32>
      %459 = tpu.matmul %458, %3, %cst_118 {dimension_numbers = #tpu.dot_dimension_numbers<[1], [0], [0], [1], [0, 0, 1, 1], [], []>} : vector<2x32xf32>, vector<32x32xf32>, vector<2x32xf32> -> vector<2x32xf32>
      %460 = vector.broadcast %4 : vector<1x32xf32> to vector<2x32xf32>
      %461 = arith.addf %459, %460 : vector<2x32xf32>
      %462 = math.tanh %461 : vector<2x32xf32>
      %cst_119 = arith.constant dense<0.000000e+00> : vector<2x12xf32>
      %463 = tpu.matmul %462, %5, %cst_119 {dimension_numbers = #tpu.dot_dimension_numbers<[1], [0], [0], [1], [0, 0, 1, 1], [], []>} : vector<2x32xf32>, vector<32x12xf32>, vector<2x12xf32> -> vector<2x12xf32>
      %464 = vector.broadcast %6 : vector<1x12xf32> to vector<2x12xf32>
      %465 = arith.addf %463, %464 : vector<2x12xf32>
      %cst_120 = arith.constant 5.000000e-01 : f32
      %466 = arith.mulf %cst_120, %19 : f32
      %467 = vector.broadcast %466 : f32 to vector<2x12xf32>
      %468 = arith.mulf %467, %465 : vector<2x12xf32>
      %469 = arith.addf %424, %468 : vector<2x12xf32>
      %cst_121 = arith.constant dense<0.000000e+00> : vector<2x32xf32>
      %470 = tpu.matmul %469, %0, %cst_121 {dimension_numbers = #tpu.dot_dimension_numbers<[1], [0], [0], [1], [0, 0, 1, 1], [], []>} : vector<2x12xf32>, vector<12x32xf32>, vector<2x32xf32> -> vector<2x32xf32>
      %471 = vector.broadcast %435 : vector<1x32xf32> to vector<2x32xf32>
      %472 = arith.addf %470, %471 : vector<2x32xf32>
      %473 = math.tanh %472 : vector<2x32xf32>
      %cst_122 = arith.constant dense<0.000000e+00> : vector<2x32xf32>
      %474 = tpu.matmul %473, %3, %cst_122 {dimension_numbers = #tpu.dot_dimension_numbers<[1], [0], [0], [1], [0, 0, 1, 1], [], []>} : vector<2x32xf32>, vector<32x32xf32>, vector<2x32xf32> -> vector<2x32xf32>
      %475 = vector.broadcast %4 : vector<1x32xf32> to vector<2x32xf32>
      %476 = arith.addf %474, %475 : vector<2x32xf32>
      %477 = math.tanh %476 : vector<2x32xf32>
      %cst_123 = arith.constant dense<0.000000e+00> : vector<2x12xf32>
      %478 = tpu.matmul %477, %5, %cst_123 {dimension_numbers = #tpu.dot_dimension_numbers<[1], [0], [0], [1], [0, 0, 1, 1], [], []>} : vector<2x32xf32>, vector<32x12xf32>, vector<2x12xf32> -> vector<2x12xf32>
      %479 = vector.broadcast %6 : vector<1x12xf32> to vector<2x12xf32>
      %480 = arith.addf %478, %479 : vector<2x12xf32>
      %481 = vector.broadcast %19 : f32 to vector<2x12xf32>
      %482 = arith.mulf %481, %480 : vector<2x12xf32>
      %483 = arith.addf %424, %482 : vector<2x12xf32>
      %cst_124 = arith.constant dense<0.000000e+00> : vector<2x32xf32>
      %484 = tpu.matmul %483, %0, %cst_124 {dimension_numbers = #tpu.dot_dimension_numbers<[1], [0], [0], [1], [0, 0, 1, 1], [], []>} : vector<2x12xf32>, vector<12x32xf32>, vector<2x32xf32> -> vector<2x32xf32>
      %485 = vector.broadcast %439 : vector<1x32xf32> to vector<2x32xf32>
      %486 = arith.addf %484, %485 : vector<2x32xf32>
      %487 = math.tanh %486 : vector<2x32xf32>
      %cst_125 = arith.constant dense<0.000000e+00> : vector<2x32xf32>
      %488 = tpu.matmul %487, %3, %cst_125 {dimension_numbers = #tpu.dot_dimension_numbers<[1], [0], [0], [1], [0, 0, 1, 1], [], []>} : vector<2x32xf32>, vector<32x32xf32>, vector<2x32xf32> -> vector<2x32xf32>
      %489 = vector.broadcast %4 : vector<1x32xf32> to vector<2x32xf32>
      %490 = arith.addf %488, %489 : vector<2x32xf32>
      %491 = math.tanh %490 : vector<2x32xf32>
      %cst_126 = arith.constant dense<0.000000e+00> : vector<2x12xf32>
      %492 = tpu.matmul %491, %5, %cst_126 {dimension_numbers = #tpu.dot_dimension_numbers<[1], [0], [0], [1], [0, 0, 1, 1], [], []>} : vector<2x32xf32>, vector<32x12xf32>, vector<2x12xf32> -> vector<2x12xf32>
      %493 = vector.broadcast %6 : vector<1x12xf32> to vector<2x12xf32>
      %494 = arith.addf %492, %493 : vector<2x12xf32>
      %cst_127 = arith.constant 6.000000e+00 : f32
      %495 = arith.divf %19, %cst_127 : f32
      %cst_128 = arith.constant 2.000000e+00 : f32
      %496 = vector.broadcast %cst_128 : f32 to vector<2x12xf32>
      %497 = arith.mulf %496, %465 : vector<2x12xf32>
      %498 = arith.addf %450, %497 : vector<2x12xf32>
      %cst_129 = arith.constant 2.000000e+00 : f32
      %499 = vector.broadcast %cst_129 : f32 to vector<2x12xf32>
      %500 = arith.mulf %499, %480 : vector<2x12xf32>
      %501 = arith.addf %498, %500 : vector<2x12xf32>
      %502 = arith.addf %501, %494 : vector<2x12xf32>
      %503 = vector.broadcast %495 : f32 to vector<2x12xf32>
      %504 = arith.mulf %503, %502 : vector<2x12xf32>
      %505 = arith.addf %424, %504 : vector<2x12xf32>
      %c6_i32 = arith.constant 6 : i32
      %506 = arith.sitofp %c6_i32 : i32 to f32
      %507 = arith.mulf %506, %19 : f32
      %508 = arith.addf %15, %507 : f32
      %509 = vector.broadcast %508 : f32 to vector<1x32xf32>
      %510 = arith.mulf %509, %1 : vector<1x32xf32>
      %511 = arith.addf %510, %2 : vector<1x32xf32>
      %cst_130 = arith.constant 5.000000e-01 : f32
      %512 = arith.mulf %cst_130, %19 : f32
      %513 = arith.addf %508, %512 : f32
      %514 = vector.broadcast %513 : f32 to vector<1x32xf32>
      %515 = arith.mulf %514, %1 : vector<1x32xf32>
      %516 = arith.addf %515, %2 : vector<1x32xf32>
      %517 = arith.addf %508, %19 : f32
      %518 = vector.broadcast %517 : f32 to vector<1x32xf32>
      %519 = arith.mulf %518, %1 : vector<1x32xf32>
      %520 = arith.addf %519, %2 : vector<1x32xf32>
      %cst_131 = arith.constant dense<0.000000e+00> : vector<2x32xf32>
      %521 = tpu.matmul %505, %0, %cst_131 {dimension_numbers = #tpu.dot_dimension_numbers<[1], [0], [0], [1], [0, 0, 1, 1], [], []>} : vector<2x12xf32>, vector<12x32xf32>, vector<2x32xf32> -> vector<2x32xf32>
      %522 = vector.broadcast %511 : vector<1x32xf32> to vector<2x32xf32>
      %523 = arith.addf %521, %522 : vector<2x32xf32>
      %524 = math.tanh %523 : vector<2x32xf32>
      %cst_132 = arith.constant dense<0.000000e+00> : vector<2x32xf32>
      %525 = tpu.matmul %524, %3, %cst_132 {dimension_numbers = #tpu.dot_dimension_numbers<[1], [0], [0], [1], [0, 0, 1, 1], [], []>} : vector<2x32xf32>, vector<32x32xf32>, vector<2x32xf32> -> vector<2x32xf32>
      %526 = vector.broadcast %4 : vector<1x32xf32> to vector<2x32xf32>
      %527 = arith.addf %525, %526 : vector<2x32xf32>
      %528 = math.tanh %527 : vector<2x32xf32>
      %cst_133 = arith.constant dense<0.000000e+00> : vector<2x12xf32>
      %529 = tpu.matmul %528, %5, %cst_133 {dimension_numbers = #tpu.dot_dimension_numbers<[1], [0], [0], [1], [0, 0, 1, 1], [], []>} : vector<2x32xf32>, vector<32x12xf32>, vector<2x12xf32> -> vector<2x12xf32>
      %530 = vector.broadcast %6 : vector<1x12xf32> to vector<2x12xf32>
      %531 = arith.addf %529, %530 : vector<2x12xf32>
      %cst_134 = arith.constant 5.000000e-01 : f32
      %532 = arith.mulf %cst_134, %19 : f32
      %533 = vector.broadcast %532 : f32 to vector<2x12xf32>
      %534 = arith.mulf %533, %531 : vector<2x12xf32>
      %535 = arith.addf %505, %534 : vector<2x12xf32>
      %cst_135 = arith.constant dense<0.000000e+00> : vector<2x32xf32>
      %536 = tpu.matmul %535, %0, %cst_135 {dimension_numbers = #tpu.dot_dimension_numbers<[1], [0], [0], [1], [0, 0, 1, 1], [], []>} : vector<2x12xf32>, vector<12x32xf32>, vector<2x32xf32> -> vector<2x32xf32>
      %537 = vector.broadcast %516 : vector<1x32xf32> to vector<2x32xf32>
      %538 = arith.addf %536, %537 : vector<2x32xf32>
      %539 = math.tanh %538 : vector<2x32xf32>
      %cst_136 = arith.constant dense<0.000000e+00> : vector<2x32xf32>
      %540 = tpu.matmul %539, %3, %cst_136 {dimension_numbers = #tpu.dot_dimension_numbers<[1], [0], [0], [1], [0, 0, 1, 1], [], []>} : vector<2x32xf32>, vector<32x32xf32>, vector<2x32xf32> -> vector<2x32xf32>
      %541 = vector.broadcast %4 : vector<1x32xf32> to vector<2x32xf32>
      %542 = arith.addf %540, %541 : vector<2x32xf32>
      %543 = math.tanh %542 : vector<2x32xf32>
      %cst_137 = arith.constant dense<0.000000e+00> : vector<2x12xf32>
      %544 = tpu.matmul %543, %5, %cst_137 {dimension_numbers = #tpu.dot_dimension_numbers<[1], [0], [0], [1], [0, 0, 1, 1], [], []>} : vector<2x32xf32>, vector<32x12xf32>, vector<2x12xf32> -> vector<2x12xf32>
      %545 = vector.broadcast %6 : vector<1x12xf32> to vector<2x12xf32>
      %546 = arith.addf %544, %545 : vector<2x12xf32>
      %cst_138 = arith.constant 5.000000e-01 : f32
      %547 = arith.mulf %cst_138, %19 : f32
      %548 = vector.broadcast %547 : f32 to vector<2x12xf32>
      %549 = arith.mulf %548, %546 : vector<2x12xf32>
      %550 = arith.addf %505, %549 : vector<2x12xf32>
      %cst_139 = arith.constant dense<0.000000e+00> : vector<2x32xf32>
      %551 = tpu.matmul %550, %0, %cst_139 {dimension_numbers = #tpu.dot_dimension_numbers<[1], [0], [0], [1], [0, 0, 1, 1], [], []>} : vector<2x12xf32>, vector<12x32xf32>, vector<2x32xf32> -> vector<2x32xf32>
      %552 = vector.broadcast %516 : vector<1x32xf32> to vector<2x32xf32>
      %553 = arith.addf %551, %552 : vector<2x32xf32>
      %554 = math.tanh %553 : vector<2x32xf32>
      %cst_140 = arith.constant dense<0.000000e+00> : vector<2x32xf32>
      %555 = tpu.matmul %554, %3, %cst_140 {dimension_numbers = #tpu.dot_dimension_numbers<[1], [0], [0], [1], [0, 0, 1, 1], [], []>} : vector<2x32xf32>, vector<32x32xf32>, vector<2x32xf32> -> vector<2x32xf32>
      %556 = vector.broadcast %4 : vector<1x32xf32> to vector<2x32xf32>
      %557 = arith.addf %555, %556 : vector<2x32xf32>
      %558 = math.tanh %557 : vector<2x32xf32>
      %cst_141 = arith.constant dense<0.000000e+00> : vector<2x12xf32>
      %559 = tpu.matmul %558, %5, %cst_141 {dimension_numbers = #tpu.dot_dimension_numbers<[1], [0], [0], [1], [0, 0, 1, 1], [], []>} : vector<2x32xf32>, vector<32x12xf32>, vector<2x12xf32> -> vector<2x12xf32>
      %560 = vector.broadcast %6 : vector<1x12xf32> to vector<2x12xf32>
      %561 = arith.addf %559, %560 : vector<2x12xf32>
      %562 = vector.broadcast %19 : f32 to vector<2x12xf32>
      %563 = arith.mulf %562, %561 : vector<2x12xf32>
      %564 = arith.addf %505, %563 : vector<2x12xf32>
      %cst_142 = arith.constant dense<0.000000e+00> : vector<2x32xf32>
      %565 = tpu.matmul %564, %0, %cst_142 {dimension_numbers = #tpu.dot_dimension_numbers<[1], [0], [0], [1], [0, 0, 1, 1], [], []>} : vector<2x12xf32>, vector<12x32xf32>, vector<2x32xf32> -> vector<2x32xf32>
      %566 = vector.broadcast %520 : vector<1x32xf32> to vector<2x32xf32>
      %567 = arith.addf %565, %566 : vector<2x32xf32>
      %568 = math.tanh %567 : vector<2x32xf32>
      %cst_143 = arith.constant dense<0.000000e+00> : vector<2x32xf32>
      %569 = tpu.matmul %568, %3, %cst_143 {dimension_numbers = #tpu.dot_dimension_numbers<[1], [0], [0], [1], [0, 0, 1, 1], [], []>} : vector<2x32xf32>, vector<32x32xf32>, vector<2x32xf32> -> vector<2x32xf32>
      %570 = vector.broadcast %4 : vector<1x32xf32> to vector<2x32xf32>
      %571 = arith.addf %569, %570 : vector<2x32xf32>
      %572 = math.tanh %571 : vector<2x32xf32>
      %cst_144 = arith.constant dense<0.000000e+00> : vector<2x12xf32>
      %573 = tpu.matmul %572, %5, %cst_144 {dimension_numbers = #tpu.dot_dimension_numbers<[1], [0], [0], [1], [0, 0, 1, 1], [], []>} : vector<2x32xf32>, vector<32x12xf32>, vector<2x12xf32> -> vector<2x12xf32>
      %574 = vector.broadcast %6 : vector<1x12xf32> to vector<2x12xf32>
      %575 = arith.addf %573, %574 : vector<2x12xf32>
      %cst_145 = arith.constant 6.000000e+00 : f32
      %576 = arith.divf %19, %cst_145 : f32
      %cst_146 = arith.constant 2.000000e+00 : f32
      %577 = vector.broadcast %cst_146 : f32 to vector<2x12xf32>
      %578 = arith.mulf %577, %546 : vector<2x12xf32>
      %579 = arith.addf %531, %578 : vector<2x12xf32>
      %cst_147 = arith.constant 2.000000e+00 : f32
      %580 = vector.broadcast %cst_147 : f32 to vector<2x12xf32>
      %581 = arith.mulf %580, %561 : vector<2x12xf32>
      %582 = arith.addf %579, %581 : vector<2x12xf32>
      %583 = arith.addf %582, %575 : vector<2x12xf32>
      %584 = vector.broadcast %576 : f32 to vector<2x12xf32>
      %585 = arith.mulf %584, %583 : vector<2x12xf32>
      %586 = arith.addf %505, %585 : vector<2x12xf32>
      %c7_i32_148 = arith.constant 7 : i32
      %587 = arith.sitofp %c7_i32_148 : i32 to f32
      %588 = arith.mulf %587, %19 : f32
      %589 = arith.addf %15, %588 : f32
      %590 = vector.broadcast %589 : f32 to vector<1x32xf32>
      %591 = arith.mulf %590, %1 : vector<1x32xf32>
      %592 = arith.addf %591, %2 : vector<1x32xf32>
      %cst_149 = arith.constant 5.000000e-01 : f32
      %593 = arith.mulf %cst_149, %19 : f32
      %594 = arith.addf %589, %593 : f32
      %595 = vector.broadcast %594 : f32 to vector<1x32xf32>
      %596 = arith.mulf %595, %1 : vector<1x32xf32>
      %597 = arith.addf %596, %2 : vector<1x32xf32>
      %598 = arith.addf %589, %19 : f32
      %599 = vector.broadcast %598 : f32 to vector<1x32xf32>
      %600 = arith.mulf %599, %1 : vector<1x32xf32>
      %601 = arith.addf %600, %2 : vector<1x32xf32>
      %cst_150 = arith.constant dense<0.000000e+00> : vector<2x32xf32>
      %602 = tpu.matmul %586, %0, %cst_150 {dimension_numbers = #tpu.dot_dimension_numbers<[1], [0], [0], [1], [0, 0, 1, 1], [], []>} : vector<2x12xf32>, vector<12x32xf32>, vector<2x32xf32> -> vector<2x32xf32>
      %603 = vector.broadcast %592 : vector<1x32xf32> to vector<2x32xf32>
      %604 = arith.addf %602, %603 : vector<2x32xf32>
      %605 = math.tanh %604 : vector<2x32xf32>
      %cst_151 = arith.constant dense<0.000000e+00> : vector<2x32xf32>
      %606 = tpu.matmul %605, %3, %cst_151 {dimension_numbers = #tpu.dot_dimension_numbers<[1], [0], [0], [1], [0, 0, 1, 1], [], []>} : vector<2x32xf32>, vector<32x32xf32>, vector<2x32xf32> -> vector<2x32xf32>
      %607 = vector.broadcast %4 : vector<1x32xf32> to vector<2x32xf32>
      %608 = arith.addf %606, %607 : vector<2x32xf32>
      %609 = math.tanh %608 : vector<2x32xf32>
      %cst_152 = arith.constant dense<0.000000e+00> : vector<2x12xf32>
      %610 = tpu.matmul %609, %5, %cst_152 {dimension_numbers = #tpu.dot_dimension_numbers<[1], [0], [0], [1], [0, 0, 1, 1], [], []>} : vector<2x32xf32>, vector<32x12xf32>, vector<2x12xf32> -> vector<2x12xf32>
      %611 = vector.broadcast %6 : vector<1x12xf32> to vector<2x12xf32>
      %612 = arith.addf %610, %611 : vector<2x12xf32>
      %cst_153 = arith.constant 5.000000e-01 : f32
      %613 = arith.mulf %cst_153, %19 : f32
      %614 = vector.broadcast %613 : f32 to vector<2x12xf32>
      %615 = arith.mulf %614, %612 : vector<2x12xf32>
      %616 = arith.addf %586, %615 : vector<2x12xf32>
      %cst_154 = arith.constant dense<0.000000e+00> : vector<2x32xf32>
      %617 = tpu.matmul %616, %0, %cst_154 {dimension_numbers = #tpu.dot_dimension_numbers<[1], [0], [0], [1], [0, 0, 1, 1], [], []>} : vector<2x12xf32>, vector<12x32xf32>, vector<2x32xf32> -> vector<2x32xf32>
      %618 = vector.broadcast %597 : vector<1x32xf32> to vector<2x32xf32>
      %619 = arith.addf %617, %618 : vector<2x32xf32>
      %620 = math.tanh %619 : vector<2x32xf32>
      %cst_155 = arith.constant dense<0.000000e+00> : vector<2x32xf32>
      %621 = tpu.matmul %620, %3, %cst_155 {dimension_numbers = #tpu.dot_dimension_numbers<[1], [0], [0], [1], [0, 0, 1, 1], [], []>} : vector<2x32xf32>, vector<32x32xf32>, vector<2x32xf32> -> vector<2x32xf32>
      %622 = vector.broadcast %4 : vector<1x32xf32> to vector<2x32xf32>
      %623 = arith.addf %621, %622 : vector<2x32xf32>
      %624 = math.tanh %623 : vector<2x32xf32>
      %cst_156 = arith.constant dense<0.000000e+00> : vector<2x12xf32>
      %625 = tpu.matmul %624, %5, %cst_156 {dimension_numbers = #tpu.dot_dimension_numbers<[1], [0], [0], [1], [0, 0, 1, 1], [], []>} : vector<2x32xf32>, vector<32x12xf32>, vector<2x12xf32> -> vector<2x12xf32>
      %626 = vector.broadcast %6 : vector<1x12xf32> to vector<2x12xf32>
      %627 = arith.addf %625, %626 : vector<2x12xf32>
      %cst_157 = arith.constant 5.000000e-01 : f32
      %628 = arith.mulf %cst_157, %19 : f32
      %629 = vector.broadcast %628 : f32 to vector<2x12xf32>
      %630 = arith.mulf %629, %627 : vector<2x12xf32>
      %631 = arith.addf %586, %630 : vector<2x12xf32>
      %cst_158 = arith.constant dense<0.000000e+00> : vector<2x32xf32>
      %632 = tpu.matmul %631, %0, %cst_158 {dimension_numbers = #tpu.dot_dimension_numbers<[1], [0], [0], [1], [0, 0, 1, 1], [], []>} : vector<2x12xf32>, vector<12x32xf32>, vector<2x32xf32> -> vector<2x32xf32>
      %633 = vector.broadcast %597 : vector<1x32xf32> to vector<2x32xf32>
      %634 = arith.addf %632, %633 : vector<2x32xf32>
      %635 = math.tanh %634 : vector<2x32xf32>
      %cst_159 = arith.constant dense<0.000000e+00> : vector<2x32xf32>
      %636 = tpu.matmul %635, %3, %cst_159 {dimension_numbers = #tpu.dot_dimension_numbers<[1], [0], [0], [1], [0, 0, 1, 1], [], []>} : vector<2x32xf32>, vector<32x32xf32>, vector<2x32xf32> -> vector<2x32xf32>
      %637 = vector.broadcast %4 : vector<1x32xf32> to vector<2x32xf32>
      %638 = arith.addf %636, %637 : vector<2x32xf32>
      %639 = math.tanh %638 : vector<2x32xf32>
      %cst_160 = arith.constant dense<0.000000e+00> : vector<2x12xf32>
      %640 = tpu.matmul %639, %5, %cst_160 {dimension_numbers = #tpu.dot_dimension_numbers<[1], [0], [0], [1], [0, 0, 1, 1], [], []>} : vector<2x32xf32>, vector<32x12xf32>, vector<2x12xf32> -> vector<2x12xf32>
      %641 = vector.broadcast %6 : vector<1x12xf32> to vector<2x12xf32>
      %642 = arith.addf %640, %641 : vector<2x12xf32>
      %643 = vector.broadcast %19 : f32 to vector<2x12xf32>
      %644 = arith.mulf %643, %642 : vector<2x12xf32>
      %645 = arith.addf %586, %644 : vector<2x12xf32>
      %cst_161 = arith.constant dense<0.000000e+00> : vector<2x32xf32>
      %646 = tpu.matmul %645, %0, %cst_161 {dimension_numbers = #tpu.dot_dimension_numbers<[1], [0], [0], [1], [0, 0, 1, 1], [], []>} : vector<2x12xf32>, vector<12x32xf32>, vector<2x32xf32> -> vector<2x32xf32>
      %647 = vector.broadcast %601 : vector<1x32xf32> to vector<2x32xf32>
      %648 = arith.addf %646, %647 : vector<2x32xf32>
      %649 = math.tanh %648 : vector<2x32xf32>
      %cst_162 = arith.constant dense<0.000000e+00> : vector<2x32xf32>
      %650 = tpu.matmul %649, %3, %cst_162 {dimension_numbers = #tpu.dot_dimension_numbers<[1], [0], [0], [1], [0, 0, 1, 1], [], []>} : vector<2x32xf32>, vector<32x32xf32>, vector<2x32xf32> -> vector<2x32xf32>
      %651 = vector.broadcast %4 : vector<1x32xf32> to vector<2x32xf32>
      %652 = arith.addf %650, %651 : vector<2x32xf32>
      %653 = math.tanh %652 : vector<2x32xf32>
      %cst_163 = arith.constant dense<0.000000e+00> : vector<2x12xf32>
      %654 = tpu.matmul %653, %5, %cst_163 {dimension_numbers = #tpu.dot_dimension_numbers<[1], [0], [0], [1], [0, 0, 1, 1], [], []>} : vector<2x32xf32>, vector<32x12xf32>, vector<2x12xf32> -> vector<2x12xf32>
      %655 = vector.broadcast %6 : vector<1x12xf32> to vector<2x12xf32>
      %656 = arith.addf %654, %655 : vector<2x12xf32>
      %cst_164 = arith.constant 6.000000e+00 : f32
      %657 = arith.divf %19, %cst_164 : f32
      %cst_165 = arith.constant 2.000000e+00 : f32
      %658 = vector.broadcast %cst_165 : f32 to vector<2x12xf32>
      %659 = arith.mulf %658, %627 : vector<2x12xf32>
      %660 = arith.addf %612, %659 : vector<2x12xf32>
      %cst_166 = arith.constant 2.000000e+00 : f32
      %661 = vector.broadcast %cst_166 : f32 to vector<2x12xf32>
      %662 = arith.mulf %661, %642 : vector<2x12xf32>
      %663 = arith.addf %660, %662 : vector<2x12xf32>
      %664 = arith.addf %663, %656 : vector<2x12xf32>
      %665 = vector.broadcast %657 : f32 to vector<2x12xf32>
      %666 = arith.mulf %665, %664 : vector<2x12xf32>
      %667 = arith.addf %586, %666 : vector<2x12xf32>
      %c8_i32 = arith.constant 8 : i32
      %668 = arith.index_cast %arg10 : i32 to index
      %c0_167 = arith.constant 0 : index
      %c0_168 = arith.constant 0 : index
      %669 = vector.load %arg9[%668, %c0_167, %c0_168] : memref<8x2x12xf32, #tpu.memory_space<vmem>>, vector<1x2x12xf32>
      %670 = vector.shape_cast %669 : vector<1x2x12xf32> to vector<2x12xf32>
      %671 = vector.shape_cast %667 : vector<2x12xf32> to vector<1x2x12xf32>
      tpu.vector_store %arg9[%668, %c0_167, %c0_168], %671 {strides = array<i32>} : memref<8x2x12xf32, #tpu.memory_space<vmem>>, vector<1x2x12xf32>,
      scf.yield %667 : vector<2x12xf32>
    }
    %c7_i32_19 = arith.constant 7 : i32
    return
  }
}

</mosaic_0001>

<llo_original>
// kernel: tpu_custom_call.1
$region0: #{tpu_custom_call.1}
  #allocation0 [shape = 'u32[]', space=smem, size = 0x4, offset = 0x4, fixed_abs, tag = 'smem constant byte address 0x4 - core index']
  #allocation1 [shape = 'u32[144,128]{1,0:T(1,128)}', space=vmem, size = 0x12000, scoped, tag = 'internal scratch']
  %s0 = inlined_call_operand.vmem [shape: f32[8], index: 0, kind: input, shape index: {}]
  %s1 = inlined_call_operand.vmem [shape: f32[2,12], index: 1, kind: input, shape index: {}]
  %s2 = inlined_call_operand.vmem [shape: f32[12,32], index: 2, kind: input, shape index: {}]
  %s3 = inlined_call_operand.vmem [shape: f32[1,32], index: 3, kind: input, shape index: {}]
  %s4 = inlined_call_operand.vmem [shape: f32[1,32], index: 4, kind: input, shape index: {}]
  %s5 = inlined_call_operand.vmem [shape: f32[32,32], index: 5, kind: input, shape index: {}]
  %s6 = inlined_call_operand.vmem [shape: f32[1,32], index: 6, kind: input, shape index: {}]
  %s7 = inlined_call_operand.vmem [shape: f32[32,12], index: 7, kind: input, shape index: {}]
  %s8 = inlined_call_operand.vmem [shape: f32[1,12], index: 8, kind: input, shape index: {}]
  %s9 = inlined_call_operand.hbm [shape: f32[8,2,12], index: 9, kind: output, shape index: {}]
  %s10 = sld [smem:[#allocation0]]
  $region57: #{tpu_custom_call.1} parent=0
    _
  %s12 = ssub.s32 1, %s10
  %s13 = scalar_select 0, %s12, %s10
  $region1: #{tpu_custom_call.1} parent=0
    #allocation2 [shape = 'u8[512]{0}', space=smem, size = 0x200, scoped, tag = 'input window, operand 0, single buffered']
    #allocation3 [shape = 's32[1]{0}', space=sflag, size = 0x4, scoped, tag = 'scoped memory for tpu_custom_call.1']
    #allocation4 [shape = 's32[1]{0}', space=sflag, size = 0x4, scoped, tag = 'scoped memory for tpu_custom_call.1']
    #allocation5 [shape = 'u8[8192]{0}', space=vmem, size = 0x2000, scoped, tag = 'output window, operand 0, single buffered']
    %14 = vsyncpa [#allocation4], 0
    %15 = vsyncpa [#allocation3], 0
    // Predicated region
    $region2: #{tpu_custom_call.1} parent=1 // pred_check
      _
    $region3: #{tpu_custom_call.1} parent=1 // pred_check_branch
      %17 = sbr.rel (0) target = $region5
    $region4: #{tpu_custom_call.1} parent=1 // pred_region
      %s19 = ssub.s32 16, 16
      %20 = vsyncadd [#allocation4], %s19
      %s22 = sshll.u32 %s0, 4
      %s23 = int_to_ptr.vmem [resolvable:$true] %s22
      %25 = dma.vmem_to_smem %s23, 16, [#allocation2], [#allocation4]
    $region5: #{tpu_custom_call.1} parent=1 // pred_fallthru
      _
    // Predicated region
    $region6: #{tpu_custom_call.1} parent=1 // pred_check
      _
    $region7: #{tpu_custom_call.1} parent=1 // pred_check_branch
      %27 = sbr.rel (0) target = $region9
    $region8: #{tpu_custom_call.1} parent=1 // pred_region
      _
    $region9: #{tpu_custom_call.1} parent=1 // pred_fallthru
      _
    // Predicated region
    $region10: #{tpu_custom_call.1} parent=1 // pred_check
      _
    $region11: #{tpu_custom_call.1} parent=1 // pred_check_branch
      %29 = sbr.rel (0) target = $region13
    $region12: #{tpu_custom_call.1} parent=1 // pred_region
      _
    $region13: #{tpu_custom_call.1} parent=1 // pred_fallthru
      _
    // Predicated region
    $region14: #{tpu_custom_call.1} parent=1 // pred_check
      _
    $region15: #{tpu_custom_call.1} parent=1 // pred_check_branch
      %31 = sbr.rel (0) target = $region17
    $region16: #{tpu_custom_call.1} parent=1 // pred_region
      _
    $region17: #{tpu_custom_call.1} parent=1 // pred_fallthru
      _
    // Predicated region
    $region18: #{tpu_custom_call.1} parent=1 // pred_check
      _
    $region19: #{tpu_custom_call.1} parent=1 // pred_check_branch
      %33 = sbr.rel (0) target = $region21
    $region20: #{tpu_custom_call.1} parent=1 // pred_region
      _
    $region21: #{tpu_custom_call.1} parent=1 // pred_fallthru
      _
    // Predicated region
    $region22: #{tpu_custom_call.1} parent=1 // pred_check
      _
    $region23: #{tpu_custom_call.1} parent=1 // pred_check_branch
      %35 = sbr.rel (0) target = $region25
    $region24: #{tpu_custom_call.1} parent=1 // pred_region
      _
    $region25: #{tpu_custom_call.1} parent=1 // pred_fallthru
      _
    // Predicated region
    $region26: #{tpu_custom_call.1} parent=1 // pred_check
      _
    $region27: #{tpu_custom_call.1} parent=1 // pred_check_branch
      %37 = sbr.rel (0) target = $region29
    $region28: #{tpu_custom_call.1} parent=1 // pred_region
      _
    $region29: #{tpu_custom_call.1} parent=1 // pred_fallthru
      _
    // Predicated region
    $region30: #{tpu_custom_call.1} parent=1 // pred_check
      _
    $region31: #{tpu_custom_call.1} parent=1 // pred_check_branch
      %39 = sbr.rel (0) target = $region33
    $region32: #{tpu_custom_call.1} parent=1 // pred_region
      _
    $region33: #{tpu_custom_call.1} parent=1 // pred_fallthru
      _
    // Predicated region
    $region34: #{tpu_custom_call.1} parent=1 // pred_check
      _
    $region35: #{tpu_custom_call.1} parent=1 // pred_check_branch
      %41 = sbr.rel (0) target = $region37
    $region36: #{tpu_custom_call.1} parent=1 // pred_region
      _
    $region37: #{tpu_custom_call.1} parent=1 // pred_fallthru
      _
    // Predicated region
    $region38: #{tpu_custom_call.1} parent=1 // pred_check
      _
    $region39: #{tpu_custom_call.1} parent=1 // pred_check_branch
      %43 = sbr.rel (0) target = $region41
    $region40: #{tpu_custom_call.1} parent=1 // pred_region
      %44 = dma.done [#allocation4], 16
    $region41: #{tpu_custom_call.1} parent=1 // pred_fallthru
      _
    %45 = sfence
    %v46 = vld [vmem:[%s2] sm:$0xff]
    %v47 = vld [vmem:[%s2 + $0x8] sm:$0xf]
    %v48 = vld [vmem:[%s3] sm:$0x1]
    %v49 = vld [vmem:[%s4] sm:$0x1]
    %v50 = vld [vmem:[%s5] sm:$0xff]
    %v51 = vld [vmem:[%s5 + $0x8] sm:$0xff]
    %v52 = vld [vmem:[%s5 + $0x10] sm:$0xff]
    %v53 = vld [vmem:[%s5 + $0x18] sm:$0xff]
    %v54 = vld [vmem:[%s6] sm:$0x1]
    %v55 = vld [vmem:[%s7] sm:$0xff]
    %v56 = vld [vmem:[%s7 + $0x8] sm:$0xff]
    %v57 = vld [vmem:[%s7 + $0x10] sm:$0xff]
    %v58 = vld [vmem:[%s7 + $0x18] sm:$0xff]
    %v59 = vld [vmem:[%s8] sm:$0x1]
    %v60 = vld [vmem:[%s1] sm:$0x3]
    %vm61 = vcmask 91136
    %62 = vst.msk [vmem:[#allocation5] sm:$0x3] %vm61, %v60
    loop: start=1, step=1, limit=8
    $region42: #{tpu_custom_call.1} parent=1 // loop_pre_header
      _
    $region43: #{tpu_custom_call.1} parent=1 // loop_header
      %s64 = sphi 1, %s68
      %p65 = scmp.ge.s32.totalorder %s64, 8
      %v69 = vphi %v60, %v7524
    $region44: #{tpu_custom_call.1} parent=1 // loop_header_branch
      %67 = sbr.rel (%p65) target = $region48
    $region45: #{tpu_custom_call.1} parent=1 // loop_body
      %s70 = ssub.s32 %s64, 1
      %s71 = sld [smem:[#allocation2 + %s70]]
      %s72 = sld [smem:[#allocation2 + %s64]]
      %s73 = ssub.f32 %s72, %s71
      %v74 = vrcp.pop 8.0
      %s75 = vtos %v74
      %s76 = smul.f32 %s73, %s75
      %s77 = smul.f32 %s76, 0.0
      %s78 = sadd.f32 %s71, %s77
      %v79 = vstv %s78
      %v80 = vmul.f32 %v79, %v48
      %v81 = vadd.f32 %v80, %v49
      %s82 = smul.f32 %s76, 0.5
      %s83 = sadd.f32 %s78, %s82
      %v84 = vstv %s83
      %v85 = vmul.f32 %v84, %v48
      %v86 = vadd.f32 %v85, %v49
      %s87 = sadd.f32 %s78, %s76
      %v88 = vstv %s87
      %v89 = vmul.f32 %v88, %v48
      %v90 = vadd.f32 %v89, %v49
      %v92 = vlaneseq
      %v93 = vshrl.u32 %v92, 7
      %v94 = vsub.s32 0, %v93
      %v95 = vrot.slane %v81, %v94
      %vm97 = vcmask 97280
      %v99 = vsel %vm97, %v69, 0
      %vm101 = vcmask 1043456
      %v103 = vsel %vm101, %v47, 0
      %105 = vmatprep.subr.mxu0 0.0
      %106 = vmatpush1.msra.mxu0 %v46
      %107 = vmatprep.subr.mxu0 0.0
      %108 = vmatpush1.msra.mxu0 %v103
      %109 = vmatprep.subr.mxu0 0.0
      %110 = vmatpush1.msra.mxu0 0.0
      %111 = vmatprep.subr.mxu0 0.0
      %112 = vmatpush1.msra.mxu0 0.0
      %113 = vmatprep.subr.mxu0 0.0
      %114 = vmatpush1.msra.mxu0 0.0
      %115 = vmatprep.subr.mxu0 0.0
      %116 = vmatpush1.msra.mxu0 0.0
      %117 = vmatprep.subr.mxu0 0.0
      %118 = vmatpush1.msra.mxu0 0.0
      %119 = vmatprep.subr.mxu0 0.0
      %120 = vmatpush1.msra.mxu0 0.0
      %121 = vmatprep.subr.mxu0 0.0
      %122 = vmatpush1.msra.mxu0 0.0
      %123 = vmatprep.subr.mxu0 0.0
      %124 = vmatpush1.msra.mxu0 0.0
      %125 = vmatprep.subr.mxu0 0.0
      %126 = vmatpush1.msra.mxu0 0.0
      %127 = vmatprep.subr.mxu0 0.0
      %128 = vmatpush1.msra.mxu0 0.0
      %129 = vmatprep.subr.mxu0 0.0
      %130 = vmatpush1.msra.mxu0 0.0
      %131 = vmatprep.subr.mxu0 0.0
      %132 = vmatpush1.msra.mxu0 0.0
      %133 = vmatprep.subr.mxu0 0.0
      %134 = vmatpush1.msra.mxu0 0.0
      %135 = vmatprep.subr.mxu0 0.0
      %136 = vmatpush1.msra.mxu0 0.0
      %137 = vmatprep.subr.mxu0 0.0
      %138 = vmatpush1.msra.mxu0 0.0
      %139 = vmatprep.subr.mxu0 0.0
      %140 = vmatpush1.msra.mxu0 0.0
      %141 = vmatprep.subr.mxu0 0.0
      %142 = vmatpush1.msra.mxu0 0.0
      %143 = vmatprep.subr.mxu0 0.0
      %144 = vmatpush1.msra.mxu0 0.0
      %145 = vmatprep.subr.mxu0 0.0
      %146 = vmatpush1.msra.mxu0 0.0
      %147 = vmatprep.subr.mxu0 0.0
      %148 = vmatpush1.msra.mxu0 0.0
      %149 = vmatprep.subr.mxu0 0.0
      %150 = vmatpush1.msra.mxu0 0.0
      %151 = vmatprep.subr.mxu0 0.0
      %152 = vmatpush1.msra.mxu0 0.0
      %153 = vmatprep.subr.mxu0 0.0
      %154 = vmatpush1.msra.mxu0 0.0
      %155 = vmatprep.subr.mxu0 0.0
      %156 = vmatpush1.msra.mxu0 0.0
      %157 = vmatprep.subr.mxu0 0.0
      %158 = vmatpush1.msra.mxu0 0.0
      %159 = vmatprep.subr.mxu0 0.0
      %160 = vmatpush1.msra.mxu0 0.0
      %161 = vmatprep.subr.mxu0 0.0
      %162 = vmatpush1.msra.mxu0 0.0
      %163 = vmatprep.subr.mxu0 0.0
      %164 = vmatpush1.msra.mxu0 0.0
      %165 = vmatprep.subr.mxu0 0.0
      %166 = vmatpush1.msra.mxu0 0.0
      %167 = vmatprep.subr.mxu0 0.0
      %168 = vmatpush1.msra.mxu0 0.0
      %169 = vmatprep.mubr.f32.mxu0 0.0
      %170 = vmatmul.mubr.f32.gmra.mrb[0].mxu0 %v99
      %v171 = vpop.f32.mrb[0].mxu0
      %v172 = vadd.f32 %v95, %v171
      %v173 = vpop.f32.mrb[0].mxu0
      %174 = vdwg.mxu0
      %v175 = vtanh.pop %v172
      %v177 = vlaneseq
      %v178 = vshrl.u32 %v177, 7
      %v179 = vsub.s32 0, %v178
      %v180 = vrot.slane %v54, %v179
      %vm182 = vcmask 261120
      %v184 = vsel %vm182, %v175, 0
      %186 = vmatprep.subr.mxu0 0.0
      %187 = vmatpush1.msra.mxu0 %v50
      %188 = vmatprep.subr.mxu0 0.0
      %189 = vmatpush1.msra.mxu0 %v51
      %190 = vmatprep.subr.mxu0 0.0
      %191 = vmatpush1.msra.mxu0 %v52
      %192 = vmatprep.subr.mxu0 0.0
      %193 = vmatpush1.msra.mxu0 %v53
      %194 = vmatprep.subr.mxu0 0.0
      %195 = vmatpush1.msra.mxu0 0.0
      %196 = vmatprep.subr.mxu0 0.0
      %197 = vmatpush1.msra.mxu0 0.0
      %198 = vmatprep.subr.mxu0 0.0
      %199 = vmatpush1.msra.mxu0 0.0
      %200 = vmatprep.subr.mxu0 0.0
      %201 = vmatpush1.msra.mxu0 0.0
      %202 = vmatprep.subr.mxu0 0.0
      %203 = vmatpush1.msra.mxu0 0.0
      %204 = vmatprep.subr.mxu0 0.0
      %205 = vmatpush1.msra.mxu0 0.0
      %206 = vmatprep.subr.mxu0 0.0
      %207 = vmatpush1.msra.mxu0 0.0
      %208 = vmatprep.subr.mxu0 0.0
      %209 = vmatpush1.msra.mxu0 0.0
      %210 = vmatprep.subr.mxu0 0.0
      %211 = vmatpush1.msra.mxu0 0.0
      %212 = vmatprep.subr.mxu0 0.0
      %213 = vmatpush1.msra.mxu0 0.0
      %214 = vmatprep.subr.mxu0 0.0
      %215 = vmatpush1.msra.mxu0 0.0
      %216 = vmatprep.subr.mxu0 0.0
      %217 = vmatpush1.msra.mxu0 0.0
      %218 = vmatprep.subr.mxu0 0.0
      %219 = vmatpush1.msra.mxu0 0.0
      %220 = vmatprep.subr.mxu0 0.0
      %221 = vmatpush1.msra.mxu0 0.0
      %222 = vmatprep.subr.mxu0 0.0
      %223 = vmatpush1.msra.mxu0 0.0
      %224 = vmatprep.subr.mxu0 0.0
      %225 = vmatpush1.msra.mxu0 0.0
      %226 = vmatprep.subr.mxu0 0.0
      %227 = vmatpush1.msra.mxu0 0.0
      %228 = vmatprep.subr.mxu0 0.0
      %229 = vmatpush1.msra.mxu0 0.0
      %230 = vmatprep.subr.mxu0 0.0
      %231 = vmatpush1.msra.mxu0 0.0
      %232 = vmatprep.subr.mxu0 0.0
      %233 = vmatpush1.msra.mxu0 0.0
      %234 = vmatprep.subr.mxu0 0.0
      %235 = vmatpush1.msra.mxu0 0.0
      %236 = vmatprep.subr.mxu0 0.0
      %237 = vmatpush1.msra.mxu0 0.0
      %238 = vmatprep.subr.mxu0 0.0
      %239 = vmatpush1.msra.mxu0 0.0
      %240 = vmatprep.subr.mxu0 0.0
      %241 = vmatpush1.msra.mxu0 0.0
      %242 = vmatprep.subr.mxu0 0.0
      %243 = vmatpush1.msra.mxu0 0.0
      %244 = vmatprep.subr.mxu0 0.0
      %245 = vmatpush1.msra.mxu0 0.0
      %246 = vmatprep.subr.mxu0 0.0
      %247 = vmatpush1.msra.mxu0 0.0
      %248 = vmatprep.subr.mxu0 0.0
      %249 = vmatpush1.msra.mxu0 0.0
      %250 = vmatprep.mubr.f32.mxu0 0.0
      %251 = vmatmul.mubr.f32.gmra.mrb[0].mxu0 %v184
      %v252 = vpop.f32.mrb[0].mxu0
      %v253 = vadd.f32 %v180, %v252
      %v254 = vpop.f32.mrb[0].mxu0
      %255 = vdwg.mxu0
      %v256 = vtanh.pop %v253
      %v258 = vlaneseq
      %v259 = vshrl.u32 %v258, 7
      %v260 = vsub.s32 0, %v259
      %v261 = vrot.slane %v59, %v260
      %v264 = vsel %vm182, %v256, 0
      %266 = vmatprep.subr.mxu0 0.0
      %267 = vmatpush1.msra.mxu0 %v55
      %268 = vmatprep.subr.mxu0 0.0
      %269 = vmatpush1.msra.mxu0 %v56
      %270 = vmatprep.subr.mxu0 0.0
      %271 = vmatpush1.msra.mxu0 %v57
      %272 = vmatprep.subr.mxu0 0.0
      %273 = vmatpush1.msra.mxu0 %v58
      %274 = vmatprep.subr.mxu0 0.0
      %275 = vmatpush1.msra.mxu0 0.0
      %276 = vmatprep.subr.mxu0 0.0
      %277 = vmatpush1.msra.mxu0 0.0
      %278 = vmatprep.subr.mxu0 0.0
      %279 = vmatpush1.msra.mxu0 0.0
      %280 = vmatprep.subr.mxu0 0.0
      %281 = vmatpush1.msra.mxu0 0.0
      %282 = vmatprep.subr.mxu0 0.0
      %283 = vmatpush1.msra.mxu0 0.0
      %284 = vmatprep.subr.mxu0 0.0
      %285 = vmatpush1.msra.mxu0 0.0
      %286 = vmatprep.subr.mxu0 0.0
      %287 = vmatpush1.msra.mxu0 0.0
      %288 = vmatprep.subr.mxu0 0.0
      %289 = vmatpush1.msra.mxu0 0.0
      %290 = vmatprep.subr.mxu0 0.0
      %291 = vmatpush1.msra.mxu0 0.0
      %292 = vmatprep.subr.mxu0 0.0
      %293 = vmatpush1.msra.mxu0 0.0
      %294 = vmatprep.subr.mxu0 0.0
      %295 = vmatpush1.msra.mxu0 0.0
      %296 = vmatprep.subr.mxu0 0.0
      %297 = vmatpush1.msra.mxu0 0.0
      %298 = vmatprep.subr.mxu0 0.0
      %299 = vmatpush1.msra.mxu0 0.0
      %300 = vmatprep.subr.mxu0 0.0
      %301 = vmatpush1.msra.mxu0 0.0
      %302 = vmatprep.subr.mxu0 0.0
      %303 = vmatpush1.msra.mxu0 0.0
      %304 = vmatprep.subr.mxu0 0.0
      %305 = vmatpush1.msra.mxu0 0.0
      %306 = vmatprep.subr.mxu0 0.0
      %307 = vmatpush1.msra.mxu0 0.0
      %308 = vmatprep.subr.mxu0 0.0
      %309 = vmatpush1.msra.mxu0 0.0
      %310 = vmatprep.subr.mxu0 0.0
      %311 = vmatpush1.msra.mxu0 0.0
      %312 = vmatprep.subr.mxu0 0.0
      %313 = vmatpush1.msra.mxu0 0.0
      %314 = vmatprep.subr.mxu0 0.0
      %315 = vmatpush1.msra.mxu0 0.0
      %316 = vmatprep.subr.mxu0 0.0
      %317 = vmatpush1.msra.mxu0 0.0
      %318 = vmatprep.subr.mxu0 0.0
      %319 = vmatpush1.msra.mxu0 0.0
      %320 = vmatprep.subr.mxu0 0.0
      %321 = vmatpush1.msra.mxu0 0.0
      %322 = vmatprep.subr.mxu0 0.0
      %323 = vmatpush1.msra.mxu0 0.0
      %324 = vmatprep.subr.mxu0 0.0
      %325 = vmatpush1.msra.mxu0 0.0
      %326 = vmatprep.subr.mxu0 0.0
      %327 = vmatpush1.msra.mxu0 0.0
      %328 = vmatprep.subr.mxu0 0.0
      %329 = vmatpush1.msra.mxu0 0.0
      %330 = vmatprep.mubr.f32.mxu0 0.0
      %331 = vmatmul.mubr.f32.gmra.mrb[0].mxu0 %v264
      %v332 = vpop.f32.mrb[0].mxu0
      %v333 = vadd.f32 %v261, %v332
      %v334 = vpop.f32.mrb[0].mxu0
      %335 = vdwg.mxu0
      %v336 = vstv %s82
      %v337 = vmul.f32 %v336, %v333
      %v338 = vadd.f32 %v69, %v337
      %v340 = vlaneseq
      %v341 = vshrl.u32 %v340, 7
      %v342 = vsub.s32 0, %v341
      %v343 = vrot.slane %v86, %v342
      %v346 = vsel %vm97, %v338, 0
      %348 = vmatprep.subr.mxu0 0.0
      %349 = vmatpush1.msra.mxu0 %v46
      %350 = vmatprep.subr.mxu0 0.0
      %351 = vmatpush1.msra.mxu0 %v103
      %352 = vmatprep.subr.mxu0 0.0
      %353 = vmatpush1.msra.mxu0 0.0
      %354 = vmatprep.subr.mxu0 0.0
      %355 = vmatpush1.msra.mxu0 0.0
      %356 = vmatprep.subr.mxu0 0.0
      %357 = vmatpush1.msra.mxu0 0.0
      %358 = vmatprep.subr.mxu0 0.0
      %359 = vmatpush1.msra.mxu0 0.0
      %360 = vmatprep.subr.mxu0 0.0
      %361 = vmatpush1.msra.mxu0 0.0
      %362 = vmatprep.subr.mxu0 0.0
      %363 = vmatpush1.msra.mxu0 0.0
      %364 = vmatprep.subr.mxu0 0.0
      %365 = vmatpush1.msra.mxu0 0.0
      %366 = vmatprep.subr.mxu0 0.0
      %367 = vmatpush1.msra.mxu0 0.0
      %368 = vmatprep.subr.mxu0 0.0
      %369 = vmatpush1.msra.mxu0 0.0
      %370 = vmatprep.subr.mxu0 0.0
      %371 = vmatpush1.msra.mxu0 0.0
      %372 = vmatprep.subr.mxu0 0.0
      %373 = vmatpush1.msra.mxu0 0.0
      %374 = vmatprep.subr.mxu0 0.0
      %375 = vmatpush1.msra.mxu0 0.0
      %376 = vmatprep.subr.mxu0 0.0
      %377 = vmatpush1.msra.mxu0 0.0
      %378 = vmatprep.subr.mxu0 0.0
      %379 = vmatpush1.msra.mxu0 0.0
      %380 = vmatprep.subr.mxu0 0.0
      %381 = vmatpush1.msra.mxu0 0.0
      %382 = vmatprep.subr.mxu0 0.0
      %383 = vmatpush1.msra.mxu0 0.0
      %384 = vmatprep.subr.mxu0 0.0
      %385 = vmatpush1.msra.mxu0 0.0
      %386 = vmatprep.subr.mxu0 0.0
      %387 = vmatpush1.msra.mxu0 0.0
      %388 = vmatprep.subr.mxu0 0.0
      %389 = vmatpush1.msra.mxu0 0.0
      %390 = vmatprep.subr.mxu0 0.0
      %391 = vmatpush1.msra.mxu0 0.0
      %392 = vmatprep.subr.mxu0 0.0
      %393 = vmatpush1.msra.mxu0 0.0
      %394 = vmatprep.subr.mxu0 0.0
      %395 = vmatpush1.msra.mxu0 0.0
      %396 = vmatprep.subr.mxu0 0.0
      %397 = vmatpush1.msra.mxu0 0.0
      %398 = vmatprep.subr.mxu0 0.0
      %399 = vmatpush1.msra.mxu0 0.0
      %400 = vmatprep.subr.mxu0 0.0
      %401 = vmatpush1.msra.mxu0 0.0
      %402 = vmatprep.subr.mxu0 0.0
      %403 = vmatpush1.msra.mxu0 0.0
      %404 = vmatprep.subr.mxu0 0.0
      %405 = vmatpush1.msra.mxu0 0.0
      %406 = vmatprep.subr.mxu0 0.0
      %407 = vmatpush1.msra.mxu0 0.0
      %408 = vmatprep.subr.mxu0 0.0
      %409 = vmatpush1.msra.mxu0 0.0
      %410 = vmatprep.subr.mxu0 0.0
      %411 = vmatpush1.msra.mxu0 0.0
      %412 = vmatprep.mubr.f32.mxu0 0.0
      %413 = vmatmul.mubr.f32.gmra.mrb[0].mxu0 %v346
      %v414 = vpop.f32.mrb[0].mxu0
      %v415 = vadd.f32 %v343, %v414
      %v416 = vpop.f32.mrb[0].mxu0
      %417 = vdwg.mxu0
      %v418 = vtanh.pop %v415
      %v420 = vsel %vm182, %v418, 0
      %422 = vmatprep.subr.mxu0 0.0
      %423 = vmatpush1.msra.mxu0 %v50
      %424 = vmatprep.subr.mxu0 0.0
      %425 = vmatpush1.msra.mxu0 %v51
      %426 = vmatprep.subr.mxu0 0.0
      %427 = vmatpush1.msra.mxu0 %v52
      %428 = vmatprep.subr.mxu0 0.0
      %429 = vmatpush1.msra.mxu0 %v53
      %430 = vmatprep.subr.mxu0 0.0
      %431 = vmatpush1.msra.mxu0 0.0
      %432 = vmatprep.subr.mxu0 0.0
      %433 = vmatpush1.msra.mxu0 0.0
      %434 = vmatprep.subr.mxu0 0.0
      %435 = vmatpush1.msra.mxu0 0.0
      %436 = vmatprep.subr.mxu0 0.0
      %437 = vmatpush1.msra.mxu0 0.0
      %438 = vmatprep.subr.mxu0 0.0
      %439 = vmatpush1.msra.mxu0 0.0
      %440 = vmatprep.subr.mxu0 0.0
      %441 = vmatpush1.msra.mxu0 0.0
      %442 = vmatprep.subr.mxu0 0.0
      %443 = vmatpush1.msra.mxu0 0.0
      %444 = vmatprep.subr.mxu0 0.0
      %445 = vmatpush1.msra.mxu0 0.0
      %446 = vmatprep.subr.mxu0 0.0
      %447 = vmatpush1.msra.mxu0 0.0
      %448 = vmatprep.subr.mxu0 0.0
      %449 = vmatpush1.msra.mxu0 0.0
      %450 = vmatprep.subr.mxu0 0.0
      %451 = vmatpush1.msra.mxu0 0.0
      %452 = vmatprep.subr.mxu0 0.0
      %453 = vmatpush1.msra.mxu0 0.0
      %454 = vmatprep.subr.mxu0 0.0
      %455 = vmatpush1.msra.mxu0 0.0
      %456 = vmatprep.subr.mxu0 0.0
      %457 = vmatpush1.msra.mxu0 0.0
      %458 = vmatprep.subr.mxu0 0.0
      %459 = vmatpush1.msra.mxu0 0.0
      %460 = vmatprep.subr.mxu0 0.0
      %461 = vmatpush1.msra.mxu0 0.0
      %462 = vmatprep.subr.mxu0 0.0
      %463 = vmatpush1.msra.mxu0 0.0
      %464 = vmatprep.subr.mxu0 0.0
      %465 = vmatpush1.msra.mxu0 0.0
      %466 = vmatprep.subr.mxu0 0.0
      %467 = vmatpush1.msra.mxu0 0.0
      %468 = vmatprep.subr.mxu0 0.0
      %469 = vmatpush1.msra.mxu0 0.0
      %470 = vmatprep.subr.mxu0 0.0
      %471 = vmatpush1.msra.mxu0 0.0
      %472 = vmatprep.subr.mxu0 0.0
      %473 = vmatpush1.msra.mxu0 0.0
      %474 = vmatprep.subr.mxu0 0.0
      %475 = vmatpush1.msra.mxu0 0.0
      %476 = vmatprep.subr.mxu0 0.0
      %477 = vmatpush1.msra.mxu0 0.0
      %478 = vmatprep.subr.mxu0 0.0
      %479 = vmatpush1.msra.mxu0 0.0
      %480 = vmatprep.subr.mxu0 0.0
      %481 = vmatpush1.msra.mxu0 0.0
      %482 = vmatprep.subr.mxu0 0.0
      %483 = vmatpush1.msra.mxu0 0.0
      %484 = vmatprep.subr.mxu0 0.0
      %485 = vmatpush1.msra.mxu0 0.0
      %486 = vmatprep.mubr.f32.mxu0 0.0
      %487 = vmatmul.mubr.f32.gmra.mrb[0].mxu0 %v420
      %v488 = vpop.f32.mrb[0].mxu0
      %v489 = vadd.f32 %v180, %v488
      %v490 = vpop.f32.mrb[0].mxu0
      %491 = vdwg.mxu0
      %v492 = vtanh.pop %v489
      %v494 = vsel %vm182, %v492, 0
      %496 = vmatprep.subr.mxu0 0.0
      %497 = vmatpush1.msra.mxu0 %v55
      %498 = vmatprep.subr.mxu0 0.0
      %499 = vmatpush1.msra.mxu0 %v56
      %500 = vmatprep.subr.mxu0 0.0
      %501 = vmatpush1.msra.mxu0 %v57
      %502 = vmatprep.subr.mxu0 0.0
      %503 = vmatpush1.msra.mxu0 %v58
      %504 = vmatprep.subr.mxu0 0.0
      %505 = vmatpush1.msra.mxu0 0.0
      %506 = vmatprep.subr.mxu0 0.0
      %507 = vmatpush1.msra.mxu0 0.0
      %508 = vmatprep.subr.mxu0 0.0
      %509 = vmatpush1.msra.mxu0 0.0
      %510 = vmatprep.subr.mxu0 0.0
      %511 = vmatpush1.msra.mxu0 0.0
      %512 = vmatprep.subr.mxu0 0.0
      %513 = vmatpush1.msra.mxu0 0.0
      %514 = vmatprep.subr.mxu0 0.0
      %515 = vmatpush1.msra.mxu0 0.0
      %516 = vmatprep.subr.mxu0 0.0
      %517 = vmatpush1.msra.mxu0 0.0
      %518 = vmatprep.subr.mxu0 0.0
      %519 = vmatpush1.msra.mxu0 0.0
      %520 = vmatprep.subr.mxu0 0.0
      %521 = vmatpush1.msra.mxu0 0.0
      %522 = vmatprep.subr.mxu0 0.0
      %523 = vmatpush1.msra.mxu0 0.0
      %524 = vmatprep.subr.mxu0 0.0
      %525 = vmatpush1.msra.mxu0 0.0
      %526 = vmatprep.subr.mxu0 0.0
      %527 = vmatpush1.msra.mxu0 0.0
      %528 = vmatprep.subr.mxu0 0.0
      %529 = vmatpush1.msra.mxu0 0.0
      %530 = vmatprep.subr.mxu0 0.0
      %531 = vmatpush1.msra.mxu0 0.0
      %532 = vmatprep.subr.mxu0 0.0
      %533 = vmatpush1.msra.mxu0 0.0
      %534 = vmatprep.subr.mxu0 0.0
      %535 = vmatpush1.msra.mxu0 0.0
      %536 = vmatprep.subr.mxu0 0.0
      %537 = vmatpush1.msra.mxu0 0.0
      %538 = vmatprep.subr.mxu0 0.0
      %539 = vmatpush1.msra.mxu0 0.0
      %540 = vmatprep.subr.mxu0 0.0
      %541 = vmatpush1.msra.mxu0 0.0
      %542 = vmatprep.subr.mxu0 0.0
      %543 = vmatpush1.msra.mxu0 0.0
      %544 = vmatprep.subr.mxu0 0.0
      %545 = vmatpush1.msra.mxu0 0.0
      %546 = vmatprep.subr.mxu0 0.0
      %547 = vmatpush1.msra.mxu0 0.0
      %548 = vmatprep.subr.mxu0 0.0
      %549 = vmatpush1.msra.mxu0 0.0
      %550 = vmatprep.subr.mxu0 0.0
      %551 = vmatpush1.msra.mxu0 0.0
      %552 = vmatprep.subr.mxu0 0.0
      %553 = vmatpush1.msra.mxu0 0.0
      %554 = vmatprep.subr.mxu0 0.0
      %555 = vmatpush1.msra.mxu0 0.0
      %556 = vmatprep.subr.mxu0 0.0
      %557 = vmatpush1.msra.mxu0 0.0
      %558 = vmatprep.subr.mxu0 0.0
      %559 = vmatpush1.msra.mxu0 0.0
      %560 = vmatprep.mubr.f32.mxu0 0.0
      %561 = vmatmul.mubr.f32.gmra.mrb[0].mxu0 %v494
      %v562 = vpop.f32.mrb[0].mxu0
      %v563 = vadd.f32 %v261, %v562
      %v564 = vpop.f32.mrb[0].mxu0
      %565 = vdwg.mxu0
      %v566 = vmul.f32 %v336, %v563
      %v567 = vadd.f32 %v69, %v566
      %v569 = vsel %vm97, %v567, 0
      %571 = vmatprep.subr.mxu0 0.0
      %572 = vmatpush1.msra.mxu0 %v46
      %573 = vmatprep.subr.mxu0 0.0
      %574 = vmatpush1.msra.mxu0 %v103
      %575 = vmatprep.subr.mxu0 0.0
      %576 = vmatpush1.msra.mxu0 0.0
      %577 = vmatprep.subr.mxu0 0.0
      %578 = vmatpush1.msra.mxu0 0.0
      %579 = vmatprep.subr.mxu0 0.0
      %580 = vmatpush1.msra.mxu0 0.0
      %581 = vmatprep.subr.mxu0 0.0
      %582 = vmatpush1.msra.mxu0 0.0
      %583 = vmatprep.subr.mxu0 0.0
      %584 = vmatpush1.msra.mxu0 0.0
      %585 = vmatprep.subr.mxu0 0.0
      %586 = vmatpush1.msra.mxu0 0.0
      %587 = vmatprep.subr.mxu0 0.0
      %588 = vmatpush1.msra.mxu0 0.0
      %589 = vmatprep.subr.mxu0 0.0
      %590 = vmatpush1.msra.mxu0 0.0
      %591 = vmatprep.subr.mxu0 0.0
      %592 = vmatpush1.msra.mxu0 0.0
      %593 = vmatprep.subr.mxu0 0.0
      %594 = vmatpush1.msra.mxu0 0.0
      %595 = vmatprep.subr.mxu0 0.0
      %596 = vmatpush1.msra.mxu0 0.0
      %597 = vmatprep.subr.mxu0 0.0
      %598 = vmatpush1.msra.mxu0 0.0
      %599 = vmatprep.subr.mxu0 0.0
      %600 = vmatpush1.msra.mxu0 0.0
      %601 = vmatprep.subr.mxu0 0.0
      %602 = vmatpush1.msra.mxu0 0.0
      %603 = vmatprep.subr.mxu0 0.0
      %604 = vmatpush1.msra.mxu0 0.0
      %605 = vmatprep.subr.mxu0 0.0
      %606 = vmatpush1.msra.mxu0 0.0
      %607 = vmatprep.subr.mxu0 0.0
      %608 = vmatpush1.msra.mxu0 0.0
      %609 = vmatprep.subr.mxu0 0.0
      %610 = vmatpush1.msra.mxu0 0.0
      %611 = vmatprep.subr.mxu0 0.0
      %612 = vmatpush1.msra.mxu0 0.0
      %613 = vmatprep.subr.mxu0 0.0
      %614 = vmatpush1.msra.mxu0 0.0
      %615 = vmatprep.subr.mxu0 0.0
      %616 = vmatpush1.msra.mxu0 0.0
      %617 = vmatprep.subr.mxu0 0.0
      %618 = vmatpush1.msra.mxu0 0.0
      %619 = vmatprep.subr.mxu0 0.0
      %620 = vmatpush1.msra.mxu0 0.0
      %621 = vmatprep.subr.mxu0 0.0
      %622 = vmatpush1.msra.mxu0 0.0
      %623 = vmatprep.subr.mxu0 0.0
      %624 = vmatpush1.msra.mxu0 0.0
      %625 = vmatprep.subr.mxu0 0.0
      %626 = vmatpush1.msra.mxu0 0.0
      %627 = vmatprep.subr.mxu0 0.0
      %628 = vmatpush1.msra.mxu0 0.0
      %629 = vmatprep.subr.mxu0 0.0
      %630 = vmatpush1.msra.mxu0 0.0
      %631 = vmatprep.subr.mxu0 0.0
      %632 = vmatpush1.msra.mxu0 0.0
      %633 = vmatprep.subr.mxu0 0.0
      %634 = vmatpush1.msra.mxu0 0.0
      %635 = vmatprep.mubr.f32.mxu0 0.0
      %636 = vmatmul.mubr.f32.gmra.mrb[0].mxu0 %v569
      %v637 = vpop.f32.mrb[0].mxu0
      %v638 = vadd.f32 %v343, %v637
      %v639 = vpop.f32.mrb[0].mxu0
      %640 = vdwg.mxu0
      %v641 = vtanh.pop %v638
      %v643 = vsel %vm182, %v641, 0
      %645 = vmatprep.subr.mxu0 0.0
      %646 = vmatpush1.msra.mxu0 %v50
      %647 = vmatprep.subr.mxu0 0.0
      %648 = vmatpush1.msra.mxu0 %v51
      %649 = vmatprep.subr.mxu0 0.0
      %650 = vmatpush1.msra.mxu0 %v52
      %651 = vmatprep.subr.mxu0 0.0
      %652 = vmatpush1.msra.mxu0 %v53
      %653 = vmatprep.subr.mxu0 0.0
      %654 = vmatpush1.msra.mxu0 0.0
      %655 = vmatprep.subr.mxu0 0.0
      %656 = vmatpush1.msra.mxu0 0.0
      %657 = vmatprep.subr.mxu0 0.0
      %658 = vmatpush1.msra.mxu0 0.0
      %659 = vmatprep.subr.mxu0 0.0
      %660 = vmatpush1.msra.mxu0 0.0
      %661 = vmatprep.subr.mxu0 0.0
      %662 = vmatpush1.msra.mxu0 0.0
      %663 = vmatprep.subr.mxu0 0.0
      %664 = vmatpush1.msra.mxu0 0.0
      %665 = vmatprep.subr.mxu0 0.0
      %666 = vmatpush1.msra.mxu0 0.0
      %667 = vmatprep.subr.mxu0 0.0
      %668 = vmatpush1.msra.mxu0 0.0
      %669 = vmatprep.subr.mxu0 0.0
      %670 = vmatpush1.msra.mxu0 0.0
      %671 = vmatprep.subr.mxu0 0.0
      %672 = vmatpush1.msra.mxu0 0.0
      %673 = vmatprep.subr.mxu0 0.0
      %674 = vmatpush1.msra.mxu0 0.0
      %675 = vmatprep.subr.mxu0 0.0
      %676 = vmatpush1.msra.mxu0 0.0
      %677 = vmatprep.subr.mxu0 0.0
      %678 = vmatpush1.msra.mxu0 0.0
      %679 = vmatprep.subr.mxu0 0.0
      %680 = vmatpush1.msra.mxu0 0.0
      %681 = vmatprep.subr.mxu0 0.0
      %682 = vmatpush1.msra.mxu0 0.0
      %683 = vmatprep.subr.mxu0 0.0
      %684 = vmatpush1.msra.mxu0 0.0
      %685 = vmatprep.subr.mxu0 0.0
      %686 = vmatpush1.msra.mxu0 0.0
      %687 = vmatprep.subr.mxu0 0.0
      %688 = vmatpush1.msra.mxu0 0.0
      %689 = vmatprep.subr.mxu0 0.0
      %690 = vmatpush1.msra.mxu0 0.0
      %691 = vmatprep.subr.mxu0 0.0
      %692 = vmatpush1.msra.mxu0 0.0
      %693 = vmatprep.subr.mxu0 0.0
      %694 = vmatpush1.msra.mxu0 0.0
      %695 = vmatprep.subr.mxu0 0.0
      %696 = vmatpush1.msra.mxu0 0.0
      %697 = vmatprep.subr.mxu0 0.0
      %698 = vmatpush1.msra.mxu0 0.0
      %699 = vmatprep.subr.mxu0 0.0
      %700 = vmatpush1.msra.mxu0 0.0
      %701 = vmatprep.subr.mxu0 0.0
      %702 = vmatpush1.msra.mxu0 0.0
      %703 = vmatprep.subr.mxu0 0.0
      %704 = vmatpush1.msra.mxu0 0.0
      %705 = vmatprep.subr.mxu0 0.0
      %706 = vmatpush1.msra.mxu0 0.0
      %707 = vmatprep.subr.mxu0 0.0
      %708 = vmatpush1.msra.mxu0 0.0
      %709 = vmatprep.mubr.f32.mxu0 0.0
      %710 = vmatmul.mubr.f32.gmra.mrb[0].mxu0 %v643
      %v711 = vpop.f32.mrb[0].mxu0
      %v712 = vadd.f32 %v180, %v711
      %v713 = vpop.f32.mrb[0].mxu0
      %714 = vdwg.mxu0
      %v715 = vtanh.pop %v712
      %v717 = vsel %vm182, %v715, 0
      %719 = vmatprep.subr.mxu0 0.0
      %720 = vmatpush1.msra.mxu0 %v55
      %721 = vmatprep.subr.mxu0 0.0
      %722 = vmatpush1.msra.mxu0 %v56
      %723 = vmatprep.subr.mxu0 0.0
      %724 = vmatpush1.msra.mxu0 %v57
      %725 = vmatprep.subr.mxu0 0.0
      %726 = vmatpush1.msra.mxu0 %v58
      %727 = vmatprep.subr.mxu0 0.0
      %728 = vmatpush1.msra.mxu0 0.0
      %729 = vmatprep.subr.mxu0 0.0
      %730 = vmatpush1.msra.mxu0 0.0
      %731 = vmatprep.subr.mxu0 0.0
      %732 = vmatpush1.msra.mxu0 0.0
      %733 = vmatprep.subr.mxu0 0.0
      %734 = vmatpush1.msra.mxu0 0.0
      %735 = vmatprep.subr.mxu0 0.0
      %736 = vmatpush1.msra.mxu0 0.0
      %737 = vmatprep.subr.mxu0 0.0
      %738 = vmatpush1.msra.mxu0 0.0
      %739 = vmatprep.subr.mxu0 0.0
      %740 = vmatpush1.msra.mxu0 0.0
      %741 = vmatprep.subr.mxu0 0.0
      %742 = vmatpush1.msra.mxu0 0.0
      %743 = vmatprep.subr.mxu0 0.0
      %744 = vmatpush1.msra.mxu0 0.0
      %745 = vmatprep.subr.mxu0 0.0
      %746 = vmatpush1.msra.mxu0 0.0
      %747 = vmatprep.subr.mxu0 0.0
      %748 = vmatpush1.msra.mxu0 0.0
      %749 = vmatprep.subr.mxu0 0.0
      %750 = vmatpush1.msra.mxu0 0.0
      %751 = vmatprep.subr.mxu0 0.0
      %752 = vmatpush1.msra.mxu0 0.0
      %753 = vmatprep.subr.mxu0 0.0
      %754 = vmatpush1.msra.mxu0 0.0
      %755 = vmatprep.subr.mxu0 0.0
      %756 = vmatpush1.msra.mxu0 0.0
      %757 = vmatprep.subr.mxu0 0.0
      %758 = vmatpush1.msra.mxu0 0.0
      %759 = vmatprep.subr.mxu0 0.0
      %760 = vmatpush1.msra.mxu0 0.0
      %761 = vmatprep.subr.mxu0 0.0
      %762 = vmatpush1.msra.mxu0 0.0
      %763 = vmatprep.subr.mxu0 0.0
      %764 = vmatpush1.msra.mxu0 0.0
      %765 = vmatprep.subr.mxu0 0.0
      %766 = vmatpush1.msra.mxu0 0.0
      %767 = vmatprep.subr.mxu0 0.0
      %768 = vmatpush1.msra.mxu0 0.0
      %769 = vmatprep.subr.mxu0 0.0
      %770 = vmatpush1.msra.mxu0 0.0
      %771 = vmatprep.subr.mxu0 0.0
      %772 = vmatpush1.msra.mxu0 0.0
      %773 = vmatprep.subr.mxu0 0.0
      %774 = vmatpush1.msra.mxu0 0.0
      %775 = vmatprep.subr.mxu0 0.0
      %776 = vmatpush1.msra.mxu0 0.0
      %777 = vmatprep.subr.mxu0 0.0
      %778 = vmatpush1.msra.mxu0 0.0
      %779 = vmatprep.subr.mxu0 0.0
      %780 = vmatpush1.msra.mxu0 0.0
      %781 = vmatprep.subr.mxu0 0.0
      %782 = vmatpush1.msra.mxu0 0.0
      %783 = vmatprep.mubr.f32.mxu0 0.0
      %784 = vmatmul.mubr.f32.gmra.mrb[0].mxu0 %v717
      %v785 = vpop.f32.mrb[0].mxu0
      %v786 = vadd.f32 %v261, %v785
      %v787 = vpop.f32.mrb[0].mxu0
      %788 = vdwg.mxu0
      %v789 = vstv %s76
      %v790 = vmul.f32 %v789, %v786
      %v791 = vadd.f32 %v69, %v790
      %v793 = vlaneseq
      %v794 = vshrl.u32 %v793, 7
      %v795 = vsub.s32 0, %v794
      %v796 = vrot.slane %v90, %v795
      %v799 = vsel %vm97, %v791, 0
      %801 = vmatprep.subr.mxu0 0.0
      %802 = vmatpush1.msra.mxu0 %v46
      %803 = vmatprep.subr.mxu0 0.0
      %804 = vmatpush1.msra.mxu0 %v103
      %805 = vmatprep.subr.mxu0 0.0
      %806 = vmatpush1.msra.mxu0 0.0
      %807 = vmatprep.subr.mxu0 0.0
      %808 = vmatpush1.msra.mxu0 0.0
      %809 = vmatprep.subr.mxu0 0.0
      %810 = vmatpush1.msra.mxu0 0.0
      %811 = vmatprep.subr.mxu0 0.0
      %812 = vmatpush1.msra.mxu0 0.0
      %813 = vmatprep.subr.mxu0 0.0
      %814 = vmatpush1.msra.mxu0 0.0
      %815 = vmatprep.subr.mxu0 0.0
      %816 = vmatpush1.msra.mxu0 0.0
      %817 = vmatprep.subr.mxu0 0.0
      %818 = vmatpush1.msra.mxu0 0.0
      %819 = vmatprep.subr.mxu0 0.0
      %820 = vmatpush1.msra.mxu0 0.0
      %821 = vmatprep.subr.mxu0 0.0
      %822 = vmatpush1.msra.mxu0 0.0
      %823 = vmatprep.subr.mxu0 0.0
      %824 = vmatpush1.msra.mxu0 0.0
      %825 = vmatprep.subr.mxu0 0.0
      %826 = vmatpush1.msra.mxu0 0.0
      %827 = vmatprep.subr.mxu0 0.0
      %828 = vmatpush1.msra.mxu0 0.0
      %829 = vmatprep.subr.mxu0 0.0
      %830 = vmatpush1.msra.mxu0 0.0
      %831 = vmatprep.subr.mxu0 0.0
      %832 = vmatpush1.msra.mxu0 0.0
      %833 = vmatprep.subr.mxu0 0.0
      %834 = vmatpush1.msra.mxu0 0.0
      %835 = vmatprep.subr.mxu0 0.0
      %836 = vmatpush1.msra.mxu0 0.0
      %837 = vmatprep.subr.mxu0 0.0
      %838 = vmatpush1.msra.mxu0 0.0
      %839 = vmatprep.subr.mxu0 0.0
      %840 = vmatpush1.msra.mxu0 0.0
      %841 = vmatprep.subr.mxu0 0.0
      %842 = vmatpush1.msra.mxu0 0.0
      %843 = vmatprep.subr.mxu0 0.0
      %844 = vmatpush1.msra.mxu0 0.0
      %845 = vmatprep.subr.mxu0 0.0
      %846 = vmatpush1.msra.mxu0 0.0
      %847 = vmatprep.subr.mxu0 0.0
      %848 = vmatpush1.msra.mxu0 0.0
      %849 = vmatprep.subr.mxu0 0.0
      %850 = vmatpush1.msra.mxu0 0.0
      %851 = vmatprep.subr.mxu0 0.0
      %852 = vmatpush1.msra.mxu0 0.0
      %853 = vmatprep.subr.mxu0 0.0
      %854 = vmatpush1.msra.mxu0 0.0
      %855 = vmatprep.subr.mxu0 0.0
      %856 = vmatpush1.msra.mxu0 0.0
      %857 = vmatprep.subr.mxu0 0.0
      %858 = vmatpush1.msra.mxu0 0.0
      %859 = vmatprep.subr.mxu0 0.0
      %860 = vmatpush1.msra.mxu0 0.0
      %861 = vmatprep.subr.mxu0 0.0
      %862 = vmatpush1.msra.mxu0 0.0
      %863 = vmatprep.subr.mxu0 0.0
      %864 = vmatpush1.msra.mxu0 0.0
      %865 = vmatprep.mubr.f32.mxu0 0.0
      %866 = vmatmul.mubr.f32.gmra.mrb[0].mxu0 %v799
      %v867 = vpop.f32.mrb[0].mxu0
      %v868 = vadd.f32 %v796, %v867
      %v869 = vpop.f32.mrb[0].mxu0
      %870 = vdwg.mxu0
      %v871 = vtanh.pop %v868
      %v873 = vsel %vm182, %v871, 0
      %875 = vmatprep.subr.mxu0 0.0
      %876 = vmatpush1.msra.mxu0 %v50
      %877 = vmatprep.subr.mxu0 0.0
      %878 = vmatpush1.msra.mxu0 %v51
      %879 = vmatprep.subr.mxu0 0.0
      %880 = vmatpush1.msra.mxu0 %v52
      %881 = vmatprep.subr.mxu0 0.0
      %882 = vmatpush1.msra.mxu0 %v53
      %883 = vmatprep.subr.mxu0 0.0
      %884 = vmatpush1.msra.mxu0 0.0
      %885 = vmatprep.subr.mxu0 0.0
      %886 = vmatpush1.msra.mxu0 0.0
      %887 = vmatprep.subr.mxu0 0.0
      %888 = vmatpush1.msra.mxu0 0.0
      %889 = vmatprep.subr.mxu0 0.0
      %890 = vmatpush1.msra.mxu0 0.0
      %891 = vmatprep.subr.mxu0 0.0
      %892 = vmatpush1.msra.mxu0 0.0
      %893 = vmatprep.subr.mxu0 0.0
      %894 = vmatpush1.msra.mxu0 0.0
      %895 = vmatprep.subr.mxu0 0.0
      %896 = vmatpush1.msra.mxu0 0.0
      %897 = vmatprep.subr.mxu0 0.0
      %898 = vmatpush1.msra.mxu0 0.0
      %899 = vmatprep.subr.mxu0 0.0
      %900 = vmatpush1.msra.mxu0 0.0
      %901 = vmatprep.subr.mxu0 0.0
      %902 = vmatpush1.msra.mxu0 0.0
      %903 = vmatprep.subr.mxu0 0.0
      %904 = vmatpush1.msra.mxu0 0.0
      %905 = vmatprep.subr.mxu0 0.0
      %906 = vmatpush1.msra.mxu0 0.0
      %907 = vmatprep.subr.mxu0 0.0
      %908 = vmatpush1.msra.mxu0 0.0
      %909 = vmatprep.subr.mxu0 0.0
      %910 = vmatpush1.msra.mxu0 0.0
      %911 = vmatprep.subr.mxu0 0.0
      %912 = vmatpush1.msra.mxu0 0.0
      %913 = vmatprep.subr.mxu0 0.0
      %914 = vmatpush1.msra.mxu0 0.0
      %915 = vmatprep.subr.mxu0 0.0
      %916 = vmatpush1.msra.mxu0 0.0
      %917 = vmatprep.subr.mxu0 0.0
      %918 = vmatpush1.msra.mxu0 0.0
      %919 = vmatprep.subr.mxu0 0.0
      %920 = vmatpush1.msra.mxu0 0.0
      %921 = vmatprep.subr.mxu0 0.0
      %922 = vmatpush1.msra.mxu0 0.0
      %923 = vmatprep.subr.mxu0 0.0
      %924 = vmatpush1.msra.mxu0 0.0
      %925 = vmatprep.subr.mxu0 0.0
      %926 = vmatpush1.msra.mxu0 0.0
      %927 = vmatprep.subr.mxu0 0.0
      %928 = vmatpush1.msra.mxu0 0.0
      %929 = vmatprep.subr.mxu0 0.0
      %930 = vmatpush1.msra.mxu0 0.0
      %931 = vmatprep.subr.mxu0 0.0
      %932 = vmatpush1.msra.mxu0 0.0
      %933 = vmatprep.subr.mxu0 0.0
      %934 = vmatpush1.msra.mxu0 0.0
      %935 = vmatprep.subr.mxu0 0.0
      %936 = vmatpush1.msra.mxu0 0.0
      %937 = vmatprep.subr.mxu0 0.0
      %938 = vmatpush1.msra.mxu0 0.0
      %939 = vmatprep.mubr.f32.mxu0 0.0
      %940 = vmatmul.mubr.f32.gmra.mrb[0].mxu0 %v873
      %v941 = vpop.f32.mrb[0].mxu0
      %v942 = vadd.f32 %v180, %v941
      %v943 = vpop.f32.mrb[0].mxu0
      %944 = vdwg.mxu0
      %v945 = vtanh.pop %v942
      %v947 = vsel %vm182, %v945, 0
      %949 = vmatprep.subr.mxu0 0.0
      %950 = vmatpush1.msra.mxu0 %v55
      %951 = vmatprep.subr.mxu0 0.0
      %952 = vmatpush1.msra.mxu0 %v56
      %953 = vmatprep.subr.mxu0 0.0
      %954 = vmatpush1.msra.mxu0 %v57
      %955 = vmatprep.subr.mxu0 0.0
      %956 = vmatpush1.msra.mxu0 %v58
      %957 = vmatprep.subr.mxu0 0.0
      %958 = vmatpush1.msra.mxu0 0.0
      %959 = vmatprep.subr.mxu0 0.0
      %960 = vmatpush1.msra.mxu0 0.0
      %961 = vmatprep.subr.mxu0 0.0
      %962 = vmatpush1.msra.mxu0 0.0
      %963 = vmatprep.subr.mxu0 0.0
      %964 = vmatpush1.msra.mxu0 0.0
      %965 = vmatprep.subr.mxu0 0.0
      %966 = vmatpush1.msra.mxu0 0.0
      %967 = vmatprep.subr.mxu0 0.0
      %968 = vmatpush1.msra.mxu0 0.0
      %969 = vmatprep.subr.mxu0 0.0
      %970 = vmatpush1.msra.mxu0 0.0
      %971 = vmatprep.subr.mxu0 0.0
      %972 = vmatpush1.msra.mxu0 0.0
      %973 = vmatprep.subr.mxu0 0.0
      %974 = vmatpush1.msra.mxu0 0.0
      %975 = vmatprep.subr.mxu0 0.0
      %976 = vmatpush1.msra.mxu0 0.0
      %977 = vmatprep.subr.mxu0 0.0
      %978 = vmatpush1.msra.mxu0 0.0
      %979 = vmatprep.subr.mxu0 0.0
      %980 = vmatpush1.msra.mxu0 0.0
      %981 = vmatprep.subr.mxu0 0.0
      %982 = vmatpush1.msra.mxu0 0.0
      %983 = vmatprep.subr.mxu0 0.0
      %984 = vmatpush1.msra.mxu0 0.0
      %985 = vmatprep.subr.mxu0 0.0
      %986 = vmatpush1.msra.mxu0 0.0
      %987 = vmatprep.subr.mxu0 0.0
      %988 = vmatpush1.msra.mxu0 0.0
      %989 = vmatprep.subr.mxu0 0.0
      %990 = vmatpush1.msra.mxu0 0.0
      %991 = vmatprep.subr.mxu0 0.0
      %992 = vmatpush1.msra.mxu0 0.0
      %993 = vmatprep.subr.mxu0 0.0
      %994 = vmatpush1.msra.mxu0 0.0
      %995 = vmatprep.subr.mxu0 0.0
      %996 = vmatpush1.msra.mxu0 0.0
      %997 = vmatprep.subr.mxu0 0.0
      %998 = vmatpush1.msra.mxu0 0.0
      %999 = vmatprep.subr.mxu0 0.0
      %1000 = vmatpush1.msra.mxu0 0.0
      %1001 = vmatprep.subr.mxu0 0.0
      %1002 = vmatpush1.msra.mxu0 0.0
      %1003 = vmatprep.subr.mxu0 0.0
      %1004 = vmatpush1.msra.mxu0 0.0
      %1005 = vmatprep.subr.mxu0 0.0
      %1006 = vmatpush1.msra.mxu0 0.0
      %1007 = vmatprep.subr.mxu0 0.0
      %1008 = vmatpush1.msra.mxu0 0.0
      %1009 = vmatprep.subr.mxu0 0.0
      %1010 = vmatpush1.msra.mxu0 0.0
      %1011 = vmatprep.subr.mxu0 0.0
      %1012 = vmatpush1.msra.mxu0 0.0
      %1013 = vmatprep.mubr.f32.mxu0 0.0
      %1014 = vmatmul.mubr.f32.gmra.mrb[0].mxu0 %v947
      %v1015 = vpop.f32.mrb[0].mxu0
      %v1016 = vadd.f32 %v261, %v1015
      %v1017 = vpop.f32.mrb[0].mxu0
      %1018 = vdwg.mxu0
      %v1019 = vrcp.pop 6.0
      %s1020 = vtos %v1019
      %s1021 = smul.f32 %s76, %s1020
      %v1022 = vmul.f32 %v563, 2.0
      %v1023 = vadd.f32 %v333, %v1022
      %v1024 = vmul.f32 %v786, 2.0
      %v1025 = vadd.f32 %v1023, %v1024
      %v1026 = vadd.f32 %v1025, %v1016
      %v1027 = vstv %s1021
      %v1028 = vmul.f32 %v1027, %v1026
      %v1029 = vadd.f32 %v69, %v1028
      %s1030 = sadd.f32 %s71, %s76
      %v1031 = vstv %s1030
      %v1032 = vmul.f32 %v1031, %v48
      %v1033 = vadd.f32 %v1032, %v49
      %s1034 = sadd.f32 %s1030, %s82
      %v1035 = vstv %s1034
      %v1036 = vmul.f32 %v1035, %v48
      %v1037 = vadd.f32 %v1036, %v49
      %s1038 = sadd.f32 %s1030, %s76
      %v1039 = vstv %s1038
      %v1040 = vmul.f32 %v1039, %v48
      %v1041 = vadd.f32 %v1040, %v49
      %v1043 = vlaneseq
      %v1044 = vshrl.u32 %v1043, 7
      %v1045 = vsub.s32 0, %v1044
      %v1046 = vrot.slane %v1033, %v1045
      %v1049 = vsel %vm97, %v1029, 0
      %1051 = vmatprep.subr.mxu0 0.0
      %1052 = vmatpush1.msra.mxu0 %v46
      %1053 = vmatprep.subr.mxu0 0.0
      %1054 = vmatpush1.msra.mxu0 %v103
      %1055 = vmatprep.subr.mxu0 0.0
      %1056 = vmatpush1.msra.mxu0 0.0
      %1057 = vmatprep.subr.mxu0 0.0
      %1058 = vmatpush1.msra.mxu0 0.0
      %1059 = vmatprep.subr.mxu0 0.0
      %1060 = vmatpush1.msra.mxu0 0.0
      %1061 = vmatprep.subr.mxu0 0.0
      %1062 = vmatpush1.msra.mxu0 0.0
      %1063 = vmatprep.subr.mxu0 0.0
      %1064 = vmatpush1.msra.mxu0 0.0
      %1065 = vmatprep.subr.mxu0 0.0
      %1066 = vmatpush1.msra.mxu0 0.0
      %1067 = vmatprep.subr.mxu0 0.0
      %1068 = vmatpush1.msra.mxu0 0.0
      %1069 = vmatprep.subr.mxu0 0.0
      %1070 = vmatpush1.msra.mxu0 0.0
      %1071 = vmatprep.subr.mxu0 0.0
      %1072 = vmatpush1.msra.mxu0 0.0
      %1073 = vmatprep.subr.mxu0 0.0
      %1074 = vmatpush1.msra.mxu0 0.0
      %1075 = vmatprep.subr.mxu0 0.0
      %1076 = vmatpush1.msra.mxu0 0.0
      %1077 = vmatprep.subr.mxu0 0.0
      %1078 = vmatpush1.msra.mxu0 0.0
      %1079 = vmatprep.subr.mxu0 0.0
      %1080 = vmatpush1.msra.mxu0 0.0
      %1081 = vmatprep.subr.mxu0 0.0
      %1082 = vmatpush1.msra.mxu0 0.0
      %1083 = vmatprep.subr.mxu0 0.0
      %1084 = vmatpush1.msra.mxu0 0.0
      %1085 = vmatprep.subr.mxu0 0.0
      %1086 = vmatpush1.msra.mxu0 0.0
      %1087 = vmatprep.subr.mxu0 0.0
      %1088 = vmatpush1.msra.mxu0 0.0
      %1089 = vmatprep.subr.mxu0 0.0
      %1090 = vmatpush1.msra.mxu0 0.0
      %1091 = vmatprep.subr.mxu0 0.0
      %1092 = vmatpush1.msra.mxu0 0.0
      %1093 = vmatprep.subr.mxu0 0.0
      %1094 = vmatpush1.msra.mxu0 0.0
      %1095 = vmatprep.subr.mxu0 0.0
      %1096 = vmatpush1.msra.mxu0 0.0
      %1097 = vmatprep.subr.mxu0 0.0
      %1098 = vmatpush1.msra.mxu0 0.0
      %1099 = vmatprep.subr.mxu0 0.0
      %1100 = vmatpush1.msra.mxu0 0.0
      %1101 = vmatprep.subr.mxu0 0.0
      %1102 = vmatpush1.msra.mxu0 0.0
      %1103 = vmatprep.subr.mxu0 0.0
      %1104 = vmatpush1.msra.mxu0 0.0
      %1105 = vmatprep.subr.mxu0 0.0
      %1106 = vmatpush1.msra.mxu0 0.0
      %1107 = vmatprep.subr.mxu0 0.0
      %1108 = vmatpush1.msra.mxu0 0.0
      %1109 = vmatprep.subr.mxu0 0.0
      %1110 = vmatpush1.msra.mxu0 0.0
      %1111 = vmatprep.subr.mxu0 0.0
      %1112 = vmatpush1.msra.mxu0 0.0
      %1113 = vmatprep.subr.mxu0 0.0
      %1114 = vmatpush1.msra.mxu0 0.0
      %1115 = vmatprep.mubr.f32.mxu0 0.0
      %1116 = vmatmul.mubr.f32.gmra.mrb[0].mxu0 %v1049
      %v1117 = vpop.f32.mrb[0].mxu0
      %v1118 = vadd.f32 %v1046, %v1117
      %v1119 = vpop.f32.mrb[0].mxu0
      %1120 = vdwg.mxu0
      %v1121 = vtanh.pop %v1118
      %v1123 = vsel %vm182, %v1121, 0
      %1125 = vmatprep.subr.mxu0 0.0
      %1126 = vmatpush1.msra.mxu0 %v50
      %1127 = vmatprep.subr.mxu0 0.0
      %1128 = vmatpush1.msra.mxu0 %v51
      %1129 = vmatprep.subr.mxu0 0.0
      %1130 = vmatpush1.msra.mxu0 %v52
      %1131 = vmatprep.subr.mxu0 0.0
      %1132 = vmatpush1.msra.mxu0 %v53
      %1133 = vmatprep.subr.mxu0 0.0
      %1134 = vmatpush1.msra.mxu0 0.0
      %1135 = vmatprep.subr.mxu0 0.0
      %1136 = vmatpush1.msra.mxu0 0.0
      %1137 = vmatprep.subr.mxu0 0.0
      %1138 = vmatpush1.msra.mxu0 0.0
      %1139 = vmatprep.subr.mxu0 0.0
      %1140 = vmatpush1.msra.mxu0 0.0
      %1141 = vmatprep.subr.mxu0 0.0
      %1142 = vmatpush1.msra.mxu0 0.0
      %1143 = vmatprep.subr.mxu0 0.0
      %1144 = vmatpush1.msra.mxu0 0.0
      %1145 = vmatprep.subr.mxu0 0.0
      %1146 = vmatpush1.msra.mxu0 0.0
      %1147 = vmatprep.subr.mxu0 0.0
      %1148 = vmatpush1.msra.mxu0 0.0
      %1149 = vmatprep.subr.mxu0 0.0
      %1150 = vmatpush1.msra.mxu0 0.0
      %1151 = vmatprep.subr.mxu0 0.0
      %1152 = vmatpush1.msra.mxu0 0.0
      %1153 = vmatprep.subr.mxu0 0.0
      %1154 = vmatpush1.msra.mxu0 0.0
      %1155 = vmatprep.subr.mxu0 0.0
      %1156 = vmatpush1.msra.mxu0 0.0
      %1157 = vmatprep.subr.mxu0 0.0
      %1158 = vmatpush1.msra.mxu0 0.0
      %1159 = vmatprep.subr.mxu0 0.0
      %1160 = vmatpush1.msra.mxu0 0.0
      %1161 = vmatprep.subr.mxu0 0.0
      %1162 = vmatpush1.msra.mxu0 0.0
      %1163 = vmatprep.subr.mxu0 0.0
      %1164 = vmatpush1.msra.mxu0 0.0
      %1165 = vmatprep.subr.mxu0 0.0
      %1166 = vmatpush1.msra.mxu0 0.0
      %1167 = vmatprep.subr.mxu0 0.0
      %1168 = vmatpush1.msra.mxu0 0.0
      %1169 = vmatprep.subr.mxu0 0.0
      %1170 = vmatpush1.msra.mxu0 0.0
      %1171 = vmatprep.subr.mxu0 0.0
      %1172 = vmatpush1.msra.mxu0 0.0
      %1173 = vmatprep.subr.mxu0 0.0
      %1174 = vmatpush1.msra.mxu0 0.0
      %1175 = vmatprep.subr.mxu0 0.0
      %1176 = vmatpush1.msra.mxu0 0.0
      %1177 = vmatprep.subr.mxu0 0.0
      %1178 = vmatpush1.msra.mxu0 0.0
      %1179 = vmatprep.subr.mxu0 0.0
      %1180 = vmatpush1.msra.mxu0 0.0
      %1181 = vmatprep.subr.mxu0 0.0
      %1182 = vmatpush1.msra.mxu0 0.0
      %1183 = vmatprep.subr.mxu0 0.0
      %1184 = vmatpush1.msra.mxu0 0.0
      %1185 = vmatprep.subr.mxu0 0.0
      %1186 = vmatpush1.msra.mxu0 0.0
      %1187 = vmatprep.subr.mxu0 0.0
      %1188 = vmatpush1.msra.mxu0 0.0
      %1189 = vmatprep.mubr.f32.mxu0 0.0
      %1190 = vmatmul.mubr.f32.gmra.mrb[0].mxu0 %v1123
      %v1191 = vpop.f32.mrb[0].mxu0
      %v1192 = vadd.f32 %v180, %v1191
      %v1193 = vpop.f32.mrb[0].mxu0
      %1194 = vdwg.mxu0
      %v1195 = vtanh.pop %v1192
      %v1197 = vsel %vm182, %v1195, 0
      %1199 = vmatprep.subr.mxu0 0.0
      %1200 = vmatpush1.msra.mxu0 %v55
      %1201 = vmatprep.subr.mxu0 0.0
      %1202 = vmatpush1.msra.mxu0 %v56
      %1203 = vmatprep.subr.mxu0 0.0
      %1204 = vmatpush1.msra.mxu0 %v57
      %1205 = vmatprep.subr.mxu0 0.0
      %1206 = vmatpush1.msra.mxu0 %v58
      %1207 = vmatprep.subr.mxu0 0.0
      %1208 = vmatpush1.msra.mxu0 0.0
      %1209 = vmatprep.subr.mxu0 0.0
      %1210 = vmatpush1.msra.mxu0 0.0
      %1211 = vmatprep.subr.mxu0 0.0
      %1212 = vmatpush1.msra.mxu0 0.0
      %1213 = vmatprep.subr.mxu0 0.0
      %1214 = vmatpush1.msra.mxu0 0.0
      %1215 = vmatprep.subr.mxu0 0.0
      %1216 = vmatpush1.msra.mxu0 0.0
      %1217 = vmatprep.subr.mxu0 0.0
      %1218 = vmatpush1.msra.mxu0 0.0
      %1219 = vmatprep.subr.mxu0 0.0
      %1220 = vmatpush1.msra.mxu0 0.0
      %1221 = vmatprep.subr.mxu0 0.0
      %1222 = vmatpush1.msra.mxu0 0.0
      %1223 = vmatprep.subr.mxu0 0.0
      %1224 = vmatpush1.msra.mxu0 0.0
      %1225 = vmatprep.subr.mxu0 0.0
      %1226 = vmatpush1.msra.mxu0 0.0
      %1227 = vmatprep.subr.mxu0 0.0
      %1228 = vmatpush1.msra.mxu0 0.0
      %1229 = vmatprep.subr.mxu0 0.0
      %1230 = vmatpush1.msra.mxu0 0.0
      %1231 = vmatprep.subr.mxu0 0.0
      %1232 = vmatpush1.msra.mxu0 0.0
      %1233 = vmatprep.subr.mxu0 0.0
      %1234 = vmatpush1.msra.mxu0 0.0
      %1235 = vmatprep.subr.mxu0 0.0
      %1236 = vmatpush1.msra.mxu0 0.0
      %1237 = vmatprep.subr.mxu0 0.0
      %1238 = vmatpush1.msra.mxu0 0.0
      %1239 = vmatprep.subr.mxu0 0.0
      %1240 = vmatpush1.msra.mxu0 0.0
      %1241 = vmatprep.subr.mxu0 0.0
      %1242 = vmatpush1.msra.mxu0 0.0
      %1243 = vmatprep.subr.mxu0 0.0
      %1244 = vmatpush1.msra.mxu0 0.0
      %1245 = vmatprep.subr.mxu0 0.0
      %1246 = vmatpush1.msra.mxu0 0.0
      %1247 = vmatprep.subr.mxu0 0.0
      %1248 = vmatpush1.msra.mxu0 0.0
      %1249 = vmatprep.subr.mxu0 0.0
      %1250 = vmatpush1.msra.mxu0 0.0
      %1251 = vmatprep.subr.mxu0 0.0
      %1252 = vmatpush1.msra.mxu0 0.0
      %1253 = vmatprep.subr.mxu0 0.0
      %1254 = vmatpush1.msra.mxu0 0.0
      %1255 = vmatprep.subr.mxu0 0.0
      %1256 = vmatpush1.msra.mxu0 0.0
      %1257 = vmatprep.subr.mxu0 0.0
      %1258 = vmatpush1.msra.mxu0 0.0
      %1259 = vmatprep.subr.mxu0 0.0
      %1260 = vmatpush1.msra.mxu0 0.0
      %1261 = vmatprep.subr.mxu0 0.0
      %1262 = vmatpush1.msra.mxu0 0.0
      %1263 = vmatprep.mubr.f32.mxu0 0.0
      %1264 = vmatmul.mubr.f32.gmra.mrb[0].mxu0 %v1197
      %v1265 = vpop.f32.mrb[0].mxu0
      %v1266 = vadd.f32 %v261, %v1265
      %v1267 = vpop.f32.mrb[0].mxu0
      %1268 = vdwg.mxu0
      %v1269 = vmul.f32 %v336, %v1266
      %v1270 = vadd.f32 %v1029, %v1269
      %v1272 = vlaneseq
      %v1273 = vshrl.u32 %v1272, 7
      %v1274 = vsub.s32 0, %v1273
      %v1275 = vrot.slane %v1037, %v1274
      %v1278 = vsel %vm97, %v1270, 0
      %1280 = vmatprep.subr.mxu0 0.0
      %1281 = vmatpush1.msra.mxu0 %v46
      %1282 = vmatprep.subr.mxu0 0.0
      %1283 = vmatpush1.msra.mxu0 %v103
      %1284 = vmatprep.subr.mxu0 0.0
      %1285 = vmatpush1.msra.mxu0 0.0
      %1286 = vmatprep.subr.mxu0 0.0
      %1287 = vmatpush1.msra.mxu0 0.0
      %1288 = vmatprep.subr.mxu0 0.0
      %1289 = vmatpush1.msra.mxu0 0.0
      %1290 = vmatprep.subr.mxu0 0.0
      %1291 = vmatpush1.msra.mxu0 0.0
      %1292 = vmatprep.subr.mxu0 0.0
      %1293 = vmatpush1.msra.mxu0 0.0
      %1294 = vmatprep.subr.mxu0 0.0
      %1295 = vmatpush1.msra.mxu0 0.0
      %1296 = vmatprep.subr.mxu0 0.0
      %1297 = vmatpush1.msra.mxu0 0.0
      %1298 = vmatprep.subr.mxu0 0.0
      %1299 = vmatpush1.msra.mxu0 0.0
      %1300 = vmatprep.subr.mxu0 0.0
      %1301 = vmatpush1.msra.mxu0 0.0
      %1302 = vmatprep.subr.mxu0 0.0
      %1303 = vmatpush1.msra.mxu0 0.0
      %1304 = vmatprep.subr.mxu0 0.0
      %1305 = vmatpush1.msra.mxu0 0.0
      %1306 = vmatprep.subr.mxu0 0.0
      %1307 = vmatpush1.msra.mxu0 0.0
      %1308 = vmatprep.subr.mxu0 0.0
      %1309 = vmatpush1.msra.mxu0 0.0
      %1310 = vmatprep.subr.mxu0 0.0
      %1311 = vmatpush1.msra.mxu0 0.0
      %1312 = vmatprep.subr.mxu0 0.0
      %1313 = vmatpush1.msra.mxu0 0.0
      %1314 = vmatprep.subr.mxu0 0.0
      %1315 = vmatpush1.msra.mxu0 0.0
      %1316 = vmatprep.subr.mxu0 0.0
      %1317 = vmatpush1.msra.mxu0 0.0
      %1318 = vmatprep.subr.mxu0 0.0
      %1319 = vmatpush1.msra.mxu0 0.0
      %1320 = vmatprep.subr.mxu0 0.0
      %1321 = vmatpush1.msra.mxu0 0.0
      %1322 = vmatprep.subr.mxu0 0.0
      %1323 = vmatpush1.msra.mxu0 0.0
      %1324 = vmatprep.subr.mxu0 0.0
      %1325 = vmatpush1.msra.mxu0 0.0
      %1326 = vmatprep.subr.mxu0 0.0
      %1327 = vmatpush1.msra.mxu0 0.0
      %1328 = vmatprep.subr.mxu0 0.0
      %1329 = vmatpush1.msra.mxu0 0.0
      %1330 = vmatprep.subr.mxu0 0.0
      %1331 = vmatpush1.msra.mxu0 0.0
      %1332 = vmatprep.subr.mxu0 0.0
      %1333 = vmatpush1.msra.mxu0 0.0
      %1334 = vmatprep.subr.mxu0 0.0
      %1335 = vmatpush1.msra.mxu0 0.0
      %1336 = vmatprep.subr.mxu0 0.0
      %1337 = vmatpush1.msra.mxu0 0.0
      %1338 = vmatprep.subr.mxu0 0.0
      %1339 = vmatpush1.msra.mxu0 0.0
      %1340 = vmatprep.subr.mxu0 0.0
      %1341 = vmatpush1.msra.mxu0 0.0
      %1342 = vmatprep.subr.mxu0 0.0
      %1343 = vmatpush1.msra.mxu0 0.0
      %1344 = vmatprep.mubr.f32.mxu0 0.0
      %1345 = vmatmul.mubr.f32.gmra.mrb[0].mxu0 %v1278
      %v1346 = vpop.f32.mrb[0].mxu0
      %v1347 = vadd.f32 %v1275, %v1346
      %v1348 = vpop.f32.mrb[0].mxu0
      %1349 = vdwg.mxu0
      %v1350 = vtanh.pop %v1347
      %v1352 = vsel %vm182, %v1350, 0
      %1354 = vmatprep.subr.mxu0 0.0
      %1355 = vmatpush1.msra.mxu0 %v50
      %1356 = vmatprep.subr.mxu0 0.0
      %1357 = vmatpush1.msra.mxu0 %v51
      %1358 = vmatprep.subr.mxu0 0.0
      %1359 = vmatpush1.msra.mxu0 %v52
      %1360 = vmatprep.subr.mxu0 0.0
      %1361 = vmatpush1.msra.mxu0 %v53
      %1362 = vmatprep.subr.mxu0 0.0
      %1363 = vmatpush1.msra.mxu0 0.0
      %1364 = vmatprep.subr.mxu0 0.0
      %1365 = vmatpush1.msra.mxu0 0.0
      %1366 = vmatprep.subr.mxu0 0.0
      %1367 = vmatpush1.msra.mxu0 0.0
      %1368 = vmatprep.subr.mxu0 0.0
      %1369 = vmatpush1.msra.mxu0 0.0
      %1370 = vmatprep.subr.mxu0 0.0
      %1371 = vmatpush1.msra.mxu0 0.0
      %1372 = vmatprep.subr.mxu0 0.0
      %1373 = vmatpush1.msra.mxu0 0.0
      %1374 = vmatprep.subr.mxu0 0.0
      %1375 = vmatpush1.msra.mxu0 0.0
      %1376 = vmatprep.subr.mxu0 0.0
      %1377 = vmatpush1.msra.mxu0 0.0
      %1378 = vmatprep.subr.mxu0 0.0
      %1379 = vmatpush1.msra.mxu0 0.0
      %1380 = vmatprep.subr.mxu0 0.0
      %1381 = vmatpush1.msra.mxu0 0.0
      %1382 = vmatprep.subr.mxu0 0.0
      %1383 = vmatpush1.msra.mxu0 0.0
      %1384 = vmatprep.subr.mxu0 0.0
      %1385 = vmatpush1.msra.mxu0 0.0
      %1386 = vmatprep.subr.mxu0 0.0
      %1387 = vmatpush1.msra.mxu0 0.0
      %1388 = vmatprep.subr.mxu0 0.0
      %1389 = vmatpush1.msra.mxu0 0.0
      %1390 = vmatprep.subr.mxu0 0.0
      %1391 = vmatpush1.msra.mxu0 0.0
      %1392 = vmatprep.subr.mxu0 0.0
      %1393 = vmatpush1.msra.mxu0 0.0
      %1394 = vmatprep.subr.mxu0 0.0
      %1395 = vmatpush1.msra.mxu0 0.0
      %1396 = vmatprep.subr.mxu0 0.0
      %1397 = vmatpush1.msra.mxu0 0.0
      %1398 = vmatprep.subr.mxu0 0.0
      %1399 = vmatpush1.msra.mxu0 0.0
      %1400 = vmatprep.subr.mxu0 0.0
      %1401 = vmatpush1.msra.mxu0 0.0
      %1402 = vmatprep.subr.mxu0 0.0
      %1403 = vmatpush1.msra.mxu0 0.0
      %1404 = vmatprep.subr.mxu0 0.0
      %1405 = vmatpush1.msra.mxu0 0.0
      %1406 = vmatprep.subr.mxu0 0.0
      %1407 = vmatpush1.msra.mxu0 0.0
      %1408 = vmatprep.subr.mxu0 0.0
      %1409 = vmatpush1.msra.mxu0 0.0
      %1410 = vmatprep.subr.mxu0 0.0
      %1411 = vmatpush1.msra.mxu0 0.0
      %1412 = vmatprep.subr.mxu0 0.0
      %1413 = vmatpush1.msra.mxu0 0.0
      %1414 = vmatprep.subr.mxu0 0.0
      %1415 = vmatpush1.msra.mxu0 0.0
      %1416 = vmatprep.subr.mxu0 0.0
      %1417 = vmatpush1.msra.mxu0 0.0
      %1418 = vmatprep.mubr.f32.mxu0 0.0
      %1419 = vmatmul.mubr.f32.gmra.mrb[0].mxu0 %v1352
      %v1420 = vpop.f32.mrb[0].mxu0
      %v1421 = vadd.f32 %v180, %v1420
      %v1422 = vpop.f32.mrb[0].mxu0
      %1423 = vdwg.mxu0
      %v1424 = vtanh.pop %v1421
      %v1426 = vsel %vm182, %v1424, 0
      %1428 = vmatprep.subr.mxu0 0.0
      %1429 = vmatpush1.msra.mxu0 %v55
      %1430 = vmatprep.subr.mxu0 0.0
      %1431 = vmatpush1.msra.mxu0 %v56
      %1432 = vmatprep.subr.mxu0 0.0
      %1433 = vmatpush1.msra.mxu0 %v57
      %1434 = vmatprep.subr.mxu0 0.0
      %1435 = vmatpush1.msra.mxu0 %v58
      %1436 = vmatprep.subr.mxu0 0.0
      %1437 = vmatpush1.msra.mxu0 0.0
      %1438 = vmatprep.subr.mxu0 0.0
      %1439 = vmatpush1.msra.mxu0 0.0
      %1440 = vmatprep.subr.mxu0 0.0
      %1441 = vmatpush1.msra.mxu0 0.0
      %1442 = vmatprep.subr.mxu0 0.0
      %1443 = vmatpush1.msra.mxu0 0.0
      %1444 = vmatprep.subr.mxu0 0.0
      %1445 = vmatpush1.msra.mxu0 0.0
      %1446 = vmatprep.subr.mxu0 0.0
      %1447 = vmatpush1.msra.mxu0 0.0
      %1448 = vmatprep.subr.mxu0 0.0
      %1449 = vmatpush1.msra.mxu0 0.0
      %1450 = vmatprep.subr.mxu0 0.0
      %1451 = vmatpush1.msra.mxu0 0.0
      %1452 = vmatprep.subr.mxu0 0.0
      %1453 = vmatpush1.msra.mxu0 0.0
      %1454 = vmatprep.subr.mxu0 0.0
      %1455 = vmatpush1.msra.mxu0 0.0
      %1456 = vmatprep.subr.mxu0 0.0
      %1457 = vmatpush1.msra.mxu0 0.0
      %1458 = vmatprep.subr.mxu0 0.0
      %1459 = vmatpush1.msra.mxu0 0.0
      %1460 = vmatprep.subr.mxu0 0.0
      %1461 = vmatpush1.msra.mxu0 0.0
      %1462 = vmatprep.subr.mxu0 0.0
      %1463 = vmatpush1.msra.mxu0 0.0
      %1464 = vmatprep.subr.mxu0 0.0
      %1465 = vmatpush1.msra.mxu0 0.0
      %1466 = vmatprep.subr.mxu0 0.0
      %1467 = vmatpush1.msra.mxu0 0.0
      %1468 = vmatprep.subr.mxu0 0.0
      %1469 = vmatpush1.msra.mxu0 0.0
      %1470 = vmatprep.subr.mxu0 0.0
      %1471 = vmatpush1.msra.mxu0 0.0
      %1472 = vmatprep.subr.mxu0 0.0
      %1473 = vmatpush1.msra.mxu0 0.0
      %1474 = vmatprep.subr.mxu0 0.0
      %1475 = vmatpush1.msra.mxu0 0.0
      %1476 = vmatprep.subr.mxu0 0.0
      %1477 = vmatpush1.msra.mxu0 0.0
      %1478 = vmatprep.subr.mxu0 0.0
      %1479 = vmatpush1.msra.mxu0 0.0
      %1480 = vmatprep.subr.mxu0 0.0
      %1481 = vmatpush1.msra.mxu0 0.0
      %1482 = vmatprep.subr.mxu0 0.0
      %1483 = vmatpush1.msra.mxu0 0.0
      %1484 = vmatprep.subr.mxu0 0.0
      %1485 = vmatpush1.msra.mxu0 0.0
      %1486 = vmatprep.subr.mxu0 0.0
      %1487 = vmatpush1.msra.mxu0 0.0
      %1488 = vmatprep.subr.mxu0 0.0
      %1489 = vmatpush1.msra.mxu0 0.0
      %1490 = vmatprep.subr.mxu0 0.0
      %1491 = vmatpush1.msra.mxu0 0.0
      %1492 = vmatprep.mubr.f32.mxu0 0.0
      %1493 = vmatmul.mubr.f32.gmra.mrb[0].mxu0 %v1426
      %v1494 = vpop.f32.mrb[0].mxu0
      %v1495 = vadd.f32 %v261, %v1494
      %v1496 = vpop.f32.mrb[0].mxu0
      %1497 = vdwg.mxu0
      %v1498 = vmul.f32 %v336, %v1495
      %v1499 = vadd.f32 %v1029, %v1498
      %v1501 = vsel %vm97, %v1499, 0
      %1503 = vmatprep.subr.mxu0 0.0
      %1504 = vmatpush1.msra.mxu0 %v46
      %1505 = vmatprep.subr.mxu0 0.0
      %1506 = vmatpush1.msra.mxu0 %v103
      %1507 = vmatprep.subr.mxu0 0.0
      %1508 = vmatpush1.msra.mxu0 0.0
      %1509 = vmatprep.subr.mxu0 0.0
      %1510 = vmatpush1.msra.mxu0 0.0
      %1511 = vmatprep.subr.mxu0 0.0
      %1512 = vmatpush1.msra.mxu0 0.0
      %1513 = vmatprep.subr.mxu0 0.0
      %1514 = vmatpush1.msra.mxu0 0.0
      %1515 = vmatprep.subr.mxu0 0.0
      %1516 = vmatpush1.msra.mxu0 0.0
      %1517 = vmatprep.subr.mxu0 0.0
      %1518 = vmatpush1.msra.mxu0 0.0
      %1519 = vmatprep.subr.mxu0 0.0
      %1520 = vmatpush1.msra.mxu0 0.0
      %1521 = vmatprep.subr.mxu0 0.0
      %1522 = vmatpush1.msra.mxu0 0.0
      %1523 = vmatprep.subr.mxu0 0.0
      %1524 = vmatpush1.msra.mxu0 0.0
      %1525 = vmatprep.subr.mxu0 0.0
      %1526 = vmatpush1.msra.mxu0 0.0
      %1527 = vmatprep.subr.mxu0 0.0
      %1528 = vmatpush1.msra.mxu0 0.0
      %1529 = vmatprep.subr.mxu0 0.0
      %1530 = vmatpush1.msra.mxu0 0.0
      %1531 = vmatprep.subr.mxu0 0.0
      %1532 = vmatpush1.msra.mxu0 0.0
      %1533 = vmatprep.subr.mxu0 0.0
      %1534 = vmatpush1.msra.mxu0 0.0
      %1535 = vmatprep.subr.mxu0 0.0
      %1536 = vmatpush1.msra.mxu0 0.0
      %1537 = vmatprep.subr.mxu0 0.0
      %1538 = vmatpush1.msra.mxu0 0.0
      %1539 = vmatprep.subr.mxu0 0.0
      %1540 = vmatpush1.msra.mxu0 0.0
      %1541 = vmatprep.subr.mxu0 0.0
      %1542 = vmatpush1.msra.mxu0 0.0
      %1543 = vmatprep.subr.mxu0 0.0
      %1544 = vmatpush1.msra.mxu0 0.0
      %1545 = vmatprep.subr.mxu0 0.0
      %1546 = vmatpush1.msra.mxu0 0.0
      %1547 = vmatprep.subr.mxu0 0.0
      %1548 = vmatpush1.msra.mxu0 0.0
      %1549 = vmatprep.subr.mxu0 0.0
      %1550 = vmatpush1.msra.mxu0 0.0
      %1551 = vmatprep.subr.mxu0 0.0
      %1552 = vmatpush1.msra.mxu0 0.0
      %1553 = vmatprep.subr.mxu0 0.0
      %1554 = vmatpush1.msra.mxu0 0.0
      %1555 = vmatprep.subr.mxu0 0.0
      %1556 = vmatpush1.msra.mxu0 0.0
      %1557 = vmatprep.subr.mxu0 0.0
      %1558 = vmatpush1.msra.mxu0 0.0
      %1559 = vmatprep.subr.mxu0 0.0
      %1560 = vmatpush1.msra.mxu0 0.0
      %1561 = vmatprep.subr.mxu0 0.0
      %1562 = vmatpush1.msra.mxu0 0.0
      %1563 = vmatprep.subr.mxu0 0.0
      %1564 = vmatpush1.msra.mxu0 0.0
      %1565 = vmatprep.subr.mxu0 0.0
      %1566 = vmatpush1.msra.mxu0 0.0
      %1567 = vmatprep.mubr.f32.mxu0 0.0
      %1568 = vmatmul.mubr.f32.gmra.mrb[0].mxu0 %v1501
      %v1569 = vpop.f32.mrb[0].mxu0
      %v1570 = vadd.f32 %v1275, %v1569
      %v1571 = vpop.f32.mrb[0].mxu0
      %1572 = vdwg.mxu0
      %v1573 = vtanh.pop %v1570
      %v1575 = vsel %vm182, %v1573, 0
      %1577 = vmatprep.subr.mxu0 0.0
      %1578 = vmatpush1.msra.mxu0 %v50
      %1579 = vmatprep.subr.mxu0 0.0
      %1580 = vmatpush1.msra.mxu0 %v51
      %1581 = vmatprep.subr.mxu0 0.0
      %1582 = vmatpush1.msra.mxu0 %v52
      %1583 = vmatprep.subr.mxu0 0.0
      %1584 = vmatpush1.msra.mxu0 %v53
      %1585 = vmatprep.subr.mxu0 0.0
      %1586 = vmatpush1.msra.mxu0 0.0
      %1587 = vmatprep.subr.mxu0 0.0
      %1588 = vmatpush1.msra.mxu0 0.0
      %1589 = vmatprep.subr.mxu0 0.0
      %1590 = vmatpush1.msra.mxu0 0.0
      %1591 = vmatprep.subr.mxu0 0.0
      %1592 = vmatpush1.msra.mxu0 0.0
      %1593 = vmatprep.subr.mxu0 0.0
      %1594 = vmatpush1.msra.mxu0 0.0
      %1595 = vmatprep.subr.mxu0 0.0
      %1596 = vmatpush1.msra.mxu0 0.0
      %1597 = vmatprep.subr.mxu0 0.0
      %1598 = vmatpush1.msra.mxu0 0.0
      %1599 = vmatprep.subr.mxu0 0.0
      %1600 = vmatpush1.msra.mxu0 0.0
      %1601 = vmatprep.subr.mxu0 0.0
      %1602 = vmatpush1.msra.mxu0 0.0
      %1603 = vmatprep.subr.mxu0 0.0
      %1604 = vmatpush1.msra.mxu0 0.0
      %1605 = vmatprep.subr.mxu0 0.0
      %1606 = vmatpush1.msra.mxu0 0.0
      %1607 = vmatprep.subr.mxu0 0.0
      %1608 = vmatpush1.msra.mxu0 0.0
      %1609 = vmatprep.subr.mxu0 0.0
      %1610 = vmatpush1.msra.mxu0 0.0
      %1611 = vmatprep.subr.mxu0 0.0
      %1612 = vmatpush1.msra.mxu0 0.0
      %1613 = vmatprep.subr.mxu0 0.0
      %1614 = vmatpush1.msra.mxu0 0.0
      %1615 = vmatprep.subr.mxu0 0.0
      %1616 = vmatpush1.msra.mxu0 0.0
      %1617 = vmatprep.subr.mxu0 0.0
      %1618 = vmatpush1.msra.mxu0 0.0
      %1619 = vmatprep.subr.mxu0 0.0
      %1620 = vmatpush1.msra.mxu0 0.0
      %1621 = vmatprep.subr.mxu0 0.0
      %1622 = vmatpush1.msra.mxu0 0.0
      %1623 = vmatprep.subr.mxu0 0.0
      %1624 = vmatpush1.msra.mxu0 0.0
      %1625 = vmatprep.subr.mxu0 0.0
      %1626 = vmatpush1.msra.mxu0 0.0
      %1627 = vmatprep.subr.mxu0 0.0
      %1628 = vmatpush1.msra.mxu0 0.0
      %1629 = vmatprep.subr.mxu0 0.0
      %1630 = vmatpush1.msra.mxu0 0.0
      %1631 = vmatprep.subr.mxu0 0.0
      %1632 = vmatpush1.msra.mxu0 0.0
      %1633 = vmatprep.subr.mxu0 0.0
      %1634 = vmatpush1.msra.mxu0 0.0
      %1635 = vmatprep.subr.mxu0 0.0
      %1636 = vmatpush1.msra.mxu0 0.0
      %1637 = vmatprep.subr.mxu0 0.0
      %1638 = vmatpush1.msra.mxu0 0.0
      %1639 = vmatprep.subr.mxu0 0.0
      %1640 = vmatpush1.msra.mxu0 0.0
      %1641 = vmatprep.mubr.f32.mxu0 0.0
      %1642 = vmatmul.mubr.f32.gmra.mrb[0].mxu0 %v1575
      %v1643 = vpop.f32.mrb[0].mxu0
      %v1644 = vadd.f32 %v180, %v1643
      %v1645 = vpop.f32.mrb[0].mxu0
      %1646 = vdwg.mxu0
      %v1647 = vtanh.pop %v1644
      %v1649 = vsel %vm182, %v1647, 0
      %1651 = vmatprep.subr.mxu0 0.0
      %1652 = vmatpush1.msra.mxu0 %v55
      %1653 = vmatprep.subr.mxu0 0.0
      %1654 = vmatpush1.msra.mxu0 %v56
      %1655 = vmatprep.subr.mxu0 0.0
      %1656 = vmatpush1.msra.mxu0 %v57
      %1657 = vmatprep.subr.mxu0 0.0
      %1658 = vmatpush1.msra.mxu0 %v58
      %1659 = vmatprep.subr.mxu0 0.0
      %1660 = vmatpush1.msra.mxu0 0.0
      %1661 = vmatprep.subr.mxu0 0.0
      %1662 = vmatpush1.msra.mxu0 0.0
      %1663 = vmatprep.subr.mxu0 0.0
      %1664 = vmatpush1.msra.mxu0 0.0
      %1665 = vmatprep.subr.mxu0 0.0
      %1666 = vmatpush1.msra.mxu0 0.0
      %1667 = vmatprep.subr.mxu0 0.0
      %1668 = vmatpush1.msra.mxu0 0.0
      %1669 = vmatprep.subr.mxu0 0.0
      %1670 = vmatpush1.msra.mxu0 0.0
      %1671 = vmatprep.subr.mxu0 0.0
      %1672 = vmatpush1.msra.mxu0 0.0
      %1673 = vmatprep.subr.mxu0 0.0
      %1674 = vmatpush1.msra.mxu0 0.0
      %1675 = vmatprep.subr.mxu0 0.0
      %1676 = vmatpush1.msra.mxu0 0.0
      %1677 = vmatprep.subr.mxu0 0.0
      %1678 = vmatpush1.msra.mxu0 0.0
      %1679 = vmatprep.subr.mxu0 0.0
      %1680 = vmatpush1.msra.mxu0 0.0
      %1681 = vmatprep.subr.mxu0 0.0
      %1682 = vmatpush1.msra.mxu0 0.0
      %1683 = vmatprep.subr.mxu0 0.0
      %1684 = vmatpush1.msra.mxu0 0.0
      %1685 = vmatprep.subr.mxu0 0.0
      %1686 = vmatpush1.msra.mxu0 0.0
      %1687 = vmatprep.subr.mxu0 0.0
      %1688 = vmatpush1.msra.mxu0 0.0
      %1689 = vmatprep.subr.mxu0 0.0
      %1690 = vmatpush1.msra.mxu0 0.0
      %1691 = vmatprep.subr.mxu0 0.0
      %1692 = vmatpush1.msra.mxu0 0.0
      %1693 = vmatprep.subr.mxu0 0.0
      %1694 = vmatpush1.msra.mxu0 0.0
      %1695 = vmatprep.subr.mxu0 0.0
      %1696 = vmatpush1.msra.mxu0 0.0
      %1697 = vmatprep.subr.mxu0 0.0
      %1698 = vmatpush1.msra.mxu0 0.0
      %1699 = vmatprep.subr.mxu0 0.0
      %1700 = vmatpush1.msra.mxu0 0.0
      %1701 = vmatprep.subr.mxu0 0.0
      %1702 = vmatpush1.msra.mxu0 0.0
      %1703 = vmatprep.subr.mxu0 0.0
      %1704 = vmatpush1.msra.mxu0 0.0
      %1705 = vmatprep.subr.mxu0 0.0
      %1706 = vmatpush1.msra.mxu0 0.0
      %1707 = vmatprep.subr.mxu0 0.0
      %1708 = vmatpush1.msra.mxu0 0.0
      %1709 = vmatprep.subr.mxu0 0.0
      %1710 = vmatpush1.msra.mxu0 0.0
      %1711 = vmatprep.subr.mxu0 0.0
      %1712 = vmatpush1.msra.mxu0 0.0
      %1713 = vmatprep.subr.mxu0 0.0
      %1714 = vmatpush1.msra.mxu0 0.0
      %1715 = vmatprep.mubr.f32.mxu0 0.0
      %1716 = vmatmul.mubr.f32.gmra.mrb[0].mxu0 %v1649
      %v1717 = vpop.f32.mrb[0].mxu0
      %v1718 = vadd.f32 %v261, %v1717
      %v1719 = vpop.f32.mrb[0].mxu0
      %1720 = vdwg.mxu0
      %v1721 = vmul.f32 %v789, %v1718
      %v1722 = vadd.f32 %v1029, %v1721
      %v1724 = vlaneseq
      %v1725 = vshrl.u32 %v1724, 7
      %v1726 = vsub.s32 0, %v1725
      %v1727 = vrot.slane %v1041, %v1726
      %v1730 = vsel %vm97, %v1722, 0
      %1732 = vmatprep.subr.mxu0 0.0
      %1733 = vmatpush1.msra.mxu0 %v46
      %1734 = vmatprep.subr.mxu0 0.0
      %1735 = vmatpush1.msra.mxu0 %v103
      %1736 = vmatprep.subr.mxu0 0.0
      %1737 = vmatpush1.msra.mxu0 0.0
      %1738 = vmatprep.subr.mxu0 0.0
      %1739 = vmatpush1.msra.mxu0 0.0
      %1740 = vmatprep.subr.mxu0 0.0
      %1741 = vmatpush1.msra.mxu0 0.0
      %1742 = vmatprep.subr.mxu0 0.0
      %1743 = vmatpush1.msra.mxu0 0.0
      %1744 = vmatprep.subr.mxu0 0.0
      %1745 = vmatpush1.msra.mxu0 0.0
      %1746 = vmatprep.subr.mxu0 0.0
      %1747 = vmatpush1.msra.mxu0 0.0
      %1748 = vmatprep.subr.mxu0 0.0
      %1749 = vmatpush1.msra.mxu0 0.0
      %1750 = vmatprep.subr.mxu0 0.0
      %1751 = vmatpush1.msra.mxu0 0.0
      %1752 = vmatprep.subr.mxu0 0.0
      %1753 = vmatpush1.msra.mxu0 0.0
      %1754 = vmatprep.subr.mxu0 0.0
      %1755 = vmatpush1.msra.mxu0 0.0
      %1756 = vmatprep.subr.mxu0 0.0
      %1757 = vmatpush1.msra.mxu0 0.0
      %1758 = vmatprep.subr.mxu0 0.0
      %1759 = vmatpush1.msra.mxu0 0.0
      %1760 = vmatprep.subr.mxu0 0.0
      %1761 = vmatpush1.msra.mxu0 0.0
      %1762 = vmatprep.subr.mxu0 0.0
      %1763 = vmatpush1.msra.mxu0 0.0
      %1764 = vmatprep.subr.mxu0 0.0
      %1765 = vmatpush1.msra.mxu0 0.0
      %1766 = vmatprep.subr.mxu0 0.0
      %1767 = vmatpush1.msra.mxu0 0.0
      %1768 = vmatprep.subr.mxu0 0.0
      %1769 = vmatpush1.msra.mxu0 0.0
      %1770 = vmatprep.subr.mxu0 0.0
      %1771 = vmatpush1.msra.mxu0 0.0
      %1772 = vmatprep.subr.mxu0 0.0
      %1773 = vmatpush1.msra.mxu0 0.0
      %1774 = vmatprep.subr.mxu0 0.0
      %1775 = vmatpush1.msra.mxu0 0.0
      %1776 = vmatprep.subr.mxu0 0.0
      %1777 = vmatpush1.msra.mxu0 0.0
      %1778 = vmatprep.subr.mxu0 0.0
      %1779 = vmatpush1.msra.mxu0 0.0
      %1780 = vmatprep.subr.mxu0 0.0
      %1781 = vmatpush1.msra.mxu0 0.0
      %1782 = vmatprep.subr.mxu0 0.0
      %1783 = vmatpush1.msra.mxu0 0.0
      %1784 = vmatprep.subr.mxu0 0.0
      %1785 = vmatpush1.msra.mxu0 0.0
      %1786 = vmatprep.subr.mxu0 0.0
      %1787 = vmatpush1.msra.mxu0 0.0
      %1788 = vmatprep.subr.mxu0 0.0
      %1789 = vmatpush1.msra.mxu0 0.0
      %1790 = vmatprep.subr.mxu0 0.0
      %1791 = vmatpush1.msra.mxu0 0.0
      %1792 = vmatprep.subr.mxu0 0.0
      %1793 = vmatpush1.msra.mxu0 0.0
      %1794 = vmatprep.subr.mxu0 0.0
      %1795 = vmatpush1.msra.mxu0 0.0
      %1796 = vmatprep.mubr.f32.mxu0 0.0
      %1797 = vmatmul.mubr.f32.gmra.mrb[0].mxu0 %v1730
      %v1798 = vpop.f32.mrb[0].mxu0
      %v1799 = vadd.f32 %v1727, %v1798
      %v1800 = vpop.f32.mrb[0].mxu0
      %1801 = vdwg.mxu0
      %v1802 = vtanh.pop %v1799
      %v1804 = vsel %vm182, %v1802, 0
      %1806 = vmatprep.subr.mxu0 0.0
      %1807 = vmatpush1.msra.mxu0 %v50
      %1808 = vmatprep.subr.mxu0 0.0
      %1809 = vmatpush1.msra.mxu0 %v51
      %1810 = vmatprep.subr.mxu0 0.0
      %1811 = vmatpush1.msra.mxu0 %v52
      %1812 = vmatprep.subr.mxu0 0.0
      %1813 = vmatpush1.msra.mxu0 %v53
      %1814 = vmatprep.subr.mxu0 0.0
      %1815 = vmatpush1.msra.mxu0 0.0
      %1816 = vmatprep.subr.mxu0 0.0
      %1817 = vmatpush1.msra.mxu0 0.0
      %1818 = vmatprep.subr.mxu0 0.0
      %1819 = vmatpush1.msra.mxu0 0.0
      %1820 = vmatprep.subr.mxu0 0.0
      %1821 = vmatpush1.msra.mxu0 0.0
      %1822 = vmatprep.subr.mxu0 0.0
      %1823 = vmatpush1.msra.mxu0 0.0
      %1824 = vmatprep.subr.mxu0 0.0
      %1825 = vmatpush1.msra.mxu0 0.0
      %1826 = vmatprep.subr.mxu0 0.0
      %1827 = vmatpush1.msra.mxu0 0.0
      %1828 = vmatprep.subr.mxu0 0.0
      %1829 = vmatpush1.msra.mxu0 0.0
      %1830 = vmatprep.subr.mxu0 0.0
      %1831 = vmatpush1.msra.mxu0 0.0
      %1832 = vmatprep.subr.mxu0 0.0
      %1833 = vmatpush1.msra.mxu0 0.0
      %1834 = vmatprep.subr.mxu0 0.0
      %1835 = vmatpush1.msra.mxu0 0.0
      %1836 = vmatprep.subr.mxu0 0.0
      %1837 = vmatpush1.msra.mxu0 0.0
      %1838 = vmatprep.subr.mxu0 0.0
      %1839 = vmatpush1.msra.mxu0 0.0
      %1840 = vmatprep.subr.mxu0 0.0
      %1841 = vmatpush1.msra.mxu0 0.0
      %1842 = vmatprep.subr.mxu0 0.0
      %1843 = vmatpush1.msra.mxu0 0.0
      %1844 = vmatprep.subr.mxu0 0.0
      %1845 = vmatpush1.msra.mxu0 0.0
      %1846 = vmatprep.subr.mxu0 0.0
      %1847 = vmatpush1.msra.mxu0 0.0
      %1848 = vmatprep.subr.mxu0 0.0
      %1849 = vmatpush1.msra.mxu0 0.0
      %1850 = vmatprep.subr.mxu0 0.0
      %1851 = vmatpush1.msra.mxu0 0.0
      %1852 = vmatprep.subr.mxu0 0.0
      %1853 = vmatpush1.msra.mxu0 0.0
      %1854 = vmatprep.subr.mxu0 0.0
      %1855 = vmatpush1.msra.mxu0 0.0
      %1856 = vmatprep.subr.mxu0 0.0
      %1857 = vmatpush1.msra.mxu0 0.0
      %1858 = vmatprep.subr.mxu0 0.0
      %1859 = vmatpush1.msra.mxu0 0.0
      %1860 = vmatprep.subr.mxu0 0.0
      %1861 = vmatpush1.msra.mxu0 0.0
      %1862 = vmatprep.subr.mxu0 0.0
      %1863 = vmatpush1.msra.mxu0 0.0
      %1864 = vmatprep.subr.mxu0 0.0
      %1865 = vmatpush1.msra.mxu0 0.0
      %1866 = vmatprep.subr.mxu0 0.0
      %1867 = vmatpush1.msra.mxu0 0.0
      %1868 = vmatprep.subr.mxu0 0.0
      %1869 = vmatpush1.msra.mxu0 0.0
      %1870 = vmatprep.mubr.f32.mxu0 0.0
      %1871 = vmatmul.mubr.f32.gmra.mrb[0].mxu0 %v1804
      %v1872 = vpop.f32.mrb[0].mxu0
      %v1873 = vadd.f32 %v180, %v1872
      %v1874 = vpop.f32.mrb[0].mxu0
      %1875 = vdwg.mxu0
      %v1876 = vtanh.pop %v1873
      %v1878 = vsel %vm182, %v1876, 0
      %1880 = vmatprep.subr.mxu0 0.0
      %1881 = vmatpush1.msra.mxu0 %v55
      %1882 = vmatprep.subr.mxu0 0.0
      %1883 = vmatpush1.msra.mxu0 %v56
      %1884 = vmatprep.subr.mxu0 0.0
      %1885 = vmatpush1.msra.mxu0 %v57
      %1886 = vmatprep.subr.mxu0 0.0
      %1887 = vmatpush1.msra.mxu0 %v58
      %1888 = vmatprep.subr.mxu0 0.0
      %1889 = vmatpush1.msra.mxu0 0.0
      %1890 = vmatprep.subr.mxu0 0.0
      %1891 = vmatpush1.msra.mxu0 0.0
      %1892 = vmatprep.subr.mxu0 0.0
      %1893 = vmatpush1.msra.mxu0 0.0
      %1894 = vmatprep.subr.mxu0 0.0
      %1895 = vmatpush1.msra.mxu0 0.0
      %1896 = vmatprep.subr.mxu0 0.0
      %1897 = vmatpush1.msra.mxu0 0.0
      %1898 = vmatprep.subr.mxu0 0.0
      %1899 = vmatpush1.msra.mxu0 0.0
      %1900 = vmatprep.subr.mxu0 0.0
      %1901 = vmatpush1.msra.mxu0 0.0
      %1902 = vmatprep.subr.mxu0 0.0
      %1903 = vmatpush1.msra.mxu0 0.0
      %1904 = vmatprep.subr.mxu0 0.0
      %1905 = vmatpush1.msra.mxu0 0.0
      %1906 = vmatprep.subr.mxu0 0.0
      %1907 = vmatpush1.msra.mxu0 0.0
      %1908 = vmatprep.subr.mxu0 0.0
      %1909 = vmatpush1.msra.mxu0 0.0
      %1910 = vmatprep.subr.mxu0 0.0
      %1911 = vmatpush1.msra.mxu0 0.0
      %1912 = vmatprep.subr.mxu0 0.0
      %1913 = vmatpush1.msra.mxu0 0.0
      %1914 = vmatprep.subr.mxu0 0.0
      %1915 = vmatpush1.msra.mxu0 0.0
      %1916 = vmatprep.subr.mxu0 0.0
      %1917 = vmatpush1.msra.mxu0 0.0
      %1918 = vmatprep.subr.mxu0 0.0
      %1919 = vmatpush1.msra.mxu0 0.0
      %1920 = vmatprep.subr.mxu0 0.0
      %1921 = vmatpush1.msra.mxu0 0.0
      %1922 = vmatprep.subr.mxu0 0.0
      %1923 = vmatpush1.msra.mxu0 0.0
      %1924 = vmatprep.subr.mxu0 0.0
      %1925 = vmatpush1.msra.mxu0 0.0
      %1926 = vmatprep.subr.mxu0 0.0
      %1927 = vmatpush1.msra.mxu0 0.0
      %1928 = vmatprep.subr.mxu0 0.0
      %1929 = vmatpush1.msra.mxu0 0.0
      %1930 = vmatprep.subr.mxu0 0.0
      %1931 = vmatpush1.msra.mxu0 0.0
      %1932 = vmatprep.subr.mxu0 0.0
      %1933 = vmatpush1.msra.mxu0 0.0
      %1934 = vmatprep.subr.mxu0 0.0
      %1935 = vmatpush1.msra.mxu0 0.0
      %1936 = vmatprep.subr.mxu0 0.0
      %1937 = vmatpush1.msra.mxu0 0.0
      %1938 = vmatprep.subr.mxu0 0.0
      %1939 = vmatpush1.msra.mxu0 0.0
      %1940 = vmatprep.subr.mxu0 0.0
      %1941 = vmatpush1.msra.mxu0 0.0
      %1942 = vmatprep.subr.mxu0 0.0
      %1943 = vmatpush1.msra.mxu0 0.0
      %1944 = vmatprep.mubr.f32.mxu0 0.0
      %1945 = vmatmul.mubr.f32.gmra.mrb[0].mxu0 %v1878
      %v1946 = vpop.f32.mrb[0].mxu0
      %v1947 = vadd.f32 %v261, %v1946
      %v1948 = vpop.f32.mrb[0].mxu0
      %1949 = vdwg.mxu0
      %v1950 = vmul.f32 %v1495, 2.0
      %v1951 = vadd.f32 %v1266, %v1950
      %v1952 = vmul.f32 %v1718, 2.0
      %v1953 = vadd.f32 %v1951, %v1952
      %v1954 = vadd.f32 %v1953, %v1947
      %v1955 = vmul.f32 %v1027, %v1954
      %v1956 = vadd.f32 %v1029, %v1955
      %s1957 = smul.f32 %s76, 2.0
      %s1958 = sadd.f32 %s71, %s1957
      %v1959 = vstv %s1958
      %v1960 = vmul.f32 %v1959, %v48
      %v1961 = vadd.f32 %v1960, %v49
      %s1962 = sadd.f32 %s1958, %s82
      %v1963 = vstv %s1962
      %v1964 = vmul.f32 %v1963, %v48
      %v1965 = vadd.f32 %v1964, %v49
      %s1966 = sadd.f32 %s1958, %s76
      %v1967 = vstv %s1966
      %v1968 = vmul.f32 %v1967, %v48
      %v1969 = vadd.f32 %v1968, %v49
      %v1971 = vlaneseq
      %v1972 = vshrl.u32 %v1971, 7
      %v1973 = vsub.s32 0, %v1972
      %v1974 = vrot.slane %v1961, %v1973
      %v1977 = vsel %vm97, %v1956, 0
      %1979 = vmatprep.subr.mxu0 0.0
      %1980 = vmatpush1.msra.mxu0 %v46
      %1981 = vmatprep.subr.mxu0 0.0
      %1982 = vmatpush1.msra.mxu0 %v103
      %1983 = vmatprep.subr.mxu0 0.0
      %1984 = vmatpush1.msra.mxu0 0.0
      %1985 = vmatprep.subr.mxu0 0.0
      %1986 = vmatpush1.msra.mxu0 0.0
      %1987 = vmatprep.subr.mxu0 0.0
      %1988 = vmatpush1.msra.mxu0 0.0
      %1989 = vmatprep.subr.mxu0 0.0
      %1990 = vmatpush1.msra.mxu0 0.0
      %1991 = vmatprep.subr.mxu0 0.0
      %1992 = vmatpush1.msra.mxu0 0.0
      %1993 = vmatprep.subr.mxu0 0.0
      %1994 = vmatpush1.msra.mxu0 0.0
      %1995 = vmatprep.subr.mxu0 0.0
      %1996 = vmatpush1.msra.mxu0 0.0
      %1997 = vmatprep.subr.mxu0 0.0
      %1998 = vmatpush1.msra.mxu0 0.0
      %1999 = vmatprep.subr.mxu0 0.0
      %2000 = vmatpush1.msra.mxu0 0.0
      %2001 = vmatprep.subr.mxu0 0.0
      %2002 = vmatpush1.msra.mxu0 0.0
      %2003 = vmatprep.subr.mxu0 0.0
      %2004 = vmatpush1.msra.mxu0 0.0
      %2005 = vmatprep.subr.mxu0 0.0
      %2006 = vmatpush1.msra.mxu0 0.0
      %2007 = vmatprep.subr.mxu0 0.0
      %2008 = vmatpush1.msra.mxu0 0.0
      %2009 = vmatprep.subr.mxu0 0.0
      %2010 = vmatpush1.msra.mxu0 0.0
      %2011 = vmatprep.subr.mxu0 0.0
      %2012 = vmatpush1.msra.mxu0 0.0
      %2013 = vmatprep.subr.mxu0 0.0
      %2014 = vmatpush1.msra.mxu0 0.0
      %2015 = vmatprep.subr.mxu0 0.0
      %2016 = vmatpush1.msra.mxu0 0.0
      %2017 = vmatprep.subr.mxu0 0.0
      %2018 = vmatpush1.msra.mxu0 0.0
      %2019 = vmatprep.subr.mxu0 0.0
      %2020 = vmatpush1.msra.mxu0 0.0
      %2021 = vmatprep.subr.mxu0 0.0
      %2022 = vmatpush1.msra.mxu0 0.0
      %2023 = vmatprep.subr.mxu0 0.0
      %2024 = vmatpush1.msra.mxu0 0.0
      %2025 = vmatprep.subr.mxu0 0.0
      %2026 = vmatpush1.msra.mxu0 0.0
      %2027 = vmatprep.subr.mxu0 0.0
      %2028 = vmatpush1.msra.mxu0 0.0
      %2029 = vmatprep.subr.mxu0 0.0
      %2030 = vmatpush1.msra.mxu0 0.0
      %2031 = vmatprep.subr.mxu0 0.0
      %2032 = vmatpush1.msra.mxu0 0.0
      %2033 = vmatprep.subr.mxu0 0.0
      %2034 = vmatpush1.msra.mxu0 0.0
      %2035 = vmatprep.subr.mxu0 0.0
      %2036 = vmatpush1.msra.mxu0 0.0
      %2037 = vmatprep.subr.mxu0 0.0
      %2038 = vmatpush1.msra.mxu0 0.0
      %2039 = vmatprep.subr.mxu0 0.0
      %2040 = vmatpush1.msra.mxu0 0.0
      %2041 = vmatprep.subr.mxu0 0.0
      %2042 = vmatpush1.msra.mxu0 0.0
      %2043 = vmatprep.mubr.f32.mxu0 0.0
      %2044 = vmatmul.mubr.f32.gmra.mrb[0].mxu0 %v1977
      %v2045 = vpop.f32.mrb[0].mxu0
      %v2046 = vadd.f32 %v1974, %v2045
      %v2047 = vpop.f32.mrb[0].mxu0
      %2048 = vdwg.mxu0
      %v2049 = vtanh.pop %v2046
      %v2051 = vsel %vm182, %v2049, 0
      %2053 = vmatprep.subr.mxu0 0.0
      %2054 = vmatpush1.msra.mxu0 %v50
      %2055 = vmatprep.subr.mxu0 0.0
      %2056 = vmatpush1.msra.mxu0 %v51
      %2057 = vmatprep.subr.mxu0 0.0
      %2058 = vmatpush1.msra.mxu0 %v52
      %2059 = vmatprep.subr.mxu0 0.0
      %2060 = vmatpush1.msra.mxu0 %v53
      %2061 = vmatprep.subr.mxu0 0.0
      %2062 = vmatpush1.msra.mxu0 0.0
      %2063 = vmatprep.subr.mxu0 0.0
      %2064 = vmatpush1.msra.mxu0 0.0
      %2065 = vmatprep.subr.mxu0 0.0
      %2066 = vmatpush1.msra.mxu0 0.0
      %2067 = vmatprep.subr.mxu0 0.0
      %2068 = vmatpush1.msra.mxu0 0.0
      %2069 = vmatprep.subr.mxu0 0.0
      %2070 = vmatpush1.msra.mxu0 0.0
      %2071 = vmatprep.subr.mxu0 0.0
      %2072 = vmatpush1.msra.mxu0 0.0
      %2073 = vmatprep.subr.mxu0 0.0
      %2074 = vmatpush1.msra.mxu0 0.0
      %2075 = vmatprep.subr.mxu0 0.0
      %2076 = vmatpush1.msra.mxu0 0.0
      %2077 = vmatprep.subr.mxu0 0.0
      %2078 = vmatpush1.msra.mxu0 0.0
      %2079 = vmatprep.subr.mxu0 0.0
      %2080 = vmatpush1.msra.mxu0 0.0
      %2081 = vmatprep.subr.mxu0 0.0
      %2082 = vmatpush1.msra.mxu0 0.0
      %2083 = vmatprep.subr.mxu0 0.0
      %2084 = vmatpush1.msra.mxu0 0.0
      %2085 = vmatprep.subr.mxu0 0.0
      %2086 = vmatpush1.msra.mxu0 0.0
      %2087 = vmatprep.subr.mxu0 0.0
      %2088 = vmatpush1.msra.mxu0 0.0
      %2089 = vmatprep.subr.mxu0 0.0
      %2090 = vmatpush1.msra.mxu0 0.0
      %2091 = vmatprep.subr.mxu0 0.0
      %2092 = vmatpush1.msra.mxu0 0.0
      %2093 = vmatprep.subr.mxu0 0.0
      %2094 = vmatpush1.msra.mxu0 0.0
      %2095 = vmatprep.subr.mxu0 0.0
      %2096 = vmatpush1.msra.mxu0 0.0
      %2097 = vmatprep.subr.mxu0 0.0
      %2098 = vmatpush1.msra.mxu0 0.0
      %2099 = vmatprep.subr.mxu0 0.0
      %2100 = vmatpush1.msra.mxu0 0.0
      %2101 = vmatprep.subr.mxu0 0.0
      %2102 = vmatpush1.msra.mxu0 0.0
      %2103 = vmatprep.subr.mxu0 0.0
      %2104 = vmatpush1.msra.mxu0 0.0
      %2105 = vmatprep.subr.mxu0 0.0
      %2106 = vmatpush1.msra.mxu0 0.0
      %2107 = vmatprep.subr.mxu0 0.0
      %2108 = vmatpush1.msra.mxu0 0.0
      %2109 = vmatprep.subr.mxu0 0.0
      %2110 = vmatpush1.msra.mxu0 0.0
      %2111 = vmatprep.subr.mxu0 0.0
      %2112 = vmatpush1.msra.mxu0 0.0
      %2113 = vmatprep.subr.mxu0 0.0
      %2114 = vmatpush1.msra.mxu0 0.0
      %2115 = vmatprep.subr.mxu0 0.0
      %2116 = vmatpush1.msra.mxu0 0.0
      %2117 = vmatprep.mubr.f32.mxu0 0.0
      %2118 = vmatmul.mubr.f32.gmra.mrb[0].mxu0 %v2051
      %v2119 = vpop.f32.mrb[0].mxu0
      %v2120 = vadd.f32 %v180, %v2119
      %v2121 = vpop.f32.mrb[0].mxu0
      %2122 = vdwg.mxu0
      %v2123 = vtanh.pop %v2120
      %v2125 = vsel %vm182, %v2123, 0
      %2127 = vmatprep.subr.mxu0 0.0
      %2128 = vmatpush1.msra.mxu0 %v55
      %2129 = vmatprep.subr.mxu0 0.0
      %2130 = vmatpush1.msra.mxu0 %v56
      %2131 = vmatprep.subr.mxu0 0.0
      %2132 = vmatpush1.msra.mxu0 %v57
      %2133 = vmatprep.subr.mxu0 0.0
      %2134 = vmatpush1.msra.mxu0 %v58
      %2135 = vmatprep.subr.mxu0 0.0
      %2136 = vmatpush1.msra.mxu0 0.0
      %2137 = vmatprep.subr.mxu0 0.0
      %2138 = vmatpush1.msra.mxu0 0.0
      %2139 = vmatprep.subr.mxu0 0.0
      %2140 = vmatpush1.msra.mxu0 0.0
      %2141 = vmatprep.subr.mxu0 0.0
      %2142 = vmatpush1.msra.mxu0 0.0
      %2143 = vmatprep.subr.mxu0 0.0
      %2144 = vmatpush1.msra.mxu0 0.0
      %2145 = vmatprep.subr.mxu0 0.0
      %2146 = vmatpush1.msra.mxu0 0.0
      %2147 = vmatprep.subr.mxu0 0.0
      %2148 = vmatpush1.msra.mxu0 0.0
      %2149 = vmatprep.subr.mxu0 0.0
      %2150 = vmatpush1.msra.mxu0 0.0
      %2151 = vmatprep.subr.mxu0 0.0
      %2152 = vmatpush1.msra.mxu0 0.0
      %2153 = vmatprep.subr.mxu0 0.0
      %2154 = vmatpush1.msra.mxu0 0.0
      %2155 = vmatprep.subr.mxu0 0.0
      %2156 = vmatpush1.msra.mxu0 0.0
      %2157 = vmatprep.subr.mxu0 0.0
      %2158 = vmatpush1.msra.mxu0 0.0
      %2159 = vmatprep.subr.mxu0 0.0
      %2160 = vmatpush1.msra.mxu0 0.0
      %2161 = vmatprep.subr.mxu0 0.0
      %2162 = vmatpush1.msra.mxu0 0.0
      %2163 = vmatprep.subr.mxu0 0.0
      %2164 = vmatpush1.msra.mxu0 0.0
      %2165 = vmatprep.subr.mxu0 0.0
      %2166 = vmatpush1.msra.mxu0 0.0
      %2167 = vmatprep.subr.mxu0 0.0
      %2168 = vmatpush1.msra.mxu0 0.0
      %2169 = vmatprep.subr.mxu0 0.0
      %2170 = vmatpush1.msra.mxu0 0.0
      %2171 = vmatprep.subr.mxu0 0.0
      %2172 = vmatpush1.msra.mxu0 0.0
      %2173 = vmatprep.subr.mxu0 0.0
      %2174 = vmatpush1.msra.mxu0 0.0
      %2175 = vmatprep.subr.mxu0 0.0
      %2176 = vmatpush1.msra.mxu0 0.0
      %2177 = vmatprep.subr.mxu0 0.0
      %2178 = vmatpush1.msra.mxu0 0.0
      %2179 = vmatprep.subr.mxu0 0.0
      %2180 = vmatpush1.msra.mxu0 0.0
      %2181 = vmatprep.subr.mxu0 0.0
      %2182 = vmatpush1.msra.mxu0 0.0
      %2183 = vmatprep.subr.mxu0 0.0
      %2184 = vmatpush1.msra.mxu0 0.0
      %2185 = vmatprep.subr.mxu0 0.0
      %2186 = vmatpush1.msra.mxu0 0.0
      %2187 = vmatprep.subr.mxu0 0.0
      %2188 = vmatpush1.msra.mxu0 0.0
      %2189 = vmatprep.subr.mxu0 0.0
      %2190 = vmatpush1.msra.mxu0 0.0
      %2191 = vmatprep.mubr.f32.mxu0 0.0
      %2192 = vmatmul.mubr.f32.gmra.mrb[0].mxu0 %v2125
      %v2193 = vpop.f32.mrb[0].mxu0
      %v2194 = vadd.f32 %v261, %v2193
      %v2195 = vpop.f32.mrb[0].mxu0
      %2196 = vdwg.mxu0
      %v2197 = vmul.f32 %v336, %v2194
      %v2198 = vadd.f32 %v1956, %v2197
      %v2200 = vlaneseq
      %v2201 = vshrl.u32 %v2200, 7
      %v2202 = vsub.s32 0, %v2201
      %v2203 = vrot.slane %v1965, %v2202
      %v2206 = vsel %vm97, %v2198, 0
      %2208 = vmatprep.subr.mxu0 0.0
      %2209 = vmatpush1.msra.mxu0 %v46
      %2210 = vmatprep.subr.mxu0 0.0
      %2211 = vmatpush1.msra.mxu0 %v103
      %2212 = vmatprep.subr.mxu0 0.0
      %2213 = vmatpush1.msra.mxu0 0.0
      %2214 = vmatprep.subr.mxu0 0.0
      %2215 = vmatpush1.msra.mxu0 0.0
      %2216 = vmatprep.subr.mxu0 0.0
      %2217 = vmatpush1.msra.mxu0 0.0
      %2218 = vmatprep.subr.mxu0 0.0
      %2219 = vmatpush1.msra.mxu0 0.0
      %2220 = vmatprep.subr.mxu0 0.0
      %2221 = vmatpush1.msra.mxu0 0.0
      %2222 = vmatprep.subr.mxu0 0.0
      %2223 = vmatpush1.msra.mxu0 0.0
      %2224 = vmatprep.subr.mxu0 0.0
      %2225 = vmatpush1.msra.mxu0 0.0
      %2226 = vmatprep.subr.mxu0 0.0
      %2227 = vmatpush1.msra.mxu0 0.0
      %2228 = vmatprep.subr.mxu0 0.0
      %2229 = vmatpush1.msra.mxu0 0.0
      %2230 = vmatprep.subr.mxu0 0.0
      %2231 = vmatpush1.msra.mxu0 0.0
      %2232 = vmatprep.subr.mxu0 0.0
      %2233 = vmatpush1.msra.mxu0 0.0
      %2234 = vmatprep.subr.mxu0 0.0
      %2235 = vmatpush1.msra.mxu0 0.0
      %2236 = vmatprep.subr.mxu0 0.0
      %2237 = vmatpush1.msra.mxu0 0.0
      %2238 = vmatprep.subr.mxu0 0.0
      %2239 = vmatpush1.msra.mxu0 0.0
      %2240 = vmatprep.subr.mxu0 0.0
      %2241 = vmatpush1.msra.mxu0 0.0
      %2242 = vmatprep.subr.mxu0 0.0
      %2243 = vmatpush1.msra.mxu0 0.0
      %2244 = vmatprep.subr.mxu0 0.0
      %2245 = vmatpush1.msra.mxu0 0.0
      %2246 = vmatprep.subr.mxu0 0.0
      %2247 = vmatpush1.msra.mxu0 0.0
      %2248 = vmatprep.subr.mxu0 0.0
      %2249 = vmatpush1.msra.mxu0 0.0
      %2250 = vmatprep.subr.mxu0 0.0
      %2251 = vmatpush1.msra.mxu0 0.0
      %2252 = vmatprep.subr.mxu0 0.0
      %2253 = vmatpush1.msra.mxu0 0.0
      %2254 = vmatprep.subr.mxu0 0.0
      %2255 = vmatpush1.msra.mxu0 0.0
      %2256 = vmatprep.subr.mxu0 0.0
      %2257 = vmatpush1.msra.mxu0 0.0
      %2258 = vmatprep.subr.mxu0 0.0
      %2259 = vmatpush1.msra.mxu0 0.0
      %2260 = vmatprep.subr.mxu0 0.0
      %2261 = vmatpush1.msra.mxu0 0.0
      %2262 = vmatprep.subr.mxu0 0.0
      %2263 = vmatpush1.msra.mxu0 0.0
      %2264 = vmatprep.subr.mxu0 0.0
      %2265 = vmatpush1.msra.mxu0 0.0
      %2266 = vmatprep.subr.mxu0 0.0
      %2267 = vmatpush1.msra.mxu0 0.0
      %2268 = vmatprep.subr.mxu0 0.0
      %2269 = vmatpush1.msra.mxu0 0.0
      %2270 = vmatprep.subr.mxu0 0.0
      %2271 = vmatpush1.msra.mxu0 0.0
      %2272 = vmatprep.mubr.f32.mxu0 0.0
      %2273 = vmatmul.mubr.f32.gmra.mrb[0].mxu0 %v2206
      %v2274 = vpop.f32.mrb[0].mxu0
      %v2275 = vadd.f32 %v2203, %v2274
      %v2276 = vpop.f32.mrb[0].mxu0
      %2277 = vdwg.mxu0
      %v2278 = vtanh.pop %v2275
      %v2280 = vsel %vm182, %v2278, 0
      %2282 = vmatprep.subr.mxu0 0.0
      %2283 = vmatpush1.msra.mxu0 %v50
      %2284 = vmatprep.subr.mxu0 0.0
      %2285 = vmatpush1.msra.mxu0 %v51
      %2286 = vmatprep.subr.mxu0 0.0
      %2287 = vmatpush1.msra.mxu0 %v52
      %2288 = vmatprep.subr.mxu0 0.0
      %2289 = vmatpush1.msra.mxu0 %v53
      %2290 = vmatprep.subr.mxu0 0.0
      %2291 = vmatpush1.msra.mxu0 0.0
      %2292 = vmatprep.subr.mxu0 0.0
      %2293 = vmatpush1.msra.mxu0 0.0
      %2294 = vmatprep.subr.mxu0 0.0
      %2295 = vmatpush1.msra.mxu0 0.0
      %2296 = vmatprep.subr.mxu0 0.0
      %2297 = vmatpush1.msra.mxu0 0.0
      %2298 = vmatprep.subr.mxu0 0.0
      %2299 = vmatpush1.msra.mxu0 0.0
      %2300 = vmatprep.subr.mxu0 0.0
      %2301 = vmatpush1.msra.mxu0 0.0
      %2302 = vmatprep.subr.mxu0 0.0
      %2303 = vmatpush1.msra.mxu0 0.0
      %2304 = vmatprep.subr.mxu0 0.0
      %2305 = vmatpush1.msra.mxu0 0.0
      %2306 = vmatprep.subr.mxu0 0.0
      %2307 = vmatpush1.msra.mxu0 0.0
      %2308 = vmatprep.subr.mxu0 0.0
      %2309 = vmatpush1.msra.mxu0 0.0
      %2310 = vmatprep.subr.mxu0 0.0
      %2311 = vmatpush1.msra.mxu0 0.0
      %2312 = vmatprep.subr.mxu0 0.0
      %2313 = vmatpush1.msra.mxu0 0.0
      %2314 = vmatprep.subr.mxu0 0.0
      %2315 = vmatpush1.msra.mxu0 0.0
      %2316 = vmatprep.subr.mxu0 0.0
      %2317 = vmatpush1.msra.mxu0 0.0
      %2318 = vmatprep.subr.mxu0 0.0
      %2319 = vmatpush1.msra.mxu0 0.0
      %2320 = vmatprep.subr.mxu0 0.0
      %2321 = vmatpush1.msra.mxu0 0.0
      %2322 = vmatprep.subr.mxu0 0.0
      %2323 = vmatpush1.msra.mxu0 0.0
      %2324 = vmatprep.subr.mxu0 0.0
      %2325 = vmatpush1.msra.mxu0 0.0
      %2326 = vmatprep.subr.mxu0 0.0
      %2327 = vmatpush1.msra.mxu0 0.0
      %2328 = vmatprep.subr.mxu0 0.0
      %2329 = vmatpush1.msra.mxu0 0.0
      %2330 = vmatprep.subr.mxu0 0.0
      %2331 = vmatpush1.msra.mxu0 0.0
      %2332 = vmatprep.subr.mxu0 0.0
      %2333 = vmatpush1.msra.mxu0 0.0
      %2334 = vmatprep.subr.mxu0 0.0
      %2335 = vmatpush1.msra.mxu0 0.0
      %2336 = vmatprep.subr.mxu0 0.0
      %2337 = vmatpush1.msra.mxu0 0.0
      %2338 = vmatprep.subr.mxu0 0.0
      %2339 = vmatpush1.msra.mxu0 0.0
      %2340 = vmatprep.subr.mxu0 0.0
      %2341 = vmatpush1.msra.mxu0 0.0
      %2342 = vmatprep.subr.mxu0 0.0
      %2343 = vmatpush1.msra.mxu0 0.0
      %2344 = vmatprep.subr.mxu0 0.0
      %2345 = vmatpush1.msra.mxu0 0.0
      %2346 = vmatprep.mubr.f32.mxu0 0.0
      %2347 = vmatmul.mubr.f32.gmra.mrb[0].mxu0 %v2280
      %v2348 = vpop.f32.mrb[0].mxu0
      %v2349 = vadd.f32 %v180, %v2348
      %v2350 = vpop.f32.mrb[0].mxu0
      %2351 = vdwg.mxu0
      %v2352 = vtanh.pop %v2349
      %v2354 = vsel %vm182, %v2352, 0
      %2356 = vmatprep.subr.mxu0 0.0
      %2357 = vmatpush1.msra.mxu0 %v55
      %2358 = vmatprep.subr.mxu0 0.0
      %2359 = vmatpush1.msra.mxu0 %v56
      %2360 = vmatprep.subr.mxu0 0.0
      %2361 = vmatpush1.msra.mxu0 %v57
      %2362 = vmatprep.subr.mxu0 0.0
      %2363 = vmatpush1.msra.mxu0 %v58
      %2364 = vmatprep.subr.mxu0 0.0
      %2365 = vmatpush1.msra.mxu0 0.0
      %2366 = vmatprep.subr.mxu0 0.0
      %2367 = vmatpush1.msra.mxu0 0.0
      %2368 = vmatprep.subr.mxu0 0.0
      %2369 = vmatpush1.msra.mxu0 0.0
      %2370 = vmatprep.subr.mxu0 0.0
      %2371 = vmatpush1.msra.mxu0 0.0
      %2372 = vmatprep.subr.mxu0 0.0
      %2373 = vmatpush1.msra.mxu0 0.0
      %2374 = vmatprep.subr.mxu0 0.0
      %2375 = vmatpush1.msra.mxu0 0.0
      %2376 = vmatprep.subr.mxu0 0.0
      %2377 = vmatpush1.msra.mxu0 0.0
      %2378 = vmatprep.subr.mxu0 0.0
      %2379 = vmatpush1.msra.mxu0 0.0
      %2380 = vmatprep.subr.mxu0 0.0
      %2381 = vmatpush1.msra.mxu0 0.0
      %2382 = vmatprep.subr.mxu0 0.0
      %2383 = vmatpush1.msra.mxu0 0.0
      %2384 = vmatprep.subr.mxu0 0.0
      %2385 = vmatpush1.msra.mxu0 0.0
      %2386 = vmatprep.subr.mxu0 0.0
      %2387 = vmatpush1.msra.mxu0 0.0
      %2388 = vmatprep.subr.mxu0 0.0
      %2389 = vmatpush1.msra.mxu0 0.0
      %2390 = vmatprep.subr.mxu0 0.0
      %2391 = vmatpush1.msra.mxu0 0.0
      %2392 = vmatprep.subr.mxu0 0.0
      %2393 = vmatpush1.msra.mxu0 0.0
      %2394 = vmatprep.subr.mxu0 0.0
      %2395 = vmatpush1.msra.mxu0 0.0
      %2396 = vmatprep.subr.mxu0 0.0
      %2397 = vmatpush1.msra.mxu0 0.0
      %2398 = vmatprep.subr.mxu0 0.0
      %2399 = vmatpush1.msra.mxu0 0.0
      %2400 = vmatprep.subr.mxu0 0.0
      %2401 = vmatpush1.msra.mxu0 0.0
      %2402 = vmatprep.subr.mxu0 0.0
      %2403 = vmatpush1.msra.mxu0 0.0
      %2404 = vmatprep.subr.mxu0 0.0
      %2405 = vmatpush1.msra.mxu0 0.0
      %2406 = vmatprep.subr.mxu0 0.0
      %2407 = vmatpush1.msra.mxu0 0.0
      %2408 = vmatprep.subr.mxu0 0.0
      %2409 = vmatpush1.msra.mxu0 0.0
      %2410 = vmatprep.subr.mxu0 0.0
      %2411 = vmatpush1.msra.mxu0 0.0
      %2412 = vmatprep.subr.mxu0 0.0
      %2413 = vmatpush1.msra.mxu0 0.0
      %2414 = vmatprep.subr.mxu0 0.0
      %2415 = vmatpush1.msra.mxu0 0.0
      %2416 = vmatprep.subr.mxu0 0.0
      %2417 = vmatpush1.msra.mxu0 0.0
      %2418 = vmatprep.subr.mxu0 0.0
      %2419 = vmatpush1.msra.mxu0 0.0
      %2420 = vmatprep.mubr.f32.mxu0 0.0
      %2421 = vmatmul.mubr.f32.gmra.mrb[0].mxu0 %v2354
      %v2422 = vpop.f32.mrb[0].mxu0
      %v2423 = vadd.f32 %v261, %v2422
      %v2424 = vpop.f32.mrb[0].mxu0
      %2425 = vdwg.mxu0
      %v2426 = vmul.f32 %v336, %v2423
      %v2427 = vadd.f32 %v1956, %v2426
      %v2429 = vsel %vm97, %v2427, 0
      %2431 = vmatprep.subr.mxu0 0.0
      %2432 = vmatpush1.msra.mxu0 %v46
      %2433 = vmatprep.subr.mxu0 0.0
      %2434 = vmatpush1.msra.mxu0 %v103
      %2435 = vmatprep.subr.mxu0 0.0
      %2436 = vmatpush1.msra.mxu0 0.0
      %2437 = vmatprep.subr.mxu0 0.0
      %2438 = vmatpush1.msra.mxu0 0.0
      %2439 = vmatprep.subr.mxu0 0.0
      %2440 = vmatpush1.msra.mxu0 0.0
      %2441 = vmatprep.subr.mxu0 0.0
      %2442 = vmatpush1.msra.mxu0 0.0
      %2443 = vmatprep.subr.mxu0 0.0
      %2444 = vmatpush1.msra.mxu0 0.0
      %2445 = vmatprep.subr.mxu0 0.0
      %2446 = vmatpush1.msra.mxu0 0.0
      %2447 = vmatprep.subr.mxu0 0.0
      %2448 = vmatpush1.msra.mxu0 0.0
      %2449 = vmatprep.subr.mxu0 0.0
      %2450 = vmatpush1.msra.mxu0 0.0
      %2451 = vmatprep.subr.mxu0 0.0
      %2452 = vmatpush1.msra.mxu0 0.0
      %2453 = vmatprep.subr.mxu0 0.0
      %2454 = vmatpush1.msra.mxu0 0.0
      %2455 = vmatprep.subr.mxu0 0.0
      %2456 = vmatpush1.msra.mxu0 0.0
      %2457 = vmatprep.subr.mxu0 0.0
      %2458 = vmatpush1.msra.mxu0 0.0
      %2459 = vmatprep.subr.mxu0 0.0
      %2460 = vmatpush1.msra.mxu0 0.0
      %2461 = vmatprep.subr.mxu0 0.0
      %2462 = vmatpush1.msra.mxu0 0.0
      %2463 = vmatprep.subr.mxu0 0.0
      %2464 = vmatpush1.msra.mxu0 0.0
      %2465 = vmatprep.subr.mxu0 0.0
      %2466 = vmatpush1.msra.mxu0 0.0
      %2467 = vmatprep.subr.mxu0 0.0
      %2468 = vmatpush1.msra.mxu0 0.0
      %2469 = vmatprep.subr.mxu0 0.0
      %2470 = vmatpush1.msra.mxu0 0.0
      %2471 = vmatprep.subr.mxu0 0.0
      %2472 = vmatpush1.msra.mxu0 0.0
      %2473 = vmatprep.subr.mxu0 0.0
      %2474 = vmatpush1.msra.mxu0 0.0
      %2475 = vmatprep.subr.mxu0 0.0
      %2476 = vmatpush1.msra.mxu0 0.0
      %2477 = vmatprep.subr.mxu0 0.0
      %2478 = vmatpush1.msra.mxu0 0.0
      %2479 = vmatprep.subr.mxu0 0.0
      %2480 = vmatpush1.msra.mxu0 0.0
      %2481 = vmatprep.subr.mxu0 0.0
      %2482 = vmatpush1.msra.mxu0 0.0
      %2483 = vmatprep.subr.mxu0 0.0
      %2484 = vmatpush1.msra.mxu0 0.0
      %2485 = vmatprep.subr.mxu0 0.0
      %2486 = vmatpush1.msra.mxu0 0.0
      %2487 = vmatprep.subr.mxu0 0.0
      %2488 = vmatpush1.msra.mxu0 0.0
      %2489 = vmatprep.subr.mxu0 0.0
      %2490 = vmatpush1.msra.mxu0 0.0
      %2491 = vmatprep.subr.mxu0 0.0
      %2492 = vmatpush1.msra.mxu0 0.0
      %2493 = vmatprep.subr.mxu0 0.0
      %2494 = vmatpush1.msra.mxu0 0.0
      %2495 = vmatprep.mubr.f32.mxu0 0.0
      %2496 = vmatmul.mubr.f32.gmra.mrb[0].mxu0 %v2429
      %v2497 = vpop.f32.mrb[0].mxu0
      %v2498 = vadd.f32 %v2203, %v2497
      %v2499 = vpop.f32.mrb[0].mxu0
      %2500 = vdwg.mxu0
      %v2501 = vtanh.pop %v2498
      %v2503 = vsel %vm182, %v2501, 0
      %2505 = vmatprep.subr.mxu0 0.0
      %2506 = vmatpush1.msra.mxu0 %v50
      %2507 = vmatprep.subr.mxu0 0.0
      %2508 = vmatpush1.msra.mxu0 %v51
      %2509 = vmatprep.subr.mxu0 0.0
      %2510 = vmatpush1.msra.mxu0 %v52
      %2511 = vmatprep.subr.mxu0 0.0
      %2512 = vmatpush1.msra.mxu0 %v53
      %2513 = vmatprep.subr.mxu0 0.0
      %2514 = vmatpush1.msra.mxu0 0.0
      %2515 = vmatprep.subr.mxu0 0.0
      %2516 = vmatpush1.msra.mxu0 0.0
      %2517 = vmatprep.subr.mxu0 0.0
      %2518 = vmatpush1.msra.mxu0 0.0
      %2519 = vmatprep.subr.mxu0 0.0
      %2520 = vmatpush1.msra.mxu0 0.0
      %2521 = vmatprep.subr.mxu0 0.0
      %2522 = vmatpush1.msra.mxu0 0.0
      %2523 = vmatprep.subr.mxu0 0.0
      %2524 = vmatpush1.msra.mxu0 0.0
      %2525 = vmatprep.subr.mxu0 0.0
      %2526 = vmatpush1.msra.mxu0 0.0
      %2527 = vmatprep.subr.mxu0 0.0
      %2528 = vmatpush1.msra.mxu0 0.0
      %2529 = vmatprep.subr.mxu0 0.0
      %2530 = vmatpush1.msra.mxu0 0.0
      %2531 = vmatprep.subr.mxu0 0.0
      %2532 = vmatpush1.msra.mxu0 0.0
      %2533 = vmatprep.subr.mxu0 0.0
      %2534 = vmatpush1.msra.mxu0 0.0
      %2535 = vmatprep.subr.mxu0 0.0
      %2536 = vmatpush1.msra.mxu0 0.0
      %2537 = vmatprep.subr.mxu0 0.0
      %2538 = vmatpush1.msra.mxu0 0.0
      %2539 = vmatprep.subr.mxu0 0.0
      %2540 = vmatpush1.msra.mxu0 0.0
      %2541 = vmatprep.subr.mxu0 0.0
      %2542 = vmatpush1.msra.mxu0 0.0
      %2543 = vmatprep.subr.mxu0 0.0
      %2544 = vmatpush1.msra.mxu0 0.0
      %2545 = vmatprep.subr.mxu0 0.0
      %2546 = vmatpush1.msra.mxu0 0.0
      %2547 = vmatprep.subr.mxu0 0.0
      %2548 = vmatpush1.msra.mxu0 0.0
      %2549 = vmatprep.subr.mxu0 0.0
      %2550 = vmatpush1.msra.mxu0 0.0
      %2551 = vmatprep.subr.mxu0 0.0
      %2552 = vmatpush1.msra.mxu0 0.0
      %2553 = vmatprep.subr.mxu0 0.0
      %2554 = vmatpush1.msra.mxu0 0.0
      %2555 = vmatprep.subr.mxu0 0.0
      %2556 = vmatpush1.msra.mxu0 0.0
      %2557 = vmatprep.subr.mxu0 0.0
      %2558 = vmatpush1.msra.mxu0 0.0
      %2559 = vmatprep.subr.mxu0 0.0
      %2560 = vmatpush1.msra.mxu0 0.0
      %2561 = vmatprep.subr.mxu0 0.0
      %2562 = vmatpush1.msra.mxu0 0.0
      %2563 = vmatprep.subr.mxu0 0.0
      %2564 = vmatpush1.msra.mxu0 0.0
      %2565 = vmatprep.subr.mxu0 0.0
      %2566 = vmatpush1.msra.mxu0 0.0
      %2567 = vmatprep.subr.mxu0 0.0
      %2568 = vmatpush1.msra.mxu0 0.0
      %2569 = vmatprep.mubr.f32.mxu0 0.0
      %2570 = vmatmul.mubr.f32.gmra.mrb[0].mxu0 %v2503
      %v2571 = vpop.f32.mrb[0].mxu0
      %v2572 = vadd.f32 %v180, %v2571
      %v2573 = vpop.f32.mrb[0].mxu0
      %2574 = vdwg.mxu0
      %v2575 = vtanh.pop %v2572
      %v2577 = vsel %vm182, %v2575, 0
      %2579 = vmatprep.subr.mxu0 0.0
      %2580 = vmatpush1.msra.mxu0 %v55
      %2581 = vmatprep.subr.mxu0 0.0
      %2582 = vmatpush1.msra.mxu0 %v56
      %2583 = vmatprep.subr.mxu0 0.0
      %2584 = vmatpush1.msra.mxu0 %v57
      %2585 = vmatprep.subr.mxu0 0.0
      %2586 = vmatpush1.msra.mxu0 %v58
      %2587 = vmatprep.subr.mxu0 0.0
      %2588 = vmatpush1.msra.mxu0 0.0
      %2589 = vmatprep.subr.mxu0 0.0
      %2590 = vmatpush1.msra.mxu0 0.0
      %2591 = vmatprep.subr.mxu0 0.0
      %2592 = vmatpush1.msra.mxu0 0.0
      %2593 = vmatprep.subr.mxu0 0.0
      %2594 = vmatpush1.msra.mxu0 0.0
      %2595 = vmatprep.subr.mxu0 0.0
      %2596 = vmatpush1.msra.mxu0 0.0
      %2597 = vmatprep.subr.mxu0 0.0
      %2598 = vmatpush1.msra.mxu0 0.0
      %2599 = vmatprep.subr.mxu0 0.0
      %2600 = vmatpush1.msra.mxu0 0.0
      %2601 = vmatprep.subr.mxu0 0.0
      %2602 = vmatpush1.msra.mxu0 0.0
      %2603 = vmatprep.subr.mxu0 0.0
      %2604 = vmatpush1.msra.mxu0 0.0
      %2605 = vmatprep.subr.mxu0 0.0
      %2606 = vmatpush1.msra.mxu0 0.0
      %2607 = vmatprep.subr.mxu0 0.0
      %2608 = vmatpush1.msra.mxu0 0.0
      %2609 = vmatprep.subr.mxu0 0.0
      %2610 = vmatpush1.msra.mxu0 0.0
      %2611 = vmatprep.subr.mxu0 0.0
      %2612 = vmatpush1.msra.mxu0 0.0
      %2613 = vmatprep.subr.mxu0 0.0
      %2614 = vmatpush1.msra.mxu0 0.0
      %2615 = vmatprep.subr.mxu0 0.0
      %2616 = vmatpush1.msra.mxu0 0.0
      %2617 = vmatprep.subr.mxu0 0.0
      %2618 = vmatpush1.msra.mxu0 0.0
      %2619 = vmatprep.subr.mxu0 0.0
      %2620 = vmatpush1.msra.mxu0 0.0
      %2621 = vmatprep.subr.mxu0 0.0
      %2622 = vmatpush1.msra.mxu0 0.0
      %2623 = vmatprep.subr.mxu0 0.0
      %2624 = vmatpush1.msra.mxu0 0.0
      %2625 = vmatprep.subr.mxu0 0.0
      %2626 = vmatpush1.msra.mxu0 0.0
      %2627 = vmatprep.subr.mxu0 0.0
      %2628 = vmatpush1.msra.mxu0 0.0
      %2629 = vmatprep.subr.mxu0 0.0
      %2630 = vmatpush1.msra.mxu0 0.0
      %2631 = vmatprep.subr.mxu0 0.0
      %2632 = vmatpush1.msra.mxu0 0.0
      %2633 = vmatprep.subr.mxu0 0.0
      %2634 = vmatpush1.msra.mxu0 0.0
      %2635 = vmatprep.subr.mxu0 0.0
      %2636 = vmatpush1.msra.mxu0 0.0
      %2637 = vmatprep.subr.mxu0 0.0
      %2638 = vmatpush1.msra.mxu0 0.0
      %2639 = vmatprep.subr.mxu0 0.0
      %2640 = vmatpush1.msra.mxu0 0.0
      %2641 = vmatprep.subr.mxu0 0.0
      %2642 = vmatpush1.msra.mxu0 0.0
      %2643 = vmatprep.mubr.f32.mxu0 0.0
      %2644 = vmatmul.mubr.f32.gmra.mrb[0].mxu0 %v2577
      %v2645 = vpop.f32.mrb[0].mxu0
      %v2646 = vadd.f32 %v261, %v2645
      %v2647 = vpop.f32.mrb[0].mxu0
      %2648 = vdwg.mxu0
      %v2649 = vmul.f32 %v789, %v2646
      %v2650 = vadd.f32 %v1956, %v2649
      %v2652 = vlaneseq
      %v2653 = vshrl.u32 %v2652, 7
      %v2654 = vsub.s32 0, %v2653
      %v2655 = vrot.slane %v1969, %v2654
      %v2658 = vsel %vm97, %v2650, 0
      %2660 = vmatprep.subr.mxu0 0.0
      %2661 = vmatpush1.msra.mxu0 %v46
      %2662 = vmatprep.subr.mxu0 0.0
      %2663 = vmatpush1.msra.mxu0 %v103
      %2664 = vmatprep.subr.mxu0 0.0
      %2665 = vmatpush1.msra.mxu0 0.0
      %2666 = vmatprep.subr.mxu0 0.0
      %2667 = vmatpush1.msra.mxu0 0.0
      %2668 = vmatprep.subr.mxu0 0.0
      %2669 = vmatpush1.msra.mxu0 0.0
      %2670 = vmatprep.subr.mxu0 0.0
      %2671 = vmatpush1.msra.mxu0 0.0
      %2672 = vmatprep.subr.mxu0 0.0
      %2673 = vmatpush1.msra.mxu0 0.0
      %2674 = vmatprep.subr.mxu0 0.0
      %2675 = vmatpush1.msra.mxu0 0.0
      %2676 = vmatprep.subr.mxu0 0.0
      %2677 = vmatpush1.msra.mxu0 0.0
      %2678 = vmatprep.subr.mxu0 0.0
      %2679 = vmatpush1.msra.mxu0 0.0
      %2680 = vmatprep.subr.mxu0 0.0
      %2681 = vmatpush1.msra.mxu0 0.0
      %2682 = vmatprep.subr.mxu0 0.0
      %2683 = vmatpush1.msra.mxu0 0.0
      %2684 = vmatprep.subr.mxu0 0.0
      %2685 = vmatpush1.msra.mxu0 0.0
      %2686 = vmatprep.subr.mxu0 0.0
      %2687 = vmatpush1.msra.mxu0 0.0
      %2688 = vmatprep.subr.mxu0 0.0
      %2689 = vmatpush1.msra.mxu0 0.0
      %2690 = vmatprep.subr.mxu0 0.0
      %2691 = vmatpush1.msra.mxu0 0.0
      %2692 = vmatprep.subr.mxu0 0.0
      %2693 = vmatpush1.msra.mxu0 0.0
      %2694 = vmatprep.subr.mxu0 0.0
      %2695 = vmatpush1.msra.mxu0 0.0
      %2696 = vmatprep.subr.mxu0 0.0
      %2697 = vmatpush1.msra.mxu0 0.0
      %2698 = vmatprep.subr.mxu0 0.0
      %2699 = vmatpush1.msra.mxu0 0.0
      %2700 = vmatprep.subr.mxu0 0.0
      %2701 = vmatpush1.msra.mxu0 0.0
      %2702 = vmatprep.subr.mxu0 0.0
      %2703 = vmatpush1.msra.mxu0 0.0
      %2704 = vmatprep.subr.mxu0 0.0
      %2705 = vmatpush1.msra.mxu0 0.0
      %2706 = vmatprep.subr.mxu0 0.0
      %2707 = vmatpush1.msra.mxu0 0.0
      %2708 = vmatprep.subr.mxu0 0.0
      %2709 = vmatpush1.msra.mxu0 0.0
      %2710 = vmatprep.subr.mxu0 0.0
      %2711 = vmatpush1.msra.mxu0 0.0
      %2712 = vmatprep.subr.mxu0 0.0
      %2713 = vmatpush1.msra.mxu0 0.0
      %2714 = vmatprep.subr.mxu0 0.0
      %2715 = vmatpush1.msra.mxu0 0.0
      %2716 = vmatprep.subr.mxu0 0.0
      %2717 = vmatpush1.msra.mxu0 0.0
      %2718 = vmatprep.subr.mxu0 0.0
      %2719 = vmatpush1.msra.mxu0 0.0
      %2720 = vmatprep.subr.mxu0 0.0
      %2721 = vmatpush1.msra.mxu0 0.0
      %2722 = vmatprep.subr.mxu0 0.0
      %2723 = vmatpush1.msra.mxu0 0.0
      %2724 = vmatprep.mubr.f32.mxu0 0.0
      %2725 = vmatmul.mubr.f32.gmra.mrb[0].mxu0 %v2658
      %v2726 = vpop.f32.mrb[0].mxu0
      %v2727 = vadd.f32 %v2655, %v2726
      %v2728 = vpop.f32.mrb[0].mxu0
      %2729 = vdwg.mxu0
      %v2730 = vtanh.pop %v2727
      %v2732 = vsel %vm182, %v2730, 0
      %2734 = vmatprep.subr.mxu0 0.0
      %2735 = vmatpush1.msra.mxu0 %v50
      %2736 = vmatprep.subr.mxu0 0.0
      %2737 = vmatpush1.msra.mxu0 %v51
      %2738 = vmatprep.subr.mxu0 0.0
      %2739 = vmatpush1.msra.mxu0 %v52
      %2740 = vmatprep.subr.mxu0 0.0
      %2741 = vmatpush1.msra.mxu0 %v53
      %2742 = vmatprep.subr.mxu0 0.0
      %2743 = vmatpush1.msra.mxu0 0.0
      %2744 = vmatprep.subr.mxu0 0.0
      %2745 = vmatpush1.msra.mxu0 0.0
      %2746 = vmatprep.subr.mxu0 0.0
      %2747 = vmatpush1.msra.mxu0 0.0
      %2748 = vmatprep.subr.mxu0 0.0
      %2749 = vmatpush1.msra.mxu0 0.0
      %2750 = vmatprep.subr.mxu0 0.0
      %2751 = vmatpush1.msra.mxu0 0.0
      %2752 = vmatprep.subr.mxu0 0.0
      %2753 = vmatpush1.msra.mxu0 0.0
      %2754 = vmatprep.subr.mxu0 0.0
      %2755 = vmatpush1.msra.mxu0 0.0
      %2756 = vmatprep.subr.mxu0 0.0
      %2757 = vmatpush1.msra.mxu0 0.0
      %2758 = vmatprep.subr.mxu0 0.0
      %2759 = vmatpush1.msra.mxu0 0.0
      %2760 = vmatprep.subr.mxu0 0.0
      %2761 = vmatpush1.msra.mxu0 0.0
      %2762 = vmatprep.subr.mxu0 0.0
      %2763 = vmatpush1.msra.mxu0 0.0
      %2764 = vmatprep.subr.mxu0 0.0
      %2765 = vmatpush1.msra.mxu0 0.0
      %2766 = vmatprep.subr.mxu0 0.0
      %2767 = vmatpush1.msra.mxu0 0.0
      %2768 = vmatprep.subr.mxu0 0.0
      %2769 = vmatpush1.msra.mxu0 0.0
      %2770 = vmatprep.subr.mxu0 0.0
      %2771 = vmatpush1.msra.mxu0 0.0
      %2772 = vmatprep.subr.mxu0 0.0
      %2773 = vmatpush1.msra.mxu0 0.0
      %2774 = vmatprep.subr.mxu0 0.0
      %2775 = vmatpush1.msra.mxu0 0.0
      %2776 = vmatprep.subr.mxu0 0.0
      %2777 = vmatpush1.msra.mxu0 0.0
      %2778 = vmatprep.subr.mxu0 0.0
      %2779 = vmatpush1.msra.mxu0 0.0
      %2780 = vmatprep.subr.mxu0 0.0
      %2781 = vmatpush1.msra.mxu0 0.0
      %2782 = vmatprep.subr.mxu0 0.0
      %2783 = vmatpush1.msra.mxu0 0.0
      %2784 = vmatprep.subr.mxu0 0.0
      %2785 = vmatpush1.msra.mxu0 0.0
      %2786 = vmatprep.subr.mxu0 0.0
      %2787 = vmatpush1.msra.mxu0 0.0
      %2788 = vmatprep.subr.mxu0 0.0
      %2789 = vmatpush1.msra.mxu0 0.0
      %2790 = vmatprep.subr.mxu0 0.0
      %2791 = vmatpush1.msra.mxu0 0.0
      %2792 = vmatprep.subr.mxu0 0.0
      %2793 = vmatpush1.msra.mxu0 0.0
      %2794 = vmatprep.subr.mxu0 0.0
      %2795 = vmatpush1.msra.mxu0 0.0
      %2796 = vmatprep.subr.mxu0 0.0
      %2797 = vmatpush1.msra.mxu0 0.0
      %2798 = vmatprep.mubr.f32.mxu0 0.0
      %2799 = vmatmul.mubr.f32.gmra.mrb[0].mxu0 %v2732
      %v2800 = vpop.f32.mrb[0].mxu0
      %v2801 = vadd.f32 %v180, %v2800
      %v2802 = vpop.f32.mrb[0].mxu0
      %2803 = vdwg.mxu0
      %v2804 = vtanh.pop %v2801
      %v2806 = vsel %vm182, %v2804, 0
      %2808 = vmatprep.subr.mxu0 0.0
      %2809 = vmatpush1.msra.mxu0 %v55
      %2810 = vmatprep.subr.mxu0 0.0
      %2811 = vmatpush1.msra.mxu0 %v56
      %2812 = vmatprep.subr.mxu0 0.0
      %2813 = vmatpush1.msra.mxu0 %v57
      %2814 = vmatprep.subr.mxu0 0.0
      %2815 = vmatpush1.msra.mxu0 %v58
      %2816 = vmatprep.subr.mxu0 0.0
      %2817 = vmatpush1.msra.mxu0 0.0
      %2818 = vmatprep.subr.mxu0 0.0
      %2819 = vmatpush1.msra.mxu0 0.0
      %2820 = vmatprep.subr.mxu0 0.0
      %2821 = vmatpush1.msra.mxu0 0.0
      %2822 = vmatprep.subr.mxu0 0.0
      %2823 = vmatpush1.msra.mxu0 0.0
      %2824 = vmatprep.subr.mxu0 0.0
      %2825 = vmatpush1.msra.mxu0 0.0
      %2826 = vmatprep.subr.mxu0 0.0
      %2827 = vmatpush1.msra.mxu0 0.0
      %2828 = vmatprep.subr.mxu0 0.0
      %2829 = vmatpush1.msra.mxu0 0.0
      %2830 = vmatprep.subr.mxu0 0.0
      %2831 = vmatpush1.msra.mxu0 0.0
      %2832 = vmatprep.subr.mxu0 0.0
      %2833 = vmatpush1.msra.mxu0 0.0
      %2834 = vmatprep.subr.mxu0 0.0
      %2835 = vmatpush1.msra.mxu0 0.0
      %2836 = vmatprep.subr.mxu0 0.0
      %2837 = vmatpush1.msra.mxu0 0.0
      %2838 = vmatprep.subr.mxu0 0.0
      %2839 = vmatpush1.msra.mxu0 0.0
      %2840 = vmatprep.subr.mxu0 0.0
      %2841 = vmatpush1.msra.mxu0 0.0
      %2842 = vmatprep.subr.mxu0 0.0
      %2843 = vmatpush1.msra.mxu0 0.0
      %2844 = vmatprep.subr.mxu0 0.0
      %2845 = vmatpush1.msra.mxu0 0.0
      %2846 = vmatprep.subr.mxu0 0.0
      %2847 = vmatpush1.msra.mxu0 0.0
      %2848 = vmatprep.subr.mxu0 0.0
      %2849 = vmatpush1.msra.mxu0 0.0
      %2850 = vmatprep.subr.mxu0 0.0
      %2851 = vmatpush1.msra.mxu0 0.0
      %2852 = vmatprep.subr.mxu0 0.0
      %2853 = vmatpush1.msra.mxu0 0.0
      %2854 = vmatprep.subr.mxu0 0.0
      %2855 = vmatpush1.msra.mxu0 0.0
      %2856 = vmatprep.subr.mxu0 0.0
      %2857 = vmatpush1.msra.mxu0 0.0
      %2858 = vmatprep.subr.mxu0 0.0
      %2859 = vmatpush1.msra.mxu0 0.0
      %2860 = vmatprep.subr.mxu0 0.0
      %2861 = vmatpush1.msra.mxu0 0.0
      %2862 = vmatprep.subr.mxu0 0.0
      %2863 = vmatpush1.msra.mxu0 0.0
      %2864 = vmatprep.subr.mxu0 0.0
      %2865 = vmatpush1.msra.mxu0 0.0
      %2866 = vmatprep.subr.mxu0 0.0
      %2867 = vmatpush1.msra.mxu0 0.0
      %2868 = vmatprep.subr.mxu0 0.0
      %2869 = vmatpush1.msra.mxu0 0.0
      %2870 = vmatprep.subr.mxu0 0.0
      %2871 = vmatpush1.msra.mxu0 0.0
      %2872 = vmatprep.mubr.f32.mxu0 0.0
      %2873 = vmatmul.mubr.f32.gmra.mrb[0].mxu0 %v2806
      %v2874 = vpop.f32.mrb[0].mxu0
      %v2875 = vadd.f32 %v261, %v2874
      %v2876 = vpop.f32.mrb[0].mxu0
      %2877 = vdwg.mxu0
      %v2878 = vmul.f32 %v2423, 2.0
      %v2879 = vadd.f32 %v2194, %v2878
      %v2880 = vmul.f32 %v2646, 2.0
      %v2881 = vadd.f32 %v2879, %v2880
      %v2882 = vadd.f32 %v2881, %v2875
      %v2883 = vmul.f32 %v1027, %v2882
      %v2884 = vadd.f32 %v1956, %v2883
      %s2885 = smul.f32 %s76, 3.0
      %s2886 = sadd.f32 %s71, %s2885
      %v2887 = vstv %s2886
      %v2888 = vmul.f32 %v2887, %v48
      %v2889 = vadd.f32 %v2888, %v49
      %s2890 = sadd.f32 %s2886, %s82
      %v2891 = vstv %s2890
      %v2892 = vmul.f32 %v2891, %v48
      %v2893 = vadd.f32 %v2892, %v49
      %s2894 = sadd.f32 %s2886, %s76
      %v2895 = vstv %s2894
      %v2896 = vmul.f32 %v2895, %v48
      %v2897 = vadd.f32 %v2896, %v49
      %v2899 = vlaneseq
      %v2900 = vshrl.u32 %v2899, 7
      %v2901 = vsub.s32 0, %v2900
      %v2902 = vrot.slane %v2889, %v2901
      %v2905 = vsel %vm97, %v2884, 0
      %2907 = vmatprep.subr.mxu0 0.0
      %2908 = vmatpush1.msra.mxu0 %v46
      %2909 = vmatprep.subr.mxu0 0.0
      %2910 = vmatpush1.msra.mxu0 %v103
      %2911 = vmatprep.subr.mxu0 0.0
      %2912 = vmatpush1.msra.mxu0 0.0
      %2913 = vmatprep.subr.mxu0 0.0
      %2914 = vmatpush1.msra.mxu0 0.0
      %2915 = vmatprep.subr.mxu0 0.0
      %2916 = vmatpush1.msra.mxu0 0.0
      %2917 = vmatprep.subr.mxu0 0.0
      %2918 = vmatpush1.msra.mxu0 0.0
      %2919 = vmatprep.subr.mxu0 0.0
      %2920 = vmatpush1.msra.mxu0 0.0
      %2921 = vmatprep.subr.mxu0 0.0
      %2922 = vmatpush1.msra.mxu0 0.0
      %2923 = vmatprep.subr.mxu0 0.0
      %2924 = vmatpush1.msra.mxu0 0.0
      %2925 = vmatprep.subr.mxu0 0.0
      %2926 = vmatpush1.msra.mxu0 0.0
      %2927 = vmatprep.subr.mxu0 0.0
      %2928 = vmatpush1.msra.mxu0 0.0
      %2929 = vmatprep.subr.mxu0 0.0
      %2930 = vmatpush1.msra.mxu0 0.0
      %2931 = vmatprep.subr.mxu0 0.0
      %2932 = vmatpush1.msra.mxu0 0.0
      %2933 = vmatprep.subr.mxu0 0.0
      %2934 = vmatpush1.msra.mxu0 0.0
      %2935 = vmatprep.subr.mxu0 0.0
      %2936 = vmatpush1.msra.mxu0 0.0
      %2937 = vmatprep.subr.mxu0 0.0
      %2938 = vmatpush1.msra.mxu0 0.0
      %2939 = vmatprep.subr.mxu0 0.0
      %2940 = vmatpush1.msra.mxu0 0.0
      %2941 = vmatprep.subr.mxu0 0.0
      %2942 = vmatpush1.msra.mxu0 0.0
      %2943 = vmatprep.subr.mxu0 0.0
      %2944 = vmatpush1.msra.mxu0 0.0
      %2945 = vmatprep.subr.mxu0 0.0
      %2946 = vmatpush1.msra.mxu0 0.0
      %2947 = vmatprep.subr.mxu0 0.0
      %2948 = vmatpush1.msra.mxu0 0.0
      %2949 = vmatprep.subr.mxu0 0.0
      %2950 = vmatpush1.msra.mxu0 0.0
      %2951 = vmatprep.subr.mxu0 0.0
      %2952 = vmatpush1.msra.mxu0 0.0
      %2953 = vmatprep.subr.mxu0 0.0
      %2954 = vmatpush1.msra.mxu0 0.0
      %2955 = vmatprep.subr.mxu0 0.0
      %2956 = vmatpush1.msra.mxu0 0.0
      %2957 = vmatprep.subr.mxu0 0.0
      %2958 = vmatpush1.msra.mxu0 0.0
      %2959 = vmatprep.subr.mxu0 0.0
      %2960 = vmatpush1.msra.mxu0 0.0
      %2961 = vmatprep.subr.mxu0 0.0
      %2962 = vmatpush1.msra.mxu0 0.0
      %2963 = vmatprep.subr.mxu0 0.0
      %2964 = vmatpush1.msra.mxu0 0.0
      %2965 = vmatprep.subr.mxu0 0.0
      %2966 = vmatpush1.msra.mxu0 0.0
      %2967 = vmatprep.subr.mxu0 0.0
      %2968 = vmatpush1.msra.mxu0 0.0
      %2969 = vmatprep.subr.mxu0 0.0
      %2970 = vmatpush1.msra.mxu0 0.0
      %2971 = vmatprep.mubr.f32.mxu0 0.0
      %2972 = vmatmul.mubr.f32.gmra.mrb[0].mxu0 %v2905
      %v2973 = vpop.f32.mrb[0].mxu0
      %v2974 = vadd.f32 %v2902, %v2973
      %v2975 = vpop.f32.mrb[0].mxu0
      %2976 = vdwg.mxu0
      %v2977 = vtanh.pop %v2974
      %v2979 = vsel %vm182, %v2977, 0
      %2981 = vmatprep.subr.mxu0 0.0
      %2982 = vmatpush1.msra.mxu0 %v50
      %2983 = vmatprep.subr.mxu0 0.0
      %2984 = vmatpush1.msra.mxu0 %v51
      %2985 = vmatprep.subr.mxu0 0.0
      %2986 = vmatpush1.msra.mxu0 %v52
      %2987 = vmatprep.subr.mxu0 0.0
      %2988 = vmatpush1.msra.mxu0 %v53
      %2989 = vmatprep.subr.mxu0 0.0
      %2990 = vmatpush1.msra.mxu0 0.0
      %2991 = vmatprep.subr.mxu0 0.0
      %2992 = vmatpush1.msra.mxu0 0.0
      %2993 = vmatprep.subr.mxu0 0.0
      %2994 = vmatpush1.msra.mxu0 0.0
      %2995 = vmatprep.subr.mxu0 0.0
      %2996 = vmatpush1.msra.mxu0 0.0
      %2997 = vmatprep.subr.mxu0 0.0
      %2998 = vmatpush1.msra.mxu0 0.0
      %2999 = vmatprep.subr.mxu0 0.0
      %3000 = vmatpush1.msra.mxu0 0.0
      %3001 = vmatprep.subr.mxu0 0.0
      %3002 = vmatpush1.msra.mxu0 0.0
      %3003 = vmatprep.subr.mxu0 0.0
      %3004 = vmatpush1.msra.mxu0 0.0
      %3005 = vmatprep.subr.mxu0 0.0
      %3006 = vmatpush1.msra.mxu0 0.0
      %3007 = vmatprep.subr.mxu0 0.0
      %3008 = vmatpush1.msra.mxu0 0.0
      %3009 = vmatprep.subr.mxu0 0.0
      %3010 = vmatpush1.msra.mxu0 0.0
      %3011 = vmatprep.subr.mxu0 0.0
      %3012 = vmatpush1.msra.mxu0 0.0
      %3013 = vmatprep.subr.mxu0 0.0
      %3014 = vmatpush1.msra.mxu0 0.0
      %3015 = vmatprep.subr.mxu0 0.0
      %3016 = vmatpush1.msra.mxu0 0.0
      %3017 = vmatprep.subr.mxu0 0.0
      %3018 = vmatpush1.msra.mxu0 0.0
      %3019 = vmatprep.subr.mxu0 0.0
      %3020 = vmatpush1.msra.mxu0 0.0
      %3021 = vmatprep.subr.mxu0 0.0
      %3022 = vmatpush1.msra.mxu0 0.0
      %3023 = vmatprep.subr.mxu0 0.0
      %3024 = vmatpush1.msra.mxu0 0.0
      %3025 = vmatprep.subr.mxu0 0.0
      %3026 = vmatpush1.msra.mxu0 0.0
      %3027 = vmatprep.subr.mxu0 0.0
      %3028 = vmatpush1.msra.mxu0 0.0
      %3029 = vmatprep.subr.mxu0 0.0
      %3030 = vmatpush1.msra.mxu0 0.0
      %3031 = vmatprep.subr.mxu0 0.0
      %3032 = vmatpush1.msra.mxu0 0.0
      %3033 = vmatprep.subr.mxu0 0.0
      %3034 = vmatpush1.msra.mxu0 0.0
      %3035 = vmatprep.subr.mxu0 0.0
      %3036 = vmatpush1.msra.mxu0 0.0
      %3037 = vmatprep.subr.mxu0 0.0
      %3038 = vmatpush1.msra.mxu0 0.0
      %3039 = vmatprep.subr.mxu0 0.0
      %3040 = vmatpush1.msra.mxu0 0.0
      %3041 = vmatprep.subr.mxu0 0.0
      %3042 = vmatpush1.msra.mxu0 0.0
      %3043 = vmatprep.subr.mxu0 0.0
      %3044 = vmatpush1.msra.mxu0 0.0
      %3045 = vmatprep.mubr.f32.mxu0 0.0
      %3046 = vmatmul.mubr.f32.gmra.mrb[0].mxu0 %v2979
      %v3047 = vpop.f32.mrb[0].mxu0
      %v3048 = vadd.f32 %v180, %v3047
      %v3049 = vpop.f32.mrb[0].mxu0
      %3050 = vdwg.mxu0
      %v3051 = vtanh.pop %v3048
      %v3053 = vsel %vm182, %v3051, 0
      %3055 = vmatprep.subr.mxu0 0.0
      %3056 = vmatpush1.msra.mxu0 %v55
      %3057 = vmatprep.subr.mxu0 0.0
      %3058 = vmatpush1.msra.mxu0 %v56
      %3059 = vmatprep.subr.mxu0 0.0
      %3060 = vmatpush1.msra.mxu0 %v57
      %3061 = vmatprep.subr.mxu0 0.0
      %3062 = vmatpush1.msra.mxu0 %v58
      %3063 = vmatprep.subr.mxu0 0.0
      %3064 = vmatpush1.msra.mxu0 0.0
      %3065 = vmatprep.subr.mxu0 0.0
      %3066 = vmatpush1.msra.mxu0 0.0
      %3067 = vmatprep.subr.mxu0 0.0
      %3068 = vmatpush1.msra.mxu0 0.0
      %3069 = vmatprep.subr.mxu0 0.0
      %3070 = vmatpush1.msra.mxu0 0.0
      %3071 = vmatprep.subr.mxu0 0.0
      %3072 = vmatpush1.msra.mxu0 0.0
      %3073 = vmatprep.subr.mxu0 0.0
      %3074 = vmatpush1.msra.mxu0 0.0
      %3075 = vmatprep.subr.mxu0 0.0
      %3076 = vmatpush1.msra.mxu0 0.0
      %3077 = vmatprep.subr.mxu0 0.0
      %3078 = vmatpush1.msra.mxu0 0.0
      %3079 = vmatprep.subr.mxu0 0.0
      %3080 = vmatpush1.msra.mxu0 0.0
      %3081 = vmatprep.subr.mxu0 0.0
      %3082 = vmatpush1.msra.mxu0 0.0
      %3083 = vmatprep.subr.mxu0 0.0
      %3084 = vmatpush1.msra.mxu0 0.0
      %3085 = vmatprep.subr.mxu0 0.0
      %3086 = vmatpush1.msra.mxu0 0.0
      %3087 = vmatprep.subr.mxu0 0.0
      %3088 = vmatpush1.msra.mxu0 0.0
      %3089 = vmatprep.subr.mxu0 0.0
      %3090 = vmatpush1.msra.mxu0 0.0
      %3091 = vmatprep.subr.mxu0 0.0
      %3092 = vmatpush1.msra.mxu0 0.0
      %3093 = vmatprep.subr.mxu0 0.0
      %3094 = vmatpush1.msra.mxu0 0.0
      %3095 = vmatprep.subr.mxu0 0.0
      %3096 = vmatpush1.msra.mxu0 0.0
      %3097 = vmatprep.subr.mxu0 0.0
      %3098 = vmatpush1.msra.mxu0 0.0
      %3099 = vmatprep.subr.mxu0 0.0
      %3100 = vmatpush1.msra.mxu0 0.0
      %3101 = vmatprep.subr.mxu0 0.0
      %3102 = vmatpush1.msra.mxu0 0.0
      %3103 = vmatprep.subr.mxu0 0.0
      %3104 = vmatpush1.msra.mxu0 0.0
      %3105 = vmatprep.subr.mxu0 0.0
      %3106 = vmatpush1.msra.mxu0 0.0
      %3107 = vmatprep.subr.mxu0 0.0
      %3108 = vmatpush1.msra.mxu0 0.0
      %3109 = vmatprep.subr.mxu0 0.0
      %3110 = vmatpush1.msra.mxu0 0.0
      %3111 = vmatprep.subr.mxu0 0.0
      %3112 = vmatpush1.msra.mxu0 0.0
      %3113 = vmatprep.subr.mxu0 0.0
      %3114 = vmatpush1.msra.mxu0 0.0
      %3115 = vmatprep.subr.mxu0 0.0
      %3116 = vmatpush1.msra.mxu0 0.0
      %3117 = vmatprep.subr.mxu0 0.0
      %3118 = vmatpush1.msra.mxu0 0.0
      %3119 = vmatprep.mubr.f32.mxu0 0.0
      %3120 = vmatmul.mubr.f32.gmra.mrb[0].mxu0 %v3053
      %v3121 = vpop.f32.mrb[0].mxu0
      %v3122 = vadd.f32 %v261, %v3121
      %v3123 = vpop.f32.mrb[0].mxu0
      %3124 = vdwg.mxu0
      %v3125 = vmul.f32 %v336, %v3122
      %v3126 = vadd.f32 %v2884, %v3125
      %v3128 = vlaneseq
      %v3129 = vshrl.u32 %v3128, 7
      %v3130 = vsub.s32 0, %v3129
      %v3131 = vrot.slane %v2893, %v3130
      %v3134 = vsel %vm97, %v3126, 0
      %3136 = vmatprep.subr.mxu0 0.0
      %3137 = vmatpush1.msra.mxu0 %v46
      %3138 = vmatprep.subr.mxu0 0.0
      %3139 = vmatpush1.msra.mxu0 %v103
      %3140 = vmatprep.subr.mxu0 0.0
      %3141 = vmatpush1.msra.mxu0 0.0
      %3142 = vmatprep.subr.mxu0 0.0
      %3143 = vmatpush1.msra.mxu0 0.0
      %3144 = vmatprep.subr.mxu0 0.0
      %3145 = vmatpush1.msra.mxu0 0.0
      %3146 = vmatprep.subr.mxu0 0.0
      %3147 = vmatpush1.msra.mxu0 0.0
      %3148 = vmatprep.subr.mxu0 0.0
      %3149 = vmatpush1.msra.mxu0 0.0
      %3150 = vmatprep.subr.mxu0 0.0
      %3151 = vmatpush1.msra.mxu0 0.0
      %3152 = vmatprep.subr.mxu0 0.0
      %3153 = vmatpush1.msra.mxu0 0.0
      %3154 = vmatprep.subr.mxu0 0.0
      %3155 = vmatpush1.msra.mxu0 0.0
      %3156 = vmatprep.subr.mxu0 0.0
      %3157 = vmatpush1.msra.mxu0 0.0
      %3158 = vmatprep.subr.mxu0 0.0
      %3159 = vmatpush1.msra.mxu0 0.0
      %3160 = vmatprep.subr.mxu0 0.0
      %3161 = vmatpush1.msra.mxu0 0.0
      %3162 = vmatprep.subr.mxu0 0.0
      %3163 = vmatpush1.msra.mxu0 0.0
      %3164 = vmatprep.subr.mxu0 0.0
      %3165 = vmatpush1.msra.mxu0 0.0
      %3166 = vmatprep.subr.mxu0 0.0
      %3167 = vmatpush1.msra.mxu0 0.0
      %3168 = vmatprep.subr.mxu0 0.0
      %3169 = vmatpush1.msra.mxu0 0.0
      %3170 = vmatprep.subr.mxu0 0.0
      %3171 = vmatpush1.msra.mxu0 0.0
      %3172 = vmatprep.subr.mxu0 0.0
      %3173 = vmatpush1.msra.mxu0 0.0
      %3174 = vmatprep.subr.mxu0 0.0
      %3175 = vmatpush1.msra.mxu0 0.0
      %3176 = vmatprep.subr.mxu0 0.0
      %3177 = vmatpush1.msra.mxu0 0.0
      %3178 = vmatprep.subr.mxu0 0.0
      %3179 = vmatpush1.msra.mxu0 0.0
      %3180 = vmatprep.subr.mxu0 0.0
      %3181 = vmatpush1.msra.mxu0 0.0
      %3182 = vmatprep.subr.mxu0 0.0
      %3183 = vmatpush1.msra.mxu0 0.0
      %3184 = vmatprep.subr.mxu0 0.0
      %3185 = vmatpush1.msra.mxu0 0.0
      %3186 = vmatprep.subr.mxu0 0.0
      %3187 = vmatpush1.msra.mxu0 0.0
      %3188 = vmatprep.subr.mxu0 0.0
      %3189 = vmatpush1.msra.mxu0 0.0
      %3190 = vmatprep.subr.mxu0 0.0
      %3191 = vmatpush1.msra.mxu0 0.0
      %3192 = vmatprep.subr.mxu0 0.0
      %3193 = vmatpush1.msra.mxu0 0.0
      %3194 = vmatprep.subr.mxu0 0.0
      %3195 = vmatpush1.msra.mxu0 0.0
      %3196 = vmatprep.subr.mxu0 0.0
      %3197 = vmatpush1.msra.mxu0 0.0
      %3198 = vmatprep.subr.mxu0 0.0
      %3199 = vmatpush1.msra.mxu0 0.0
      %3200 = vmatprep.mubr.f32.mxu0 0.0
      %3201 = vmatmul.mubr.f32.gmra.mrb[0].mxu0 %v3134
      %v3202 = vpop.f32.mrb[0].mxu0
      %v3203 = vadd.f32 %v3131, %v3202
      %v3204 = vpop.f32.mrb[0].mxu0
      %3205 = vdwg.mxu0
      %v3206 = vtanh.pop %v3203
      %v3208 = vsel %vm182, %v3206, 0
      %3210 = vmatprep.subr.mxu0 0.0
      %3211 = vmatpush1.msra.mxu0 %v50
      %3212 = vmatprep.subr.mxu0 0.0
      %3213 = vmatpush1.msra.mxu0 %v51
      %3214 = vmatprep.subr.mxu0 0.0
      %3215 = vmatpush1.msra.mxu0 %v52
      %3216 = vmatprep.subr.mxu0 0.0
      %3217 = vmatpush1.msra.mxu0 %v53
      %3218 = vmatprep.subr.mxu0 0.0
      %3219 = vmatpush1.msra.mxu0 0.0
      %3220 = vmatprep.subr.mxu0 0.0
      %3221 = vmatpush1.msra.mxu0 0.0
      %3222 = vmatprep.subr.mxu0 0.0
      %3223 = vmatpush1.msra.mxu0 0.0
      %3224 = vmatprep.subr.mxu0 0.0
      %3225 = vmatpush1.msra.mxu0 0.0
      %3226 = vmatprep.subr.mxu0 0.0
      %3227 = vmatpush1.msra.mxu0 0.0
      %3228 = vmatprep.subr.mxu0 0.0
      %3229 = vmatpush1.msra.mxu0 0.0
      %3230 = vmatprep.subr.mxu0 0.0
      %3231 = vmatpush1.msra.mxu0 0.0
      %3232 = vmatprep.subr.mxu0 0.0
      %3233 = vmatpush1.msra.mxu0 0.0
      %3234 = vmatprep.subr.mxu0 0.0
      %3235 = vmatpush1.msra.mxu0 0.0
      %3236 = vmatprep.subr.mxu0 0.0
      %3237 = vmatpush1.msra.mxu0 0.0
      %3238 = vmatprep.subr.mxu0 0.0
      %3239 = vmatpush1.msra.mxu0 0.0
      %3240 = vmatprep.subr.mxu0 0.0
      %3241 = vmatpush1.msra.mxu0 0.0
      %3242 = vmatprep.subr.mxu0 0.0
      %3243 = vmatpush1.msra.mxu0 0.0
      %3244 = vmatprep.subr.mxu0 0.0
      %3245 = vmatpush1.msra.mxu0 0.0
      %3246 = vmatprep.subr.mxu0 0.0
      %3247 = vmatpush1.msra.mxu0 0.0
      %3248 = vmatprep.subr.mxu0 0.0
      %3249 = vmatpush1.msra.mxu0 0.0
      %3250 = vmatprep.subr.mxu0 0.0
      %3251 = vmatpush1.msra.mxu0 0.0
      %3252 = vmatprep.subr.mxu0 0.0
      %3253 = vmatpush1.msra.mxu0 0.0
      %3254 = vmatprep.subr.mxu0 0.0
      %3255 = vmatpush1.msra.mxu0 0.0
      %3256 = vmatprep.subr.mxu0 0.0
      %3257 = vmatpush1.msra.mxu0 0.0
      %3258 = vmatprep.subr.mxu0 0.0
      %3259 = vmatpush1.msra.mxu0 0.0
      %3260 = vmatprep.subr.mxu0 0.0
      %3261 = vmatpush1.msra.mxu0 0.0
      %3262 = vmatprep.subr.mxu0 0.0
      %3263 = vmatpush1.msra.mxu0 0.0
      %3264 = vmatprep.subr.mxu0 0.0
      %3265 = vmatpush1.msra.mxu0 0.0
      %3266 = vmatprep.subr.mxu0 0.0
      %3267 = vmatpush1.msra.mxu0 0.0
      %3268 = vmatprep.subr.mxu0 0.0
      %3269 = vmatpush1.msra.mxu0 0.0
      %3270 = vmatprep.subr.mxu0 0.0
      %3271 = vmatpush1.msra.mxu0 0.0
      %3272 = vmatprep.subr.mxu0 0.0
      %3273 = vmatpush1.msra.mxu0 0.0
      %3274 = vmatprep.mubr.f32.mxu0 0.0
      %3275 = vmatmul.mubr.f32.gmra.mrb[0].mxu0 %v3208
      %v3276 = vpop.f32.mrb[0].mxu0
      %v3277 = vadd.f32 %v180, %v3276
      %v3278 = vpop.f32.mrb[0].mxu0
      %3279 = vdwg.mxu0
      %v3280 = vtanh.pop %v3277
      %v3282 = vsel %vm182, %v3280, 0
      %3284 = vmatprep.subr.mxu0 0.0
      %3285 = vmatpush1.msra.mxu0 %v55
      %3286 = vmatprep.subr.mxu0 0.0
      %3287 = vmatpush1.msra.mxu0 %v56
      %3288 = vmatprep.subr.mxu0 0.0
      %3289 = vmatpush1.msra.mxu0 %v57
      %3290 = vmatprep.subr.mxu0 0.0
      %3291 = vmatpush1.msra.mxu0 %v58
      %3292 = vmatprep.subr.mxu0 0.0
      %3293 = vmatpush1.msra.mxu0 0.0
      %3294 = vmatprep.subr.mxu0 0.0
      %3295 = vmatpush1.msra.mxu0 0.0
      %3296 = vmatprep.subr.mxu0 0.0
      %3297 = vmatpush1.msra.mxu0 0.0
      %3298 = vmatprep.subr.mxu0 0.0
      %3299 = vmatpush1.msra.mxu0 0.0
      %3300 = vmatprep.subr.mxu0 0.0
      %3301 = vmatpush1.msra.mxu0 0.0
      %3302 = vmatprep.subr.mxu0 0.0
      %3303 = vmatpush1.msra.mxu0 0.0
      %3304 = vmatprep.subr.mxu0 0.0
      %3305 = vmatpush1.msra.mxu0 0.0
      %3306 = vmatprep.subr.mxu0 0.0
      %3307 = vmatpush1.msra.mxu0 0.0
      %3308 = vmatprep.subr.mxu0 0.0
      %3309 = vmatpush1.msra.mxu0 0.0
      %3310 = vmatprep.subr.mxu0 0.0
      %3311 = vmatpush1.msra.mxu0 0.0
      %3312 = vmatprep.subr.mxu0 0.0
      %3313 = vmatpush1.msra.mxu0 0.0
      %3314 = vmatprep.subr.mxu0 0.0
      %3315 = vmatpush1.msra.mxu0 0.0
      %3316 = vmatprep.subr.mxu0 0.0
      %3317 = vmatpush1.msra.mxu0 0.0
      %3318 = vmatprep.subr.mxu0 0.0
      %3319 = vmatpush1.msra.mxu0 0.0
      %3320 = vmatprep.subr.mxu0 0.0
      %3321 = vmatpush1.msra.mxu0 0.0
      %3322 = vmatprep.subr.mxu0 0.0
      %3323 = vmatpush1.msra.mxu0 0.0
      %3324 = vmatprep.subr.mxu0 0.0
      %3325 = vmatpush1.msra.mxu0 0.0
      %3326 = vmatprep.subr.mxu0 0.0
      %3327 = vmatpush1.msra.mxu0 0.0
      %3328 = vmatprep.subr.mxu0 0.0
      %3329 = vmatpush1.msra.mxu0 0.0
      %3330 = vmatprep.subr.mxu0 0.0
      %3331 = vmatpush1.msra.mxu0 0.0
      %3332 = vmatprep.subr.mxu0 0.0
      %3333 = vmatpush1.msra.mxu0 0.0
      %3334 = vmatprep.subr.mxu0 0.0
      %3335 = vmatpush1.msra.mxu0 0.0
      %3336 = vmatprep.subr.mxu0 0.0
      %3337 = vmatpush1.msra.mxu0 0.0
      %3338 = vmatprep.subr.mxu0 0.0
      %3339 = vmatpush1.msra.mxu0 0.0
      %3340 = vmatprep.subr.mxu0 0.0
      %3341 = vmatpush1.msra.mxu0 0.0
      %3342 = vmatprep.subr.mxu0 0.0
      %3343 = vmatpush1.msra.mxu0 0.0
      %3344 = vmatprep.subr.mxu0 0.0
      %3345 = vmatpush1.msra.mxu0 0.0
      %3346 = vmatprep.subr.mxu0 0.0
      %3347 = vmatpush1.msra.mxu0 0.0
      %3348 = vmatprep.mubr.f32.mxu0 0.0
      %3349 = vmatmul.mubr.f32.gmra.mrb[0].mxu0 %v3282
      %v3350 = vpop.f32.mrb[0].mxu0
      %v3351 = vadd.f32 %v261, %v3350
      %v3352 = vpop.f32.mrb[0].mxu0
      %3353 = vdwg.mxu0
      %v3354 = vmul.f32 %v336, %v3351
      %v3355 = vadd.f32 %v2884, %v3354
      %v3357 = vsel %vm97, %v3355, 0
      %3359 = vmatprep.subr.mxu0 0.0
      %3360 = vmatpush1.msra.mxu0 %v46
      %3361 = vmatprep.subr.mxu0 0.0
      %3362 = vmatpush1.msra.mxu0 %v103
      %3363 = vmatprep.subr.mxu0 0.0
      %3364 = vmatpush1.msra.mxu0 0.0
      %3365 = vmatprep.subr.mxu0 0.0
      %3366 = vmatpush1.msra.mxu0 0.0
      %3367 = vmatprep.subr.mxu0 0.0
      %3368 = vmatpush1.msra.mxu0 0.0
      %3369 = vmatprep.subr.mxu0 0.0
      %3370 = vmatpush1.msra.mxu0 0.0
      %3371 = vmatprep.subr.mxu0 0.0
      %3372 = vmatpush1.msra.mxu0 0.0
      %3373 = vmatprep.subr.mxu0 0.0
      %3374 = vmatpush1.msra.mxu0 0.0
      %3375 = vmatprep.subr.mxu0 0.0
      %3376 = vmatpush1.msra.mxu0 0.0
      %3377 = vmatprep.subr.mxu0 0.0
      %3378 = vmatpush1.msra.mxu0 0.0
      %3379 = vmatprep.subr.mxu0 0.0
      %3380 = vmatpush1.msra.mxu0 0.0
      %3381 = vmatprep.subr.mxu0 0.0
      %3382 = vmatpush1.msra.mxu0 0.0
      %3383 = vmatprep.subr.mxu0 0.0
      %3384 = vmatpush1.msra.mxu0 0.0
      %3385 = vmatprep.subr.mxu0 0.0
      %3386 = vmatpush1.msra.mxu0 0.0
      %3387 = vmatprep.subr.mxu0 0.0
      %3388 = vmatpush1.msra.mxu0 0.0
      %3389 = vmatprep.subr.mxu0 0.0
      %3390 = vmatpush1.msra.mxu0 0.0
      %3391 = vmatprep.subr.mxu0 0.0
      %3392 = vmatpush1.msra.mxu0 0.0
      %3393 = vmatprep.subr.mxu0 0.0
      %3394 = vmatpush1.msra.mxu0 0.0
      %3395 = vmatprep.subr.mxu0 0.0
      %3396 = vmatpush1.msra.mxu0 0.0
      %3397 = vmatprep.subr.mxu0 0.0
      %3398 = vmatpush1.msra.mxu0 0.0
      %3399 = vmatprep.subr.mxu0 0.0
      %3400 = vmatpush1.msra.mxu0 0.0
      %3401 = vmatprep.subr.mxu0 0.0
      %3402 = vmatpush1.msra.mxu0 0.0
      %3403 = vmatprep.subr.mxu0 0.0
      %3404 = vmatpush1.msra.mxu0 0.0
      %3405 = vmatprep.subr.mxu0 0.0
      %3406 = vmatpush1.msra.mxu0 0.0
      %3407 = vmatprep.subr.mxu0 0.0
      %3408 = vmatpush1.msra.mxu0 0.0
      %3409 = vmatprep.subr.mxu0 0.0
      %3410 = vmatpush1.msra.mxu0 0.0
      %3411 = vmatprep.subr.mxu0 0.0
      %3412 = vmatpush1.msra.mxu0 0.0
      %3413 = vmatprep.subr.mxu0 0.0
      %3414 = vmatpush1.msra.mxu0 0.0
      %3415 = vmatprep.subr.mxu0 0.0
      %3416 = vmatpush1.msra.mxu0 0.0
      %3417 = vmatprep.subr.mxu0 0.0
      %3418 = vmatpush1.msra.mxu0 0.0
      %3419 = vmatprep.subr.mxu0 0.0
      %3420 = vmatpush1.msra.mxu0 0.0
      %3421 = vmatprep.subr.mxu0 0.0
      %3422 = vmatpush1.msra.mxu0 0.0
      %3423 = vmatprep.mubr.f32.mxu0 0.0
      %3424 = vmatmul.mubr.f32.gmra.mrb[0].mxu0 %v3357
      %v3425 = vpop.f32.mrb[0].mxu0
      %v3426 = vadd.f32 %v3131, %v3425
      %v3427 = vpop.f32.mrb[0].mxu0
      %3428 = vdwg.mxu0
      %v3429 = vtanh.pop %v3426
      %v3431 = vsel %vm182, %v3429, 0
      %3433 = vmatprep.subr.mxu0 0.0
      %3434 = vmatpush1.msra.mxu0 %v50
      %3435 = vmatprep.subr.mxu0 0.0
      %3436 = vmatpush1.msra.mxu0 %v51
      %3437 = vmatprep.subr.mxu0 0.0
      %3438 = vmatpush1.msra.mxu0 %v52
      %3439 = vmatprep.subr.mxu0 0.0
      %3440 = vmatpush1.msra.mxu0 %v53
      %3441 = vmatprep.subr.mxu0 0.0
      %3442 = vmatpush1.msra.mxu0 0.0
      %3443 = vmatprep.subr.mxu0 0.0
      %3444 = vmatpush1.msra.mxu0 0.0
      %3445 = vmatprep.subr.mxu0 0.0
      %3446 = vmatpush1.msra.mxu0 0.0
      %3447 = vmatprep.subr.mxu0 0.0
      %3448 = vmatpush1.msra.mxu0 0.0
      %3449 = vmatprep.subr.mxu0 0.0
      %3450 = vmatpush1.msra.mxu0 0.0
      %3451 = vmatprep.subr.mxu0 0.0
      %3452 = vmatpush1.msra.mxu0 0.0
      %3453 = vmatprep.subr.mxu0 0.0
      %3454 = vmatpush1.msra.mxu0 0.0
      %3455 = vmatprep.subr.mxu0 0.0
      %3456 = vmatpush1.msra.mxu0 0.0
      %3457 = vmatprep.subr.mxu0 0.0
      %3458 = vmatpush1.msra.mxu0 0.0
      %3459 = vmatprep.subr.mxu0 0.0
      %3460 = vmatpush1.msra.mxu0 0.0
      %3461 = vmatprep.subr.mxu0 0.0
      %3462 = vmatpush1.msra.mxu0 0.0
      %3463 = vmatprep.subr.mxu0 0.0
      %3464 = vmatpush1.msra.mxu0 0.0
      %3465 = vmatprep.subr.mxu0 0.0
      %3466 = vmatpush1.msra.mxu0 0.0
      %3467 = vmatprep.subr.mxu0 0.0
      %3468 = vmatpush1.msra.mxu0 0.0
      %3469 = vmatprep.subr.mxu0 0.0
      %3470 = vmatpush1.msra.mxu0 0.0
      %3471 = vmatprep.subr.mxu0 0.0
      %3472 = vmatpush1.msra.mxu0 0.0
      %3473 = vmatprep.subr.mxu0 0.0
      %3474 = vmatpush1.msra.mxu0 0.0
      %3475 = vmatprep.subr.mxu0 0.0
      %3476 = vmatpush1.msra.mxu0 0.0
      %3477 = vmatprep.subr.mxu0 0.0
      %3478 = vmatpush1.msra.mxu0 0.0
      %3479 = vmatprep.subr.mxu0 0.0
      %3480 = vmatpush1.msra.mxu0 0.0
      %3481 = vmatprep.subr.mxu0 0.0
      %3482 = vmatpush1.msra.mxu0 0.0
      %3483 = vmatprep.subr.mxu0 0.0
      %3484 = vmatpush1.msra.mxu0 0.0
      %3485 = vmatprep.subr.mxu0 0.0
      %3486 = vmatpush1.msra.mxu0 0.0
      %3487 = vmatprep.subr.mxu0 0.0
      %3488 = vmatpush1.msra.mxu0 0.0
      %3489 = vmatprep.subr.mxu0 0.0
      %3490 = vmatpush1.msra.mxu0 0.0
      %3491 = vmatprep.subr.mxu0 0.0
      %3492 = vmatpush1.msra.mxu0 0.0
      %3493 = vmatprep.subr.mxu0 0.0
      %3494 = vmatpush1.msra.mxu0 0.0
      %3495 = vmatprep.subr.mxu0 0.0
      %3496 = vmatpush1.msra.mxu0 0.0
      %3497 = vmatprep.mubr.f32.mxu0 0.0
      %3498 = vmatmul.mubr.f32.gmra.mrb[0].mxu0 %v3431
      %v3499 = vpop.f32.mrb[0].mxu0
      %v3500 = vadd.f32 %v180, %v3499
      %v3501 = vpop.f32.mrb[0].mxu0
      %3502 = vdwg.mxu0
      %v3503 = vtanh.pop %v3500
      %v3505 = vsel %vm182, %v3503, 0
      %3507 = vmatprep.subr.mxu0 0.0
      %3508 = vmatpush1.msra.mxu0 %v55
      %3509 = vmatprep.subr.mxu0 0.0
      %3510 = vmatpush1.msra.mxu0 %v56
      %3511 = vmatprep.subr.mxu0 0.0
      %3512 = vmatpush1.msra.mxu0 %v57
      %3513 = vmatprep.subr.mxu0 0.0
      %3514 = vmatpush1.msra.mxu0 %v58
      %3515 = vmatprep.subr.mxu0 0.0
      %3516 = vmatpush1.msra.mxu0 0.0
      %3517 = vmatprep.subr.mxu0 0.0
      %3518 = vmatpush1.msra.mxu0 0.0
      %3519 = vmatprep.subr.mxu0 0.0
      %3520 = vmatpush1.msra.mxu0 0.0
      %3521 = vmatprep.subr.mxu0 0.0
      %3522 = vmatpush1.msra.mxu0 0.0
      %3523 = vmatprep.subr.mxu0 0.0
      %3524 = vmatpush1.msra.mxu0 0.0
      %3525 = vmatprep.subr.mxu0 0.0
      %3526 = vmatpush1.msra.mxu0 0.0
      %3527 = vmatprep.subr.mxu0 0.0
      %3528 = vmatpush1.msra.mxu0 0.0
      %3529 = vmatprep.subr.mxu0 0.0
      %3530 = vmatpush1.msra.mxu0 0.0
      %3531 = vmatprep.subr.mxu0 0.0
      %3532 = vmatpush1.msra.mxu0 0.0
      %3533 = vmatprep.subr.mxu0 0.0
      %3534 = vmatpush1.msra.mxu0 0.0
      %3535 = vmatprep.subr.mxu0 0.0
      %3536 = vmatpush1.msra.mxu0 0.0
      %3537 = vmatprep.subr.mxu0 0.0
      %3538 = vmatpush1.msra.mxu0 0.0
      %3539 = vmatprep.subr.mxu0 0.0
      %3540 = vmatpush1.msra.mxu0 0.0
      %3541 = vmatprep.subr.mxu0 0.0
      %3542 = vmatpush1.msra.mxu0 0.0
      %3543 = vmatprep.subr.mxu0 0.0
      %3544 = vmatpush1.msra.mxu0 0.0
      %3545 = vmatprep.subr.mxu0 0.0
      %3546 = vmatpush1.msra.mxu0 0.0
      %3547 = vmatprep.subr.mxu0 0.0
      %3548 = vmatpush1.msra.mxu0 0.0
      %3549 = vmatprep.subr.mxu0 0.0
      %3550 = vmatpush1.msra.mxu0 0.0
      %3551 = vmatprep.subr.mxu0 0.0
      %3552 = vmatpush1.msra.mxu0 0.0
      %3553 = vmatprep.subr.mxu0 0.0
      %3554 = vmatpush1.msra.mxu0 0.0
      %3555 = vmatprep.subr.mxu0 0.0
      %3556 = vmatpush1.msra.mxu0 0.0
      %3557 = vmatprep.subr.mxu0 0.0
      %3558 = vmatpush1.msra.mxu0 0.0
      %3559 = vmatprep.subr.mxu0 0.0
      %3560 = vmatpush1.msra.mxu0 0.0
      %3561 = vmatprep.subr.mxu0 0.0
      %3562 = vmatpush1.msra.mxu0 0.0
      %3563 = vmatprep.subr.mxu0 0.0
      %3564 = vmatpush1.msra.mxu0 0.0
      %3565 = vmatprep.subr.mxu0 0.0
      %3566 = vmatpush1.msra.mxu0 0.0
      %3567 = vmatprep.subr.mxu0 0.0
      %3568 = vmatpush1.msra.mxu0 0.0
      %3569 = vmatprep.subr.mxu0 0.0
      %3570 = vmatpush1.msra.mxu0 0.0
      %3571 = vmatprep.mubr.f32.mxu0 0.0
      %3572 = vmatmul.mubr.f32.gmra.mrb[0].mxu0 %v3505
      %v3573 = vpop.f32.mrb[0].mxu0
      %v3574 = vadd.f32 %v261, %v3573
      %v3575 = vpop.f32.mrb[0].mxu0
      %3576 = vdwg.mxu0
      %v3577 = vmul.f32 %v789, %v3574
      %v3578 = vadd.f32 %v2884, %v3577
      %v3580 = vlaneseq
      %v3581 = vshrl.u32 %v3580, 7
      %v3582 = vsub.s32 0, %v3581
      %v3583 = vrot.slane %v2897, %v3582
      %v3586 = vsel %vm97, %v3578, 0
      %3588 = vmatprep.subr.mxu0 0.0
      %3589 = vmatpush1.msra.mxu0 %v46
      %3590 = vmatprep.subr.mxu0 0.0
      %3591 = vmatpush1.msra.mxu0 %v103
      %3592 = vmatprep.subr.mxu0 0.0
      %3593 = vmatpush1.msra.mxu0 0.0
      %3594 = vmatprep.subr.mxu0 0.0
      %3595 = vmatpush1.msra.mxu0 0.0
      %3596 = vmatprep.subr.mxu0 0.0
      %3597 = vmatpush1.msra.mxu0 0.0
      %3598 = vmatprep.subr.mxu0 0.0
      %3599 = vmatpush1.msra.mxu0 0.0
      %3600 = vmatprep.subr.mxu0 0.0
      %3601 = vmatpush1.msra.mxu0 0.0
      %3602 = vmatprep.subr.mxu0 0.0
      %3603 = vmatpush1.msra.mxu0 0.0
      %3604 = vmatprep.subr.mxu0 0.0
      %3605 = vmatpush1.msra.mxu0 0.0
      %3606 = vmatprep.subr.mxu0 0.0
      %3607 = vmatpush1.msra.mxu0 0.0
      %3608 = vmatprep.subr.mxu0 0.0
      %3609 = vmatpush1.msra.mxu0 0.0
      %3610 = vmatprep.subr.mxu0 0.0
      %3611 = vmatpush1.msra.mxu0 0.0
      %3612 = vmatprep.subr.mxu0 0.0
      %3613 = vmatpush1.msra.mxu0 0.0
      %3614 = vmatprep.subr.mxu0 0.0
      %3615 = vmatpush1.msra.mxu0 0.0
      %3616 = vmatprep.subr.mxu0 0.0
      %3617 = vmatpush1.msra.mxu0 0.0
      %3618 = vmatprep.subr.mxu0 0.0
      %3619 = vmatpush1.msra.mxu0 0.0
      %3620 = vmatprep.subr.mxu0 0.0
      %3621 = vmatpush1.msra.mxu0 0.0
      %3622 = vmatprep.subr.mxu0 0.0
      %3623 = vmatpush1.msra.mxu0 0.0
      %3624 = vmatprep.subr.mxu0 0.0
      %3625 = vmatpush1.msra.mxu0 0.0
      %3626 = vmatprep.subr.mxu0 0.0
      %3627 = vmatpush1.msra.mxu0 0.0
      %3628 = vmatprep.subr.mxu0 0.0
      %3629 = vmatpush1.msra.mxu0 0.0
      %3630 = vmatprep.subr.mxu0 0.0
      %3631 = vmatpush1.msra.mxu0 0.0
      %3632 = vmatprep.subr.mxu0 0.0
      %3633 = vmatpush1.msra.mxu0 0.0
      %3634 = vmatprep.subr.mxu0 0.0
      %3635 = vmatpush1.msra.mxu0 0.0
      %3636 = vmatprep.subr.mxu0 0.0
      %3637 = vmatpush1.msra.mxu0 0.0
      %3638 = vmatprep.subr.mxu0 0.0
      %3639 = vmatpush1.msra.mxu0 0.0
      %3640 = vmatprep.subr.mxu0 0.0
      %3641 = vmatpush1.msra.mxu0 0.0
      %3642 = vmatprep.subr.mxu0 0.0
      %3643 = vmatpush1.msra.mxu0 0.0
      %3644 = vmatprep.subr.mxu0 0.0
      %3645 = vmatpush1.msra.mxu0 0.0
      %3646 = vmatprep.subr.mxu0 0.0
      %3647 = vmatpush1.msra.mxu0 0.0
      %3648 = vmatprep.subr.mxu0 0.0
      %3649 = vmatpush1.msra.mxu0 0.0
      %3650 = vmatprep.subr.mxu0 0.0
      %3651 = vmatpush1.msra.mxu0 0.0
      %3652 = vmatprep.mubr.f32.mxu0 0.0
      %3653 = vmatmul.mubr.f32.gmra.mrb[0].mxu0 %v3586
      %v3654 = vpop.f32.mrb[0].mxu0
      %v3655 = vadd.f32 %v3583, %v3654
      %v3656 = vpop.f32.mrb[0].mxu0
      %3657 = vdwg.mxu0
      %v3658 = vtanh.pop %v3655
      %v3660 = vsel %vm182, %v3658, 0
      %3662 = vmatprep.subr.mxu0 0.0
      %3663 = vmatpush1.msra.mxu0 %v50
      %3664 = vmatprep.subr.mxu0 0.0
      %3665 = vmatpush1.msra.mxu0 %v51
      %3666 = vmatprep.subr.mxu0 0.0
      %3667 = vmatpush1.msra.mxu0 %v52
      %3668 = vmatprep.subr.mxu0 0.0
      %3669 = vmatpush1.msra.mxu0 %v53
      %3670 = vmatprep.subr.mxu0 0.0
      %3671 = vmatpush1.msra.mxu0 0.0
      %3672 = vmatprep.subr.mxu0 0.0
      %3673 = vmatpush1.msra.mxu0 0.0
      %3674 = vmatprep.subr.mxu0 0.0
      %3675 = vmatpush1.msra.mxu0 0.0
      %3676 = vmatprep.subr.mxu0 0.0
      %3677 = vmatpush1.msra.mxu0 0.0
      %3678 = vmatprep.subr.mxu0 0.0
      %3679 = vmatpush1.msra.mxu0 0.0
      %3680 = vmatprep.subr.mxu0 0.0
      %3681 = vmatpush1.msra.mxu0 0.0
      %3682 = vmatprep.subr.mxu0 0.0
      %3683 = vmatpush1.msra.mxu0 0.0
      %3684 = vmatprep.subr.mxu0 0.0
      %3685 = vmatpush1.msra.mxu0 0.0
      %3686 = vmatprep.subr.mxu0 0.0
      %3687 = vmatpush1.msra.mxu0 0.0
      %3688 = vmatprep.subr.mxu0 0.0
      %3689 = vmatpush1.msra.mxu0 0.0
      %3690 = vmatprep.subr.mxu0 0.0
      %3691 = vmatpush1.msra.mxu0 0.0
      %3692 = vmatprep.subr.mxu0 0.0
      %3693 = vmatpush1.msra.mxu0 0.0
      %3694 = vmatprep.subr.mxu0 0.0
      %3695 = vmatpush1.msra.mxu0 0.0
      %3696 = vmatprep.subr.mxu0 0.0
      %3697 = vmatpush1.msra.mxu0 0.0
      %3698 = vmatprep.subr.mxu0 0.0
      %3699 = vmatpush1.msra.mxu0 0.0
      %3700 = vmatprep.subr.mxu0 0.0
      %3701 = vmatpush1.msra.mxu0 0.0
      %3702 = vmatprep.subr.mxu0 0.0
      %3703 = vmatpush1.msra.mxu0 0.0
      %3704 = vmatprep.subr.mxu0 0.0
      %3705 = vmatpush1.msra.mxu0 0.0
      %3706 = vmatprep.subr.mxu0 0.0
      %3707 = vmatpush1.msra.mxu0 0.0
      %3708 = vmatprep.subr.mxu0 0.0
      %3709 = vmatpush1.msra.mxu0 0.0
      %3710 = vmatprep.subr.mxu0 0.0
      %3711 = vmatpush1.msra.mxu0 0.0
      %3712 = vmatprep.subr.mxu0 0.0
      %3713 = vmatpush1.msra.mxu0 0.0
      %3714 = vmatprep.subr.mxu0 0.0
      %3715 = vmatpush1.msra.mxu0 0.0
      %3716 = vmatprep.subr.mxu0 0.0
      %3717 = vmatpush1.msra.mxu0 0.0
      %3718 = vmatprep.subr.mxu0 0.0
      %3719 = vmatpush1.msra.mxu0 0.0
      %3720 = vmatprep.subr.mxu0 0.0
      %3721 = vmatpush1.msra.mxu0 0.0
      %3722 = vmatprep.subr.mxu0 0.0
      %3723 = vmatpush1.msra.mxu0 0.0
      %3724 = vmatprep.subr.mxu0 0.0
      %3725 = vmatpush1.msra.mxu0 0.0
      %3726 = vmatprep.mubr.f32.mxu0 0.0
      %3727 = vmatmul.mubr.f32.gmra.mrb[0].mxu0 %v3660
      %v3728 = vpop.f32.mrb[0].mxu0
      %v3729 = vadd.f32 %v180, %v3728
      %v3730 = vpop.f32.mrb[0].mxu0
      %3731 = vdwg.mxu0
      %v3732 = vtanh.pop %v3729
      %v3734 = vsel %vm182, %v3732, 0
      %3736 = vmatprep.subr.mxu0 0.0
      %3737 = vmatpush1.msra.mxu0 %v55
      %3738 = vmatprep.subr.mxu0 0.0
      %3739 = vmatpush1.msra.mxu0 %v56
      %3740 = vmatprep.subr.mxu0 0.0
      %3741 = vmatpush1.msra.mxu0 %v57
      %3742 = vmatprep.subr.mxu0 0.0
      %3743 = vmatpush1.msra.mxu0 %v58
      %3744 = vmatprep.subr.mxu0 0.0
      %3745 = vmatpush1.msra.mxu0 0.0
      %3746 = vmatprep.subr.mxu0 0.0
      %3747 = vmatpush1.msra.mxu0 0.0
      %3748 = vmatprep.subr.mxu0 0.0
      %3749 = vmatpush1.msra.mxu0 0.0
      %3750 = vmatprep.subr.mxu0 0.0
      %3751 = vmatpush1.msra.mxu0 0.0
      %3752 = vmatprep.subr.mxu0 0.0
      %3753 = vmatpush1.msra.mxu0 0.0
      %3754 = vmatprep.subr.mxu0 0.0
      %3755 = vmatpush1.msra.mxu0 0.0
      %3756 = vmatprep.subr.mxu0 0.0
      %3757 = vmatpush1.msra.mxu0 0.0
      %3758 = vmatprep.subr.mxu0 0.0
      %3759 = vmatpush1.msra.mxu0 0.0
      %3760 = vmatprep.subr.mxu0 0.0
      %3761 = vmatpush1.msra.mxu0 0.0
      %3762 = vmatprep.subr.mxu0 0.0
      %3763 = vmatpush1.msra.mxu0 0.0
      %3764 = vmatprep.subr.mxu0 0.0
      %3765 = vmatpush1.msra.mxu0 0.0
      %3766 = vmatprep.subr.mxu0 0.0
      %3767 = vmatpush1.msra.mxu0 0.0
      %3768 = vmatprep.subr.mxu0 0.0
      %3769 = vmatpush1.msra.mxu0 0.0
      %3770 = vmatprep.subr.mxu0 0.0
      %3771 = vmatpush1.msra.mxu0 0.0
      %3772 = vmatprep.subr.mxu0 0.0
      %3773 = vmatpush1.msra.mxu0 0.0
      %3774 = vmatprep.subr.mxu0 0.0
      %3775 = vmatpush1.msra.mxu0 0.0
      %3776 = vmatprep.subr.mxu0 0.0
      %3777 = vmatpush1.msra.mxu0 0.0
      %3778 = vmatprep.subr.mxu0 0.0
      %3779 = vmatpush1.msra.mxu0 0.0
      %3780 = vmatprep.subr.mxu0 0.0
      %3781 = vmatpush1.msra.mxu0 0.0
      %3782 = vmatprep.subr.mxu0 0.0
      %3783 = vmatpush1.msra.mxu0 0.0
      %3784 = vmatprep.subr.mxu0 0.0
      %3785 = vmatpush1.msra.mxu0 0.0
      %3786 = vmatprep.subr.mxu0 0.0
      %3787 = vmatpush1.msra.mxu0 0.0
      %3788 = vmatprep.subr.mxu0 0.0
      %3789 = vmatpush1.msra.mxu0 0.0
      %3790 = vmatprep.subr.mxu0 0.0
      %3791 = vmatpush1.msra.mxu0 0.0
      %3792 = vmatprep.subr.mxu0 0.0
      %3793 = vmatpush1.msra.mxu0 0.0
      %3794 = vmatprep.subr.mxu0 0.0
      %3795 = vmatpush1.msra.mxu0 0.0
      %3796 = vmatprep.subr.mxu0 0.0
      %3797 = vmatpush1.msra.mxu0 0.0
      %3798 = vmatprep.subr.mxu0 0.0
      %3799 = vmatpush1.msra.mxu0 0.0
      %3800 = vmatprep.mubr.f32.mxu0 0.0
      %3801 = vmatmul.mubr.f32.gmra.mrb[0].mxu0 %v3734
      %v3802 = vpop.f32.mrb[0].mxu0
      %v3803 = vadd.f32 %v261, %v3802
      %v3804 = vpop.f32.mrb[0].mxu0
      %3805 = vdwg.mxu0
      %v3806 = vmul.f32 %v3351, 2.0
      %v3807 = vadd.f32 %v3122, %v3806
      %v3808 = vmul.f32 %v3574, 2.0
      %v3809 = vadd.f32 %v3807, %v3808
      %v3810 = vadd.f32 %v3809, %v3803
      %v3811 = vmul.f32 %v1027, %v3810
      %v3812 = vadd.f32 %v2884, %v3811
      %s3813 = smul.f32 %s76, 4.0
      %s3814 = sadd.f32 %s71, %s3813
      %v3815 = vstv %s3814
      %v3816 = vmul.f32 %v3815, %v48
      %v3817 = vadd.f32 %v3816, %v49
      %s3818 = sadd.f32 %s3814, %s82
      %v3819 = vstv %s3818
      %v3820 = vmul.f32 %v3819, %v48
      %v3821 = vadd.f32 %v3820, %v49
      %s3822 = sadd.f32 %s3814, %s76
      %v3823 = vstv %s3822
      %v3824 = vmul.f32 %v3823, %v48
      %v3825 = vadd.f32 %v3824, %v49
      %v3827 = vlaneseq
      %v3828 = vshrl.u32 %v3827, 7
      %v3829 = vsub.s32 0, %v3828
      %v3830 = vrot.slane %v3817, %v3829
      %v3833 = vsel %vm97, %v3812, 0
      %3835 = vmatprep.subr.mxu0 0.0
      %3836 = vmatpush1.msra.mxu0 %v46
      %3837 = vmatprep.subr.mxu0 0.0
      %3838 = vmatpush1.msra.mxu0 %v103
      %3839 = vmatprep.subr.mxu0 0.0
      %3840 = vmatpush1.msra.mxu0 0.0
      %3841 = vmatprep.subr.mxu0 0.0
      %3842 = vmatpush1.msra.mxu0 0.0
      %3843 = vmatprep.subr.mxu0 0.0
      %3844 = vmatpush1.msra.mxu0 0.0
      %3845 = vmatprep.subr.mxu0 0.0
      %3846 = vmatpush1.msra.mxu0 0.0
      %3847 = vmatprep.subr.mxu0 0.0
      %3848 = vmatpush1.msra.mxu0 0.0
      %3849 = vmatprep.subr.mxu0 0.0
      %3850 = vmatpush1.msra.mxu0 0.0
      %3851 = vmatprep.subr.mxu0 0.0
      %3852 = vmatpush1.msra.mxu0 0.0
      %3853 = vmatprep.subr.mxu0 0.0
      %3854 = vmatpush1.msra.mxu0 0.0
      %3855 = vmatprep.subr.mxu0 0.0
      %3856 = vmatpush1.msra.mxu0 0.0
      %3857 = vmatprep.subr.mxu0 0.0
      %3858 = vmatpush1.msra.mxu0 0.0
      %3859 = vmatprep.subr.mxu0 0.0
      %3860 = vmatpush1.msra.mxu0 0.0
      %3861 = vmatprep.subr.mxu0 0.0
      %3862 = vmatpush1.msra.mxu0 0.0
      %3863 = vmatprep.subr.mxu0 0.0
      %3864 = vmatpush1.msra.mxu0 0.0
      %3865 = vmatprep.subr.mxu0 0.0
      %3866 = vmatpush1.msra.mxu0 0.0
      %3867 = vmatprep.subr.mxu0 0.0
      %3868 = vmatpush1.msra.mxu0 0.0
      %3869 = vmatprep.subr.mxu0 0.0
      %3870 = vmatpush1.msra.mxu0 0.0
      %3871 = vmatprep.subr.mxu0 0.0
      %3872 = vmatpush1.msra.mxu0 0.0
      %3873 = vmatprep.subr.mxu0 0.0
      %3874 = vmatpush1.msra.mxu0 0.0
      %3875 = vmatprep.subr.mxu0 0.0
      %3876 = vmatpush1.msra.mxu0 0.0
      %3877 = vmatprep.subr.mxu0 0.0
      %3878 = vmatpush1.msra.mxu0 0.0
      %3879 = vmatprep.subr.mxu0 0.0
      %3880 = vmatpush1.msra.mxu0 0.0
      %3881 = vmatprep.subr.mxu0 0.0
      %3882 = vmatpush1.msra.mxu0 0.0
      %3883 = vmatprep.subr.mxu0 0.0
      %3884 = vmatpush1.msra.mxu0 0.0
      %3885 = vmatprep.subr.mxu0 0.0
      %3886 = vmatpush1.msra.mxu0 0.0
      %3887 = vmatprep.subr.mxu0 0.0
      %3888 = vmatpush1.msra.mxu0 0.0
      %3889 = vmatprep.subr.mxu0 0.0
      %3890 = vmatpush1.msra.mxu0 0.0
      %3891 = vmatprep.subr.mxu0 0.0
      %3892 = vmatpush1.msra.mxu0 0.0
      %3893 = vmatprep.subr.mxu0 0.0
      %3894 = vmatpush1.msra.mxu0 0.0
      %3895 = vmatprep.subr.mxu0 0.0
      %3896 = vmatpush1.msra.mxu0 0.0
      %3897 = vmatprep.subr.mxu0 0.0
      %3898 = vmatpush1.msra.mxu0 0.0
      %3899 = vmatprep.mubr.f32.mxu0 0.0
      %3900 = vmatmul.mubr.f32.gmra.mrb[0].mxu0 %v3833
      %v3901 = vpop.f32.mrb[0].mxu0
      %v3902 = vadd.f32 %v3830, %v3901
      %v3903 = vpop.f32.mrb[0].mxu0
      %3904 = vdwg.mxu0
      %v3905 = vtanh.pop %v3902
      %v3907 = vsel %vm182, %v3905, 0
      %3909 = vmatprep.subr.mxu0 0.0
      %3910 = vmatpush1.msra.mxu0 %v50
      %3911 = vmatprep.subr.mxu0 0.0
      %3912 = vmatpush1.msra.mxu0 %v51
      %3913 = vmatprep.subr.mxu0 0.0
      %3914 = vmatpush1.msra.mxu0 %v52
      %3915 = vmatprep.subr.mxu0 0.0
      %3916 = vmatpush1.msra.mxu0 %v53
      %3917 = vmatprep.subr.mxu0 0.0
      %3918 = vmatpush1.msra.mxu0 0.0
      %3919 = vmatprep.subr.mxu0 0.0
      %3920 = vmatpush1.msra.mxu0 0.0
      %3921 = vmatprep.subr.mxu0 0.0
      %3922 = vmatpush1.msra.mxu0 0.0
      %3923 = vmatprep.subr.mxu0 0.0
      %3924 = vmatpush1.msra.mxu0 0.0
      %3925 = vmatprep.subr.mxu0 0.0
      %3926 = vmatpush1.msra.mxu0 0.0
      %3927 = vmatprep.subr.mxu0 0.0
      %3928 = vmatpush1.msra.mxu0 0.0
      %3929 = vmatprep.subr.mxu0 0.0
      %3930 = vmatpush1.msra.mxu0 0.0
      %3931 = vmatprep.subr.mxu0 0.0
      %3932 = vmatpush1.msra.mxu0 0.0
      %3933 = vmatprep.subr.mxu0 0.0
      %3934 = vmatpush1.msra.mxu0 0.0
      %3935 = vmatprep.subr.mxu0 0.0
      %3936 = vmatpush1.msra.mxu0 0.0
      %3937 = vmatprep.subr.mxu0 0.0
      %3938 = vmatpush1.msra.mxu0 0.0
      %3939 = vmatprep.subr.mxu0 0.0
      %3940 = vmatpush1.msra.mxu0 0.0
      %3941 = vmatprep.subr.mxu0 0.0
      %3942 = vmatpush1.msra.mxu0 0.0
      %3943 = vmatprep.subr.mxu0 0.0
      %3944 = vmatpush1.msra.mxu0 0.0
      %3945 = vmatprep.subr.mxu0 0.0
      %3946 = vmatpush1.msra.mxu0 0.0
      %3947 = vmatprep.subr.mxu0 0.0
      %3948 = vmatpush1.msra.mxu0 0.0
      %3949 = vmatprep.subr.mxu0 0.0
      %3950 = vmatpush1.msra.mxu0 0.0
      %3951 = vmatprep.subr.mxu0 0.0
      %3952 = vmatpush1.msra.mxu0 0.0
      %3953 = vmatprep.subr.mxu0 0.0
      %3954 = vmatpush1.msra.mxu0 0.0
      %3955 = vmatprep.subr.mxu0 0.0
      %3956 = vmatpush1.msra.mxu0 0.0
      %3957 = vmatprep.subr.mxu0 0.0
      %3958 = vmatpush1.msra.mxu0 0.0
      %3959 = vmatprep.subr.mxu0 0.0
      %3960 = vmatpush1.msra.mxu0 0.0
      %3961 = vmatprep.subr.mxu0 0.0
      %3962 = vmatpush1.msra.mxu0 0.0
      %3963 = vmatprep.subr.mxu0 0.0
      %3964 = vmatpush1.msra.mxu0 0.0
      %3965 = vmatprep.subr.mxu0 0.0
      %3966 = vmatpush1.msra.mxu0 0.0
      %3967 = vmatprep.subr.mxu0 0.0
      %3968 = vmatpush1.msra.mxu0 0.0
      %3969 = vmatprep.subr.mxu0 0.0
      %3970 = vmatpush1.msra.mxu0 0.0
      %3971 = vmatprep.subr.mxu0 0.0
      %3972 = vmatpush1.msra.mxu0 0.0
      %3973 = vmatprep.mubr.f32.mxu0 0.0
      %3974 = vmatmul.mubr.f32.gmra.mrb[0].mxu0 %v3907
      %v3975 = vpop.f32.mrb[0].mxu0
      %v3976 = vadd.f32 %v180, %v3975
      %v3977 = vpop.f32.mrb[0].mxu0
      %3978 = vdwg.mxu0
      %v3979 = vtanh.pop %v3976
      %v3981 = vsel %vm182, %v3979, 0
      %3983 = vmatprep.subr.mxu0 0.0
      %3984 = vmatpush1.msra.mxu0 %v55
      %3985 = vmatprep.subr.mxu0 0.0
      %3986 = vmatpush1.msra.mxu0 %v56
      %3987 = vmatprep.subr.mxu0 0.0
      %3988 = vmatpush1.msra.mxu0 %v57
      %3989 = vmatprep.subr.mxu0 0.0
      %3990 = vmatpush1.msra.mxu0 %v58
      %3991 = vmatprep.subr.mxu0 0.0
      %3992 = vmatpush1.msra.mxu0 0.0
      %3993 = vmatprep.subr.mxu0 0.0
      %3994 = vmatpush1.msra.mxu0 0.0
      %3995 = vmatprep.subr.mxu0 0.0
      %3996 = vmatpush1.msra.mxu0 0.0
      %3997 = vmatprep.subr.mxu0 0.0
      %3998 = vmatpush1.msra.mxu0 0.0
      %3999 = vmatprep.subr.mxu0 0.0
      %4000 = vmatpush1.msra.mxu0 0.0
      %4001 = vmatprep.subr.mxu0 0.0
      %4002 = vmatpush1.msra.mxu0 0.0
      %4003 = vmatprep.subr.mxu0 0.0
      %4004 = vmatpush1.msra.mxu0 0.0
      %4005 = vmatprep.subr.mxu0 0.0
      %4006 = vmatpush1.msra.mxu0 0.0
      %4007 = vmatprep.subr.mxu0 0.0
      %4008 = vmatpush1.msra.mxu0 0.0
      %4009 = vmatprep.subr.mxu0 0.0
      %4010 = vmatpush1.msra.mxu0 0.0
      %4011 = vmatprep.subr.mxu0 0.0
      %4012 = vmatpush1.msra.mxu0 0.0
      %4013 = vmatprep.subr.mxu0 0.0
      %4014 = vmatpush1.msra.mxu0 0.0
      %4015 = vmatprep.subr.mxu0 0.0
      %4016 = vmatpush1.msra.mxu0 0.0
      %4017 = vmatprep.subr.mxu0 0.0
      %4018 = vmatpush1.msra.mxu0 0.0
      %4019 = vmatprep.subr.mxu0 0.0
      %4020 = vmatpush1.msra.mxu0 0.0
      %4021 = vmatprep.subr.mxu0 0.0
      %4022 = vmatpush1.msra.mxu0 0.0
      %4023 = vmatprep.subr.mxu0 0.0
      %4024 = vmatpush1.msra.mxu0 0.0
      %4025 = vmatprep.subr.mxu0 0.0
      %4026 = vmatpush1.msra.mxu0 0.0
      %4027 = vmatprep.subr.mxu0 0.0
      %4028 = vmatpush1.msra.mxu0 0.0
      %4029 = vmatprep.subr.mxu0 0.0
      %4030 = vmatpush1.msra.mxu0 0.0
      %4031 = vmatprep.subr.mxu0 0.0
      %4032 = vmatpush1.msra.mxu0 0.0
      %4033 = vmatprep.subr.mxu0 0.0
      %4034 = vmatpush1.msra.mxu0 0.0
      %4035 = vmatprep.subr.mxu0 0.0
      %4036 = vmatpush1.msra.mxu0 0.0
      %4037 = vmatprep.subr.mxu0 0.0
      %4038 = vmatpush1.msra.mxu0 0.0
      %4039 = vmatprep.subr.mxu0 0.0
      %4040 = vmatpush1.msra.mxu0 0.0
      %4041 = vmatprep.subr.mxu0 0.0
      %4042 = vmatpush1.msra.mxu0 0.0
      %4043 = vmatprep.subr.mxu0 0.0
      %4044 = vmatpush1.msra.mxu0 0.0
      %4045 = vmatprep.subr.mxu0 0.0
      %4046 = vmatpush1.msra.mxu0 0.0
      %4047 = vmatprep.mubr.f32.mxu0 0.0
      %4048 = vmatmul.mubr.f32.gmra.mrb[0].mxu0 %v3981
      %v4049 = vpop.f32.mrb[0].mxu0
      %v4050 = vadd.f32 %v261, %v4049
      %v4051 = vpop.f32.mrb[0].mxu0
      %4052 = vdwg.mxu0
      %v4053 = vmul.f32 %v336, %v4050
      %v4054 = vadd.f32 %v3812, %v4053
      %v4056 = vlaneseq
      %v4057 = vshrl.u32 %v4056, 7
      %v4058 = vsub.s32 0, %v4057
      %v4059 = vrot.slane %v3821, %v4058
      %v4062 = vsel %vm97, %v4054, 0
      %4064 = vmatprep.subr.mxu0 0.0
      %4065 = vmatpush1.msra.mxu0 %v46
      %4066 = vmatprep.subr.mxu0 0.0
      %4067 = vmatpush1.msra.mxu0 %v103
      %4068 = vmatprep.subr.mxu0 0.0
      %4069 = vmatpush1.msra.mxu0 0.0
      %4070 = vmatprep.subr.mxu0 0.0
      %4071 = vmatpush1.msra.mxu0 0.0
      %4072 = vmatprep.subr.mxu0 0.0
      %4073 = vmatpush1.msra.mxu0 0.0
      %4074 = vmatprep.subr.mxu0 0.0
      %4075 = vmatpush1.msra.mxu0 0.0
      %4076 = vmatprep.subr.mxu0 0.0
      %4077 = vmatpush1.msra.mxu0 0.0
      %4078 = vmatprep.subr.mxu0 0.0
      %4079 = vmatpush1.msra.mxu0 0.0
      %4080 = vmatprep.subr.mxu0 0.0
      %4081 = vmatpush1.msra.mxu0 0.0
      %4082 = vmatprep.subr.mxu0 0.0
      %4083 = vmatpush1.msra.mxu0 0.0
      %4084 = vmatprep.subr.mxu0 0.0
      %4085 = vmatpush1.msra.mxu0 0.0
      %4086 = vmatprep.subr.mxu0 0.0
      %4087 = vmatpush1.msra.mxu0 0.0
      %4088 = vmatprep.subr.mxu0 0.0
      %4089 = vmatpush1.msra.mxu0 0.0
      %4090 = vmatprep.subr.mxu0 0.0
      %4091 = vmatpush1.msra.mxu0 0.0
      %4092 = vmatprep.subr.mxu0 0.0
      %4093 = vmatpush1.msra.mxu0 0.0
      %4094 = vmatprep.subr.mxu0 0.0
      %4095 = vmatpush1.msra.mxu0 0.0
      %4096 = vmatprep.subr.mxu0 0.0
      %4097 = vmatpush1.msra.mxu0 0.0
      %4098 = vmatprep.subr.mxu0 0.0
      %4099 = vmatpush1.msra.mxu0 0.0
      %4100 = vmatprep.subr.mxu0 0.0
      %4101 = vmatpush1.msra.mxu0 0.0
      %4102 = vmatprep.subr.mxu0 0.0
      %4103 = vmatpush1.msra.mxu0 0.0
      %4104 = vmatprep.subr.mxu0 0.0
      %4105 = vmatpush1.msra.mxu0 0.0
      %4106 = vmatprep.subr.mxu0 0.0
      %4107 = vmatpush1.msra.mxu0 0.0
      %4108 = vmatprep.subr.mxu0 0.0
      %4109 = vmatpush1.msra.mxu0 0.0
      %4110 = vmatprep.subr.mxu0 0.0
      %4111 = vmatpush1.msra.mxu0 0.0
      %4112 = vmatprep.subr.mxu0 0.0
      %4113 = vmatpush1.msra.mxu0 0.0
      %4114 = vmatprep.subr.mxu0 0.0
      %4115 = vmatpush1.msra.mxu0 0.0
      %4116 = vmatprep.subr.mxu0 0.0
      %4117 = vmatpush1.msra.mxu0 0.0
      %4118 = vmatprep.subr.mxu0 0.0
      %4119 = vmatpush1.msra.mxu0 0.0
      %4120 = vmatprep.subr.mxu0 0.0
      %4121 = vmatpush1.msra.mxu0 0.0
      %4122 = vmatprep.subr.mxu0 0.0
      %4123 = vmatpush1.msra.mxu0 0.0
      %4124 = vmatprep.subr.mxu0 0.0
      %4125 = vmatpush1.msra.mxu0 0.0
      %4126 = vmatprep.subr.mxu0 0.0
      %4127 = vmatpush1.msra.mxu0 0.0
      %4128 = vmatprep.mubr.f32.mxu0 0.0
      %4129 = vmatmul.mubr.f32.gmra.mrb[0].mxu0 %v4062
      %v4130 = vpop.f32.mrb[0].mxu0
      %v4131 = vadd.f32 %v4059, %v4130
      %v4132 = vpop.f32.mrb[0].mxu0
      %4133 = vdwg.mxu0
      %v4134 = vtanh.pop %v4131
      %v4136 = vsel %vm182, %v4134, 0
      %4138 = vmatprep.subr.mxu0 0.0
      %4139 = vmatpush1.msra.mxu0 %v50
      %4140 = vmatprep.subr.mxu0 0.0
      %4141 = vmatpush1.msra.mxu0 %v51
      %4142 = vmatprep.subr.mxu0 0.0
      %4143 = vmatpush1.msra.mxu0 %v52
      %4144 = vmatprep.subr.mxu0 0.0
      %4145 = vmatpush1.msra.mxu0 %v53
      %4146 = vmatprep.subr.mxu0 0.0
      %4147 = vmatpush1.msra.mxu0 0.0
      %4148 = vmatprep.subr.mxu0 0.0
      %4149 = vmatpush1.msra.mxu0 0.0
      %4150 = vmatprep.subr.mxu0 0.0
      %4151 = vmatpush1.msra.mxu0 0.0
      %4152 = vmatprep.subr.mxu0 0.0
      %4153 = vmatpush1.msra.mxu0 0.0
      %4154 = vmatprep.subr.mxu0 0.0
      %4155 = vmatpush1.msra.mxu0 0.0
      %4156 = vmatprep.subr.mxu0 0.0
      %4157 = vmatpush1.msra.mxu0 0.0
      %4158 = vmatprep.subr.mxu0 0.0
      %4159 = vmatpush1.msra.mxu0 0.0
      %4160 = vmatprep.subr.mxu0 0.0
      %4161 = vmatpush1.msra.mxu0 0.0
      %4162 = vmatprep.subr.mxu0 0.0
      %4163 = vmatpush1.msra.mxu0 0.0
      %4164 = vmatprep.subr.mxu0 0.0
      %4165 = vmatpush1.msra.mxu0 0.0
      %4166 = vmatprep.subr.mxu0 0.0
      %4167 = vmatpush1.msra.mxu0 0.0
      %4168 = vmatprep.subr.mxu0 0.0
      %4169 = vmatpush1.msra.mxu0 0.0
      %4170 = vmatprep.subr.mxu0 0.0
      %4171 = vmatpush1.msra.mxu0 0.0
      %4172 = vmatprep.subr.mxu0 0.0
      %4173 = vmatpush1.msra.mxu0 0.0
      %4174 = vmatprep.subr.mxu0 0.0
      %4175 = vmatpush1.msra.mxu0 0.0
      %4176 = vmatprep.subr.mxu0 0.0
      %4177 = vmatpush1.msra.mxu0 0.0
      %4178 = vmatprep.subr.mxu0 0.0
      %4179 = vmatpush1.msra.mxu0 0.0
      %4180 = vmatprep.subr.mxu0 0.0
      %4181 = vmatpush1.msra.mxu0 0.0
      %4182 = vmatprep.subr.mxu0 0.0
      %4183 = vmatpush1.msra.mxu0 0.0
      %4184 = vmatprep.subr.mxu0 0.0
      %4185 = vmatpush1.msra.mxu0 0.0
      %4186 = vmatprep.subr.mxu0 0.0
      %4187 = vmatpush1.msra.mxu0 0.0
      %4188 = vmatprep.subr.mxu0 0.0
      %4189 = vmatpush1.msra.mxu0 0.0
      %4190 = vmatprep.subr.mxu0 0.0
      %4191 = vmatpush1.msra.mxu0 0.0
      %4192 = vmatprep.subr.mxu0 0.0
      %4193 = vmatpush1.msra.mxu0 0.0
      %4194 = vmatprep.subr.mxu0 0.0
      %4195 = vmatpush1.msra.mxu0 0.0
      %4196 = vmatprep.subr.mxu0 0.0
      %4197 = vmatpush1.msra.mxu0 0.0
      %4198 = vmatprep.subr.mxu0 0.0
      %4199 = vmatpush1.msra.mxu0 0.0
      %4200 = vmatprep.subr.mxu0 0.0
      %4201 = vmatpush1.msra.mxu0 0.0
      %4202 = vmatprep.mubr.f32.mxu0 0.0
      %4203 = vmatmul.mubr.f32.gmra.mrb[0].mxu0 %v4136
      %v4204 = vpop.f32.mrb[0].mxu0
      %v4205 = vadd.f32 %v180, %v4204
      %v4206 = vpop.f32.mrb[0].mxu0
      %4207 = vdwg.mxu0
      %v4208 = vtanh.pop %v4205
      %v4210 = vsel %vm182, %v4208, 0
      %4212 = vmatprep.subr.mxu0 0.0
      %4213 = vmatpush1.msra.mxu0 %v55
      %4214 = vmatprep.subr.mxu0 0.0
      %4215 = vmatpush1.msra.mxu0 %v56
      %4216 = vmatprep.subr.mxu0 0.0
      %4217 = vmatpush1.msra.mxu0 %v57
      %4218 = vmatprep.subr.mxu0 0.0
      %4219 = vmatpush1.msra.mxu0 %v58
      %4220 = vmatprep.subr.mxu0 0.0
      %4221 = vmatpush1.msra.mxu0 0.0
      %4222 = vmatprep.subr.mxu0 0.0
      %4223 = vmatpush1.msra.mxu0 0.0
      %4224 = vmatprep.subr.mxu0 0.0
      %4225 = vmatpush1.msra.mxu0 0.0
      %4226 = vmatprep.subr.mxu0 0.0
      %4227 = vmatpush1.msra.mxu0 0.0
      %4228 = vmatprep.subr.mxu0 0.0
      %4229 = vmatpush1.msra.mxu0 0.0
      %4230 = vmatprep.subr.mxu0 0.0
      %4231 = vmatpush1.msra.mxu0 0.0
      %4232 = vmatprep.subr.mxu0 0.0
      %4233 = vmatpush1.msra.mxu0 0.0
      %4234 = vmatprep.subr.mxu0 0.0
      %4235 = vmatpush1.msra.mxu0 0.0
      %4236 = vmatprep.subr.mxu0 0.0
      %4237 = vmatpush1.msra.mxu0 0.0
      %4238 = vmatprep.subr.mxu0 0.0
      %4239 = vmatpush1.msra.mxu0 0.0
      %4240 = vmatprep.subr.mxu0 0.0
      %4241 = vmatpush1.msra.mxu0 0.0
      %4242 = vmatprep.subr.mxu0 0.0
      %4243 = vmatpush1.msra.mxu0 0.0
      %4244 = vmatprep.subr.mxu0 0.0
      %4245 = vmatpush1.msra.mxu0 0.0
      %4246 = vmatprep.subr.mxu0 0.0
      %4247 = vmatpush1.msra.mxu0 0.0
      %4248 = vmatprep.subr.mxu0 0.0
      %4249 = vmatpush1.msra.mxu0 0.0
      %4250 = vmatprep.subr.mxu0 0.0
      %4251 = vmatpush1.msra.mxu0 0.0
      %4252 = vmatprep.subr.mxu0 0.0
      %4253 = vmatpush1.msra.mxu0 0.0
      %4254 = vmatprep.subr.mxu0 0.0
      %4255 = vmatpush1.msra.mxu0 0.0
      %4256 = vmatprep.subr.mxu0 0.0
      %4257 = vmatpush1.msra.mxu0 0.0
      %4258 = vmatprep.subr.mxu0 0.0
      %4259 = vmatpush1.msra.mxu0 0.0
      %4260 = vmatprep.subr.mxu0 0.0
      %4261 = vmatpush1.msra.mxu0 0.0
      %4262 = vmatprep.subr.mxu0 0.0
      %4263 = vmatpush1.msra.mxu0 0.0
      %4264 = vmatprep.subr.mxu0 0.0
      %4265 = vmatpush1.msra.mxu0 0.0
      %4266 = vmatprep.subr.mxu0 0.0
      %4267 = vmatpush1.msra.mxu0 0.0
      %4268 = vmatprep.subr.mxu0 0.0
      %4269 = vmatpush1.msra.mxu0 0.0
      %4270 = vmatprep.subr.mxu0 0.0
      %4271 = vmatpush1.msra.mxu0 0.0
      %4272 = vmatprep.subr.mxu0 0.0
      %4273 = vmatpush1.msra.mxu0 0.0
      %4274 = vmatprep.subr.mxu0 0.0
      %4275 = vmatpush1.msra.mxu0 0.0
      %4276 = vmatprep.mubr.f32.mxu0 0.0
      %4277 = vmatmul.mubr.f32.gmra.mrb[0].mxu0 %v4210
      %v4278 = vpop.f32.mrb[0].mxu0
      %v4279 = vadd.f32 %v261, %v4278
      %v4280 = vpop.f32.mrb[0].mxu0
      %4281 = vdwg.mxu0
      %v4282 = vmul.f32 %v336, %v4279
      %v4283 = vadd.f32 %v3812, %v4282
      %v4285 = vsel %vm97, %v4283, 0
      %4287 = vmatprep.subr.mxu0 0.0
      %4288 = vmatpush1.msra.mxu0 %v46
      %4289 = vmatprep.subr.mxu0 0.0
      %4290 = vmatpush1.msra.mxu0 %v103
      %4291 = vmatprep.subr.mxu0 0.0
      %4292 = vmatpush1.msra.mxu0 0.0
      %4293 = vmatprep.subr.mxu0 0.0
      %4294 = vmatpush1.msra.mxu0 0.0
      %4295 = vmatprep.subr.mxu0 0.0
      %4296 = vmatpush1.msra.mxu0 0.0
      %4297 = vmatprep.subr.mxu0 0.0
      %4298 = vmatpush1.msra.mxu0 0.0
      %4299 = vmatprep.subr.mxu0 0.0
      %4300 = vmatpush1.msra.mxu0 0.0
      %4301 = vmatprep.subr.mxu0 0.0
      %4302 = vmatpush1.msra.mxu0 0.0
      %4303 = vmatprep.subr.mxu0 0.0
      %4304 = vmatpush1.msra.mxu0 0.0
      %4305 = vmatprep.subr.mxu0 0.0
      %4306 = vmatpush1.msra.mxu0 0.0
      %4307 = vmatprep.subr.mxu0 0.0
      %4308 = vmatpush1.msra.mxu0 0.0
      %4309 = vmatprep.subr.mxu0 0.0
      %4310 = vmatpush1.msra.mxu0 0.0
      %4311 = vmatprep.subr.mxu0 0.0
      %4312 = vmatpush1.msra.mxu0 0.0
      %4313 = vmatprep.subr.mxu0 0.0
      %4314 = vmatpush1.msra.mxu0 0.0
      %4315 = vmatprep.subr.mxu0 0.0
      %4316 = vmatpush1.msra.mxu0 0.0
      %4317 = vmatprep.subr.mxu0 0.0
      %4318 = vmatpush1.msra.mxu0 0.0
      %4319 = vmatprep.subr.mxu0 0.0
      %4320 = vmatpush1.msra.mxu0 0.0
      %4321 = vmatprep.subr.mxu0 0.0
      %4322 = vmatpush1.msra.mxu0 0.0
      %4323 = vmatprep.subr.mxu0 0.0
      %4324 = vmatpush1.msra.mxu0 0.0
      %4325 = vmatprep.subr.mxu0 0.0
      %4326 = vmatpush1.msra.mxu0 0.0
      %4327 = vmatprep.subr.mxu0 0.0
      %4328 = vmatpush1.msra.mxu0 0.0
      %4329 = vmatprep.subr.mxu0 0.0
      %4330 = vmatpush1.msra.mxu0 0.0
      %4331 = vmatprep.subr.mxu0 0.0
      %4332 = vmatpush1.msra.mxu0 0.0
      %4333 = vmatprep.subr.mxu0 0.0
      %4334 = vmatpush1.msra.mxu0 0.0
      %4335 = vmatprep.subr.mxu0 0.0
      %4336 = vmatpush1.msra.mxu0 0.0
      %4337 = vmatprep.subr.mxu0 0.0
      %4338 = vmatpush1.msra.mxu0 0.0
      %4339 = vmatprep.subr.mxu0 0.0
      %4340 = vmatpush1.msra.mxu0 0.0
      %4341 = vmatprep.subr.mxu0 0.0
      %4342 = vmatpush1.msra.mxu0 0.0
      %4343 = vmatprep.subr.mxu0 0.0
      %4344 = vmatpush1.msra.mxu0 0.0
      %4345 = vmatprep.subr.mxu0 0.0
      %4346 = vmatpush1.msra.mxu0 0.0
      %4347 = vmatprep.subr.mxu0 0.0
      %4348 = vmatpush1.msra.mxu0 0.0
      %4349 = vmatprep.subr.mxu0 0.0
      %4350 = vmatpush1.msra.mxu0 0.0
      %4351 = vmatprep.mubr.f32.mxu0 0.0
      %4352 = vmatmul.mubr.f32.gmra.mrb[0].mxu0 %v4285
      %v4353 = vpop.f32.mrb[0].mxu0
      %v4354 = vadd.f32 %v4059, %v4353
      %v4355 = vpop.f32.mrb[0].mxu0
      %4356 = vdwg.mxu0
      %v4357 = vtanh.pop %v4354
      %v4359 = vsel %vm182, %v4357, 0
      %4361 = vmatprep.subr.mxu0 0.0
      %4362 = vmatpush1.msra.mxu0 %v50
      %4363 = vmatprep.subr.mxu0 0.0
      %4364 = vmatpush1.msra.mxu0 %v51
      %4365 = vmatprep.subr.mxu0 0.0
      %4366 = vmatpush1.msra.mxu0 %v52
      %4367 = vmatprep.subr.mxu0 0.0
      %4368 = vmatpush1.msra.mxu0 %v53
      %4369 = vmatprep.subr.mxu0 0.0
      %4370 = vmatpush1.msra.mxu0 0.0
      %4371 = vmatprep.subr.mxu0 0.0
      %4372 = vmatpush1.msra.mxu0 0.0
      %4373 = vmatprep.subr.mxu0 0.0
      %4374 = vmatpush1.msra.mxu0 0.0
      %4375 = vmatprep.subr.mxu0 0.0
      %4376 = vmatpush1.msra.mxu0 0.0
      %4377 = vmatprep.subr.mxu0 0.0
      %4378 = vmatpush1.msra.mxu0 0.0
      %4379 = vmatprep.subr.mxu0 0.0
      %4380 = vmatpush1.msra.mxu0 0.0
      %4381 = vmatprep.subr.mxu0 0.0
      %4382 = vmatpush1.msra.mxu0 0.0
      %4383 = vmatprep.subr.mxu0 0.0
      %4384 = vmatpush1.msra.mxu0 0.0
      %4385 = vmatprep.subr.mxu0 0.0
      %4386 = vmatpush1.msra.mxu0 0.0
      %4387 = vmatprep.subr.mxu0 0.0
      %4388 = vmatpush1.msra.mxu0 0.0
      %4389 = vmatprep.subr.mxu0 0.0
      %4390 = vmatpush1.msra.mxu0 0.0
      %4391 = vmatprep.subr.mxu0 0.0
      %4392 = vmatpush1.msra.mxu0 0.0
      %4393 = vmatprep.subr.mxu0 0.0
      %4394 = vmatpush1.msra.mxu0 0.0
      %4395 = vmatprep.subr.mxu0 0.0
      %4396 = vmatpush1.msra.mxu0 0.0
      %4397 = vmatprep.subr.mxu0 0.0
      %4398 = vmatpush1.msra.mxu0 0.0
      %4399 = vmatprep.subr.mxu0 0.0
      %4400 = vmatpush1.msra.mxu0 0.0
      %4401 = vmatprep.subr.mxu0 0.0
      %4402 = vmatpush1.msra.mxu0 0.0
      %4403 = vmatprep.subr.mxu0 0.0
      %4404 = vmatpush1.msra.mxu0 0.0
      %4405 = vmatprep.subr.mxu0 0.0
      %4406 = vmatpush1.msra.mxu0 0.0
      %4407 = vmatprep.subr.mxu0 0.0
      %4408 = vmatpush1.msra.mxu0 0.0
      %4409 = vmatprep.subr.mxu0 0.0
      %4410 = vmatpush1.msra.mxu0 0.0
      %4411 = vmatprep.subr.mxu0 0.0
      %4412 = vmatpush1.msra.mxu0 0.0
      %4413 = vmatprep.subr.mxu0 0.0
      %4414 = vmatpush1.msra.mxu0 0.0
      %4415 = vmatprep.subr.mxu0 0.0
      %4416 = vmatpush1.msra.mxu0 0.0
      %4417 = vmatprep.subr.mxu0 0.0
      %4418 = vmatpush1.msra.mxu0 0.0
      %4419 = vmatprep.subr.mxu0 0.0
      %4420 = vmatpush1.msra.mxu0 0.0
      %4421 = vmatprep.subr.mxu0 0.0
      %4422 = vmatpush1.msra.mxu0 0.0
      %4423 = vmatprep.subr.mxu0 0.0
      %4424 = vmatpush1.msra.mxu0 0.0
      %4425 = vmatprep.mubr.f32.mxu0 0.0
      %4426 = vmatmul.mubr.f32.gmra.mrb[0].mxu0 %v4359
      %v4427 = vpop.f32.mrb[0].mxu0
      %v4428 = vadd.f32 %v180, %v4427
      %v4429 = vpop.f32.mrb[0].mxu0
      %4430 = vdwg.mxu0
      %v4431 = vtanh.pop %v4428
      %v4433 = vsel %vm182, %v4431, 0
      %4435 = vmatprep.subr.mxu0 0.0
      %4436 = vmatpush1.msra.mxu0 %v55
      %4437 = vmatprep.subr.mxu0 0.0
      %4438 = vmatpush1.msra.mxu0 %v56
      %4439 = vmatprep.subr.mxu0 0.0
      %4440 = vmatpush1.msra.mxu0 %v57
      %4441 = vmatprep.subr.mxu0 0.0
      %4442 = vmatpush1.msra.mxu0 %v58
      %4443 = vmatprep.subr.mxu0 0.0
      %4444 = vmatpush1.msra.mxu0 0.0
      %4445 = vmatprep.subr.mxu0 0.0
      %4446 = vmatpush1.msra.mxu0 0.0
      %4447 = vmatprep.subr.mxu0 0.0
      %4448 = vmatpush1.msra.mxu0 0.0
      %4449 = vmatprep.subr.mxu0 0.0
      %4450 = vmatpush1.msra.mxu0 0.0
      %4451 = vmatprep.subr.mxu0 0.0
      %4452 = vmatpush1.msra.mxu0 0.0
      %4453 = vmatprep.subr.mxu0 0.0
      %4454 = vmatpush1.msra.mxu0 0.0
      %4455 = vmatprep.subr.mxu0 0.0
      %4456 = vmatpush1.msra.mxu0 0.0
      %4457 = vmatprep.subr.mxu0 0.0
      %4458 = vmatpush1.msra.mxu0 0.0
      %4459 = vmatprep.subr.mxu0 0.0
      %4460 = vmatpush1.msra.mxu0 0.0
      %4461 = vmatprep.subr.mxu0 0.0
      %4462 = vmatpush1.msra.mxu0 0.0
      %4463 = vmatprep.subr.mxu0 0.0
      %4464 = vmatpush1.msra.mxu0 0.0
      %4465 = vmatprep.subr.mxu0 0.0
      %4466 = vmatpush1.msra.mxu0 0.0
      %4467 = vmatprep.subr.mxu0 0.0
      %4468 = vmatpush1.msra.mxu0 0.0
      %4469 = vmatprep.subr.mxu0 0.0
      %4470 = vmatpush1.msra.mxu0 0.0
      %4471 = vmatprep.subr.mxu0 0.0
      %4472 = vmatpush1.msra.mxu0 0.0
      %4473 = vmatprep.subr.mxu0 0.0
      %4474 = vmatpush1.msra.mxu0 0.0
      %4475 = vmatprep.subr.mxu0 0.0
      %4476 = vmatpush1.msra.mxu0 0.0
      %4477 = vmatprep.subr.mxu0 0.0
      %4478 = vmatpush1.msra.mxu0 0.0
      %4479 = vmatprep.subr.mxu0 0.0
      %4480 = vmatpush1.msra.mxu0 0.0
      %4481 = vmatprep.subr.mxu0 0.0
      %4482 = vmatpush1.msra.mxu0 0.0
      %4483 = vmatprep.subr.mxu0 0.0
      %4484 = vmatpush1.msra.mxu0 0.0
      %4485 = vmatprep.subr.mxu0 0.0
      %4486 = vmatpush1.msra.mxu0 0.0
      %4487 = vmatprep.subr.mxu0 0.0
      %4488 = vmatpush1.msra.mxu0 0.0
      %4489 = vmatprep.subr.mxu0 0.0
      %4490 = vmatpush1.msra.mxu0 0.0
      %4491 = vmatprep.subr.mxu0 0.0
      %4492 = vmatpush1.msra.mxu0 0.0
      %4493 = vmatprep.subr.mxu0 0.0
      %4494 = vmatpush1.msra.mxu0 0.0
      %4495 = vmatprep.subr.mxu0 0.0
      %4496 = vmatpush1.msra.mxu0 0.0
      %4497 = vmatprep.subr.mxu0 0.0
      %4498 = vmatpush1.msra.mxu0 0.0
      %4499 = vmatprep.mubr.f32.mxu0 0.0
      %4500 = vmatmul.mubr.f32.gmra.mrb[0].mxu0 %v4433
      %v4501 = vpop.f32.mrb[0].mxu0
      %v4502 = vadd.f32 %v261, %v4501
      %v4503 = vpop.f32.mrb[0].mxu0
      %4504 = vdwg.mxu0
      %v4505 = vmul.f32 %v789, %v4502
      %v4506 = vadd.f32 %v3812, %v4505
      %v4508 = vlaneseq
      %v4509 = vshrl.u32 %v4508, 7
      %v4510 = vsub.s32 0, %v4509
      %v4511 = vrot.slane %v3825, %v4510
      %v4514 = vsel %vm97, %v4506, 0
      %4516 = vmatprep.subr.mxu0 0.0
      %4517 = vmatpush1.msra.mxu0 %v46
      %4518 = vmatprep.subr.mxu0 0.0
      %4519 = vmatpush1.msra.mxu0 %v103
      %4520 = vmatprep.subr.mxu0 0.0
      %4521 = vmatpush1.msra.mxu0 0.0
      %4522 = vmatprep.subr.mxu0 0.0
      %4523 = vmatpush1.msra.mxu0 0.0
      %4524 = vmatprep.subr.mxu0 0.0
      %4525 = vmatpush1.msra.mxu0 0.0
      %4526 = vmatprep.subr.mxu0 0.0
      %4527 = vmatpush1.msra.mxu0 0.0
      %4528 = vmatprep.subr.mxu0 0.0
      %4529 = vmatpush1.msra.mxu0 0.0
      %4530 = vmatprep.subr.mxu0 0.0
      %4531 = vmatpush1.msra.mxu0 0.0
      %4532 = vmatprep.subr.mxu0 0.0
      %4533 = vmatpush1.msra.mxu0 0.0
      %4534 = vmatprep.subr.mxu0 0.0
      %4535 = vmatpush1.msra.mxu0 0.0
      %4536 = vmatprep.subr.mxu0 0.0
      %4537 = vmatpush1.msra.mxu0 0.0
      %4538 = vmatprep.subr.mxu0 0.0
      %4539 = vmatpush1.msra.mxu0 0.0
      %4540 = vmatprep.subr.mxu0 0.0
      %4541 = vmatpush1.msra.mxu0 0.0
      %4542 = vmatprep.subr.mxu0 0.0
      %4543 = vmatpush1.msra.mxu0 0.0
      %4544 = vmatprep.subr.mxu0 0.0
      %4545 = vmatpush1.msra.mxu0 0.0
      %4546 = vmatprep.subr.mxu0 0.0
      %4547 = vmatpush1.msra.mxu0 0.0
      %4548 = vmatprep.subr.mxu0 0.0
      %4549 = vmatpush1.msra.mxu0 0.0
      %4550 = vmatprep.subr.mxu0 0.0
      %4551 = vmatpush1.msra.mxu0 0.0
      %4552 = vmatprep.subr.mxu0 0.0
      %4553 = vmatpush1.msra.mxu0 0.0
      %4554 = vmatprep.subr.mxu0 0.0
      %4555 = vmatpush1.msra.mxu0 0.0
      %4556 = vmatprep.subr.mxu0 0.0
      %4557 = vmatpush1.msra.mxu0 0.0
      %4558 = vmatprep.subr.mxu0 0.0
      %4559 = vmatpush1.msra.mxu0 0.0
      %4560 = vmatprep.subr.mxu0 0.0
      %4561 = vmatpush1.msra.mxu0 0.0
      %4562 = vmatprep.subr.mxu0 0.0
      %4563 = vmatpush1.msra.mxu0 0.0
      %4564 = vmatprep.subr.mxu0 0.0
      %4565 = vmatpush1.msra.mxu0 0.0
      %4566 = vmatprep.subr.mxu0 0.0
      %4567 = vmatpush1.msra.mxu0 0.0
      %4568 = vmatprep.subr.mxu0 0.0
      %4569 = vmatpush1.msra.mxu0 0.0
      %4570 = vmatprep.subr.mxu0 0.0
      %4571 = vmatpush1.msra.mxu0 0.0
      %4572 = vmatprep.subr.mxu0 0.0
      %4573 = vmatpush1.msra.mxu0 0.0
      %4574 = vmatprep.subr.mxu0 0.0
      %4575 = vmatpush1.msra.mxu0 0.0
      %4576 = vmatprep.subr.mxu0 0.0
      %4577 = vmatpush1.msra.mxu0 0.0
      %4578 = vmatprep.subr.mxu0 0.0
      %4579 = vmatpush1.msra.mxu0 0.0
      %4580 = vmatprep.mubr.f32.mxu0 0.0
      %4581 = vmatmul.mubr.f32.gmra.mrb[0].mxu0 %v4514
      %v4582 = vpop.f32.mrb[0].mxu0
      %v4583 = vadd.f32 %v4511, %v4582
      %v4584 = vpop.f32.mrb[0].mxu0
      %4585 = vdwg.mxu0
      %v4586 = vtanh.pop %v4583
      %v4588 = vsel %vm182, %v4586, 0
      %4590 = vmatprep.subr.mxu0 0.0
      %4591 = vmatpush1.msra.mxu0 %v50
      %4592 = vmatprep.subr.mxu0 0.0
      %4593 = vmatpush1.msra.mxu0 %v51
      %4594 = vmatprep.subr.mxu0 0.0
      %4595 = vmatpush1.msra.mxu0 %v52
      %4596 = vmatprep.subr.mxu0 0.0
      %4597 = vmatpush1.msra.mxu0 %v53
      %4598 = vmatprep.subr.mxu0 0.0
      %4599 = vmatpush1.msra.mxu0 0.0
      %4600 = vmatprep.subr.mxu0 0.0
      %4601 = vmatpush1.msra.mxu0 0.0
      %4602 = vmatprep.subr.mxu0 0.0
      %4603 = vmatpush1.msra.mxu0 0.0
      %4604 = vmatprep.subr.mxu0 0.0
      %4605 = vmatpush1.msra.mxu0 0.0
      %4606 = vmatprep.subr.mxu0 0.0
      %4607 = vmatpush1.msra.mxu0 0.0
      %4608 = vmatprep.subr.mxu0 0.0
      %4609 = vmatpush1.msra.mxu0 0.0
      %4610 = vmatprep.subr.mxu0 0.0
      %4611 = vmatpush1.msra.mxu0 0.0
      %4612 = vmatprep.subr.mxu0 0.0
      %4613 = vmatpush1.msra.mxu0 0.0
      %4614 = vmatprep.subr.mxu0 0.0
      %4615 = vmatpush1.msra.mxu0 0.0
      %4616 = vmatprep.subr.mxu0 0.0
      %4617 = vmatpush1.msra.mxu0 0.0
      %4618 = vmatprep.subr.mxu0 0.0
      %4619 = vmatpush1.msra.mxu0 0.0
      %4620 = vmatprep.subr.mxu0 0.0
      %4621 = vmatpush1.msra.mxu0 0.0
      %4622 = vmatprep.subr.mxu0 0.0
      %4623 = vmatpush1.msra.mxu0 0.0
      %4624 = vmatprep.subr.mxu0 0.0
      %4625 = vmatpush1.msra.mxu0 0.0
      %4626 = vmatprep.subr.mxu0 0.0
      %4627 = vmatpush1.msra.mxu0 0.0
      %4628 = vmatprep.subr.mxu0 0.0
      %4629 = vmatpush1.msra.mxu0 0.0
      %4630 = vmatprep.subr.mxu0 0.0
      %4631 = vmatpush1.msra.mxu0 0.0
      %4632 = vmatprep.subr.mxu0 0.0
      %4633 = vmatpush1.msra.mxu0 0.0
      %4634 = vmatprep.subr.mxu0 0.0
      %4635 = vmatpush1.msra.mxu0 0.0
      %4636 = vmatprep.subr.mxu0 0.0
      %4637 = vmatpush1.msra.mxu0 0.0
      %4638 = vmatprep.subr.mxu0 0.0
      %4639 = vmatpush1.msra.mxu0 0.0
      %4640 = vmatprep.subr.mxu0 0.0
      %4641 = vmatpush1.msra.mxu0 0.0
      %4642 = vmatprep.subr.mxu0 0.0
      %4643 = vmatpush1.msra.mxu0 0.0
      %4644 = vmatprep.subr.mxu0 0.0
      %4645 = vmatpush1.msra.mxu0 0.0
      %4646 = vmatprep.subr.mxu0 0.0
      %4647 = vmatpush1.msra.mxu0 0.0
      %4648 = vmatprep.subr.mxu0 0.0
      %4649 = vmatpush1.msra.mxu0 0.0
      %4650 = vmatprep.subr.mxu0 0.0
      %4651 = vmatpush1.msra.mxu0 0.0
      %4652 = vmatprep.subr.mxu0 0.0
      %4653 = vmatpush1.msra.mxu0 0.0
      %4654 = vmatprep.mubr.f32.mxu0 0.0
      %4655 = vmatmul.mubr.f32.gmra.mrb[0].mxu0 %v4588
      %v4656 = vpop.f32.mrb[0].mxu0
      %v4657 = vadd.f32 %v180, %v4656
      %v4658 = vpop.f32.mrb[0].mxu0
      %4659 = vdwg.mxu0
      %v4660 = vtanh.pop %v4657
      %v4662 = vsel %vm182, %v4660, 0
      %4664 = vmatprep.subr.mxu0 0.0
      %4665 = vmatpush1.msra.mxu0 %v55
      %4666 = vmatprep.subr.mxu0 0.0
      %4667 = vmatpush1.msra.mxu0 %v56
      %4668 = vmatprep.subr.mxu0 0.0
      %4669 = vmatpush1.msra.mxu0 %v57
      %4670 = vmatprep.subr.mxu0 0.0
      %4671 = vmatpush1.msra.mxu0 %v58
      %4672 = vmatprep.subr.mxu0 0.0
      %4673 = vmatpush1.msra.mxu0 0.0
      %4674 = vmatprep.subr.mxu0 0.0
      %4675 = vmatpush1.msra.mxu0 0.0
      %4676 = vmatprep.subr.mxu0 0.0
      %4677 = vmatpush1.msra.mxu0 0.0
      %4678 = vmatprep.subr.mxu0 0.0
      %4679 = vmatpush1.msra.mxu0 0.0
      %4680 = vmatprep.subr.mxu0 0.0
      %4681 = vmatpush1.msra.mxu0 0.0
      %4682 = vmatprep.subr.mxu0 0.0
      %4683 = vmatpush1.msra.mxu0 0.0
      %4684 = vmatprep.subr.mxu0 0.0
      %4685 = vmatpush1.msra.mxu0 0.0
      %4686 = vmatprep.subr.mxu0 0.0
      %4687 = vmatpush1.msra.mxu0 0.0
      %4688 = vmatprep.subr.mxu0 0.0
      %4689 = vmatpush1.msra.mxu0 0.0
      %4690 = vmatprep.subr.mxu0 0.0
      %4691 = vmatpush1.msra.mxu0 0.0
      %4692 = vmatprep.subr.mxu0 0.0
      %4693 = vmatpush1.msra.mxu0 0.0
      %4694 = vmatprep.subr.mxu0 0.0
      %4695 = vmatpush1.msra.mxu0 0.0
      %4696 = vmatprep.subr.mxu0 0.0
      %4697 = vmatpush1.msra.mxu0 0.0
      %4698 = vmatprep.subr.mxu0 0.0
      %4699 = vmatpush1.msra.mxu0 0.0
      %4700 = vmatprep.subr.mxu0 0.0
      %4701 = vmatpush1.msra.mxu0 0.0
      %4702 = vmatprep.subr.mxu0 0.0
      %4703 = vmatpush1.msra.mxu0 0.0
      %4704 = vmatprep.subr.mxu0 0.0
      %4705 = vmatpush1.msra.mxu0 0.0
      %4706 = vmatprep.subr.mxu0 0.0
      %4707 = vmatpush1.msra.mxu0 0.0
      %4708 = vmatprep.subr.mxu0 0.0
      %4709 = vmatpush1.msra.mxu0 0.0
      %4710 = vmatprep.subr.mxu0 0.0
      %4711 = vmatpush1.msra.mxu0 0.0
      %4712 = vmatprep.subr.mxu0 0.0
      %4713 = vmatpush1.msra.mxu0 0.0
      %4714 = vmatprep.subr.mxu0 0.0
      %4715 = vmatpush1.msra.mxu0 0.0
      %4716 = vmatprep.subr.mxu0 0.0
      %4717 = vmatpush1.msra.mxu0 0.0
      %4718 = vmatprep.subr.mxu0 0.0
      %4719 = vmatpush1.msra.mxu0 0.0
      %4720 = vmatprep.subr.mxu0 0.0
      %4721 = vmatpush1.msra.mxu0 0.0
      %4722 = vmatprep.subr.mxu0 0.0
      %4723 = vmatpush1.msra.mxu0 0.0
      %4724 = vmatprep.subr.mxu0 0.0
      %4725 = vmatpush1.msra.mxu0 0.0
      %4726 = vmatprep.subr.mxu0 0.0
      %4727 = vmatpush1.msra.mxu0 0.0
      %4728 = vmatprep.mubr.f32.mxu0 0.0
      %4729 = vmatmul.mubr.f32.gmra.mrb[0].mxu0 %v4662
      %v4730 = vpop.f32.mrb[0].mxu0
      %v4731 = vadd.f32 %v261, %v4730
      %v4732 = vpop.f32.mrb[0].mxu0
      %4733 = vdwg.mxu0
      %v4734 = vmul.f32 %v4279, 2.0
      %v4735 = vadd.f32 %v4050, %v4734
      %v4736 = vmul.f32 %v4502, 2.0
      %v4737 = vadd.f32 %v4735, %v4736
      %v4738 = vadd.f32 %v4737, %v4731
      %v4739 = vmul.f32 %v1027, %v4738
      %v4740 = vadd.f32 %v3812, %v4739
      %s4741 = smul.f32 %s76, 5.0
      %s4742 = sadd.f32 %s71, %s4741
      %v4743 = vstv %s4742
      %v4744 = vmul.f32 %v4743, %v48
      %v4745 = vadd.f32 %v4744, %v49
      %s4746 = sadd.f32 %s4742, %s82
      %v4747 = vstv %s4746
      %v4748 = vmul.f32 %v4747, %v48
      %v4749 = vadd.f32 %v4748, %v49
      %s4750 = sadd.f32 %s4742, %s76
      %v4751 = vstv %s4750
      %v4752 = vmul.f32 %v4751, %v48
      %v4753 = vadd.f32 %v4752, %v49
      %v4755 = vlaneseq
      %v4756 = vshrl.u32 %v4755, 7
      %v4757 = vsub.s32 0, %v4756
      %v4758 = vrot.slane %v4745, %v4757
      %v4761 = vsel %vm97, %v4740, 0
      %4763 = vmatprep.subr.mxu0 0.0
      %4764 = vmatpush1.msra.mxu0 %v46
      %4765 = vmatprep.subr.mxu0 0.0
      %4766 = vmatpush1.msra.mxu0 %v103
      %4767 = vmatprep.subr.mxu0 0.0
      %4768 = vmatpush1.msra.mxu0 0.0
      %4769 = vmatprep.subr.mxu0 0.0
      %4770 = vmatpush1.msra.mxu0 0.0
      %4771 = vmatprep.subr.mxu0 0.0
      %4772 = vmatpush1.msra.mxu0 0.0
      %4773 = vmatprep.subr.mxu0 0.0
      %4774 = vmatpush1.msra.mxu0 0.0
      %4775 = vmatprep.subr.mxu0 0.0
      %4776 = vmatpush1.msra.mxu0 0.0
      %4777 = vmatprep.subr.mxu0 0.0
      %4778 = vmatpush1.msra.mxu0 0.0
      %4779 = vmatprep.subr.mxu0 0.0
      %4780 = vmatpush1.msra.mxu0 0.0
      %4781 = vmatprep.subr.mxu0 0.0
      %4782 = vmatpush1.msra.mxu0 0.0
      %4783 = vmatprep.subr.mxu0 0.0
      %4784 = vmatpush1.msra.mxu0 0.0
      %4785 = vmatprep.subr.mxu0 0.0
      %4786 = vmatpush1.msra.mxu0 0.0
      %4787 = vmatprep.subr.mxu0 0.0
      %4788 = vmatpush1.msra.mxu0 0.0
      %4789 = vmatprep.subr.mxu0 0.0
      %4790 = vmatpush1.msra.mxu0 0.0
      %4791 = vmatprep.subr.mxu0 0.0
      %4792 = vmatpush1.msra.mxu0 0.0
      %4793 = vmatprep.subr.mxu0 0.0
      %4794 = vmatpush1.msra.mxu0 0.0
      %4795 = vmatprep.subr.mxu0 0.0
      %4796 = vmatpush1.msra.mxu0 0.0
      %4797 = vmatprep.subr.mxu0 0.0
      %4798 = vmatpush1.msra.mxu0 0.0
      %4799 = vmatprep.subr.mxu0 0.0
      %4800 = vmatpush1.msra.mxu0 0.0
      %4801 = vmatprep.subr.mxu0 0.0
      %4802 = vmatpush1.msra.mxu0 0.0
      %4803 = vmatprep.subr.mxu0 0.0
      %4804 = vmatpush1.msra.mxu0 0.0
      %4805 = vmatprep.subr.mxu0 0.0
      %4806 = vmatpush1.msra.mxu0 0.0
      %4807 = vmatprep.subr.mxu0 0.0
      %4808 = vmatpush1.msra.mxu0 0.0
      %4809 = vmatprep.subr.mxu0 0.0
      %4810 = vmatpush1.msra.mxu0 0.0
      %4811 = vmatprep.subr.mxu0 0.0
      %4812 = vmatpush1.msra.mxu0 0.0
      %4813 = vmatprep.subr.mxu0 0.0
      %4814 = vmatpush1.msra.mxu0 0.0
      %4815 = vmatprep.subr.mxu0 0.0
      %4816 = vmatpush1.msra.mxu0 0.0
      %4817 = vmatprep.subr.mxu0 0.0
      %4818 = vmatpush1.msra.mxu0 0.0
      %4819 = vmatprep.subr.mxu0 0.0
      %4820 = vmatpush1.msra.mxu0 0.0
      %4821 = vmatprep.subr.mxu0 0.0
      %4822 = vmatpush1.msra.mxu0 0.0
      %4823 = vmatprep.subr.mxu0 0.0
      %4824 = vmatpush1.msra.mxu0 0.0
      %4825 = vmatprep.subr.mxu0 0.0
      %4826 = vmatpush1.msra.mxu0 0.0
      %4827 = vmatprep.mubr.f32.mxu0 0.0
      %4828 = vmatmul.mubr.f32.gmra.mrb[0].mxu0 %v4761
      %v4829 = vpop.f32.mrb[0].mxu0
      %v4830 = vadd.f32 %v4758, %v4829
      %v4831 = vpop.f32.mrb[0].mxu0
      %4832 = vdwg.mxu0
      %v4833 = vtanh.pop %v4830
      %v4835 = vsel %vm182, %v4833, 0
      %4837 = vmatprep.subr.mxu0 0.0
      %4838 = vmatpush1.msra.mxu0 %v50
      %4839 = vmatprep.subr.mxu0 0.0
      %4840 = vmatpush1.msra.mxu0 %v51
      %4841 = vmatprep.subr.mxu0 0.0
      %4842 = vmatpush1.msra.mxu0 %v52
      %4843 = vmatprep.subr.mxu0 0.0
      %4844 = vmatpush1.msra.mxu0 %v53
      %4845 = vmatprep.subr.mxu0 0.0
      %4846 = vmatpush1.msra.mxu0 0.0
      %4847 = vmatprep.subr.mxu0 0.0
      %4848 = vmatpush1.msra.mxu0 0.0
      %4849 = vmatprep.subr.mxu0 0.0
      %4850 = vmatpush1.msra.mxu0 0.0
      %4851 = vmatprep.subr.mxu0 0.0
      %4852 = vmatpush1.msra.mxu0 0.0
      %4853 = vmatprep.subr.mxu0 0.0
      %4854 = vmatpush1.msra.mxu0 0.0
      %4855 = vmatprep.subr.mxu0 0.0
      %4856 = vmatpush1.msra.mxu0 0.0
      %4857 = vmatprep.subr.mxu0 0.0
      %4858 = vmatpush1.msra.mxu0 0.0
      %4859 = vmatprep.subr.mxu0 0.0
      %4860 = vmatpush1.msra.mxu0 0.0
      %4861 = vmatprep.subr.mxu0 0.0
      %4862 = vmatpush1.msra.mxu0 0.0
      %4863 = vmatprep.subr.mxu0 0.0
      %4864 = vmatpush1.msra.mxu0 0.0
      %4865 = vmatprep.subr.mxu0 0.0
      %4866 = vmatpush1.msra.mxu0 0.0
      %4867 = vmatprep.subr.mxu0 0.0
      %4868 = vmatpush1.msra.mxu0 0.0
      %4869 = vmatprep.subr.mxu0 0.0
      %4870 = vmatpush1.msra.mxu0 0.0
      %4871 = vmatprep.subr.mxu0 0.0
      %4872 = vmatpush1.msra.mxu0 0.0
      %4873 = vmatprep.subr.mxu0 0.0
      %4874 = vmatpush1.msra.mxu0 0.0
      %4875 = vmatprep.subr.mxu0 0.0
      %4876 = vmatpush1.msra.mxu0 0.0
      %4877 = vmatprep.subr.mxu0 0.0
      %4878 = vmatpush1.msra.mxu0 0.0
      %4879 = vmatprep.subr.mxu0 0.0
      %4880 = vmatpush1.msra.mxu0 0.0
      %4881 = vmatprep.subr.mxu0 0.0
      %4882 = vmatpush1.msra.mxu0 0.0
      %4883 = vmatprep.subr.mxu0 0.0
      %4884 = vmatpush1.msra.mxu0 0.0
      %4885 = vmatprep.subr.mxu0 0.0
      %4886 = vmatpush1.msra.mxu0 0.0
      %4887 = vmatprep.subr.mxu0 0.0
      %4888 = vmatpush1.msra.mxu0 0.0
      %4889 = vmatprep.subr.mxu0 0.0
      %4890 = vmatpush1.msra.mxu0 0.0
      %4891 = vmatprep.subr.mxu0 0.0
      %4892 = vmatpush1.msra.mxu0 0.0
      %4893 = vmatprep.subr.mxu0 0.0
      %4894 = vmatpush1.msra.mxu0 0.0
      %4895 = vmatprep.subr.mxu0 0.0
      %4896 = vmatpush1.msra.mxu0 0.0
      %4897 = vmatprep.subr.mxu0 0.0
      %4898 = vmatpush1.msra.mxu0 0.0
      %4899 = vmatprep.subr.mxu0 0.0
      %4900 = vmatpush1.msra.mxu0 0.0
      %4901 = vmatprep.mubr.f32.mxu0 0.0
      %4902 = vmatmul.mubr.f32.gmra.mrb[0].mxu0 %v4835
      %v4903 = vpop.f32.mrb[0].mxu0
      %v4904 = vadd.f32 %v180, %v4903
      %v4905 = vpop.f32.mrb[0].mxu0
      %4906 = vdwg.mxu0
      %v4907 = vtanh.pop %v4904
      %v4909 = vsel %vm182, %v4907, 0
      %4911 = vmatprep.subr.mxu0 0.0
      %4912 = vmatpush1.msra.mxu0 %v55
      %4913 = vmatprep.subr.mxu0 0.0
      %4914 = vmatpush1.msra.mxu0 %v56
      %4915 = vmatprep.subr.mxu0 0.0
      %4916 = vmatpush1.msra.mxu0 %v57
      %4917 = vmatprep.subr.mxu0 0.0
      %4918 = vmatpush1.msra.mxu0 %v58
      %4919 = vmatprep.subr.mxu0 0.0
      %4920 = vmatpush1.msra.mxu0 0.0
      %4921 = vmatprep.subr.mxu0 0.0
      %4922 = vmatpush1.msra.mxu0 0.0
      %4923 = vmatprep.subr.mxu0 0.0
      %4924 = vmatpush1.msra.mxu0 0.0
      %4925 = vmatprep.subr.mxu0 0.0
      %4926 = vmatpush1.msra.mxu0 0.0
      %4927 = vmatprep.subr.mxu0 0.0
      %4928 = vmatpush1.msra.mxu0 0.0
      %4929 = vmatprep.subr.mxu0 0.0
      %4930 = vmatpush1.msra.mxu0 0.0
      %4931 = vmatprep.subr.mxu0 0.0
      %4932 = vmatpush1.msra.mxu0 0.0
      %4933 = vmatprep.subr.mxu0 0.0
      %4934 = vmatpush1.msra.mxu0 0.0
      %4935 = vmatprep.subr.mxu0 0.0
      %4936 = vmatpush1.msra.mxu0 0.0
      %4937 = vmatprep.subr.mxu0 0.0
      %4938 = vmatpush1.msra.mxu0 0.0
      %4939 = vmatprep.subr.mxu0 0.0
      %4940 = vmatpush1.msra.mxu0 0.0
      %4941 = vmatprep.subr.mxu0 0.0
      %4942 = vmatpush1.msra.mxu0 0.0
      %4943 = vmatprep.subr.mxu0 0.0
      %4944 = vmatpush1.msra.mxu0 0.0
      %4945 = vmatprep.subr.mxu0 0.0
      %4946 = vmatpush1.msra.mxu0 0.0
      %4947 = vmatprep.subr.mxu0 0.0
      %4948 = vmatpush1.msra.mxu0 0.0
      %4949 = vmatprep.subr.mxu0 0.0
      %4950 = vmatpush1.msra.mxu0 0.0
      %4951 = vmatprep.subr.mxu0 0.0
      %4952 = vmatpush1.msra.mxu0 0.0
      %4953 = vmatprep.subr.mxu0 0.0
      %4954 = vmatpush1.msra.mxu0 0.0
      %4955 = vmatprep.subr.mxu0 0.0
      %4956 = vmatpush1.msra.mxu0 0.0
      %4957 = vmatprep.subr.mxu0 0.0
      %4958 = vmatpush1.msra.mxu0 0.0
      %4959 = vmatprep.subr.mxu0 0.0
      %4960 = vmatpush1.msra.mxu0 0.0
      %4961 = vmatprep.subr.mxu0 0.0
      %4962 = vmatpush1.msra.mxu0 0.0
      %4963 = vmatprep.subr.mxu0 0.0
      %4964 = vmatpush1.msra.mxu0 0.0
      %4965 = vmatprep.subr.mxu0 0.0
      %4966 = vmatpush1.msra.mxu0 0.0
      %4967 = vmatprep.subr.mxu0 0.0
      %4968 = vmatpush1.msra.mxu0 0.0
      %4969 = vmatprep.subr.mxu0 0.0
      %4970 = vmatpush1.msra.mxu0 0.0
      %4971 = vmatprep.subr.mxu0 0.0
      %4972 = vmatpush1.msra.mxu0 0.0
      %4973 = vmatprep.subr.mxu0 0.0
      %4974 = vmatpush1.msra.mxu0 0.0
      %4975 = vmatprep.mubr.f32.mxu0 0.0
      %4976 = vmatmul.mubr.f32.gmra.mrb[0].mxu0 %v4909
      %v4977 = vpop.f32.mrb[0].mxu0
      %v4978 = vadd.f32 %v261, %v4977
      %v4979 = vpop.f32.mrb[0].mxu0
      %4980 = vdwg.mxu0
      %v4981 = vmul.f32 %v336, %v4978
      %v4982 = vadd.f32 %v4740, %v4981
      %v4984 = vlaneseq
      %v4985 = vshrl.u32 %v4984, 7
      %v4986 = vsub.s32 0, %v4985
      %v4987 = vrot.slane %v4749, %v4986
      %v4990 = vsel %vm97, %v4982, 0
      %4992 = vmatprep.subr.mxu0 0.0
      %4993 = vmatpush1.msra.mxu0 %v46
      %4994 = vmatprep.subr.mxu0 0.0
      %4995 = vmatpush1.msra.mxu0 %v103
      %4996 = vmatprep.subr.mxu0 0.0
      %4997 = vmatpush1.msra.mxu0 0.0
      %4998 = vmatprep.subr.mxu0 0.0
      %4999 = vmatpush1.msra.mxu0 0.0
      %5000 = vmatprep.subr.mxu0 0.0
      %5001 = vmatpush1.msra.mxu0 0.0
      %5002 = vmatprep.subr.mxu0 0.0
      %5003 = vmatpush1.msra.mxu0 0.0
      %5004 = vmatprep.subr.mxu0 0.0
      %5005 = vmatpush1.msra.mxu0 0.0
      %5006 = vmatprep.subr.mxu0 0.0
      %5007 = vmatpush1.msra.mxu0 0.0
      %5008 = vmatprep.subr.mxu0 0.0
      %5009 = vmatpush1.msra.mxu0 0.0
      %5010 = vmatprep.subr.mxu0 0.0
      %5011 = vmatpush1.msra.mxu0 0.0
      %5012 = vmatprep.subr.mxu0 0.0
      %5013 = vmatpush1.msra.mxu0 0.0
      %5014 = vmatprep.subr.mxu0 0.0
      %5015 = vmatpush1.msra.mxu0 0.0
      %5016 = vmatprep.subr.mxu0 0.0
      %5017 = vmatpush1.msra.mxu0 0.0
      %5018 = vmatprep.subr.mxu0 0.0
      %5019 = vmatpush1.msra.mxu0 0.0
      %5020 = vmatprep.subr.mxu0 0.0
      %5021 = vmatpush1.msra.mxu0 0.0
      %5022 = vmatprep.subr.mxu0 0.0
      %5023 = vmatpush1.msra.mxu0 0.0
      %5024 = vmatprep.subr.mxu0 0.0
      %5025 = vmatpush1.msra.mxu0 0.0
      %5026 = vmatprep.subr.mxu0 0.0
      %5027 = vmatpush1.msra.mxu0 0.0
      %5028 = vmatprep.subr.mxu0 0.0
      %5029 = vmatpush1.msra.mxu0 0.0
      %5030 = vmatprep.subr.mxu0 0.0
      %5031 = vmatpush1.msra.mxu0 0.0
      %5032 = vmatprep.subr.mxu0 0.0
      %5033 = vmatpush1.msra.mxu0 0.0
      %5034 = vmatprep.subr.mxu0 0.0
      %5035 = vmatpush1.msra.mxu0 0.0
      %5036 = vmatprep.subr.mxu0 0.0
      %5037 = vmatpush1.msra.mxu0 0.0
      %5038 = vmatprep.subr.mxu0 0.0
      %5039 = vmatpush1.msra.mxu0 0.0
      %5040 = vmatprep.subr.mxu0 0.0
      %5041 = vmatpush1.msra.mxu0 0.0
      %5042 = vmatprep.subr.mxu0 0.0
      %5043 = vmatpush1.msra.mxu0 0.0
      %5044 = vmatprep.subr.mxu0 0.0
      %5045 = vmatpush1.msra.mxu0 0.0
      %5046 = vmatprep.subr.mxu0 0.0
      %5047 = vmatpush1.msra.mxu0 0.0
      %5048 = vmatprep.subr.mxu0 0.0
      %5049 = vmatpush1.msra.mxu0 0.0
      %5050 = vmatprep.subr.mxu0 0.0
      %5051 = vmatpush1.msra.mxu0 0.0
      %5052 = vmatprep.subr.mxu0 0.0
      %5053 = vmatpush1.msra.mxu0 0.0
      %5054 = vmatprep.subr.mxu0 0.0
      %5055 = vmatpush1.msra.mxu0 0.0
      %5056 = vmatprep.mubr.f32.mxu0 0.0
      %5057 = vmatmul.mubr.f32.gmra.mrb[0].mxu0 %v4990
      %v5058 = vpop.f32.mrb[0].mxu0
      %v5059 = vadd.f32 %v4987, %v5058
      %v5060 = vpop.f32.mrb[0].mxu0
      %5061 = vdwg.mxu0
      %v5062 = vtanh.pop %v5059
      %v5064 = vsel %vm182, %v5062, 0
      %5066 = vmatprep.subr.mxu0 0.0
      %5067 = vmatpush1.msra.mxu0 %v50
      %5068 = vmatprep.subr.mxu0 0.0
      %5069 = vmatpush1.msra.mxu0 %v51
      %5070 = vmatprep.subr.mxu0 0.0
      %5071 = vmatpush1.msra.mxu0 %v52
      %5072 = vmatprep.subr.mxu0 0.0
      %5073 = vmatpush1.msra.mxu0 %v53
      %5074 = vmatprep.subr.mxu0 0.0
      %5075 = vmatpush1.msra.mxu0 0.0
      %5076 = vmatprep.subr.mxu0 0.0
      %5077 = vmatpush1.msra.mxu0 0.0
      %5078 = vmatprep.subr.mxu0 0.0
      %5079 = vmatpush1.msra.mxu0 0.0
      %5080 = vmatprep.subr.mxu0 0.0
      %5081 = vmatpush1.msra.mxu0 0.0
      %5082 = vmatprep.subr.mxu0 0.0
      %5083 = vmatpush1.msra.mxu0 0.0
      %5084 = vmatprep.subr.mxu0 0.0
      %5085 = vmatpush1.msra.mxu0 0.0
      %5086 = vmatprep.subr.mxu0 0.0
      %5087 = vmatpush1.msra.mxu0 0.0
      %5088 = vmatprep.subr.mxu0 0.0
      %5089 = vmatpush1.msra.mxu0 0.0
      %5090 = vmatprep.subr.mxu0 0.0
      %5091 = vmatpush1.msra.mxu0 0.0
      %5092 = vmatprep.subr.mxu0 0.0
      %5093 = vmatpush1.msra.mxu0 0.0
      %5094 = vmatprep.subr.mxu0 0.0
      %5095 = vmatpush1.msra.mxu0 0.0
      %5096 = vmatprep.subr.mxu0 0.0
      %5097 = vmatpush1.msra.mxu0 0.0
      %5098 = vmatprep.subr.mxu0 0.0
      %5099 = vmatpush1.msra.mxu0 0.0
      %5100 = vmatprep.subr.mxu0 0.0
      %5101 = vmatpush1.msra.mxu0 0.0
      %5102 = vmatprep.subr.mxu0 0.0
      %5103 = vmatpush1.msra.mxu0 0.0
      %5104 = vmatprep.subr.mxu0 0.0
      %5105 = vmatpush1.msra.mxu0 0.0
      %5106 = vmatprep.subr.mxu0 0.0
      %5107 = vmatpush1.msra.mxu0 0.0
      %5108 = vmatprep.subr.mxu0 0.0
      %5109 = vmatpush1.msra.mxu0 0.0
      %5110 = vmatprep.subr.mxu0 0.0
      %5111 = vmatpush1.msra.mxu0 0.0
      %5112 = vmatprep.subr.mxu0 0.0
      %5113 = vmatpush1.msra.mxu0 0.0
      %5114 = vmatprep.subr.mxu0 0.0
      %5115 = vmatpush1.msra.mxu0 0.0
      %5116 = vmatprep.subr.mxu0 0.0
      %5117 = vmatpush1.msra.mxu0 0.0
      %5118 = vmatprep.subr.mxu0 0.0
      %5119 = vmatpush1.msra.mxu0 0.0
      %5120 = vmatprep.subr.mxu0 0.0
      %5121 = vmatpush1.msra.mxu0 0.0
      %5122 = vmatprep.subr.mxu0 0.0
      %5123 = vmatpush1.msra.mxu0 0.0
      %5124 = vmatprep.subr.mxu0 0.0
      %5125 = vmatpush1.msra.mxu0 0.0
      %5126 = vmatprep.subr.mxu0 0.0
      %5127 = vmatpush1.msra.mxu0 0.0
      %5128 = vmatprep.subr.mxu0 0.0
      %5129 = vmatpush1.msra.mxu0 0.0
      %5130 = vmatprep.mubr.f32.mxu0 0.0
      %5131 = vmatmul.mubr.f32.gmra.mrb[0].mxu0 %v5064
      %v5132 = vpop.f32.mrb[0].mxu0
      %v5133 = vadd.f32 %v180, %v5132
      %v5134 = vpop.f32.mrb[0].mxu0
      %5135 = vdwg.mxu0
      %v5136 = vtanh.pop %v5133
      %v5138 = vsel %vm182, %v5136, 0
      %5140 = vmatprep.subr.mxu0 0.0
      %5141 = vmatpush1.msra.mxu0 %v55
      %5142 = vmatprep.subr.mxu0 0.0
      %5143 = vmatpush1.msra.mxu0 %v56
      %5144 = vmatprep.subr.mxu0 0.0
      %5145 = vmatpush1.msra.mxu0 %v57
      %5146 = vmatprep.subr.mxu0 0.0
      %5147 = vmatpush1.msra.mxu0 %v58
      %5148 = vmatprep.subr.mxu0 0.0
      %5149 = vmatpush1.msra.mxu0 0.0
      %5150 = vmatprep.subr.mxu0 0.0
      %5151 = vmatpush1.msra.mxu0 0.0
      %5152 = vmatprep.subr.mxu0 0.0
      %5153 = vmatpush1.msra.mxu0 0.0
      %5154 = vmatprep.subr.mxu0 0.0
      %5155 = vmatpush1.msra.mxu0 0.0
      %5156 = vmatprep.subr.mxu0 0.0
      %5157 = vmatpush1.msra.mxu0 0.0
      %5158 = vmatprep.subr.mxu0 0.0
      %5159 = vmatpush1.msra.mxu0 0.0
      %5160 = vmatprep.subr.mxu0 0.0
      %5161 = vmatpush1.msra.mxu0 0.0
      %5162 = vmatprep.subr.mxu0 0.0
      %5163 = vmatpush1.msra.mxu0 0.0
      %5164 = vmatprep.subr.mxu0 0.0
      %5165 = vmatpush1.msra.mxu0 0.0
      %5166 = vmatprep.subr.mxu0 0.0
      %5167 = vmatpush1.msra.mxu0 0.0
      %5168 = vmatprep.subr.mxu0 0.0
      %5169 = vmatpush1.msra.mxu0 0.0
      %5170 = vmatprep.subr.mxu0 0.0
      %5171 = vmatpush1.msra.mxu0 0.0
      %5172 = vmatprep.subr.mxu0 0.0
      %5173 = vmatpush1.msra.mxu0 0.0
      %5174 = vmatprep.subr.mxu0 0.0
      %5175 = vmatpush1.msra.mxu0 0.0
      %5176 = vmatprep.subr.mxu0 0.0
      %5177 = vmatpush1.msra.mxu0 0.0
      %5178 = vmatprep.subr.mxu0 0.0
      %5179 = vmatpush1.msra.mxu0 0.0
      %5180 = vmatprep.subr.mxu0 0.0
      %5181 = vmatpush1.msra.mxu0 0.0
      %5182 = vmatprep.subr.mxu0 0.0
      %5183 = vmatpush1.msra.mxu0 0.0
      %5184 = vmatprep.subr.mxu0 0.0
      %5185 = vmatpush1.msra.mxu0 0.0
      %5186 = vmatprep.subr.mxu0 0.0
      %5187 = vmatpush1.msra.mxu0 0.0
      %5188 = vmatprep.subr.mxu0 0.0
      %5189 = vmatpush1.msra.mxu0 0.0
      %5190 = vmatprep.subr.mxu0 0.0
      %5191 = vmatpush1.msra.mxu0 0.0
      %5192 = vmatprep.subr.mxu0 0.0
      %5193 = vmatpush1.msra.mxu0 0.0
      %5194 = vmatprep.subr.mxu0 0.0
      %5195 = vmatpush1.msra.mxu0 0.0
      %5196 = vmatprep.subr.mxu0 0.0
      %5197 = vmatpush1.msra.mxu0 0.0
      %5198 = vmatprep.subr.mxu0 0.0
      %5199 = vmatpush1.msra.mxu0 0.0
      %5200 = vmatprep.subr.mxu0 0.0
      %5201 = vmatpush1.msra.mxu0 0.0
      %5202 = vmatprep.subr.mxu0 0.0
      %5203 = vmatpush1.msra.mxu0 0.0
      %5204 = vmatprep.mubr.f32.mxu0 0.0
      %5205 = vmatmul.mubr.f32.gmra.mrb[0].mxu0 %v5138
      %v5206 = vpop.f32.mrb[0].mxu0
      %v5207 = vadd.f32 %v261, %v5206
      %v5208 = vpop.f32.mrb[0].mxu0
      %5209 = vdwg.mxu0
      %v5210 = vmul.f32 %v336, %v5207
      %v5211 = vadd.f32 %v4740, %v5210
      %v5213 = vsel %vm97, %v5211, 0
      %5215 = vmatprep.subr.mxu0 0.0
      %5216 = vmatpush1.msra.mxu0 %v46
      %5217 = vmatprep.subr.mxu0 0.0
      %5218 = vmatpush1.msra.mxu0 %v103
      %5219 = vmatprep.subr.mxu0 0.0
      %5220 = vmatpush1.msra.mxu0 0.0
      %5221 = vmatprep.subr.mxu0 0.0
      %5222 = vmatpush1.msra.mxu0 0.0
      %5223 = vmatprep.subr.mxu0 0.0
      %5224 = vmatpush1.msra.mxu0 0.0
      %5225 = vmatprep.subr.mxu0 0.0
      %5226 = vmatpush1.msra.mxu0 0.0
      %5227 = vmatprep.subr.mxu0 0.0
      %5228 = vmatpush1.msra.mxu0 0.0
      %5229 = vmatprep.subr.mxu0 0.0
      %5230 = vmatpush1.msra.mxu0 0.0
      %5231 = vmatprep.subr.mxu0 0.0
      %5232 = vmatpush1.msra.mxu0 0.0
      %5233 = vmatprep.subr.mxu0 0.0
      %5234 = vmatpush1.msra.mxu0 0.0
      %5235 = vmatprep.subr.mxu0 0.0
      %5236 = vmatpush1.msra.mxu0 0.0
      %5237 = vmatprep.subr.mxu0 0.0
      %5238 = vmatpush1.msra.mxu0 0.0
      %5239 = vmatprep.subr.mxu0 0.0
      %5240 = vmatpush1.msra.mxu0 0.0
      %5241 = vmatprep.subr.mxu0 0.0
      %5242 = vmatpush1.msra.mxu0 0.0
      %5243 = vmatprep.subr.mxu0 0.0
      %5244 = vmatpush1.msra.mxu0 0.0
      %5245 = vmatprep.subr.mxu0 0.0
      %5246 = vmatpush1.msra.mxu0 0.0
      %5247 = vmatprep.subr.mxu0 0.0
      %5248 = vmatpush1.msra.mxu0 0.0
      %5249 = vmatprep.subr.mxu0 0.0
      %5250 = vmatpush1.msra.mxu0 0.0
      %5251 = vmatprep.subr.mxu0 0.0
      %5252 = vmatpush1.msra.mxu0 0.0
      %5253 = vmatprep.subr.mxu0 0.0
      %5254 = vmatpush1.msra.mxu0 0.0
      %5255 = vmatprep.subr.mxu0 0.0
      %5256 = vmatpush1.msra.mxu0 0.0
      %5257 = vmatprep.subr.mxu0 0.0
      %5258 = vmatpush1.msra.mxu0 0.0
      %5259 = vmatprep.subr.mxu0 0.0
      %5260 = vmatpush1.msra.mxu0 0.0
      %5261 = vmatprep.subr.mxu0 0.0
      %5262 = vmatpush1.msra.mxu0 0.0
      %5263 = vmatprep.subr.mxu0 0.0
      %5264 = vmatpush1.msra.mxu0 0.0
      %5265 = vmatprep.subr.mxu0 0.0
      %5266 = vmatpush1.msra.mxu0 0.0
      %5267 = vmatprep.subr.mxu0 0.0
      %5268 = vmatpush1.msra.mxu0 0.0
      %5269 = vmatprep.subr.mxu0 0.0
      %5270 = vmatpush1.msra.mxu0 0.0
      %5271 = vmatprep.subr.mxu0 0.0
      %5272 = vmatpush1.msra.mxu0 0.0
      %5273 = vmatprep.subr.mxu0 0.0
      %5274 = vmatpush1.msra.mxu0 0.0
      %5275 = vmatprep.subr.mxu0 0.0
      %5276 = vmatpush1.msra.mxu0 0.0
      %5277 = vmatprep.subr.mxu0 0.0
      %5278 = vmatpush1.msra.mxu0 0.0
      %5279 = vmatprep.mubr.f32.mxu0 0.0
      %5280 = vmatmul.mubr.f32.gmra.mrb[0].mxu0 %v5213
      %v5281 = vpop.f32.mrb[0].mxu0
      %v5282 = vadd.f32 %v4987, %v5281
      %v5283 = vpop.f32.mrb[0].mxu0
      %5284 = vdwg.mxu0
      %v5285 = vtanh.pop %v5282
      %v5287 = vsel %vm182, %v5285, 0
      %5289 = vmatprep.subr.mxu0 0.0
      %5290 = vmatpush1.msra.mxu0 %v50
      %5291 = vmatprep.subr.mxu0 0.0
      %5292 = vmatpush1.msra.mxu0 %v51
      %5293 = vmatprep.subr.mxu0 0.0
      %5294 = vmatpush1.msra.mxu0 %v52
      %5295 = vmatprep.subr.mxu0 0.0
      %5296 = vmatpush1.msra.mxu0 %v53
      %5297 = vmatprep.subr.mxu0 0.0
      %5298 = vmatpush1.msra.mxu0 0.0
      %5299 = vmatprep.subr.mxu0 0.0
      %5300 = vmatpush1.msra.mxu0 0.0
      %5301 = vmatprep.subr.mxu0 0.0
      %5302 = vmatpush1.msra.mxu0 0.0
      %5303 = vmatprep.subr.mxu0 0.0
      %5304 = vmatpush1.msra.mxu0 0.0
      %5305 = vmatprep.subr.mxu0 0.0
      %5306 = vmatpush1.msra.mxu0 0.0
      %5307 = vmatprep.subr.mxu0 0.0
      %5308 = vmatpush1.msra.mxu0 0.0
      %5309 = vmatprep.subr.mxu0 0.0
      %5310 = vmatpush1.msra.mxu0 0.0
      %5311 = vmatprep.subr.mxu0 0.0
      %5312 = vmatpush1.msra.mxu0 0.0
      %5313 = vmatprep.subr.mxu0 0.0
      %5314 = vmatpush1.msra.mxu0 0.0
      %5315 = vmatprep.subr.mxu0 0.0
      %5316 = vmatpush1.msra.mxu0 0.0
      %5317 = vmatprep.subr.mxu0 0.0
      %5318 = vmatpush1.msra.mxu0 0.0
      %5319 = vmatprep.subr.mxu0 0.0
      %5320 = vmatpush1.msra.mxu0 0.0
      %5321 = vmatprep.subr.mxu0 0.0
      %5322 = vmatpush1.msra.mxu0 0.0
      %5323 = vmatprep.subr.mxu0 0.0
      %5324 = vmatpush1.msra.mxu0 0.0
      %5325 = vmatprep.subr.mxu0 0.0
      %5326 = vmatpush1.msra.mxu0 0.0
      %5327 = vmatprep.subr.mxu0 0.0
      %5328 = vmatpush1.msra.mxu0 0.0
      %5329 = vmatprep.subr.mxu0 0.0
      %5330 = vmatpush1.msra.mxu0 0.0
      %5331 = vmatprep.subr.mxu0 0.0
      %5332 = vmatpush1.msra.mxu0 0.0
      %5333 = vmatprep.subr.mxu0 0.0
      %5334 = vmatpush1.msra.mxu0 0.0
      %5335 = vmatprep.subr.mxu0 0.0
      %5336 = vmatpush1.msra.mxu0 0.0
      %5337 = vmatprep.subr.mxu0 0.0
      %5338 = vmatpush1.msra.mxu0 0.0
      %5339 = vmatprep.subr.mxu0 0.0
      %5340 = vmatpush1.msra.mxu0 0.0
      %5341 = vmatprep.subr.mxu0 0.0
      %5342 = vmatpush1.msra.mxu0 0.0
      %5343 = vmatprep.subr.mxu0 0.0
      %5344 = vmatpush1.msra.mxu0 0.0
      %5345 = vmatprep.subr.mxu0 0.0
      %5346 = vmatpush1.msra.mxu0 0.0
      %5347 = vmatprep.subr.mxu0 0.0
      %5348 = vmatpush1.msra.mxu0 0.0
      %5349 = vmatprep.subr.mxu0 0.0
      %5350 = vmatpush1.msra.mxu0 0.0
      %5351 = vmatprep.subr.mxu0 0.0
      %5352 = vmatpush1.msra.mxu0 0.0
      %5353 = vmatprep.mubr.f32.mxu0 0.0
      %5354 = vmatmul.mubr.f32.gmra.mrb[0].mxu0 %v5287
      %v5355 = vpop.f32.mrb[0].mxu0
      %v5356 = vadd.f32 %v180, %v5355
      %v5357 = vpop.f32.mrb[0].mxu0
      %5358 = vdwg.mxu0
      %v5359 = vtanh.pop %v5356
      %v5361 = vsel %vm182, %v5359, 0
      %5363 = vmatprep.subr.mxu0 0.0
      %5364 = vmatpush1.msra.mxu0 %v55
      %5365 = vmatprep.subr.mxu0 0.0
      %5366 = vmatpush1.msra.mxu0 %v56
      %5367 = vmatprep.subr.mxu0 0.0
      %5368 = vmatpush1.msra.mxu0 %v57
      %5369 = vmatprep.subr.mxu0 0.0
      %5370 = vmatpush1.msra.mxu0 %v58
      %5371 = vmatprep.subr.mxu0 0.0
      %5372 = vmatpush1.msra.mxu0 0.0
      %5373 = vmatprep.subr.mxu0 0.0
      %5374 = vmatpush1.msra.mxu0 0.0
      %5375 = vmatprep.subr.mxu0 0.0
      %5376 = vmatpush1.msra.mxu0 0.0
      %5377 = vmatprep.subr.mxu0 0.0
      %5378 = vmatpush1.msra.mxu0 0.0
      %5379 = vmatprep.subr.mxu0 0.0
      %5380 = vmatpush1.msra.mxu0 0.0
      %5381 = vmatprep.subr.mxu0 0.0
      %5382 = vmatpush1.msra.mxu0 0.0
      %5383 = vmatprep.subr.mxu0 0.0
      %5384 = vmatpush1.msra.mxu0 0.0
      %5385 = vmatprep.subr.mxu0 0.0
      %5386 = vmatpush1.msra.mxu0 0.0
      %5387 = vmatprep.subr.mxu0 0.0
      %5388 = vmatpush1.msra.mxu0 0.0
      %5389 = vmatprep.subr.mxu0 0.0
      %5390 = vmatpush1.msra.mxu0 0.0
      %5391 = vmatprep.subr.mxu0 0.0
      %5392 = vmatpush1.msra.mxu0 0.0
      %5393 = vmatprep.subr.mxu0 0.0
      %5394 = vmatpush1.msra.mxu0 0.0
      %5395 = vmatprep.subr.mxu0 0.0
      %5396 = vmatpush1.msra.mxu0 0.0
      %5397 = vmatprep.subr.mxu0 0.0
      %5398 = vmatpush1.msra.mxu0 0.0
      %5399 = vmatprep.subr.mxu0 0.0
      %5400 = vmatpush1.msra.mxu0 0.0
      %5401 = vmatprep.subr.mxu0 0.0
      %5402 = vmatpush1.msra.mxu0 0.0
      %5403 = vmatprep.subr.mxu0 0.0
      %5404 = vmatpush1.msra.mxu0 0.0
      %5405 = vmatprep.subr.mxu0 0.0
      %5406 = vmatpush1.msra.mxu0 0.0
      %5407 = vmatprep.subr.mxu0 0.0
      %5408 = vmatpush1.msra.mxu0 0.0
      %5409 = vmatprep.subr.mxu0 0.0
      %5410 = vmatpush1.msra.mxu0 0.0
      %5411 = vmatprep.subr.mxu0 0.0
      %5412 = vmatpush1.msra.mxu0 0.0
      %5413 = vmatprep.subr.mxu0 0.0
      %5414 = vmatpush1.msra.mxu0 0.0
      %5415 = vmatprep.subr.mxu0 0.0
      %5416 = vmatpush1.msra.mxu0 0.0
      %5417 = vmatprep.subr.mxu0 0.0
      %5418 = vmatpush1.msra.mxu0 0.0
      %5419 = vmatprep.subr.mxu0 0.0
      %5420 = vmatpush1.msra.mxu0 0.0
      %5421 = vmatprep.subr.mxu0 0.0
      %5422 = vmatpush1.msra.mxu0 0.0
      %5423 = vmatprep.subr.mxu0 0.0
      %5424 = vmatpush1.msra.mxu0 0.0
      %5425 = vmatprep.subr.mxu0 0.0
      %5426 = vmatpush1.msra.mxu0 0.0
      %5427 = vmatprep.mubr.f32.mxu0 0.0
      %5428 = vmatmul.mubr.f32.gmra.mrb[0].mxu0 %v5361
      %v5429 = vpop.f32.mrb[0].mxu0
      %v5430 = vadd.f32 %v261, %v5429
      %v5431 = vpop.f32.mrb[0].mxu0
      %5432 = vdwg.mxu0
      %v5433 = vmul.f32 %v789, %v5430
      %v5434 = vadd.f32 %v4740, %v5433
      %v5436 = vlaneseq
      %v5437 = vshrl.u32 %v5436, 7
      %v5438 = vsub.s32 0, %v5437
      %v5439 = vrot.slane %v4753, %v5438
      %v5442 = vsel %vm97, %v5434, 0
      %5444 = vmatprep.subr.mxu0 0.0
      %5445 = vmatpush1.msra.mxu0 %v46
      %5446 = vmatprep.subr.mxu0 0.0
      %5447 = vmatpush1.msra.mxu0 %v103
      %5448 = vmatprep.subr.mxu0 0.0
      %5449 = vmatpush1.msra.mxu0 0.0
      %5450 = vmatprep.subr.mxu0 0.0
      %5451 = vmatpush1.msra.mxu0 0.0
      %5452 = vmatprep.subr.mxu0 0.0
      %5453 = vmatpush1.msra.mxu0 0.0
      %5454 = vmatprep.subr.mxu0 0.0
      %5455 = vmatpush1.msra.mxu0 0.0
      %5456 = vmatprep.subr.mxu0 0.0
      %5457 = vmatpush1.msra.mxu0 0.0
      %5458 = vmatprep.subr.mxu0 0.0
      %5459 = vmatpush1.msra.mxu0 0.0
      %5460 = vmatprep.subr.mxu0 0.0
      %5461 = vmatpush1.msra.mxu0 0.0
      %5462 = vmatprep.subr.mxu0 0.0
      %5463 = vmatpush1.msra.mxu0 0.0
      %5464 = vmatprep.subr.mxu0 0.0
      %5465 = vmatpush1.msra.mxu0 0.0
      %5466 = vmatprep.subr.mxu0 0.0
      %5467 = vmatpush1.msra.mxu0 0.0
      %5468 = vmatprep.subr.mxu0 0.0
      %5469 = vmatpush1.msra.mxu0 0.0
      %5470 = vmatprep.subr.mxu0 0.0
      %5471 = vmatpush1.msra.mxu0 0.0
      %5472 = vmatprep.subr.mxu0 0.0
      %5473 = vmatpush1.msra.mxu0 0.0
      %5474 = vmatprep.subr.mxu0 0.0
      %5475 = vmatpush1.msra.mxu0 0.0
      %5476 = vmatprep.subr.mxu0 0.0
      %5477 = vmatpush1.msra.mxu0 0.0
      %5478 = vmatprep.subr.mxu0 0.0
      %5479 = vmatpush1.msra.mxu0 0.0
      %5480 = vmatprep.subr.mxu0 0.0
      %5481 = vmatpush1.msra.mxu0 0.0
      %5482 = vmatprep.subr.mxu0 0.0
      %5483 = vmatpush1.msra.mxu0 0.0
      %5484 = vmatprep.subr.mxu0 0.0
      %5485 = vmatpush1.msra.mxu0 0.0
      %5486 = vmatprep.subr.mxu0 0.0
      %5487 = vmatpush1.msra.mxu0 0.0
      %5488 = vmatprep.subr.mxu0 0.0
      %5489 = vmatpush1.msra.mxu0 0.0
      %5490 = vmatprep.subr.mxu0 0.0
      %5491 = vmatpush1.msra.mxu0 0.0
      %5492 = vmatprep.subr.mxu0 0.0
      %5493 = vmatpush1.msra.mxu0 0.0
      %5494 = vmatprep.subr.mxu0 0.0
      %5495 = vmatpush1.msra.mxu0 0.0
      %5496 = vmatprep.subr.mxu0 0.0
      %5497 = vmatpush1.msra.mxu0 0.0
      %5498 = vmatprep.subr.mxu0 0.0
      %5499 = vmatpush1.msra.mxu0 0.0
      %5500 = vmatprep.subr.mxu0 0.0
      %5501 = vmatpush1.msra.mxu0 0.0
      %5502 = vmatprep.subr.mxu0 0.0
      %5503 = vmatpush1.msra.mxu0 0.0
      %5504 = vmatprep.subr.mxu0 0.0
      %5505 = vmatpush1.msra.mxu0 0.0
      %5506 = vmatprep.subr.mxu0 0.0
      %5507 = vmatpush1.msra.mxu0 0.0
      %5508 = vmatprep.mubr.f32.mxu0 0.0
      %5509 = vmatmul.mubr.f32.gmra.mrb[0].mxu0 %v5442
      %v5510 = vpop.f32.mrb[0].mxu0
      %v5511 = vadd.f32 %v5439, %v5510
      %v5512 = vpop.f32.mrb[0].mxu0
      %5513 = vdwg.mxu0
      %v5514 = vtanh.pop %v5511
      %v5516 = vsel %vm182, %v5514, 0
      %5518 = vmatprep.subr.mxu0 0.0
      %5519 = vmatpush1.msra.mxu0 %v50
      %5520 = vmatprep.subr.mxu0 0.0
      %5521 = vmatpush1.msra.mxu0 %v51
      %5522 = vmatprep.subr.mxu0 0.0
      %5523 = vmatpush1.msra.mxu0 %v52
      %5524 = vmatprep.subr.mxu0 0.0
      %5525 = vmatpush1.msra.mxu0 %v53
      %5526 = vmatprep.subr.mxu0 0.0
      %5527 = vmatpush1.msra.mxu0 0.0
      %5528 = vmatprep.subr.mxu0 0.0
      %5529 = vmatpush1.msra.mxu0 0.0
      %5530 = vmatprep.subr.mxu0 0.0
      %5531 = vmatpush1.msra.mxu0 0.0
      %5532 = vmatprep.subr.mxu0 0.0
      %5533 = vmatpush1.msra.mxu0 0.0
      %5534 = vmatprep.subr.mxu0 0.0
      %5535 = vmatpush1.msra.mxu0 0.0
      %5536 = vmatprep.subr.mxu0 0.0
      %5537 = vmatpush1.msra.mxu0 0.0
      %5538 = vmatprep.subr.mxu0 0.0
      %5539 = vmatpush1.msra.mxu0 0.0
      %5540 = vmatprep.subr.mxu0 0.0
      %5541 = vmatpush1.msra.mxu0 0.0
      %5542 = vmatprep.subr.mxu0 0.0
      %5543 = vmatpush1.msra.mxu0 0.0
      %5544 = vmatprep.subr.mxu0 0.0
      %5545 = vmatpush1.msra.mxu0 0.0
      %5546 = vmatprep.subr.mxu0 0.0
      %5547 = vmatpush1.msra.mxu0 0.0
      %5548 = vmatprep.subr.mxu0 0.0
      %5549 = vmatpush1.msra.mxu0 0.0
      %5550 = vmatprep.subr.mxu0 0.0
      %5551 = vmatpush1.msra.mxu0 0.0
      %5552 = vmatprep.subr.mxu0 0.0
      %5553 = vmatpush1.msra.mxu0 0.0
      %5554 = vmatprep.subr.mxu0 0.0
      %5555 = vmatpush1.msra.mxu0 0.0
      %5556 = vmatprep.subr.mxu0 0.0
      %5557 = vmatpush1.msra.mxu0 0.0
      %5558 = vmatprep.subr.mxu0 0.0
      %5559 = vmatpush1.msra.mxu0 0.0
      %5560 = vmatprep.subr.mxu0 0.0
      %5561 = vmatpush1.msra.mxu0 0.0
      %5562 = vmatprep.subr.mxu0 0.0
      %5563 = vmatpush1.msra.mxu0 0.0
      %5564 = vmatprep.subr.mxu0 0.0
      %5565 = vmatpush1.msra.mxu0 0.0
      %5566 = vmatprep.subr.mxu0 0.0
      %5567 = vmatpush1.msra.mxu0 0.0
      %5568 = vmatprep.subr.mxu0 0.0
      %5569 = vmatpush1.msra.mxu0 0.0
      %5570 = vmatprep.subr.mxu0 0.0
      %5571 = vmatpush1.msra.mxu0 0.0
      %5572 = vmatprep.subr.mxu0 0.0
      %5573 = vmatpush1.msra.mxu0 0.0
      %5574 = vmatprep.subr.mxu0 0.0
      %5575 = vmatpush1.msra.mxu0 0.0
      %5576 = vmatprep.subr.mxu0 0.0
      %5577 = vmatpush1.msra.mxu0 0.0
      %5578 = vmatprep.subr.mxu0 0.0
      %5579 = vmatpush1.msra.mxu0 0.0
      %5580 = vmatprep.subr.mxu0 0.0
      %5581 = vmatpush1.msra.mxu0 0.0
      %5582 = vmatprep.mubr.f32.mxu0 0.0
      %5583 = vmatmul.mubr.f32.gmra.mrb[0].mxu0 %v5516
      %v5584 = vpop.f32.mrb[0].mxu0
      %v5585 = vadd.f32 %v180, %v5584
      %v5586 = vpop.f32.mrb[0].mxu0
      %5587 = vdwg.mxu0
      %v5588 = vtanh.pop %v5585
      %v5590 = vsel %vm182, %v5588, 0
      %5592 = vmatprep.subr.mxu0 0.0
      %5593 = vmatpush1.msra.mxu0 %v55
      %5594 = vmatprep.subr.mxu0 0.0
      %5595 = vmatpush1.msra.mxu0 %v56
      %5596 = vmatprep.subr.mxu0 0.0
      %5597 = vmatpush1.msra.mxu0 %v57
      %5598 = vmatprep.subr.mxu0 0.0
      %5599 = vmatpush1.msra.mxu0 %v58
      %5600 = vmatprep.subr.mxu0 0.0
      %5601 = vmatpush1.msra.mxu0 0.0
      %5602 = vmatprep.subr.mxu0 0.0
      %5603 = vmatpush1.msra.mxu0 0.0
      %5604 = vmatprep.subr.mxu0 0.0
      %5605 = vmatpush1.msra.mxu0 0.0
      %5606 = vmatprep.subr.mxu0 0.0
      %5607 = vmatpush1.msra.mxu0 0.0
      %5608 = vmatprep.subr.mxu0 0.0
      %5609 = vmatpush1.msra.mxu0 0.0
      %5610 = vmatprep.subr.mxu0 0.0
      %5611 = vmatpush1.msra.mxu0 0.0
      %5612 = vmatprep.subr.mxu0 0.0
      %5613 = vmatpush1.msra.mxu0 0.0
      %5614 = vmatprep.subr.mxu0 0.0
      %5615 = vmatpush1.msra.mxu0 0.0
      %5616 = vmatprep.subr.mxu0 0.0
      %5617 = vmatpush1.msra.mxu0 0.0
      %5618 = vmatprep.subr.mxu0 0.0
      %5619 = vmatpush1.msra.mxu0 0.0
      %5620 = vmatprep.subr.mxu0 0.0
      %5621 = vmatpush1.msra.mxu0 0.0
      %5622 = vmatprep.subr.mxu0 0.0
      %5623 = vmatpush1.msra.mxu0 0.0
      %5624 = vmatprep.subr.mxu0 0.0
      %5625 = vmatpush1.msra.mxu0 0.0
      %5626 = vmatprep.subr.mxu0 0.0
      %5627 = vmatpush1.msra.mxu0 0.0
      %5628 = vmatprep.subr.mxu0 0.0
      %5629 = vmatpush1.msra.mxu0 0.0
      %5630 = vmatprep.subr.mxu0 0.0
      %5631 = vmatpush1.msra.mxu0 0.0
      %5632 = vmatprep.subr.mxu0 0.0
      %5633 = vmatpush1.msra.mxu0 0.0
      %5634 = vmatprep.subr.mxu0 0.0
      %5635 = vmatpush1.msra.mxu0 0.0
      %5636 = vmatprep.subr.mxu0 0.0
      %5637 = vmatpush1.msra.mxu0 0.0
      %5638 = vmatprep.subr.mxu0 0.0
      %5639 = vmatpush1.msra.mxu0 0.0
      %5640 = vmatprep.subr.mxu0 0.0
      %5641 = vmatpush1.msra.mxu0 0.0
      %5642 = vmatprep.subr.mxu0 0.0
      %5643 = vmatpush1.msra.mxu0 0.0
      %5644 = vmatprep.subr.mxu0 0.0
      %5645 = vmatpush1.msra.mxu0 0.0
      %5646 = vmatprep.subr.mxu0 0.0
      %5647 = vmatpush1.msra.mxu0 0.0
      %5648 = vmatprep.subr.mxu0 0.0
      %5649 = vmatpush1.msra.mxu0 0.0
      %5650 = vmatprep.subr.mxu0 0.0
      %5651 = vmatpush1.msra.mxu0 0.0
      %5652 = vmatprep.subr.mxu0 0.0
      %5653 = vmatpush1.msra.mxu0 0.0
      %5654 = vmatprep.subr.mxu0 0.0
      %5655 = vmatpush1.msra.mxu0 0.0
      %5656 = vmatprep.mubr.f32.mxu0 0.0
      %5657 = vmatmul.mubr.f32.gmra.mrb[0].mxu0 %v5590
      %v5658 = vpop.f32.mrb[0].mxu0
      %v5659 = vadd.f32 %v261, %v5658
      %v5660 = vpop.f32.mrb[0].mxu0
      %5661 = vdwg.mxu0
      %v5662 = vmul.f32 %v5207, 2.0
      %v5663 = vadd.f32 %v4978, %v5662
      %v5664 = vmul.f32 %v5430, 2.0
      %v5665 = vadd.f32 %v5663, %v5664
      %v5666 = vadd.f32 %v5665, %v5659
      %v5667 = vmul.f32 %v1027, %v5666
      %v5668 = vadd.f32 %v4740, %v5667
      %s5669 = smul.f32 %s76, 6.0
      %s5670 = sadd.f32 %s71, %s5669
      %v5671 = vstv %s5670
      %v5672 = vmul.f32 %v5671, %v48
      %v5673 = vadd.f32 %v5672, %v49
      %s5674 = sadd.f32 %s5670, %s82
      %v5675 = vstv %s5674
      %v5676 = vmul.f32 %v5675, %v48
      %v5677 = vadd.f32 %v5676, %v49
      %s5678 = sadd.f32 %s5670, %s76
      %v5679 = vstv %s5678
      %v5680 = vmul.f32 %v5679, %v48
      %v5681 = vadd.f32 %v5680, %v49
      %v5683 = vlaneseq
      %v5684 = vshrl.u32 %v5683, 7
      %v5685 = vsub.s32 0, %v5684
      %v5686 = vrot.slane %v5673, %v5685
      %v5689 = vsel %vm97, %v5668, 0
      %5691 = vmatprep.subr.mxu0 0.0
      %5692 = vmatpush1.msra.mxu0 %v46
      %5693 = vmatprep.subr.mxu0 0.0
      %5694 = vmatpush1.msra.mxu0 %v103
      %5695 = vmatprep.subr.mxu0 0.0
      %5696 = vmatpush1.msra.mxu0 0.0
      %5697 = vmatprep.subr.mxu0 0.0
      %5698 = vmatpush1.msra.mxu0 0.0
      %5699 = vmatprep.subr.mxu0 0.0
      %5700 = vmatpush1.msra.mxu0 0.0
      %5701 = vmatprep.subr.mxu0 0.0
      %5702 = vmatpush1.msra.mxu0 0.0
      %5703 = vmatprep.subr.mxu0 0.0
      %5704 = vmatpush1.msra.mxu0 0.0
      %5705 = vmatprep.subr.mxu0 0.0
      %5706 = vmatpush1.msra.mxu0 0.0
      %5707 = vmatprep.subr.mxu0 0.0
      %5708 = vmatpush1.msra.mxu0 0.0
      %5709 = vmatprep.subr.mxu0 0.0
      %5710 = vmatpush1.msra.mxu0 0.0
      %5711 = vmatprep.subr.mxu0 0.0
      %5712 = vmatpush1.msra.mxu0 0.0
      %5713 = vmatprep.subr.mxu0 0.0
      %5714 = vmatpush1.msra.mxu0 0.0
      %5715 = vmatprep.subr.mxu0 0.0
      %5716 = vmatpush1.msra.mxu0 0.0
      %5717 = vmatprep.subr.mxu0 0.0
      %5718 = vmatpush1.msra.mxu0 0.0
      %5719 = vmatprep.subr.mxu0 0.0
      %5720 = vmatpush1.msra.mxu0 0.0
      %5721 = vmatprep.subr.mxu0 0.0
      %5722 = vmatpush1.msra.mxu0 0.0
      %5723 = vmatprep.subr.mxu0 0.0
      %5724 = vmatpush1.msra.mxu0 0.0
      %5725 = vmatprep.subr.mxu0 0.0
      %5726 = vmatpush1.msra.mxu0 0.0
      %5727 = vmatprep.subr.mxu0 0.0
      %5728 = vmatpush1.msra.mxu0 0.0
      %5729 = vmatprep.subr.mxu0 0.0
      %5730 = vmatpush1.msra.mxu0 0.0
      %5731 = vmatprep.subr.mxu0 0.0
      %5732 = vmatpush1.msra.mxu0 0.0
      %5733 = vmatprep.subr.mxu0 0.0
      %5734 = vmatpush1.msra.mxu0 0.0
      %5735 = vmatprep.subr.mxu0 0.0
      %5736 = vmatpush1.msra.mxu0 0.0
      %5737 = vmatprep.subr.mxu0 0.0
      %5738 = vmatpush1.msra.mxu0 0.0
      %5739 = vmatprep.subr.mxu0 0.0
      %5740 = vmatpush1.msra.mxu0 0.0
      %5741 = vmatprep.subr.mxu0 0.0
      %5742 = vmatpush1.msra.mxu0 0.0
      %5743 = vmatprep.subr.mxu0 0.0
      %5744 = vmatpush1.msra.mxu0 0.0
      %5745 = vmatprep.subr.mxu0 0.0
      %5746 = vmatpush1.msra.mxu0 0.0
      %5747 = vmatprep.subr.mxu0 0.0
      %5748 = vmatpush1.msra.mxu0 0.0
      %5749 = vmatprep.subr.mxu0 0.0
      %5750 = vmatpush1.msra.mxu0 0.0
      %5751 = vmatprep.subr.mxu0 0.0
      %5752 = vmatpush1.msra.mxu0 0.0
      %5753 = vmatprep.subr.mxu0 0.0
      %5754 = vmatpush1.msra.mxu0 0.0
      %5755 = vmatprep.mubr.f32.mxu0 0.0
      %5756 = vmatmul.mubr.f32.gmra.mrb[0].mxu0 %v5689
      %v5757 = vpop.f32.mrb[0].mxu0
      %v5758 = vadd.f32 %v5686, %v5757
      %v5759 = vpop.f32.mrb[0].mxu0
      %5760 = vdwg.mxu0
      %v5761 = vtanh.pop %v5758
      %v5763 = vsel %vm182, %v5761, 0
      %5765 = vmatprep.subr.mxu0 0.0
      %5766 = vmatpush1.msra.mxu0 %v50
      %5767 = vmatprep.subr.mxu0 0.0
      %5768 = vmatpush1.msra.mxu0 %v51
      %5769 = vmatprep.subr.mxu0 0.0
      %5770 = vmatpush1.msra.mxu0 %v52
      %5771 = vmatprep.subr.mxu0 0.0
      %5772 = vmatpush1.msra.mxu0 %v53
      %5773 = vmatprep.subr.mxu0 0.0
      %5774 = vmatpush1.msra.mxu0 0.0
      %5775 = vmatprep.subr.mxu0 0.0
      %5776 = vmatpush1.msra.mxu0 0.0
      %5777 = vmatprep.subr.mxu0 0.0
      %5778 = vmatpush1.msra.mxu0 0.0
      %5779 = vmatprep.subr.mxu0 0.0
      %5780 = vmatpush1.msra.mxu0 0.0
      %5781 = vmatprep.subr.mxu0 0.0
      %5782 = vmatpush1.msra.mxu0 0.0
      %5783 = vmatprep.subr.mxu0 0.0
      %5784 = vmatpush1.msra.mxu0 0.0
      %5785 = vmatprep.subr.mxu0 0.0
      %5786 = vmatpush1.msra.mxu0 0.0
      %5787 = vmatprep.subr.mxu0 0.0
      %5788 = vmatpush1.msra.mxu0 0.0
      %5789 = vmatprep.subr.mxu0 0.0
      %5790 = vmatpush1.msra.mxu0 0.0
      %5791 = vmatprep.subr.mxu0 0.0
      %5792 = vmatpush1.msra.mxu0 0.0
      %5793 = vmatprep.subr.mxu0 0.0
      %5794 = vmatpush1.msra.mxu0 0.0
      %5795 = vmatprep.subr.mxu0 0.0
      %5796 = vmatpush1.msra.mxu0 0.0
      %5797 = vmatprep.subr.mxu0 0.0
      %5798 = vmatpush1.msra.mxu0 0.0
      %5799 = vmatprep.subr.mxu0 0.0
      %5800 = vmatpush1.msra.mxu0 0.0
      %5801 = vmatprep.subr.mxu0 0.0
      %5802 = vmatpush1.msra.mxu0 0.0
      %5803 = vmatprep.subr.mxu0 0.0
      %5804 = vmatpush1.msra.mxu0 0.0
      %5805 = vmatprep.subr.mxu0 0.0
      %5806 = vmatpush1.msra.mxu0 0.0
      %5807 = vmatprep.subr.mxu0 0.0
      %5808 = vmatpush1.msra.mxu0 0.0
      %5809 = vmatprep.subr.mxu0 0.0
      %5810 = vmatpush1.msra.mxu0 0.0
      %5811 = vmatprep.subr.mxu0 0.0
      %5812 = vmatpush1.msra.mxu0 0.0
      %5813 = vmatprep.subr.mxu0 0.0
      %5814 = vmatpush1.msra.mxu0 0.0
      %5815 = vmatprep.subr.mxu0 0.0
      %5816 = vmatpush1.msra.mxu0 0.0
      %5817 = vmatprep.subr.mxu0 0.0
      %5818 = vmatpush1.msra.mxu0 0.0
      %5819 = vmatprep.subr.mxu0 0.0
      %5820 = vmatpush1.msra.mxu0 0.0
      %5821 = vmatprep.subr.mxu0 0.0
      %5822 = vmatpush1.msra.mxu0 0.0
      %5823 = vmatprep.subr.mxu0 0.0
      %5824 = vmatpush1.msra.mxu0 0.0
      %5825 = vmatprep.subr.mxu0 0.0
      %5826 = vmatpush1.msra.mxu0 0.0
      %5827 = vmatprep.subr.mxu0 0.0
      %5828 = vmatpush1.msra.mxu0 0.0
      %5829 = vmatprep.mubr.f32.mxu0 0.0
      %5830 = vmatmul.mubr.f32.gmra.mrb[0].mxu0 %v5763
      %v5831 = vpop.f32.mrb[0].mxu0
      %v5832 = vadd.f32 %v180, %v5831
      %v5833 = vpop.f32.mrb[0].mxu0
      %5834 = vdwg.mxu0
      %v5835 = vtanh.pop %v5832
      %v5837 = vsel %vm182, %v5835, 0
      %5839 = vmatprep.subr.mxu0 0.0
      %5840 = vmatpush1.msra.mxu0 %v55
      %5841 = vmatprep.subr.mxu0 0.0
      %5842 = vmatpush1.msra.mxu0 %v56
      %5843 = vmatprep.subr.mxu0 0.0
      %5844 = vmatpush1.msra.mxu0 %v57
      %5845 = vmatprep.subr.mxu0 0.0
      %5846 = vmatpush1.msra.mxu0 %v58
      %5847 = vmatprep.subr.mxu0 0.0
      %5848 = vmatpush1.msra.mxu0 0.0
      %5849 = vmatprep.subr.mxu0 0.0
      %5850 = vmatpush1.msra.mxu0 0.0
      %5851 = vmatprep.subr.mxu0 0.0
      %5852 = vmatpush1.msra.mxu0 0.0
      %5853 = vmatprep.subr.mxu0 0.0
      %5854 = vmatpush1.msra.mxu0 0.0
      %5855 = vmatprep.subr.mxu0 0.0
      %5856 = vmatpush1.msra.mxu0 0.0
      %5857 = vmatprep.subr.mxu0 0.0
      %5858 = vmatpush1.msra.mxu0 0.0
      %5859 = vmatprep.subr.mxu0 0.0
      %5860 = vmatpush1.msra.mxu0 0.0
      %5861 = vmatprep.subr.mxu0 0.0
      %5862 = vmatpush1.msra.mxu0 0.0
      %5863 = vmatprep.subr.mxu0 0.0
      %5864 = vmatpush1.msra.mxu0 0.0
      %5865 = vmatprep.subr.mxu0 0.0
      %5866 = vmatpush1.msra.mxu0 0.0
      %5867 = vmatprep.subr.mxu0 0.0
      %5868 = vmatpush1.msra.mxu0 0.0
      %5869 = vmatprep.subr.mxu0 0.0
      %5870 = vmatpush1.msra.mxu0 0.0
      %5871 = vmatprep.subr.mxu0 0.0
      %5872 = vmatpush1.msra.mxu0 0.0
      %5873 = vmatprep.subr.mxu0 0.0
      %5874 = vmatpush1.msra.mxu0 0.0
      %5875 = vmatprep.subr.mxu0 0.0
      %5876 = vmatpush1.msra.mxu0 0.0
      %5877 = vmatprep.subr.mxu0 0.0
      %5878 = vmatpush1.msra.mxu0 0.0
      %5879 = vmatprep.subr.mxu0 0.0
      %5880 = vmatpush1.msra.mxu0 0.0
      %5881 = vmatprep.subr.mxu0 0.0
      %5882 = vmatpush1.msra.mxu0 0.0
      %5883 = vmatprep.subr.mxu0 0.0
      %5884 = vmatpush1.msra.mxu0 0.0
      %5885 = vmatprep.subr.mxu0 0.0
      %5886 = vmatpush1.msra.mxu0 0.0
      %5887 = vmatprep.subr.mxu0 0.0
      %5888 = vmatpush1.msra.mxu0 0.0
      %5889 = vmatprep.subr.mxu0 0.0
      %5890 = vmatpush1.msra.mxu0 0.0
      %5891 = vmatprep.subr.mxu0 0.0
      %5892 = vmatpush1.msra.mxu0 0.0
      %5893 = vmatprep.subr.mxu0 0.0
      %5894 = vmatpush1.msra.mxu0 0.0
      %5895 = vmatprep.subr.mxu0 0.0
      %5896 = vmatpush1.msra.mxu0 0.0
      %5897 = vmatprep.subr.mxu0 0.0
      %5898 = vmatpush1.msra.mxu0 0.0
      %5899 = vmatprep.subr.mxu0 0.0
      %5900 = vmatpush1.msra.mxu0 0.0
      %5901 = vmatprep.subr.mxu0 0.0
      %5902 = vmatpush1.msra.mxu0 0.0
      %5903 = vmatprep.mubr.f32.mxu0 0.0
      %5904 = vmatmul.mubr.f32.gmra.mrb[0].mxu0 %v5837
      %v5905 = vpop.f32.mrb[0].mxu0
      %v5906 = vadd.f32 %v261, %v5905
      %v5907 = vpop.f32.mrb[0].mxu0
      %5908 = vdwg.mxu0
      %v5909 = vmul.f32 %v336, %v5906
      %v5910 = vadd.f32 %v5668, %v5909
      %v5912 = vlaneseq
      %v5913 = vshrl.u32 %v5912, 7
      %v5914 = vsub.s32 0, %v5913
      %v5915 = vrot.slane %v5677, %v5914
      %v5918 = vsel %vm97, %v5910, 0
      %5920 = vmatprep.subr.mxu0 0.0
      %5921 = vmatpush1.msra.mxu0 %v46
      %5922 = vmatprep.subr.mxu0 0.0
      %5923 = vmatpush1.msra.mxu0 %v103
      %5924 = vmatprep.subr.mxu0 0.0
      %5925 = vmatpush1.msra.mxu0 0.0
      %5926 = vmatprep.subr.mxu0 0.0
      %5927 = vmatpush1.msra.mxu0 0.0
      %5928 = vmatprep.subr.mxu0 0.0
      %5929 = vmatpush1.msra.mxu0 0.0
      %5930 = vmatprep.subr.mxu0 0.0
      %5931 = vmatpush1.msra.mxu0 0.0
      %5932 = vmatprep.subr.mxu0 0.0
      %5933 = vmatpush1.msra.mxu0 0.0
      %5934 = vmatprep.subr.mxu0 0.0
      %5935 = vmatpush1.msra.mxu0 0.0
      %5936 = vmatprep.subr.mxu0 0.0
      %5937 = vmatpush1.msra.mxu0 0.0
      %5938 = vmatprep.subr.mxu0 0.0
      %5939 = vmatpush1.msra.mxu0 0.0
      %5940 = vmatprep.subr.mxu0 0.0
      %5941 = vmatpush1.msra.mxu0 0.0
      %5942 = vmatprep.subr.mxu0 0.0
      %5943 = vmatpush1.msra.mxu0 0.0
      %5944 = vmatprep.subr.mxu0 0.0
      %5945 = vmatpush1.msra.mxu0 0.0
      %5946 = vmatprep.subr.mxu0 0.0
      %5947 = vmatpush1.msra.mxu0 0.0
      %5948 = vmatprep.subr.mxu0 0.0
      %5949 = vmatpush1.msra.mxu0 0.0
      %5950 = vmatprep.subr.mxu0 0.0
      %5951 = vmatpush1.msra.mxu0 0.0
      %5952 = vmatprep.subr.mxu0 0.0
      %5953 = vmatpush1.msra.mxu0 0.0
      %5954 = vmatprep.subr.mxu0 0.0
      %5955 = vmatpush1.msra.mxu0 0.0
      %5956 = vmatprep.subr.mxu0 0.0
      %5957 = vmatpush1.msra.mxu0 0.0
      %5958 = vmatprep.subr.mxu0 0.0
      %5959 = vmatpush1.msra.mxu0 0.0
      %5960 = vmatprep.subr.mxu0 0.0
      %5961 = vmatpush1.msra.mxu0 0.0
      %5962 = vmatprep.subr.mxu0 0.0
      %5963 = vmatpush1.msra.mxu0 0.0
      %5964 = vmatprep.subr.mxu0 0.0
      %5965 = vmatpush1.msra.mxu0 0.0
      %5966 = vmatprep.subr.mxu0 0.0
      %5967 = vmatpush1.msra.mxu0 0.0
      %5968 = vmatprep.subr.mxu0 0.0
      %5969 = vmatpush1.msra.mxu0 0.0
      %5970 = vmatprep.subr.mxu0 0.0
      %5971 = vmatpush1.msra.mxu0 0.0
      %5972 = vmatprep.subr.mxu0 0.0
      %5973 = vmatpush1.msra.mxu0 0.0
      %5974 = vmatprep.subr.mxu0 0.0
      %5975 = vmatpush1.msra.mxu0 0.0
      %5976 = vmatprep.subr.mxu0 0.0
      %5977 = vmatpush1.msra.mxu0 0.0
      %5978 = vmatprep.subr.mxu0 0.0
      %5979 = vmatpush1.msra.mxu0 0.0
      %5980 = vmatprep.subr.mxu0 0.0
      %5981 = vmatpush1.msra.mxu0 0.0
      %5982 = vmatprep.subr.mxu0 0.0
      %5983 = vmatpush1.msra.mxu0 0.0
      %5984 = vmatprep.mubr.f32.mxu0 0.0
      %5985 = vmatmul.mubr.f32.gmra.mrb[0].mxu0 %v5918
      %v5986 = vpop.f32.mrb[0].mxu0
      %v5987 = vadd.f32 %v5915, %v5986
      %v5988 = vpop.f32.mrb[0].mxu0
      %5989 = vdwg.mxu0
      %v5990 = vtanh.pop %v5987
      %v5992 = vsel %vm182, %v5990, 0
      %5994 = vmatprep.subr.mxu0 0.0
      %5995 = vmatpush1.msra.mxu0 %v50
      %5996 = vmatprep.subr.mxu0 0.0
      %5997 = vmatpush1.msra.mxu0 %v51
      %5998 = vmatprep.subr.mxu0 0.0
      %5999 = vmatpush1.msra.mxu0 %v52
      %6000 = vmatprep.subr.mxu0 0.0
      %6001 = vmatpush1.msra.mxu0 %v53
      %6002 = vmatprep.subr.mxu0 0.0
      %6003 = vmatpush1.msra.mxu0 0.0
      %6004 = vmatprep.subr.mxu0 0.0
      %6005 = vmatpush1.msra.mxu0 0.0
      %6006 = vmatprep.subr.mxu0 0.0
      %6007 = vmatpush1.msra.mxu0 0.0
      %6008 = vmatprep.subr.mxu0 0.0
      %6009 = vmatpush1.msra.mxu0 0.0
      %6010 = vmatprep.subr.mxu0 0.0
      %6011 = vmatpush1.msra.mxu0 0.0
      %6012 = vmatprep.subr.mxu0 0.0
      %6013 = vmatpush1.msra.mxu0 0.0
      %6014 = vmatprep.subr.mxu0 0.0
      %6015 = vmatpush1.msra.mxu0 0.0
      %6016 = vmatprep.subr.mxu0 0.0
      %6017 = vmatpush1.msra.mxu0 0.0
      %6018 = vmatprep.subr.mxu0 0.0
      %6019 = vmatpush1.msra.mxu0 0.0
      %6020 = vmatprep.subr.mxu0 0.0
      %6021 = vmatpush1.msra.mxu0 0.0
      %6022 = vmatprep.subr.mxu0 0.0
      %6023 = vmatpush1.msra.mxu0 0.0
      %6024 = vmatprep.subr.mxu0 0.0
      %6025 = vmatpush1.msra.mxu0 0.0
      %6026 = vmatprep.subr.mxu0 0.0
      %6027 = vmatpush1.msra.mxu0 0.0
      %6028 = vmatprep.subr.mxu0 0.0
      %6029 = vmatpush1.msra.mxu0 0.0
      %6030 = vmatprep.subr.mxu0 0.0
      %6031 = vmatpush1.msra.mxu0 0.0
      %6032 = vmatprep.subr.mxu0 0.0
      %6033 = vmatpush1.msra.mxu0 0.0
      %6034 = vmatprep.subr.mxu0 0.0
      %6035 = vmatpush1.msra.mxu0 0.0
      %6036 = vmatprep.subr.mxu0 0.0
      %6037 = vmatpush1.msra.mxu0 0.0
      %6038 = vmatprep.subr.mxu0 0.0
      %6039 = vmatpush1.msra.mxu0 0.0
      %6040 = vmatprep.subr.mxu0 0.0
      %6041 = vmatpush1.msra.mxu0 0.0
      %6042 = vmatprep.subr.mxu0 0.0
      %6043 = vmatpush1.msra.mxu0 0.0
      %6044 = vmatprep.subr.mxu0 0.0
      %6045 = vmatpush1.msra.mxu0 0.0
      %6046 = vmatprep.subr.mxu0 0.0
      %6047 = vmatpush1.msra.mxu0 0.0
      %6048 = vmatprep.subr.mxu0 0.0
      %6049 = vmatpush1.msra.mxu0 0.0
      %6050 = vmatprep.subr.mxu0 0.0
      %6051 = vmatpush1.msra.mxu0 0.0
      %6052 = vmatprep.subr.mxu0 0.0
      %6053 = vmatpush1.msra.mxu0 0.0
      %6054 = vmatprep.subr.mxu0 0.0
      %6055 = vmatpush1.msra.mxu0 0.0
      %6056 = vmatprep.subr.mxu0 0.0
      %6057 = vmatpush1.msra.mxu0 0.0
      %6058 = vmatprep.mubr.f32.mxu0 0.0
      %6059 = vmatmul.mubr.f32.gmra.mrb[0].mxu0 %v5992
      %v6060 = vpop.f32.mrb[0].mxu0
      %v6061 = vadd.f32 %v180, %v6060
      %v6062 = vpop.f32.mrb[0].mxu0
      %6063 = vdwg.mxu0
      %v6064 = vtanh.pop %v6061
      %v6066 = vsel %vm182, %v6064, 0
      %6068 = vmatprep.subr.mxu0 0.0
      %6069 = vmatpush1.msra.mxu0 %v55
      %6070 = vmatprep.subr.mxu0 0.0
      %6071 = vmatpush1.msra.mxu0 %v56
      %6072 = vmatprep.subr.mxu0 0.0
      %6073 = vmatpush1.msra.mxu0 %v57
      %6074 = vmatprep.subr.mxu0 0.0
      %6075 = vmatpush1.msra.mxu0 %v58
      %6076 = vmatprep.subr.mxu0 0.0
      %6077 = vmatpush1.msra.mxu0 0.0
      %6078 = vmatprep.subr.mxu0 0.0
      %6079 = vmatpush1.msra.mxu0 0.0
      %6080 = vmatprep.subr.mxu0 0.0
      %6081 = vmatpush1.msra.mxu0 0.0
      %6082 = vmatprep.subr.mxu0 0.0
      %6083 = vmatpush1.msra.mxu0 0.0
      %6084 = vmatprep.subr.mxu0 0.0
      %6085 = vmatpush1.msra.mxu0 0.0
      %6086 = vmatprep.subr.mxu0 0.0
      %6087 = vmatpush1.msra.mxu0 0.0
      %6088 = vmatprep.subr.mxu0 0.0
      %6089 = vmatpush1.msra.mxu0 0.0
      %6090 = vmatprep.subr.mxu0 0.0
      %6091 = vmatpush1.msra.mxu0 0.0
      %6092 = vmatprep.subr.mxu0 0.0
      %6093 = vmatpush1.msra.mxu0 0.0
      %6094 = vmatprep.subr.mxu0 0.0
      %6095 = vmatpush1.msra.mxu0 0.0
      %6096 = vmatprep.subr.mxu0 0.0
      %6097 = vmatpush1.msra.mxu0 0.0
      %6098 = vmatprep.subr.mxu0 0.0
      %6099 = vmatpush1.msra.mxu0 0.0
      %6100 = vmatprep.subr.mxu0 0.0
      %6101 = vmatpush1.msra.mxu0 0.0
      %6102 = vmatprep.subr.mxu0 0.0
      %6103 = vmatpush1.msra.mxu0 0.0
      %6104 = vmatprep.subr.mxu0 0.0
      %6105 = vmatpush1.msra.mxu0 0.0
      %6106 = vmatprep.subr.mxu0 0.0
      %6107 = vmatpush1.msra.mxu0 0.0
      %6108 = vmatprep.subr.mxu0 0.0
      %6109 = vmatpush1.msra.mxu0 0.0
      %6110 = vmatprep.subr.mxu0 0.0
      %6111 = vmatpush1.msra.mxu0 0.0
      %6112 = vmatprep.subr.mxu0 0.0
      %6113 = vmatpush1.msra.mxu0 0.0
      %6114 = vmatprep.subr.mxu0 0.0
      %6115 = vmatpush1.msra.mxu0 0.0
      %6116 = vmatprep.subr.mxu0 0.0
      %6117 = vmatpush1.msra.mxu0 0.0
      %6118 = vmatprep.subr.mxu0 0.0
      %6119 = vmatpush1.msra.mxu0 0.0
      %6120 = vmatprep.subr.mxu0 0.0
      %6121 = vmatpush1.msra.mxu0 0.0
      %6122 = vmatprep.subr.mxu0 0.0
      %6123 = vmatpush1.msra.mxu0 0.0
      %6124 = vmatprep.subr.mxu0 0.0
      %6125 = vmatpush1.msra.mxu0 0.0
      %6126 = vmatprep.subr.mxu0 0.0
      %6127 = vmatpush1.msra.mxu0 0.0
      %6128 = vmatprep.subr.mxu0 0.0
      %6129 = vmatpush1.msra.mxu0 0.0
      %6130 = vmatprep.subr.mxu0 0.0
      %6131 = vmatpush1.msra.mxu0 0.0
      %6132 = vmatprep.mubr.f32.mxu0 0.0
      %6133 = vmatmul.mubr.f32.gmra.mrb[0].mxu0 %v6066
      %v6134 = vpop.f32.mrb[0].mxu0
      %v6135 = vadd.f32 %v261, %v6134
      %v6136 = vpop.f32.mrb[0].mxu0
      %6137 = vdwg.mxu0
      %v6138 = vmul.f32 %v336, %v6135
      %v6139 = vadd.f32 %v5668, %v6138
      %v6141 = vsel %vm97, %v6139, 0
      %6143 = vmatprep.subr.mxu0 0.0
      %6144 = vmatpush1.msra.mxu0 %v46
      %6145 = vmatprep.subr.mxu0 0.0
      %6146 = vmatpush1.msra.mxu0 %v103
      %6147 = vmatprep.subr.mxu0 0.0
      %6148 = vmatpush1.msra.mxu0 0.0
      %6149 = vmatprep.subr.mxu0 0.0
      %6150 = vmatpush1.msra.mxu0 0.0
      %6151 = vmatprep.subr.mxu0 0.0
      %6152 = vmatpush1.msra.mxu0 0.0
      %6153 = vmatprep.subr.mxu0 0.0
      %6154 = vmatpush1.msra.mxu0 0.0
      %6155 = vmatprep.subr.mxu0 0.0
      %6156 = vmatpush1.msra.mxu0 0.0
      %6157 = vmatprep.subr.mxu0 0.0
      %6158 = vmatpush1.msra.mxu0 0.0
      %6159 = vmatprep.subr.mxu0 0.0
      %6160 = vmatpush1.msra.mxu0 0.0
      %6161 = vmatprep.subr.mxu0 0.0
      %6162 = vmatpush1.msra.mxu0 0.0
      %6163 = vmatprep.subr.mxu0 0.0
      %6164 = vmatpush1.msra.mxu0 0.0
      %6165 = vmatprep.subr.mxu0 0.0
      %6166 = vmatpush1.msra.mxu0 0.0
      %6167 = vmatprep.subr.mxu0 0.0
      %6168 = vmatpush1.msra.mxu0 0.0
      %6169 = vmatprep.subr.mxu0 0.0
      %6170 = vmatpush1.msra.mxu0 0.0
      %6171 = vmatprep.subr.mxu0 0.0
      %6172 = vmatpush1.msra.mxu0 0.0
      %6173 = vmatprep.subr.mxu0 0.0
      %6174 = vmatpush1.msra.mxu0 0.0
      %6175 = vmatprep.subr.mxu0 0.0
      %6176 = vmatpush1.msra.mxu0 0.0
      %6177 = vmatprep.subr.mxu0 0.0
      %6178 = vmatpush1.msra.mxu0 0.0
      %6179 = vmatprep.subr.mxu0 0.0
      %6180 = vmatpush1.msra.mxu0 0.0
      %6181 = vmatprep.subr.mxu0 0.0
      %6182 = vmatpush1.msra.mxu0 0.0
      %6183 = vmatprep.subr.mxu0 0.0
      %6184 = vmatpush1.msra.mxu0 0.0
      %6185 = vmatprep.subr.mxu0 0.0
      %6186 = vmatpush1.msra.mxu0 0.0
      %6187 = vmatprep.subr.mxu0 0.0
      %6188 = vmatpush1.msra.mxu0 0.0
      %6189 = vmatprep.subr.mxu0 0.0
      %6190 = vmatpush1.msra.mxu0 0.0
      %6191 = vmatprep.subr.mxu0 0.0
      %6192 = vmatpush1.msra.mxu0 0.0
      %6193 = vmatprep.subr.mxu0 0.0
      %6194 = vmatpush1.msra.mxu0 0.0
      %6195 = vmatprep.subr.mxu0 0.0
      %6196 = vmatpush1.msra.mxu0 0.0
      %6197 = vmatprep.subr.mxu0 0.0
      %6198 = vmatpush1.msra.mxu0 0.0
      %6199 = vmatprep.subr.mxu0 0.0
      %6200 = vmatpush1.msra.mxu0 0.0
      %6201 = vmatprep.subr.mxu0 0.0
      %6202 = vmatpush1.msra.mxu0 0.0
      %6203 = vmatprep.subr.mxu0 0.0
      %6204 = vmatpush1.msra.mxu0 0.0
      %6205 = vmatprep.subr.mxu0 0.0
      %6206 = vmatpush1.msra.mxu0 0.0
      %6207 = vmatprep.mubr.f32.mxu0 0.0
      %6208 = vmatmul.mubr.f32.gmra.mrb[0].mxu0 %v6141
      %v6209 = vpop.f32.mrb[0].mxu0
      %v6210 = vadd.f32 %v5915, %v6209
      %v6211 = vpop.f32.mrb[0].mxu0
      %6212 = vdwg.mxu0
      %v6213 = vtanh.pop %v6210
      %v6215 = vsel %vm182, %v6213, 0
      %6217 = vmatprep.subr.mxu0 0.0
      %6218 = vmatpush1.msra.mxu0 %v50
      %6219 = vmatprep.subr.mxu0 0.0
      %6220 = vmatpush1.msra.mxu0 %v51
      %6221 = vmatprep.subr.mxu0 0.0
      %6222 = vmatpush1.msra.mxu0 %v52
      %6223 = vmatprep.subr.mxu0 0.0
      %6224 = vmatpush1.msra.mxu0 %v53
      %6225 = vmatprep.subr.mxu0 0.0
      %6226 = vmatpush1.msra.mxu0 0.0
      %6227 = vmatprep.subr.mxu0 0.0
      %6228 = vmatpush1.msra.mxu0 0.0
      %6229 = vmatprep.subr.mxu0 0.0
      %6230 = vmatpush1.msra.mxu0 0.0
      %6231 = vmatprep.subr.mxu0 0.0
      %6232 = vmatpush1.msra.mxu0 0.0
      %6233 = vmatprep.subr.mxu0 0.0
      %6234 = vmatpush1.msra.mxu0 0.0
      %6235 = vmatprep.subr.mxu0 0.0
      %6236 = vmatpush1.msra.mxu0 0.0
      %6237 = vmatprep.subr.mxu0 0.0
      %6238 = vmatpush1.msra.mxu0 0.0
      %6239 = vmatprep.subr.mxu0 0.0
      %6240 = vmatpush1.msra.mxu0 0.0
      %6241 = vmatprep.subr.mxu0 0.0
      %6242 = vmatpush1.msra.mxu0 0.0
      %6243 = vmatprep.subr.mxu0 0.0
      %6244 = vmatpush1.msra.mxu0 0.0
      %6245 = vmatprep.subr.mxu0 0.0
      %6246 = vmatpush1.msra.mxu0 0.0
      %6247 = vmatprep.subr.mxu0 0.0
      %6248 = vmatpush1.msra.mxu0 0.0
      %6249 = vmatprep.subr.mxu0 0.0
      %6250 = vmatpush1.msra.mxu0 0.0
      %6251 = vmatprep.subr.mxu0 0.0
      %6252 = vmatpush1.msra.mxu0 0.0
      %6253 = vmatprep.subr.mxu0 0.0
      %6254 = vmatpush1.msra.mxu0 0.0
      %6255 = vmatprep.subr.mxu0 0.0
      %6256 = vmatpush1.msra.mxu0 0.0
      %6257 = vmatprep.subr.mxu0 0.0
      %6258 = vmatpush1.msra.mxu0 0.0
      %6259 = vmatprep.subr.mxu0 0.0
      %6260 = vmatpush1.msra.mxu0 0.0
      %6261 = vmatprep.subr.mxu0 0.0
      %6262 = vmatpush1.msra.mxu0 0.0
      %6263 = vmatprep.subr.mxu0 0.0
      %6264 = vmatpush1.msra.mxu0 0.0
      %6265 = vmatprep.subr.mxu0 0.0
      %6266 = vmatpush1.msra.mxu0 0.0
      %6267 = vmatprep.subr.mxu0 0.0
      %6268 = vmatpush1.msra.mxu0 0.0
      %6269 = vmatprep.subr.mxu0 0.0
      %6270 = vmatpush1.msra.mxu0 0.0
      %6271 = vmatprep.subr.mxu0 0.0
      %6272 = vmatpush1.msra.mxu0 0.0
      %6273 = vmatprep.subr.mxu0 0.0
      %6274 = vmatpush1.msra.mxu0 0.0
      %6275 = vmatprep.subr.mxu0 0.0
      %6276 = vmatpush1.msra.mxu0 0.0
      %6277 = vmatprep.subr.mxu0 0.0
      %6278 = vmatpush1.msra.mxu0 0.0
      %6279 = vmatprep.subr.mxu0 0.0
      %6280 = vmatpush1.msra.mxu0 0.0
      %6281 = vmatprep.mubr.f32.mxu0 0.0
      %6282 = vmatmul.mubr.f32.gmra.mrb[0].mxu0 %v6215
      %v6283 = vpop.f32.mrb[0].mxu0
      %v6284 = vadd.f32 %v180, %v6283
      %v6285 = vpop.f32.mrb[0].mxu0
      %6286 = vdwg.mxu0
      %v6287 = vtanh.pop %v6284
      %v6289 = vsel %vm182, %v6287, 0
      %6291 = vmatprep.subr.mxu0 0.0
      %6292 = vmatpush1.msra.mxu0 %v55
      %6293 = vmatprep.subr.mxu0 0.0
      %6294 = vmatpush1.msra.mxu0 %v56
      %6295 = vmatprep.subr.mxu0 0.0
      %6296 = vmatpush1.msra.mxu0 %v57
      %6297 = vmatprep.subr.mxu0 0.0
      %6298 = vmatpush1.msra.mxu0 %v58
      %6299 = vmatprep.subr.mxu0 0.0
      %6300 = vmatpush1.msra.mxu0 0.0
      %6301 = vmatprep.subr.mxu0 0.0
      %6302 = vmatpush1.msra.mxu0 0.0
      %6303 = vmatprep.subr.mxu0 0.0
      %6304 = vmatpush1.msra.mxu0 0.0
      %6305 = vmatprep.subr.mxu0 0.0
      %6306 = vmatpush1.msra.mxu0 0.0
      %6307 = vmatprep.subr.mxu0 0.0
      %6308 = vmatpush1.msra.mxu0 0.0
      %6309 = vmatprep.subr.mxu0 0.0
      %6310 = vmatpush1.msra.mxu0 0.0
      %6311 = vmatprep.subr.mxu0 0.0
      %6312 = vmatpush1.msra.mxu0 0.0
      %6313 = vmatprep.subr.mxu0 0.0
      %6314 = vmatpush1.msra.mxu0 0.0
      %6315 = vmatprep.subr.mxu0 0.0
      %6316 = vmatpush1.msra.mxu0 0.0
      %6317 = vmatprep.subr.mxu0 0.0
      %6318 = vmatpush1.msra.mxu0 0.0
      %6319 = vmatprep.subr.mxu0 0.0
      %6320 = vmatpush1.msra.mxu0 0.0
      %6321 = vmatprep.subr.mxu0 0.0
      %6322 = vmatpush1.msra.mxu0 0.0
      %6323 = vmatprep.subr.mxu0 0.0
      %6324 = vmatpush1.msra.mxu0 0.0
      %6325 = vmatprep.subr.mxu0 0.0
      %6326 = vmatpush1.msra.mxu0 0.0
      %6327 = vmatprep.subr.mxu0 0.0
      %6328 = vmatpush1.msra.mxu0 0.0
      %6329 = vmatprep.subr.mxu0 0.0
      %6330 = vmatpush1.msra.mxu0 0.0
      %6331 = vmatprep.subr.mxu0 0.0
      %6332 = vmatpush1.msra.mxu0 0.0
      %6333 = vmatprep.subr.mxu0 0.0
      %6334 = vmatpush1.msra.mxu0 0.0
      %6335 = vmatprep.subr.mxu0 0.0
      %6336 = vmatpush1.msra.mxu0 0.0
      %6337 = vmatprep.subr.mxu0 0.0
      %6338 = vmatpush1.msra.mxu0 0.0
      %6339 = vmatprep.subr.mxu0 0.0
      %6340 = vmatpush1.msra.mxu0 0.0
      %6341 = vmatprep.subr.mxu0 0.0
      %6342 = vmatpush1.msra.mxu0 0.0
      %6343 = vmatprep.subr.mxu0 0.0
      %6344 = vmatpush1.msra.mxu0 0.0
      %6345 = vmatprep.subr.mxu0 0.0
      %6346 = vmatpush1.msra.mxu0 0.0
      %6347 = vmatprep.subr.mxu0 0.0
      %6348 = vmatpush1.msra.mxu0 0.0
      %6349 = vmatprep.subr.mxu0 0.0
      %6350 = vmatpush1.msra.mxu0 0.0
      %6351 = vmatprep.subr.mxu0 0.0
      %6352 = vmatpush1.msra.mxu0 0.0
      %6353 = vmatprep.subr.mxu0 0.0
      %6354 = vmatpush1.msra.mxu0 0.0
      %6355 = vmatprep.mubr.f32.mxu0 0.0
      %6356 = vmatmul.mubr.f32.gmra.mrb[0].mxu0 %v6289
      %v6357 = vpop.f32.mrb[0].mxu0
      %v6358 = vadd.f32 %v261, %v6357
      %v6359 = vpop.f32.mrb[0].mxu0
      %6360 = vdwg.mxu0
      %v6361 = vmul.f32 %v789, %v6358
      %v6362 = vadd.f32 %v5668, %v6361
      %v6364 = vlaneseq
      %v6365 = vshrl.u32 %v6364, 7
      %v6366 = vsub.s32 0, %v6365
      %v6367 = vrot.slane %v5681, %v6366
      %v6370 = vsel %vm97, %v6362, 0
      %6372 = vmatprep.subr.mxu0 0.0
      %6373 = vmatpush1.msra.mxu0 %v46
      %6374 = vmatprep.subr.mxu0 0.0
      %6375 = vmatpush1.msra.mxu0 %v103
      %6376 = vmatprep.subr.mxu0 0.0
      %6377 = vmatpush1.msra.mxu0 0.0
      %6378 = vmatprep.subr.mxu0 0.0
      %6379 = vmatpush1.msra.mxu0 0.0
      %6380 = vmatprep.subr.mxu0 0.0
      %6381 = vmatpush1.msra.mxu0 0.0
      %6382 = vmatprep.subr.mxu0 0.0
      %6383 = vmatpush1.msra.mxu0 0.0
      %6384 = vmatprep.subr.mxu0 0.0
      %6385 = vmatpush1.msra.mxu0 0.0
      %6386 = vmatprep.subr.mxu0 0.0
      %6387 = vmatpush1.msra.mxu0 0.0
      %6388 = vmatprep.subr.mxu0 0.0
      %6389 = vmatpush1.msra.mxu0 0.0
      %6390 = vmatprep.subr.mxu0 0.0
      %6391 = vmatpush1.msra.mxu0 0.0
      %6392 = vmatprep.subr.mxu0 0.0
      %6393 = vmatpush1.msra.mxu0 0.0
      %6394 = vmatprep.subr.mxu0 0.0
      %6395 = vmatpush1.msra.mxu0 0.0
      %6396 = vmatprep.subr.mxu0 0.0
      %6397 = vmatpush1.msra.mxu0 0.0
      %6398 = vmatprep.subr.mxu0 0.0
      %6399 = vmatpush1.msra.mxu0 0.0
      %6400 = vmatprep.subr.mxu0 0.0
      %6401 = vmatpush1.msra.mxu0 0.0
      %6402 = vmatprep.subr.mxu0 0.0
      %6403 = vmatpush1.msra.mxu0 0.0
      %6404 = vmatprep.subr.mxu0 0.0
      %6405 = vmatpush1.msra.mxu0 0.0
      %6406 = vmatprep.subr.mxu0 0.0
      %6407 = vmatpush1.msra.mxu0 0.0
      %6408 = vmatprep.subr.mxu0 0.0
      %6409 = vmatpush1.msra.mxu0 0.0
      %6410 = vmatprep.subr.mxu0 0.0
      %6411 = vmatpush1.msra.mxu0 0.0
      %6412 = vmatprep.subr.mxu0 0.0
      %6413 = vmatpush1.msra.mxu0 0.0
      %6414 = vmatprep.subr.mxu0 0.0
      %6415 = vmatpush1.msra.mxu0 0.0
      %6416 = vmatprep.subr.mxu0 0.0
      %6417 = vmatpush1.msra.mxu0 0.0
      %6418 = vmatprep.subr.mxu0 0.0
      %6419 = vmatpush1.msra.mxu0 0.0
      %6420 = vmatprep.subr.mxu0 0.0
      %6421 = vmatpush1.msra.mxu0 0.0
      %6422 = vmatprep.subr.mxu0 0.0
      %6423 = vmatpush1.msra.mxu0 0.0
      %6424 = vmatprep.subr.mxu0 0.0
      %6425 = vmatpush1.msra.mxu0 0.0
      %6426 = vmatprep.subr.mxu0 0.0
      %6427 = vmatpush1.msra.mxu0 0.0
      %6428 = vmatprep.subr.mxu0 0.0
      %6429 = vmatpush1.msra.mxu0 0.0
      %6430 = vmatprep.subr.mxu0 0.0
      %6431 = vmatpush1.msra.mxu0 0.0
      %6432 = vmatprep.subr.mxu0 0.0
      %6433 = vmatpush1.msra.mxu0 0.0
      %6434 = vmatprep.subr.mxu0 0.0
      %6435 = vmatpush1.msra.mxu0 0.0
      %6436 = vmatprep.mubr.f32.mxu0 0.0
      %6437 = vmatmul.mubr.f32.gmra.mrb[0].mxu0 %v6370
      %v6438 = vpop.f32.mrb[0].mxu0
      %v6439 = vadd.f32 %v6367, %v6438
      %v6440 = vpop.f32.mrb[0].mxu0
      %6441 = vdwg.mxu0
      %v6442 = vtanh.pop %v6439
      %v6444 = vsel %vm182, %v6442, 0
      %6446 = vmatprep.subr.mxu0 0.0
      %6447 = vmatpush1.msra.mxu0 %v50
      %6448 = vmatprep.subr.mxu0 0.0
      %6449 = vmatpush1.msra.mxu0 %v51
      %6450 = vmatprep.subr.mxu0 0.0
      %6451 = vmatpush1.msra.mxu0 %v52
      %6452 = vmatprep.subr.mxu0 0.0
      %6453 = vmatpush1.msra.mxu0 %v53
      %6454 = vmatprep.subr.mxu0 0.0
      %6455 = vmatpush1.msra.mxu0 0.0
      %6456 = vmatprep.subr.mxu0 0.0
      %6457 = vmatpush1.msra.mxu0 0.0
      %6458 = vmatprep.subr.mxu0 0.0
      %6459 = vmatpush1.msra.mxu0 0.0
      %6460 = vmatprep.subr.mxu0 0.0
      %6461 = vmatpush1.msra.mxu0 0.0
      %6462 = vmatprep.subr.mxu0 0.0
      %6463 = vmatpush1.msra.mxu0 0.0
      %6464 = vmatprep.subr.mxu0 0.0
      %6465 = vmatpush1.msra.mxu0 0.0
      %6466 = vmatprep.subr.mxu0 0.0
      %6467 = vmatpush1.msra.mxu0 0.0
      %6468 = vmatprep.subr.mxu0 0.0
      %6469 = vmatpush1.msra.mxu0 0.0
      %6470 = vmatprep.subr.mxu0 0.0
      %6471 = vmatpush1.msra.mxu0 0.0
      %6472 = vmatprep.subr.mxu0 0.0
      %6473 = vmatpush1.msra.mxu0 0.0
      %6474 = vmatprep.subr.mxu0 0.0
      %6475 = vmatpush1.msra.mxu0 0.0
      %6476 = vmatprep.subr.mxu0 0.0
      %6477 = vmatpush1.msra.mxu0 0.0
      %6478 = vmatprep.subr.mxu0 0.0
      %6479 = vmatpush1.msra.mxu0 0.0
      %6480 = vmatprep.subr.mxu0 0.0
      %6481 = vmatpush1.msra.mxu0 0.0
      %6482 = vmatprep.subr.mxu0 0.0
      %6483 = vmatpush1.msra.mxu0 0.0
      %6484 = vmatprep.subr.mxu0 0.0
      %6485 = vmatpush1.msra.mxu0 0.0
      %6486 = vmatprep.subr.mxu0 0.0
      %6487 = vmatpush1.msra.mxu0 0.0
      %6488 = vmatprep.subr.mxu0 0.0
      %6489 = vmatpush1.msra.mxu0 0.0
      %6490 = vmatprep.subr.mxu0 0.0
      %6491 = vmatpush1.msra.mxu0 0.0
      %6492 = vmatprep.subr.mxu0 0.0
      %6493 = vmatpush1.msra.mxu0 0.0
      %6494 = vmatprep.subr.mxu0 0.0
      %6495 = vmatpush1.msra.mxu0 0.0
      %6496 = vmatprep.subr.mxu0 0.0
      %6497 = vmatpush1.msra.mxu0 0.0
      %6498 = vmatprep.subr.mxu0 0.0
      %6499 = vmatpush1.msra.mxu0 0.0
      %6500 = vmatprep.subr.mxu0 0.0
      %6501 = vmatpush1.msra.mxu0 0.0
      %6502 = vmatprep.subr.mxu0 0.0
      %6503 = vmatpush1.msra.mxu0 0.0
      %6504 = vmatprep.subr.mxu0 0.0
      %6505 = vmatpush1.msra.mxu0 0.0
      %6506 = vmatprep.subr.mxu0 0.0
      %6507 = vmatpush1.msra.mxu0 0.0
      %6508 = vmatprep.subr.mxu0 0.0
      %6509 = vmatpush1.msra.mxu0 0.0
      %6510 = vmatprep.mubr.f32.mxu0 0.0
      %6511 = vmatmul.mubr.f32.gmra.mrb[0].mxu0 %v6444
      %v6512 = vpop.f32.mrb[0].mxu0
      %v6513 = vadd.f32 %v180, %v6512
      %v6514 = vpop.f32.mrb[0].mxu0
      %6515 = vdwg.mxu0
      %v6516 = vtanh.pop %v6513
      %v6518 = vsel %vm182, %v6516, 0
      %6520 = vmatprep.subr.mxu0 0.0
      %6521 = vmatpush1.msra.mxu0 %v55
      %6522 = vmatprep.subr.mxu0 0.0
      %6523 = vmatpush1.msra.mxu0 %v56
      %6524 = vmatprep.subr.mxu0 0.0
      %6525 = vmatpush1.msra.mxu0 %v57
      %6526 = vmatprep.subr.mxu0 0.0
      %6527 = vmatpush1.msra.mxu0 %v58
      %6528 = vmatprep.subr.mxu0 0.0
      %6529 = vmatpush1.msra.mxu0 0.0
      %6530 = vmatprep.subr.mxu0 0.0
      %6531 = vmatpush1.msra.mxu0 0.0
      %6532 = vmatprep.subr.mxu0 0.0
      %6533 = vmatpush1.msra.mxu0 0.0
      %6534 = vmatprep.subr.mxu0 0.0
      %6535 = vmatpush1.msra.mxu0 0.0
      %6536 = vmatprep.subr.mxu0 0.0
      %6537 = vmatpush1.msra.mxu0 0.0
      %6538 = vmatprep.subr.mxu0 0.0
      %6539 = vmatpush1.msra.mxu0 0.0
      %6540 = vmatprep.subr.mxu0 0.0
      %6541 = vmatpush1.msra.mxu0 0.0
      %6542 = vmatprep.subr.mxu0 0.0
      %6543 = vmatpush1.msra.mxu0 0.0
      %6544 = vmatprep.subr.mxu0 0.0
      %6545 = vmatpush1.msra.mxu0 0.0
      %6546 = vmatprep.subr.mxu0 0.0
      %6547 = vmatpush1.msra.mxu0 0.0
      %6548 = vmatprep.subr.mxu0 0.0
      %6549 = vmatpush1.msra.mxu0 0.0
      %6550 = vmatprep.subr.mxu0 0.0
      %6551 = vmatpush1.msra.mxu0 0.0
      %6552 = vmatprep.subr.mxu0 0.0
      %6553 = vmatpush1.msra.mxu0 0.0
      %6554 = vmatprep.subr.mxu0 0.0
      %6555 = vmatpush1.msra.mxu0 0.0
      %6556 = vmatprep.subr.mxu0 0.0
      %6557 = vmatpush1.msra.mxu0 0.0
      %6558 = vmatprep.subr.mxu0 0.0
      %6559 = vmatpush1.msra.mxu0 0.0
      %6560 = vmatprep.subr.mxu0 0.0
      %6561 = vmatpush1.msra.mxu0 0.0
      %6562 = vmatprep.subr.mxu0 0.0
      %6563 = vmatpush1.msra.mxu0 0.0
      %6564 = vmatprep.subr.mxu0 0.0
      %6565 = vmatpush1.msra.mxu0 0.0
      %6566 = vmatprep.subr.mxu0 0.0
      %6567 = vmatpush1.msra.mxu0 0.0
      %6568 = vmatprep.subr.mxu0 0.0
      %6569 = vmatpush1.msra.mxu0 0.0
      %6570 = vmatprep.subr.mxu0 0.0
      %6571 = vmatpush1.msra.mxu0 0.0
      %6572 = vmatprep.subr.mxu0 0.0
      %6573 = vmatpush1.msra.mxu0 0.0
      %6574 = vmatprep.subr.mxu0 0.0
      %6575 = vmatpush1.msra.mxu0 0.0
      %6576 = vmatprep.subr.mxu0 0.0
      %6577 = vmatpush1.msra.mxu0 0.0
      %6578 = vmatprep.subr.mxu0 0.0
      %6579 = vmatpush1.msra.mxu0 0.0
      %6580 = vmatprep.subr.mxu0 0.0
      %6581 = vmatpush1.msra.mxu0 0.0
      %6582 = vmatprep.subr.mxu0 0.0
      %6583 = vmatpush1.msra.mxu0 0.0
      %6584 = vmatprep.mubr.f32.mxu0 0.0
      %6585 = vmatmul.mubr.f32.gmra.mrb[0].mxu0 %v6518
      %v6586 = vpop.f32.mrb[0].mxu0
      %v6587 = vadd.f32 %v261, %v6586
      %v6588 = vpop.f32.mrb[0].mxu0
      %6589 = vdwg.mxu0
      %v6590 = vmul.f32 %v6135, 2.0
      %v6591 = vadd.f32 %v5906, %v6590
      %v6592 = vmul.f32 %v6358, 2.0
      %v6593 = vadd.f32 %v6591, %v6592
      %v6594 = vadd.f32 %v6593, %v6587
      %v6595 = vmul.f32 %v1027, %v6594
      %v6596 = vadd.f32 %v5668, %v6595
      %s6597 = smul.f32 %s76, 7.0
      %s6598 = sadd.f32 %s71, %s6597
      %v6599 = vstv %s6598
      %v6600 = vmul.f32 %v6599, %v48
      %v6601 = vadd.f32 %v6600, %v49
      %s6602 = sadd.f32 %s6598, %s82
      %v6603 = vstv %s6602
      %v6604 = vmul.f32 %v6603, %v48
      %v6605 = vadd.f32 %v6604, %v49
      %s6606 = sadd.f32 %s6598, %s76
      %v6607 = vstv %s6606
      %v6608 = vmul.f32 %v6607, %v48
      %v6609 = vadd.f32 %v6608, %v49
      %v6611 = vlaneseq
      %v6612 = vshrl.u32 %v6611, 7
      %v6613 = vsub.s32 0, %v6612
      %v6614 = vrot.slane %v6601, %v6613
      %v6617 = vsel %vm97, %v6596, 0
      %6619 = vmatprep.subr.mxu0 0.0
      %6620 = vmatpush1.msra.mxu0 %v46
      %6621 = vmatprep.subr.mxu0 0.0
      %6622 = vmatpush1.msra.mxu0 %v103
      %6623 = vmatprep.subr.mxu0 0.0
      %6624 = vmatpush1.msra.mxu0 0.0
      %6625 = vmatprep.subr.mxu0 0.0
      %6626 = vmatpush1.msra.mxu0 0.0
      %6627 = vmatprep.subr.mxu0 0.0
      %6628 = vmatpush1.msra.mxu0 0.0
      %6629 = vmatprep.subr.mxu0 0.0
      %6630 = vmatpush1.msra.mxu0 0.0
      %6631 = vmatprep.subr.mxu0 0.0
      %6632 = vmatpush1.msra.mxu0 0.0
      %6633 = vmatprep.subr.mxu0 0.0
      %6634 = vmatpush1.msra.mxu0 0.0
      %6635 = vmatprep.subr.mxu0 0.0
      %6636 = vmatpush1.msra.mxu0 0.0
      %6637 = vmatprep.subr.mxu0 0.0
      %6638 = vmatpush1.msra.mxu0 0.0
      %6639 = vmatprep.subr.mxu0 0.0
      %6640 = vmatpush1.msra.mxu0 0.0
      %6641 = vmatprep.subr.mxu0 0.0
      %6642 = vmatpush1.msra.mxu0 0.0
      %6643 = vmatprep.subr.mxu0 0.0
      %6644 = vmatpush1.msra.mxu0 0.0
      %6645 = vmatprep.subr.mxu0 0.0
      %6646 = vmatpush1.msra.mxu0 0.0
      %6647 = vmatprep.subr.mxu0 0.0
      %6648 = vmatpush1.msra.mxu0 0.0
      %6649 = vmatprep.subr.mxu0 0.0
      %6650 = vmatpush1.msra.mxu0 0.0
      %6651 = vmatprep.subr.mxu0 0.0
      %6652 = vmatpush1.msra.mxu0 0.0
      %6653 = vmatprep.subr.mxu0 0.0
      %6654 = vmatpush1.msra.mxu0 0.0
      %6655 = vmatprep.subr.mxu0 0.0
      %6656 = vmatpush1.msra.mxu0 0.0
      %6657 = vmatprep.subr.mxu0 0.0
      %6658 = vmatpush1.msra.mxu0 0.0
      %6659 = vmatprep.subr.mxu0 0.0
      %6660 = vmatpush1.msra.mxu0 0.0
      %6661 = vmatprep.subr.mxu0 0.0
      %6662 = vmatpush1.msra.mxu0 0.0
      %6663 = vmatprep.subr.mxu0 0.0
      %6664 = vmatpush1.msra.mxu0 0.0
      %6665 = vmatprep.subr.mxu0 0.0
      %6666 = vmatpush1.msra.mxu0 0.0
      %6667 = vmatprep.subr.mxu0 0.0
      %6668 = vmatpush1.msra.mxu0 0.0
      %6669 = vmatprep.subr.mxu0 0.0
      %6670 = vmatpush1.msra.mxu0 0.0
      %6671 = vmatprep.subr.mxu0 0.0
      %6672 = vmatpush1.msra.mxu0 0.0
      %6673 = vmatprep.subr.mxu0 0.0
      %6674 = vmatpush1.msra.mxu0 0.0
      %6675 = vmatprep.subr.mxu0 0.0
      %6676 = vmatpush1.msra.mxu0 0.0
      %6677 = vmatprep.subr.mxu0 0.0
      %6678 = vmatpush1.msra.mxu0 0.0
      %6679 = vmatprep.subr.mxu0 0.0
      %6680 = vmatpush1.msra.mxu0 0.0
      %6681 = vmatprep.subr.mxu0 0.0
      %6682 = vmatpush1.msra.mxu0 0.0
      %6683 = vmatprep.mubr.f32.mxu0 0.0
      %6684 = vmatmul.mubr.f32.gmra.mrb[0].mxu0 %v6617
      %v6685 = vpop.f32.mrb[0].mxu0
      %v6686 = vadd.f32 %v6614, %v6685
      %v6687 = vpop.f32.mrb[0].mxu0
      %6688 = vdwg.mxu0
      %v6689 = vtanh.pop %v6686
      %v6691 = vsel %vm182, %v6689, 0
      %6693 = vmatprep.subr.mxu0 0.0
      %6694 = vmatpush1.msra.mxu0 %v50
      %6695 = vmatprep.subr.mxu0 0.0
      %6696 = vmatpush1.msra.mxu0 %v51
      %6697 = vmatprep.subr.mxu0 0.0
      %6698 = vmatpush1.msra.mxu0 %v52
      %6699 = vmatprep.subr.mxu0 0.0
      %6700 = vmatpush1.msra.mxu0 %v53
      %6701 = vmatprep.subr.mxu0 0.0
      %6702 = vmatpush1.msra.mxu0 0.0
      %6703 = vmatprep.subr.mxu0 0.0
      %6704 = vmatpush1.msra.mxu0 0.0
      %6705 = vmatprep.subr.mxu0 0.0
      %6706 = vmatpush1.msra.mxu0 0.0
      %6707 = vmatprep.subr.mxu0 0.0
      %6708 = vmatpush1.msra.mxu0 0.0
      %6709 = vmatprep.subr.mxu0 0.0
      %6710 = vmatpush1.msra.mxu0 0.0
      %6711 = vmatprep.subr.mxu0 0.0
      %6712 = vmatpush1.msra.mxu0 0.0
      %6713 = vmatprep.subr.mxu0 0.0
      %6714 = vmatpush1.msra.mxu0 0.0
      %6715 = vmatprep.subr.mxu0 0.0
      %6716 = vmatpush1.msra.mxu0 0.0
      %6717 = vmatprep.subr.mxu0 0.0
      %6718 = vmatpush1.msra.mxu0 0.0
      %6719 = vmatprep.subr.mxu0 0.0
      %6720 = vmatpush1.msra.mxu0 0.0
      %6721 = vmatprep.subr.mxu0 0.0
      %6722 = vmatpush1.msra.mxu0 0.0
      %6723 = vmatprep.subr.mxu0 0.0
      %6724 = vmatpush1.msra.mxu0 0.0
      %6725 = vmatprep.subr.mxu0 0.0
      %6726 = vmatpush1.msra.mxu0 0.0
      %6727 = vmatprep.subr.mxu0 0.0
      %6728 = vmatpush1.msra.mxu0 0.0
      %6729 = vmatprep.subr.mxu0 0.0
      %6730 = vmatpush1.msra.mxu0 0.0
      %6731 = vmatprep.subr.mxu0 0.0
      %6732 = vmatpush1.msra.mxu0 0.0
      %6733 = vmatprep.subr.mxu0 0.0
      %6734 = vmatpush1.msra.mxu0 0.0
      %6735 = vmatprep.subr.mxu0 0.0
      %6736 = vmatpush1.msra.mxu0 0.0
      %6737 = vmatprep.subr.mxu0 0.0
      %6738 = vmatpush1.msra.mxu0 0.0
      %6739 = vmatprep.subr.mxu0 0.0
      %6740 = vmatpush1.msra.mxu0 0.0
      %6741 = vmatprep.subr.mxu0 0.0
      %6742 = vmatpush1.msra.mxu0 0.0
      %6743 = vmatprep.subr.mxu0 0.0
      %6744 = vmatpush1.msra.mxu0 0.0
      %6745 = vmatprep.subr.mxu0 0.0
      %6746 = vmatpush1.msra.mxu0 0.0
      %6747 = vmatprep.subr.mxu0 0.0
      %6748 = vmatpush1.msra.mxu0 0.0
      %6749 = vmatprep.subr.mxu0 0.0
      %6750 = vmatpush1.msra.mxu0 0.0
      %6751 = vmatprep.subr.mxu0 0.0
      %6752 = vmatpush1.msra.mxu0 0.0
      %6753 = vmatprep.subr.mxu0 0.0
      %6754 = vmatpush1.msra.mxu0 0.0
      %6755 = vmatprep.subr.mxu0 0.0
      %6756 = vmatpush1.msra.mxu0 0.0
      %6757 = vmatprep.mubr.f32.mxu0 0.0
      %6758 = vmatmul.mubr.f32.gmra.mrb[0].mxu0 %v6691
      %v6759 = vpop.f32.mrb[0].mxu0
      %v6760 = vadd.f32 %v180, %v6759
      %v6761 = vpop.f32.mrb[0].mxu0
      %6762 = vdwg.mxu0
      %v6763 = vtanh.pop %v6760
      %v6765 = vsel %vm182, %v6763, 0
      %6767 = vmatprep.subr.mxu0 0.0
      %6768 = vmatpush1.msra.mxu0 %v55
      %6769 = vmatprep.subr.mxu0 0.0
      %6770 = vmatpush1.msra.mxu0 %v56
      %6771 = vmatprep.subr.mxu0 0.0
      %6772 = vmatpush1.msra.mxu0 %v57
      %6773 = vmatprep.subr.mxu0 0.0
      %6774 = vmatpush1.msra.mxu0 %v58
      %6775 = vmatprep.subr.mxu0 0.0
      %6776 = vmatpush1.msra.mxu0 0.0
      %6777 = vmatprep.subr.mxu0 0.0
      %6778 = vmatpush1.msra.mxu0 0.0
      %6779 = vmatprep.subr.mxu0 0.0
      %6780 = vmatpush1.msra.mxu0 0.0
      %6781 = vmatprep.subr.mxu0 0.0
      %6782 = vmatpush1.msra.mxu0 0.0
      %6783 = vmatprep.subr.mxu0 0.0
      %6784 = vmatpush1.msra.mxu0 0.0
      %6785 = vmatprep.subr.mxu0 0.0
      %6786 = vmatpush1.msra.mxu0 0.0
      %6787 = vmatprep.subr.mxu0 0.0
      %6788 = vmatpush1.msra.mxu0 0.0
      %6789 = vmatprep.subr.mxu0 0.0
      %6790 = vmatpush1.msra.mxu0 0.0
      %6791 = vmatprep.subr.mxu0 0.0
      %6792 = vmatpush1.msra.mxu0 0.0
      %6793 = vmatprep.subr.mxu0 0.0
      %6794 = vmatpush1.msra.mxu0 0.0
      %6795 = vmatprep.subr.mxu0 0.0
      %6796 = vmatpush1.msra.mxu0 0.0
      %6797 = vmatprep.subr.mxu0 0.0
      %6798 = vmatpush1.msra.mxu0 0.0
      %6799 = vmatprep.subr.mxu0 0.0
      %6800 = vmatpush1.msra.mxu0 0.0
      %6801 = vmatprep.subr.mxu0 0.0
      %6802 = vmatpush1.msra.mxu0 0.0
      %6803 = vmatprep.subr.mxu0 0.0
      %6804 = vmatpush1.msra.mxu0 0.0
      %6805 = vmatprep.subr.mxu0 0.0
      %6806 = vmatpush1.msra.mxu0 0.0
      %6807 = vmatprep.subr.mxu0 0.0
      %6808 = vmatpush1.msra.mxu0 0.0
      %6809 = vmatprep.subr.mxu0 0.0
      %6810 = vmatpush1.msra.mxu0 0.0
      %6811 = vmatprep.subr.mxu0 0.0
      %6812 = vmatpush1.msra.mxu0 0.0
      %6813 = vmatprep.subr.mxu0 0.0
      %6814 = vmatpush1.msra.mxu0 0.0
      %6815 = vmatprep.subr.mxu0 0.0
      %6816 = vmatpush1.msra.mxu0 0.0
      %6817 = vmatprep.subr.mxu0 0.0
      %6818 = vmatpush1.msra.mxu0 0.0
      %6819 = vmatprep.subr.mxu0 0.0
      %6820 = vmatpush1.msra.mxu0 0.0
      %6821 = vmatprep.subr.mxu0 0.0
      %6822 = vmatpush1.msra.mxu0 0.0
      %6823 = vmatprep.subr.mxu0 0.0
      %6824 = vmatpush1.msra.mxu0 0.0
      %6825 = vmatprep.subr.mxu0 0.0
      %6826 = vmatpush1.msra.mxu0 0.0
      %6827 = vmatprep.subr.mxu0 0.0
      %6828 = vmatpush1.msra.mxu0 0.0
      %6829 = vmatprep.subr.mxu0 0.0
      %6830 = vmatpush1.msra.mxu0 0.0
      %6831 = vmatprep.mubr.f32.mxu0 0.0
      %6832 = vmatmul.mubr.f32.gmra.mrb[0].mxu0 %v6765
      %v6833 = vpop.f32.mrb[0].mxu0
      %v6834 = vadd.f32 %v261, %v6833
      %v6835 = vpop.f32.mrb[0].mxu0
      %6836 = vdwg.mxu0
      %v6837 = vmul.f32 %v336, %v6834
      %v6838 = vadd.f32 %v6596, %v6837
      %v6840 = vlaneseq
      %v6841 = vshrl.u32 %v6840, 7
      %v6842 = vsub.s32 0, %v6841
      %v6843 = vrot.slane %v6605, %v6842
      %v6846 = vsel %vm97, %v6838, 0
      %6848 = vmatprep.subr.mxu0 0.0
      %6849 = vmatpush1.msra.mxu0 %v46
      %6850 = vmatprep.subr.mxu0 0.0
      %6851 = vmatpush1.msra.mxu0 %v103
      %6852 = vmatprep.subr.mxu0 0.0
      %6853 = vmatpush1.msra.mxu0 0.0
      %6854 = vmatprep.subr.mxu0 0.0
      %6855 = vmatpush1.msra.mxu0 0.0
      %6856 = vmatprep.subr.mxu0 0.0
      %6857 = vmatpush1.msra.mxu0 0.0
      %6858 = vmatprep.subr.mxu0 0.0
      %6859 = vmatpush1.msra.mxu0 0.0
      %6860 = vmatprep.subr.mxu0 0.0
      %6861 = vmatpush1.msra.mxu0 0.0
      %6862 = vmatprep.subr.mxu0 0.0
      %6863 = vmatpush1.msra.mxu0 0.0
      %6864 = vmatprep.subr.mxu0 0.0
      %6865 = vmatpush1.msra.mxu0 0.0
      %6866 = vmatprep.subr.mxu0 0.0
      %6867 = vmatpush1.msra.mxu0 0.0
      %6868 = vmatprep.subr.mxu0 0.0
      %6869 = vmatpush1.msra.mxu0 0.0
      %6870 = vmatprep.subr.mxu0 0.0
      %6871 = vmatpush1.msra.mxu0 0.0
      %6872 = vmatprep.subr.mxu0 0.0
      %6873 = vmatpush1.msra.mxu0 0.0
      %6874 = vmatprep.subr.mxu0 0.0
      %6875 = vmatpush1.msra.mxu0 0.0
      %6876 = vmatprep.subr.mxu0 0.0
      %6877 = vmatpush1.msra.mxu0 0.0
      %6878 = vmatprep.subr.mxu0 0.0
      %6879 = vmatpush1.msra.mxu0 0.0
      %6880 = vmatprep.subr.mxu0 0.0
      %6881 = vmatpush1.msra.mxu0 0.0
      %6882 = vmatprep.subr.mxu0 0.0
      %6883 = vmatpush1.msra.mxu0 0.0
      %6884 = vmatprep.subr.mxu0 0.0
      %6885 = vmatpush1.msra.mxu0 0.0
      %6886 = vmatprep.subr.mxu0 0.0
      %6887 = vmatpush1.msra.mxu0 0.0
      %6888 = vmatprep.subr.mxu0 0.0
      %6889 = vmatpush1.msra.mxu0 0.0
      %6890 = vmatprep.subr.mxu0 0.0
      %6891 = vmatpush1.msra.mxu0 0.0
      %6892 = vmatprep.subr.mxu0 0.0
      %6893 = vmatpush1.msra.mxu0 0.0
      %6894 = vmatprep.subr.mxu0 0.0
      %6895 = vmatpush1.msra.mxu0 0.0
      %6896 = vmatprep.subr.mxu0 0.0
      %6897 = vmatpush1.msra.mxu0 0.0
      %6898 = vmatprep.subr.mxu0 0.0
      %6899 = vmatpush1.msra.mxu0 0.0
      %6900 = vmatprep.subr.mxu0 0.0
      %6901 = vmatpush1.msra.mxu0 0.0
      %6902 = vmatprep.subr.mxu0 0.0
      %6903 = vmatpush1.msra.mxu0 0.0
      %6904 = vmatprep.subr.mxu0 0.0
      %6905 = vmatpush1.msra.mxu0 0.0
      %6906 = vmatprep.subr.mxu0 0.0
      %6907 = vmatpush1.msra.mxu0 0.0
      %6908 = vmatprep.subr.mxu0 0.0
      %6909 = vmatpush1.msra.mxu0 0.0
      %6910 = vmatprep.subr.mxu0 0.0
      %6911 = vmatpush1.msra.mxu0 0.0
      %6912 = vmatprep.mubr.f32.mxu0 0.0
      %6913 = vmatmul.mubr.f32.gmra.mrb[0].mxu0 %v6846
      %v6914 = vpop.f32.mrb[0].mxu0
      %v6915 = vadd.f32 %v6843, %v6914
      %v6916 = vpop.f32.mrb[0].mxu0
      %6917 = vdwg.mxu0
      %v6918 = vtanh.pop %v6915
      %v6920 = vsel %vm182, %v6918, 0
      %6922 = vmatprep.subr.mxu0 0.0
      %6923 = vmatpush1.msra.mxu0 %v50
      %6924 = vmatprep.subr.mxu0 0.0
      %6925 = vmatpush1.msra.mxu0 %v51
      %6926 = vmatprep.subr.mxu0 0.0
      %6927 = vmatpush1.msra.mxu0 %v52
      %6928 = vmatprep.subr.mxu0 0.0
      %6929 = vmatpush1.msra.mxu0 %v53
      %6930 = vmatprep.subr.mxu0 0.0
      %6931 = vmatpush1.msra.mxu0 0.0
      %6932 = vmatprep.subr.mxu0 0.0
      %6933 = vmatpush1.msra.mxu0 0.0
      %6934 = vmatprep.subr.mxu0 0.0
      %6935 = vmatpush1.msra.mxu0 0.0
      %6936 = vmatprep.subr.mxu0 0.0
      %6937 = vmatpush1.msra.mxu0 0.0
      %6938 = vmatprep.subr.mxu0 0.0
      %6939 = vmatpush1.msra.mxu0 0.0
      %6940 = vmatprep.subr.mxu0 0.0
      %6941 = vmatpush1.msra.mxu0 0.0
      %6942 = vmatprep.subr.mxu0 0.0
      %6943 = vmatpush1.msra.mxu0 0.0
      %6944 = vmatprep.subr.mxu0 0.0
      %6945 = vmatpush1.msra.mxu0 0.0
      %6946 = vmatprep.subr.mxu0 0.0
      %6947 = vmatpush1.msra.mxu0 0.0
      %6948 = vmatprep.subr.mxu0 0.0
      %6949 = vmatpush1.msra.mxu0 0.0
      %6950 = vmatprep.subr.mxu0 0.0
      %6951 = vmatpush1.msra.mxu0 0.0
      %6952 = vmatprep.subr.mxu0 0.0
      %6953 = vmatpush1.msra.mxu0 0.0
      %6954 = vmatprep.subr.mxu0 0.0
      %6955 = vmatpush1.msra.mxu0 0.0
      %6956 = vmatprep.subr.mxu0 0.0
      %6957 = vmatpush1.msra.mxu0 0.0
      %6958 = vmatprep.subr.mxu0 0.0
      %6959 = vmatpush1.msra.mxu0 0.0
      %6960 = vmatprep.subr.mxu0 0.0
      %6961 = vmatpush1.msra.mxu0 0.0
      %6962 = vmatprep.subr.mxu0 0.0
      %6963 = vmatpush1.msra.mxu0 0.0
      %6964 = vmatprep.subr.mxu0 0.0
      %6965 = vmatpush1.msra.mxu0 0.0
      %6966 = vmatprep.subr.mxu0 0.0
      %6967 = vmatpush1.msra.mxu0 0.0
      %6968 = vmatprep.subr.mxu0 0.0
      %6969 = vmatpush1.msra.mxu0 0.0
      %6970 = vmatprep.subr.mxu0 0.0
      %6971 = vmatpush1.msra.mxu0 0.0
      %6972 = vmatprep.subr.mxu0 0.0
      %6973 = vmatpush1.msra.mxu0 0.0
      %6974 = vmatprep.subr.mxu0 0.0
      %6975 = vmatpush1.msra.mxu0 0.0
      %6976 = vmatprep.subr.mxu0 0.0
      %6977 = vmatpush1.msra.mxu0 0.0
      %6978 = vmatprep.subr.mxu0 0.0
      %6979 = vmatpush1.msra.mxu0 0.0
      %6980 = vmatprep.subr.mxu0 0.0
      %6981 = vmatpush1.msra.mxu0 0.0
      %6982 = vmatprep.subr.mxu0 0.0
      %6983 = vmatpush1.msra.mxu0 0.0
      %6984 = vmatprep.subr.mxu0 0.0
      %6985 = vmatpush1.msra.mxu0 0.0
      %6986 = vmatprep.mubr.f32.mxu0 0.0
      %6987 = vmatmul.mubr.f32.gmra.mrb[0].mxu0 %v6920
      %v6988 = vpop.f32.mrb[0].mxu0
      %v6989 = vadd.f32 %v180, %v6988
      %v6990 = vpop.f32.mrb[0].mxu0
      %6991 = vdwg.mxu0
      %v6992 = vtanh.pop %v6989
      %v6994 = vsel %vm182, %v6992, 0
      %6996 = vmatprep.subr.mxu0 0.0
      %6997 = vmatpush1.msra.mxu0 %v55
      %6998 = vmatprep.subr.mxu0 0.0
      %6999 = vmatpush1.msra.mxu0 %v56
      %7000 = vmatprep.subr.mxu0 0.0
      %7001 = vmatpush1.msra.mxu0 %v57
      %7002 = vmatprep.subr.mxu0 0.0
      %7003 = vmatpush1.msra.mxu0 %v58
      %7004 = vmatprep.subr.mxu0 0.0
      %7005 = vmatpush1.msra.mxu0 0.0
      %7006 = vmatprep.subr.mxu0 0.0
      %7007 = vmatpush1.msra.mxu0 0.0
      %7008 = vmatprep.subr.mxu0 0.0
      %7009 = vmatpush1.msra.mxu0 0.0
      %7010 = vmatprep.subr.mxu0 0.0
      %7011 = vmatpush1.msra.mxu0 0.0
      %7012 = vmatprep.subr.mxu0 0.0
      %7013 = vmatpush1.msra.mxu0 0.0
      %7014 = vmatprep.subr.mxu0 0.0
      %7015 = vmatpush1.msra.mxu0 0.0
      %7016 = vmatprep.subr.mxu0 0.0
      %7017 = vmatpush1.msra.mxu0 0.0
      %7018 = vmatprep.subr.mxu0 0.0
      %7019 = vmatpush1.msra.mxu0 0.0
      %7020 = vmatprep.subr.mxu0 0.0
      %7021 = vmatpush1.msra.mxu0 0.0
      %7022 = vmatprep.subr.mxu0 0.0
      %7023 = vmatpush1.msra.mxu0 0.0
      %7024 = vmatprep.subr.mxu0 0.0
      %7025 = vmatpush1.msra.mxu0 0.0
      %7026 = vmatprep.subr.mxu0 0.0
      %7027 = vmatpush1.msra.mxu0 0.0
      %7028 = vmatprep.subr.mxu0 0.0
      %7029 = vmatpush1.msra.mxu0 0.0
      %7030 = vmatprep.subr.mxu0 0.0
      %7031 = vmatpush1.msra.mxu0 0.0
      %7032 = vmatprep.subr.mxu0 0.0
      %7033 = vmatpush1.msra.mxu0 0.0
      %7034 = vmatprep.subr.mxu0 0.0
      %7035 = vmatpush1.msra.mxu0 0.0
      %7036 = vmatprep.subr.mxu0 0.0
      %7037 = vmatpush1.msra.mxu0 0.0
      %7038 = vmatprep.subr.mxu0 0.0
      %7039 = vmatpush1.msra.mxu0 0.0
      %7040 = vmatprep.subr.mxu0 0.0
      %7041 = vmatpush1.msra.mxu0 0.0
      %7042 = vmatprep.subr.mxu0 0.0
      %7043 = vmatpush1.msra.mxu0 0.0
      %7044 = vmatprep.subr.mxu0 0.0
      %7045 = vmatpush1.msra.mxu0 0.0
      %7046 = vmatprep.subr.mxu0 0.0
      %7047 = vmatpush1.msra.mxu0 0.0
      %7048 = vmatprep.subr.mxu0 0.0
      %7049 = vmatpush1.msra.mxu0 0.0
      %7050 = vmatprep.subr.mxu0 0.0
      %7051 = vmatpush1.msra.mxu0 0.0
      %7052 = vmatprep.subr.mxu0 0.0
      %7053 = vmatpush1.msra.mxu0 0.0
      %7054 = vmatprep.subr.mxu0 0.0
      %7055 = vmatpush1.msra.mxu0 0.0
      %7056 = vmatprep.subr.mxu0 0.0
      %7057 = vmatpush1.msra.mxu0 0.0
      %7058 = vmatprep.subr.mxu0 0.0
      %7059 = vmatpush1.msra.mxu0 0.0
      %7060 = vmatprep.mubr.f32.mxu0 0.0
      %7061 = vmatmul.mubr.f32.gmra.mrb[0].mxu0 %v6994
      %v7062 = vpop.f32.mrb[0].mxu0
      %v7063 = vadd.f32 %v261, %v7062
      %v7064 = vpop.f32.mrb[0].mxu0
      %7065 = vdwg.mxu0
      %v7066 = vmul.f32 %v336, %v7063
      %v7067 = vadd.f32 %v6596, %v7066
      %v7069 = vsel %vm97, %v7067, 0
      %7071 = vmatprep.subr.mxu0 0.0
      %7072 = vmatpush1.msra.mxu0 %v46
      %7073 = vmatprep.subr.mxu0 0.0
      %7074 = vmatpush1.msra.mxu0 %v103
      %7075 = vmatprep.subr.mxu0 0.0
      %7076 = vmatpush1.msra.mxu0 0.0
      %7077 = vmatprep.subr.mxu0 0.0
      %7078 = vmatpush1.msra.mxu0 0.0
      %7079 = vmatprep.subr.mxu0 0.0
      %7080 = vmatpush1.msra.mxu0 0.0
      %7081 = vmatprep.subr.mxu0 0.0
      %7082 = vmatpush1.msra.mxu0 0.0
      %7083 = vmatprep.subr.mxu0 0.0
      %7084 = vmatpush1.msra.mxu0 0.0
      %7085 = vmatprep.subr.mxu0 0.0
      %7086 = vmatpush1.msra.mxu0 0.0
      %7087 = vmatprep.subr.mxu0 0.0
      %7088 = vmatpush1.msra.mxu0 0.0
      %7089 = vmatprep.subr.mxu0 0.0
      %7090 = vmatpush1.msra.mxu0 0.0
      %7091 = vmatprep.subr.mxu0 0.0
      %7092 = vmatpush1.msra.mxu0 0.0
      %7093 = vmatprep.subr.mxu0 0.0
      %7094 = vmatpush1.msra.mxu0 0.0
      %7095 = vmatprep.subr.mxu0 0.0
      %7096 = vmatpush1.msra.mxu0 0.0
      %7097 = vmatprep.subr.mxu0 0.0
      %7098 = vmatpush1.msra.mxu0 0.0
      %7099 = vmatprep.subr.mxu0 0.0
      %7100 = vmatpush1.msra.mxu0 0.0
      %7101 = vmatprep.subr.mxu0 0.0
      %7102 = vmatpush1.msra.mxu0 0.0
      %7103 = vmatprep.subr.mxu0 0.0
      %7104 = vmatpush1.msra.mxu0 0.0
      %7105 = vmatprep.subr.mxu0 0.0
      %7106 = vmatpush1.msra.mxu0 0.0
      %7107 = vmatprep.subr.mxu0 0.0
      %7108 = vmatpush1.msra.mxu0 0.0
      %7109 = vmatprep.subr.mxu0 0.0
      %7110 = vmatpush1.msra.mxu0 0.0
      %7111 = vmatprep.subr.mxu0 0.0
      %7112 = vmatpush1.msra.mxu0 0.0
      %7113 = vmatprep.subr.mxu0 0.0
      %7114 = vmatpush1.msra.mxu0 0.0
      %7115 = vmatprep.subr.mxu0 0.0
      %7116 = vmatpush1.msra.mxu0 0.0
      %7117 = vmatprep.subr.mxu0 0.0
      %7118 = vmatpush1.msra.mxu0 0.0
      %7119 = vmatprep.subr.mxu0 0.0
      %7120 = vmatpush1.msra.mxu0 0.0
      %7121 = vmatprep.subr.mxu0 0.0
      %7122 = vmatpush1.msra.mxu0 0.0
      %7123 = vmatprep.subr.mxu0 0.0
      %7124 = vmatpush1.msra.mxu0 0.0
      %7125 = vmatprep.subr.mxu0 0.0
      %7126 = vmatpush1.msra.mxu0 0.0
      %7127 = vmatprep.subr.mxu0 0.0
      %7128 = vmatpush1.msra.mxu0 0.0
      %7129 = vmatprep.subr.mxu0 0.0
      %7130 = vmatpush1.msra.mxu0 0.0
      %7131 = vmatprep.subr.mxu0 0.0
      %7132 = vmatpush1.msra.mxu0 0.0
      %7133 = vmatprep.subr.mxu0 0.0
      %7134 = vmatpush1.msra.mxu0 0.0
      %7135 = vmatprep.mubr.f32.mxu0 0.0
      %7136 = vmatmul.mubr.f32.gmra.mrb[0].mxu0 %v7069
      %v7137 = vpop.f32.mrb[0].mxu0
      %v7138 = vadd.f32 %v6843, %v7137
      %v7139 = vpop.f32.mrb[0].mxu0
      %7140 = vdwg.mxu0
      %v7141 = vtanh.pop %v7138
      %v7143 = vsel %vm182, %v7141, 0
      %7145 = vmatprep.subr.mxu0 0.0
      %7146 = vmatpush1.msra.mxu0 %v50
      %7147 = vmatprep.subr.mxu0 0.0
      %7148 = vmatpush1.msra.mxu0 %v51
      %7149 = vmatprep.subr.mxu0 0.0
      %7150 = vmatpush1.msra.mxu0 %v52
      %7151 = vmatprep.subr.mxu0 0.0
      %7152 = vmatpush1.msra.mxu0 %v53
      %7153 = vmatprep.subr.mxu0 0.0
      %7154 = vmatpush1.msra.mxu0 0.0
      %7155 = vmatprep.subr.mxu0 0.0
      %7156 = vmatpush1.msra.mxu0 0.0
      %7157 = vmatprep.subr.mxu0 0.0
      %7158 = vmatpush1.msra.mxu0 0.0
      %7159 = vmatprep.subr.mxu0 0.0
      %7160 = vmatpush1.msra.mxu0 0.0
      %7161 = vmatprep.subr.mxu0 0.0
      %7162 = vmatpush1.msra.mxu0 0.0
      %7163 = vmatprep.subr.mxu0 0.0
      %7164 = vmatpush1.msra.mxu0 0.0
      %7165 = vmatprep.subr.mxu0 0.0
      %7166 = vmatpush1.msra.mxu0 0.0
      %7167 = vmatprep.subr.mxu0 0.0
      %7168 = vmatpush1.msra.mxu0 0.0
      %7169 = vmatprep.subr.mxu0 0.0
      %7170 = vmatpush1.msra.mxu0 0.0
      %7171 = vmatprep.subr.mxu0 0.0
      %7172 = vmatpush1.msra.mxu0 0.0
      %7173 = vmatprep.subr.mxu0 0.0
      %7174 = vmatpush1.msra.mxu0 0.0
      %7175 = vmatprep.subr.mxu0 0.0
      %7176 = vmatpush1.msra.mxu0 0.0
      %7177 = vmatprep.subr.mxu0 0.0
      %7178 = vmatpush1.msra.mxu0 0.0
      %7179 = vmatprep.subr.mxu0 0.0
      %7180 = vmatpush1.msra.mxu0 0.0
      %7181 = vmatprep.subr.mxu0 0.0
      %7182 = vmatpush1.msra.mxu0 0.0
      %7183 = vmatprep.subr.mxu0 0.0
      %7184 = vmatpush1.msra.mxu0 0.0
      %7185 = vmatprep.subr.mxu0 0.0
      %7186 = vmatpush1.msra.mxu0 0.0
      %7187 = vmatprep.subr.mxu0 0.0
      %7188 = vmatpush1.msra.mxu0 0.0
      %7189 = vmatprep.subr.mxu0 0.0
      %7190 = vmatpush1.msra.mxu0 0.0
      %7191 = vmatprep.subr.mxu0 0.0
      %7192 = vmatpush1.msra.mxu0 0.0
      %7193 = vmatprep.subr.mxu0 0.0
      %7194 = vmatpush1.msra.mxu0 0.0
      %7195 = vmatprep.subr.mxu0 0.0
      %7196 = vmatpush1.msra.mxu0 0.0
      %7197 = vmatprep.subr.mxu0 0.0
      %7198 = vmatpush1.msra.mxu0 0.0
      %7199 = vmatprep.subr.mxu0 0.0
      %7200 = vmatpush1.msra.mxu0 0.0
      %7201 = vmatprep.subr.mxu0 0.0
      %7202 = vmatpush1.msra.mxu0 0.0
      %7203 = vmatprep.subr.mxu0 0.0
      %7204 = vmatpush1.msra.mxu0 0.0
      %7205 = vmatprep.subr.mxu0 0.0
      %7206 = vmatpush1.msra.mxu0 0.0
      %7207 = vmatprep.subr.mxu0 0.0
      %7208 = vmatpush1.msra.mxu0 0.0
      %7209 = vmatprep.mubr.f32.mxu0 0.0
      %7210 = vmatmul.mubr.f32.gmra.mrb[0].mxu0 %v7143
      %v7211 = vpop.f32.mrb[0].mxu0
      %v7212 = vadd.f32 %v180, %v7211
      %v7213 = vpop.f32.mrb[0].mxu0
      %7214 = vdwg.mxu0
      %v7215 = vtanh.pop %v7212
      %v7217 = vsel %vm182, %v7215, 0
      %7219 = vmatprep.subr.mxu0 0.0
      %7220 = vmatpush1.msra.mxu0 %v55
      %7221 = vmatprep.subr.mxu0 0.0
      %7222 = vmatpush1.msra.mxu0 %v56
      %7223 = vmatprep.subr.mxu0 0.0
      %7224 = vmatpush1.msra.mxu0 %v57
      %7225 = vmatprep.subr.mxu0 0.0
      %7226 = vmatpush1.msra.mxu0 %v58
      %7227 = vmatprep.subr.mxu0 0.0
      %7228 = vmatpush1.msra.mxu0 0.0
      %7229 = vmatprep.subr.mxu0 0.0
      %7230 = vmatpush1.msra.mxu0 0.0
      %7231 = vmatprep.subr.mxu0 0.0
      %7232 = vmatpush1.msra.mxu0 0.0
      %7233 = vmatprep.subr.mxu0 0.0
      %7234 = vmatpush1.msra.mxu0 0.0
      %7235 = vmatprep.subr.mxu0 0.0
      %7236 = vmatpush1.msra.mxu0 0.0
      %7237 = vmatprep.subr.mxu0 0.0
      %7238 = vmatpush1.msra.mxu0 0.0
      %7239 = vmatprep.subr.mxu0 0.0
      %7240 = vmatpush1.msra.mxu0 0.0
      %7241 = vmatprep.subr.mxu0 0.0
      %7242 = vmatpush1.msra.mxu0 0.0
      %7243 = vmatprep.subr.mxu0 0.0
      %7244 = vmatpush1.msra.mxu0 0.0
      %7245 = vmatprep.subr.mxu0 0.0
      %7246 = vmatpush1.msra.mxu0 0.0
      %7247 = vmatprep.subr.mxu0 0.0
      %7248 = vmatpush1.msra.mxu0 0.0
      %7249 = vmatprep.subr.mxu0 0.0
      %7250 = vmatpush1.msra.mxu0 0.0
      %7251 = vmatprep.subr.mxu0 0.0
      %7252 = vmatpush1.msra.mxu0 0.0
      %7253 = vmatprep.subr.mxu0 0.0
      %7254 = vmatpush1.msra.mxu0 0.0
      %7255 = vmatprep.subr.mxu0 0.0
      %7256 = vmatpush1.msra.mxu0 0.0
      %7257 = vmatprep.subr.mxu0 0.0
      %7258 = vmatpush1.msra.mxu0 0.0
      %7259 = vmatprep.subr.mxu0 0.0
      %7260 = vmatpush1.msra.mxu0 0.0
      %7261 = vmatprep.subr.mxu0 0.0
      %7262 = vmatpush1.msra.mxu0 0.0
      %7263 = vmatprep.subr.mxu0 0.0
      %7264 = vmatpush1.msra.mxu0 0.0
      %7265 = vmatprep.subr.mxu0 0.0
      %7266 = vmatpush1.msra.mxu0 0.0
      %7267 = vmatprep.subr.mxu0 0.0
      %7268 = vmatpush1.msra.mxu0 0.0
      %7269 = vmatprep.subr.mxu0 0.0
      %7270 = vmatpush1.msra.mxu0 0.0
      %7271 = vmatprep.subr.mxu0 0.0
      %7272 = vmatpush1.msra.mxu0 0.0
      %7273 = vmatprep.subr.mxu0 0.0
      %7274 = vmatpush1.msra.mxu0 0.0
      %7275 = vmatprep.subr.mxu0 0.0
      %7276 = vmatpush1.msra.mxu0 0.0
      %7277 = vmatprep.subr.mxu0 0.0
      %7278 = vmatpush1.msra.mxu0 0.0
      %7279 = vmatprep.subr.mxu0 0.0
      %7280 = vmatpush1.msra.mxu0 0.0
      %7281 = vmatprep.subr.mxu0 0.0
      %7282 = vmatpush1.msra.mxu0 0.0
      %7283 = vmatprep.mubr.f32.mxu0 0.0
      %7284 = vmatmul.mubr.f32.gmra.mrb[0].mxu0 %v7217
      %v7285 = vpop.f32.mrb[0].mxu0
      %v7286 = vadd.f32 %v261, %v7285
      %v7287 = vpop.f32.mrb[0].mxu0
      %7288 = vdwg.mxu0
      %v7289 = vmul.f32 %v789, %v7286
      %v7290 = vadd.f32 %v6596, %v7289
      %v7292 = vlaneseq
      %v7293 = vshrl.u32 %v7292, 7
      %v7294 = vsub.s32 0, %v7293
      %v7295 = vrot.slane %v6609, %v7294
      %v7298 = vsel %vm97, %v7290, 0
      %7300 = vmatprep.subr.mxu0 0.0
      %7301 = vmatpush1.msra.mxu0 %v46
      %7302 = vmatprep.subr.mxu0 0.0
      %7303 = vmatpush1.msra.mxu0 %v103
      %7304 = vmatprep.subr.mxu0 0.0
      %7305 = vmatpush1.msra.mxu0 0.0
      %7306 = vmatprep.subr.mxu0 0.0
      %7307 = vmatpush1.msra.mxu0 0.0
      %7308 = vmatprep.subr.mxu0 0.0
      %7309 = vmatpush1.msra.mxu0 0.0
      %7310 = vmatprep.subr.mxu0 0.0
      %7311 = vmatpush1.msra.mxu0 0.0
      %7312 = vmatprep.subr.mxu0 0.0
      %7313 = vmatpush1.msra.mxu0 0.0
      %7314 = vmatprep.subr.mxu0 0.0
      %7315 = vmatpush1.msra.mxu0 0.0
      %7316 = vmatprep.subr.mxu0 0.0
      %7317 = vmatpush1.msra.mxu0 0.0
      %7318 = vmatprep.subr.mxu0 0.0
      %7319 = vmatpush1.msra.mxu0 0.0
      %7320 = vmatprep.subr.mxu0 0.0
      %7321 = vmatpush1.msra.mxu0 0.0
      %7322 = vmatprep.subr.mxu0 0.0
      %7323 = vmatpush1.msra.mxu0 0.0
      %7324 = vmatprep.subr.mxu0 0.0
      %7325 = vmatpush1.msra.mxu0 0.0
      %7326 = vmatprep.subr.mxu0 0.0
      %7327 = vmatpush1.msra.mxu0 0.0
      %7328 = vmatprep.subr.mxu0 0.0
      %7329 = vmatpush1.msra.mxu0 0.0
      %7330 = vmatprep.subr.mxu0 0.0
      %7331 = vmatpush1.msra.mxu0 0.0
      %7332 = vmatprep.subr.mxu0 0.0
      %7333 = vmatpush1.msra.mxu0 0.0
      %7334 = vmatprep.subr.mxu0 0.0
      %7335 = vmatpush1.msra.mxu0 0.0
      %7336 = vmatprep.subr.mxu0 0.0
      %7337 = vmatpush1.msra.mxu0 0.0
      %7338 = vmatprep.subr.mxu0 0.0
      %7339 = vmatpush1.msra.mxu0 0.0
      %7340 = vmatprep.subr.mxu0 0.0
      %7341 = vmatpush1.msra.mxu0 0.0
      %7342 = vmatprep.subr.mxu0 0.0
      %7343 = vmatpush1.msra.mxu0 0.0
      %7344 = vmatprep.subr.mxu0 0.0
      %7345 = vmatpush1.msra.mxu0 0.0
      %7346 = vmatprep.subr.mxu0 0.0
      %7347 = vmatpush1.msra.mxu0 0.0
      %7348 = vmatprep.subr.mxu0 0.0
      %7349 = vmatpush1.msra.mxu0 0.0
      %7350 = vmatprep.subr.mxu0 0.0
      %7351 = vmatpush1.msra.mxu0 0.0
      %7352 = vmatprep.subr.mxu0 0.0
      %7353 = vmatpush1.msra.mxu0 0.0
      %7354 = vmatprep.subr.mxu0 0.0
      %7355 = vmatpush1.msra.mxu0 0.0
      %7356 = vmatprep.subr.mxu0 0.0
      %7357 = vmatpush1.msra.mxu0 0.0
      %7358 = vmatprep.subr.mxu0 0.0
      %7359 = vmatpush1.msra.mxu0 0.0
      %7360 = vmatprep.subr.mxu0 0.0
      %7361 = vmatpush1.msra.mxu0 0.0
      %7362 = vmatprep.subr.mxu0 0.0
      %7363 = vmatpush1.msra.mxu0 0.0
      %7364 = vmatprep.mubr.f32.mxu0 0.0
      %7365 = vmatmul.mubr.f32.gmra.mrb[0].mxu0 %v7298
      %v7366 = vpop.f32.mrb[0].mxu0
      %v7367 = vadd.f32 %v7295, %v7366
      %v7368 = vpop.f32.mrb[0].mxu0
      %7369 = vdwg.mxu0
      %v7370 = vtanh.pop %v7367
      %v7372 = vsel %vm182, %v7370, 0
      %7374 = vmatprep.subr.mxu0 0.0
      %7375 = vmatpush1.msra.mxu0 %v50
      %7376 = vmatprep.subr.mxu0 0.0
      %7377 = vmatpush1.msra.mxu0 %v51
      %7378 = vmatprep.subr.mxu0 0.0
      %7379 = vmatpush1.msra.mxu0 %v52
      %7380 = vmatprep.subr.mxu0 0.0
      %7381 = vmatpush1.msra.mxu0 %v53
      %7382 = vmatprep.subr.mxu0 0.0
      %7383 = vmatpush1.msra.mxu0 0.0
      %7384 = vmatprep.subr.mxu0 0.0
      %7385 = vmatpush1.msra.mxu0 0.0
      %7386 = vmatprep.subr.mxu0 0.0
      %7387 = vmatpush1.msra.mxu0 0.0
      %7388 = vmatprep.subr.mxu0 0.0
      %7389 = vmatpush1.msra.mxu0 0.0
      %7390 = vmatprep.subr.mxu0 0.0
      %7391 = vmatpush1.msra.mxu0 0.0
      %7392 = vmatprep.subr.mxu0 0.0
      %7393 = vmatpush1.msra.mxu0 0.0
      %7394 = vmatprep.subr.mxu0 0.0
      %7395 = vmatpush1.msra.mxu0 0.0
      %7396 = vmatprep.subr.mxu0 0.0
      %7397 = vmatpush1.msra.mxu0 0.0
      %7398 = vmatprep.subr.mxu0 0.0
      %7399 = vmatpush1.msra.mxu0 0.0
      %7400 = vmatprep.subr.mxu0 0.0
      %7401 = vmatpush1.msra.mxu0 0.0
      %7402 = vmatprep.subr.mxu0 0.0
      %7403 = vmatpush1.msra.mxu0 0.0
      %7404 = vmatprep.subr.mxu0 0.0
      %7405 = vmatpush1.msra.mxu0 0.0
      %7406 = vmatprep.subr.mxu0 0.0
      %7407 = vmatpush1.msra.mxu0 0.0
      %7408 = vmatprep.subr.mxu0 0.0
      %7409 = vmatpush1.msra.mxu0 0.0
      %7410 = vmatprep.subr.mxu0 0.0
      %7411 = vmatpush1.msra.mxu0 0.0
      %7412 = vmatprep.subr.mxu0 0.0
      %7413 = vmatpush1.msra.mxu0 0.0
      %7414 = vmatprep.subr.mxu0 0.0
      %7415 = vmatpush1.msra.mxu0 0.0
      %7416 = vmatprep.subr.mxu0 0.0
      %7417 = vmatpush1.msra.mxu0 0.0
      %7418 = vmatprep.subr.mxu0 0.0
      %7419 = vmatpush1.msra.mxu0 0.0
      %7420 = vmatprep.subr.mxu0 0.0
      %7421 = vmatpush1.msra.mxu0 0.0
      %7422 = vmatprep.subr.mxu0 0.0
      %7423 = vmatpush1.msra.mxu0 0.0
      %7424 = vmatprep.subr.mxu0 0.0
      %7425 = vmatpush1.msra.mxu0 0.0
      %7426 = vmatprep.subr.mxu0 0.0
      %7427 = vmatpush1.msra.mxu0 0.0
      %7428 = vmatprep.subr.mxu0 0.0
      %7429 = vmatpush1.msra.mxu0 0.0
      %7430 = vmatprep.subr.mxu0 0.0
      %7431 = vmatpush1.msra.mxu0 0.0
      %7432 = vmatprep.subr.mxu0 0.0
      %7433 = vmatpush1.msra.mxu0 0.0
      %7434 = vmatprep.subr.mxu0 0.0
      %7435 = vmatpush1.msra.mxu0 0.0
      %7436 = vmatprep.subr.mxu0 0.0
      %7437 = vmatpush1.msra.mxu0 0.0
      %7438 = vmatprep.mubr.f32.mxu0 0.0
      %7439 = vmatmul.mubr.f32.gmra.mrb[0].mxu0 %v7372
      %v7440 = vpop.f32.mrb[0].mxu0
      %v7441 = vadd.f32 %v180, %v7440
      %v7442 = vpop.f32.mrb[0].mxu0
      %7443 = vdwg.mxu0
      %v7444 = vtanh.pop %v7441
      %v7446 = vsel %vm182, %v7444, 0
      %7448 = vmatprep.subr.mxu0 0.0
      %7449 = vmatpush1.msra.mxu0 %v55
      %7450 = vmatprep.subr.mxu0 0.0
      %7451 = vmatpush1.msra.mxu0 %v56
      %7452 = vmatprep.subr.mxu0 0.0
      %7453 = vmatpush1.msra.mxu0 %v57
      %7454 = vmatprep.subr.mxu0 0.0
      %7455 = vmatpush1.msra.mxu0 %v58
      %7456 = vmatprep.subr.mxu0 0.0
      %7457 = vmatpush1.msra.mxu0 0.0
      %7458 = vmatprep.subr.mxu0 0.0
      %7459 = vmatpush1.msra.mxu0 0.0
      %7460 = vmatprep.subr.mxu0 0.0
      %7461 = vmatpush1.msra.mxu0 0.0
      %7462 = vmatprep.subr.mxu0 0.0
      %7463 = vmatpush1.msra.mxu0 0.0
      %7464 = vmatprep.subr.mxu0 0.0
      %7465 = vmatpush1.msra.mxu0 0.0
      %7466 = vmatprep.subr.mxu0 0.0
      %7467 = vmatpush1.msra.mxu0 0.0
      %7468 = vmatprep.subr.mxu0 0.0
      %7469 = vmatpush1.msra.mxu0 0.0
      %7470 = vmatprep.subr.mxu0 0.0
      %7471 = vmatpush1.msra.mxu0 0.0
      %7472 = vmatprep.subr.mxu0 0.0
      %7473 = vmatpush1.msra.mxu0 0.0
      %7474 = vmatprep.subr.mxu0 0.0
      %7475 = vmatpush1.msra.mxu0 0.0
      %7476 = vmatprep.subr.mxu0 0.0
      %7477 = vmatpush1.msra.mxu0 0.0
      %7478 = vmatprep.subr.mxu0 0.0
      %7479 = vmatpush1.msra.mxu0 0.0
      %7480 = vmatprep.subr.mxu0 0.0
      %7481 = vmatpush1.msra.mxu0 0.0
      %7482 = vmatprep.subr.mxu0 0.0
      %7483 = vmatpush1.msra.mxu0 0.0
      %7484 = vmatprep.subr.mxu0 0.0
      %7485 = vmatpush1.msra.mxu0 0.0
      %7486 = vmatprep.subr.mxu0 0.0
      %7487 = vmatpush1.msra.mxu0 0.0
      %7488 = vmatprep.subr.mxu0 0.0
      %7489 = vmatpush1.msra.mxu0 0.0
      %7490 = vmatprep.subr.mxu0 0.0
      %7491 = vmatpush1.msra.mxu0 0.0
      %7492 = vmatprep.subr.mxu0 0.0
      %7493 = vmatpush1.msra.mxu0 0.0
      %7494 = vmatprep.subr.mxu0 0.0
      %7495 = vmatpush1.msra.mxu0 0.0
      %7496 = vmatprep.subr.mxu0 0.0
      %7497 = vmatpush1.msra.mxu0 0.0
      %7498 = vmatprep.subr.mxu0 0.0
      %7499 = vmatpush1.msra.mxu0 0.0
      %7500 = vmatprep.subr.mxu0 0.0
      %7501 = vmatpush1.msra.mxu0 0.0
      %7502 = vmatprep.subr.mxu0 0.0
      %7503 = vmatpush1.msra.mxu0 0.0
      %7504 = vmatprep.subr.mxu0 0.0
      %7505 = vmatpush1.msra.mxu0 0.0
      %7506 = vmatprep.subr.mxu0 0.0
      %7507 = vmatpush1.msra.mxu0 0.0
      %7508 = vmatprep.subr.mxu0 0.0
      %7509 = vmatpush1.msra.mxu0 0.0
      %7510 = vmatprep.subr.mxu0 0.0
      %7511 = vmatpush1.msra.mxu0 0.0
      %7512 = vmatprep.mubr.f32.mxu0 0.0
      %7513 = vmatmul.mubr.f32.gmra.mrb[0].mxu0 %v7446
      %v7514 = vpop.f32.mrb[0].mxu0
      %v7515 = vadd.f32 %v261, %v7514
      %v7516 = vpop.f32.mrb[0].mxu0
      %7517 = vdwg.mxu0
      %v7518 = vmul.f32 %v7063, 2.0
      %v7519 = vadd.f32 %v6834, %v7518
      %v7520 = vmul.f32 %v7286, 2.0
      %v7521 = vadd.f32 %v7519, %v7520
      %v7522 = vadd.f32 %v7521, %v7515
      %v7523 = vmul.f32 %v1027, %v7522
      %v7524 = vadd.f32 %v6596, %v7523
      %s7525 = smul.u32 %s64, 2
      %s7526 = scalar_lea.vmem [#allocation5], %s7525
      %7527 = vst.msk [vmem:[%s7526] sm:$0x3] %vm61, %v7524
    $region46: #{tpu_custom_call.1} parent=1 // loop_footer
      %s68 = sadd.s32 1, %s64
    $region47: #{tpu_custom_call.1} parent=1 // loop_footer_branch
      %63 = sbr.rel target = $region43
    $region48: #{tpu_custom_call.1} parent=1 // loop_exit
      _
    // Predicated region
    $region49: #{tpu_custom_call.1} parent=1 // pred_check
      _
    $region50: #{tpu_custom_call.1} parent=1 // pred_check_branch
      %7529 = sbr.rel (0) target = $region52
    $region51: #{tpu_custom_call.1} parent=1 // pred_region
      %s7531 = ssub.s32 256, 256
      %7532 = vsyncadd [#allocation3], %s7531
      %s7533 = sshll.u32 [#allocation5], 4
      %s7534 = int_to_ptr.vmem [resolvable:$true] %s7533
      %7539 = dma.vmem_to_hbm [thread:$0]  %s7534, 256, %s9, [#allocation3], 32, 32, 2
    $region52: #{tpu_custom_call.1} parent=1 // pred_fallthru
      _
    // Predicated region
    $region53: #{tpu_custom_call.1} parent=1 // pred_check
      _
    $region54: #{tpu_custom_call.1} parent=1 // pred_check_branch
      %7541 = sbr.rel (0) target = $region56
    $region55: #{tpu_custom_call.1} parent=1 // pred_region
      %7542 = dma.done [#allocation3], 256
    $region56: #{tpu_custom_call.1} parent=1 // pred_fallthru
      _
    %7543 = vsyncpa [#allocation3], 1
    %7544 = vsyncpa [#allocation4], 1

</llo_original>
